<compile_context>
chip_gen: v6e
topology: v6e:2x2x1
jax: 0.10.0
libtpu: 0.0.40
codegen_flags: <defaults>
</compile_context>

<pallas_src>
import functools

import jax
import jax.numpy as jnp
from jax import lax
from jax.experimental import pallas as pl
from jax.experimental.pallas import tpu as pltpu


def _binarization_kernel(H, W,
                         xcol_ref, w1_ref, b1_ref, w2_ref, b2_ref,
                         wt_ref, bt_ref, w3_ref, b3_ref,
                         out_ref,
                         h1p_ref, q_ref):
    f32 = jnp.float32
    bf16 = jnp.bfloat16
    HP, WP = H + 2, W + 2
    H2, W2 = H // 2, W // 2
    HW = H * W

    # ---- zero only the 1-element halo ring of the padded scratch buffers
    #      (interiors are fully overwritten every grid step; zeroing every step
    #      keeps the "parallel" batch axis safe on megacore). ----
    h1p_ref[0:1, :, :] = jnp.zeros((1, WP, 32), bf16)
    h1p_ref[H + 1:H + 2, :, :] = jnp.zeros((1, WP, 32), bf16)
    h1p_ref[:, 0:1, :] = jnp.zeros((HP, 1, 32), bf16)
    h1p_ref[:, W + 1:W + 2, :] = jnp.zeros((HP, 1, 32), bf16)
    q_ref[:, 0:1, :, :] = jnp.zeros((4, 1, W2 + 2, 32), f32)
    q_ref[:, H2 + 1:H2 + 2, :, :] = jnp.zeros((4, 1, W2 + 2, 32), f32)
    q_ref[:, :, 0:1, :] = jnp.zeros((4, H2 + 2, 1, 32), f32)
    q_ref[:, :, W2 + 1:W2 + 2, :] = jnp.zeros((4, H2 + 2, 1, 32), f32)

    # ---- conv1: 1 -> 32, 3x3, pad=1, ReLU.  Wrapper pre-builds the 9-tap
    #      im2col so conv1 is a single MXU matmul (no VPU broadcast FMAs). ----
    h1 = jnp.dot(xcol_ref[0], w1_ref[...], preferred_element_type=f32)  # (HW, 32)
    h1 = jnp.maximum(h1 + b1_ref[...], 0.0).astype(bf16)
    h1p_ref[1:H + 1, 1:W + 1, :] = h1.reshape(H, W, 32)

    # ---- conv2: 32 -> 64, 3x3, pad=1, ReLU.  K raised to 96 by concatenating
    #      the 3 dx-shifted bf16 patches per dy -> 3 MXU matmuls (HW,96)x(96,64)
    #      with f32 accumulation. ----
    acc2 = jnp.zeros((HW, 64), f32)
    for dy in range(3):
        p = jnp.concatenate(
            [h1p_ref[dy:dy + H, dx:dx + W, :] for dx in range(3)], axis=-1)
        acc2 = acc2 + jnp.dot(p.reshape(HW, 96), w2_ref[dy],
                              preferred_element_type=f32)
    h2 = jnp.maximum(acc2 + b2_ref[...], 0.0)                    # (HW, 64) f32

    # ---- maxpool 2x2 stride 2 directly on the conv2 value (no f32 scratch
    #      round-trip).  Horizontal pairs are adjacent rows of (HW, 64);
    #      vertical pairs are tile-aligned slabs (needs W % 16 == 0). ----
    h2p = h2.reshape(HW // 2, 2, 64)
    cmax = jnp.maximum(h2p[:, 0, :], h2p[:, 1, :])               # (H*W2, 64)
    rmax = cmax.reshape(H2, 2 * W2, 64)
    pmax = jnp.maximum(rmax[:, :W2, :], rmax[:, W2:, :])         # (H2, W2, 64)
    pmax = pmax.reshape(H2 * W2, 64).astype(bf16)

    # ---- conv-transpose: 64 -> 32, 2x2, stride 2, ReLU.  All 4 taps packed on
    #      the output dim: ONE (H2*W2,64)x(64,128) MXU matmul; lane slices give
    #      the 4 output-parity quarter-planes (never interleaved per-element). ----
    dq = jnp.dot(pmax, wt_ref[...], preferred_element_type=f32)  # (H2*W2, 128)
    for t in range(4):
        qt = jnp.maximum(dq[:, t * 32:(t + 1) * 32] + bt_ref[...], 0.0)
        q_ref[t, 1:H2 + 1, 1:W2 + 1, :] = qt.reshape(H2, W2, 32)

    # ---- conv3: 32 -> 1, 3x3, pad=1, Sigmoid, per output-parity plane straight
    #      from the padded deconv quarter-planes.  Channel sum drops the trailing
    #      dim so the output store is lane-dense (W2 on lanes). ----
    for r in range(2):
        for s in range(2):
            acc3 = jnp.zeros((H2, W2, 32), f32)
            for dy in range(3):
                for dx in range(3):
                    t_ = r + dy - 1
                    u_ = s + dx - 1
                    pa, pb = t_ % 2, u_ % 2
                    oy = 1 + (t_ - pa) // 2                      # in {0, 1, 2}
                    ox = 1 + (u_ - pb) // 2                      # in {0, 1, 2}
                    patch = q_ref[pa * 2 + pb, oy:oy + H2, ox:ox + W2, :]
                    acc3 = acc3 + patch * w3_ref[dy * 3 + dx]    # * (1, 32)
            z = jnp.sum(acc3, axis=-1) + b3_ref[...]             # (H2, W2)
            out_ref[r * 2 + s] = pl.reciprocal(1.0 + jnp.exp(-z), approx=True)


def binarization_net_pallas(x_nchw, kernel_params):
    """Forward pass of BinarizationNet.  x_nchw: (N, 1, H, W) f32 -> (N, 1, H, W) f32."""
    w1, b1, w2, b2, wt, bt, w3, b3 = kernel_params
    N, C, H, W = x_nchw.shape
    assert C == 1 and H % 2 == 0 and W % 16 == 0
    HP, WP = H + 2, W + 2
    H2, W2 = H // 2, W // 2
    HW = H * W

    # Wrapper-side layout plumbing: 9-tap im2col of the zero-padded input so
    # conv1 runs as one MXU matmul inside the kernel.
    xp = jnp.pad(x_nchw[:, 0], ((0, 0), (1, 1), (1, 1)))         # (N, HP, WP)
    cols = [xp[:, dy:dy + H, dx:dx + W] for dy in range(3) for dx in range(3)]
    xcol = jnp.stack(cols, axis=-1).reshape(N, HW, 9).astype(jnp.bfloat16)

    kernel = functools.partial(_binarization_kernel, H, W)
    grid_spec = pltpu.PrefetchScalarGridSpec(
        num_scalar_prefetch=0,
        grid=(N,),
        in_specs=[
            pl.BlockSpec((1, HW, 9), lambda b: (b, 0, 0)),       # im2col input (bf16)
            pl.BlockSpec((9, 32), lambda b: (0, 0)),             # w1 (bf16)
            pl.BlockSpec((1, 32), lambda b: (0, 0)),             # b1
            pl.BlockSpec((3, 96, 64), lambda b: (0, 0, 0)),      # w2 (bf16, K=96 packed)
            pl.BlockSpec((1, 64), lambda b: (0, 0)),             # b2
            pl.BlockSpec((64, 128), lambda b: (0, 0)),           # wt (bf16, 4 taps on N)
            pl.BlockSpec((1, 32), lambda b: (0, 0)),             # bt
            pl.BlockSpec((9, 1, 32), lambda b: (0, 0, 0)),       # w3 (f32, VPU)
            pl.BlockSpec((1, 1), lambda b: (0, 0)),              # b3
        ],
        out_specs=pl.BlockSpec((4, H2, W2), lambda b: (b, 0, 0)),
        scratch_shapes=[
            pltpu.VMEM((HP, WP, 32), jnp.bfloat16),              # padded conv1 output
            pltpu.VMEM((4, H2 + 2, W2 + 2, 32), jnp.float32),    # padded deconv parity planes
        ],
    )
    out4 = pl.pallas_call(
        kernel,
        out_shape=jax.ShapeDtypeStruct((N * 4, H2, W2), jnp.float32),
        grid_spec=grid_spec,
        compiler_params=pltpu.CompilerParams(dimension_semantics=("parallel",)),
    )(xcol, w1, b1, w2, b2, wt, bt, w3, b3)

    # Wrapper-side layout plumbing: reassemble the 4 output-parity planes into
    # the full-resolution NCHW image.  out4[n*4 + 2r + s, i, j] == O[n, 2i+r, 2j+s].
    o = out4.reshape(N, 2, 2, H2, W2)
    o = jnp.transpose(o, (0, 3, 1, 4, 2)).reshape(N, H, W)
    return o[:, None, :, :]


def make_params(key):
    """Deterministic synthetic weights in PyTorch layouts, plus kernel re-packing."""
    ks = jax.random.split(key, 8)
    W1 = 0.1 * jax.random.normal(ks[0], (32, 1, 3, 3), jnp.float32)    # Conv2d(1,32,3)
    b1 = 0.01 * jax.random.normal(ks[1], (32,), jnp.float32)
    W2 = 0.1 * jax.random.normal(ks[2], (64, 32, 3, 3), jnp.float32)   # Conv2d(32,64,3)
    b2 = 0.01 * jax.random.normal(ks[3], (64,), jnp.float32)
    Wt = 0.1 * jax.random.normal(ks[4], (64, 32, 2, 2), jnp.float32)   # ConvTranspose2d(64,32,2)
    bt = 0.01 * jax.random.normal(ks[5], (32,), jnp.float32)
    W3 = 0.1 * jax.random.normal(ks[6], (1, 32, 3, 3), jnp.float32)    # Conv2d(32,1,3)
    b3 = 0.01 * jax.random.normal(ks[7], (1,), jnp.float32)

    torch_params = (W1, b1, W2, b2, Wt, bt, W3, b3)
    kernel_params = (
        # conv1: (ky,kx,cin=1,cout) -> (9, 32), MXU bf16
        jnp.transpose(W1, (2, 3, 1, 0)).reshape(9, 32).astype(jnp.bfloat16),
        b1.reshape(1, 32),
        # conv2: (ky, kx*32+cin, cout) -> (3, 96, 64), MXU bf16, K=96 packed
        jnp.transpose(W2, (2, 3, 1, 0)).reshape(3, 96, 64).astype(jnp.bfloat16),
        b2.reshape(1, 64),
        # deconv: (cin, (ky*2+kx)*32 + cout) -> (64, 128), MXU bf16, 4 taps on N
        jnp.transpose(Wt, (0, 2, 3, 1)).reshape(64, 128).astype(jnp.bfloat16),
        bt.reshape(1, 32),
        # conv3: (ky*3+kx, cout=1, cin=32) -> (9, 1, 32), f32 (VPU)
        jnp.transpose(W3, (2, 3, 0, 1)).reshape(9, 1, 32),
        b3.reshape(1, 1),
    )
    return torch_params, kernel_params


def reference_forward(x_nchw, torch_params):
    """Pure-JAX reference reproducing the PyTorch module in NCHW."""
    W1, b1, W2, b2, Wt, bt, W3, b3 = torch_params
    dn = ("NCHW", "OIHW", "NCHW")
    prec = lax.Precision.HIGHEST
    pad1 = ((1, 1), (1, 1))
    h = lax.conv_general_dilated(x_nchw, W1, (1, 1), pad1,
                                 dimension_numbers=dn, precision=prec)
    h = jnp.maximum(h + b1[None, :, None, None], 0.0)
    h = lax.conv_general_dilated(h, W2, (1, 1), pad1,
                                 dimension_numbers=dn, precision=prec)
    h = jnp.maximum(h + b2[None, :, None, None], 0.0)
    p = lax.reduce_window(h, -jnp.inf, lax.max, (1, 1, 2, 2), (1, 1, 2, 2), "VALID")
    N, _, Hh, Wh = p.shape
    t = jnp.einsum("ncij,cokl->noikjl", p, Wt, precision=prec)
    up = t.reshape(N, 32, 2 * Hh, 2 * Wh) + bt[None, :, None, None]
    up = jnp.maximum(up, 0.0)
    o = lax.conv_general_dilated(up, W3, (1, 1), pad1,
                                 dimension_numbers=dn, precision=prec)
    o = o + b3[None, :, None, None]
    return 1.0 / (1.0 + jnp.exp(-o))


if __name__ == "__main__":
    key = jax.random.PRNGKey(0)
    k_x, k_p = jax.random.split(key)

    N, C, H, W = 2, 1, 16, 16
    x_nchw = jax.random.normal(k_x, (N, C, H, W), jnp.float32)     # PyTorch-style NCHW input

    torch_params, kernel_params = make_params(k_p)

    out_nchw = binarization_net_pallas(x_nchw, kernel_params)
    out_nchw = jax.block_until_ready(out_nchw)

    ref_nchw = reference_forward(x_nchw, torch_params)
    max_diff = float(jnp.max(jnp.abs(out_nchw - ref_nchw)))
    assert out_nchw.shape == (N, 1, H, W)
    assert max_diff < 5e-2, f"kernel/reference mismatch: max|diff|={max_diff}"

    print("KERNEL_OK")
</pallas_src>

<mosaic_0001>
module attributes {stable_mosaic.version = 11 : i64} {
  func.func @_binarization_kernel(%arg0: i32, %arg1: memref<1x256x9xbf16, #tpu.memory_space<vmem>>, %arg2: memref<9x32xbf16, #tpu.memory_space<vmem>>, %arg3: memref<1x32xf32, #tpu.memory_space<vmem>>, %arg4: memref<3x96x64xbf16, #tpu.memory_space<vmem>>, %arg5: memref<1x64xf32, #tpu.memory_space<vmem>>, %arg6: memref<64x128xbf16, #tpu.memory_space<vmem>>, %arg7: memref<1x32xf32, #tpu.memory_space<vmem>>, %arg8: memref<9x1x32xf32, #tpu.memory_space<vmem>>, %arg9: memref<1x1xf32, #tpu.memory_space<vmem>>, %arg10: memref<4x8x8xf32, #tpu.memory_space<vmem>>, %arg11: memref<18x18x32xbf16, #tpu.memory_space<vmem>>, %arg12: memref<4x10x10x32xf32, #tpu.memory_space<vmem>>) attributes {dimension_semantics = [#tpu.dimension_semantics<parallel>], iteration_bounds = array<i64: 2>, scalar_prefetch = 0 : i64, scratch_operands = 2 : i64, tpu.core_type = #tpu.core_type<tc>, window_params = [{transform_indices = @transform_0, window_bounds = array<i64: 1, 256, 9>}, {pipeline_mode = #tpu.pipeline_mode<synchronous>, transform_indices = @transform_1, window_bounds = array<i64: 9, 32>}, {pipeline_mode = #tpu.pipeline_mode<synchronous>, transform_indices = @transform_2, window_bounds = array<i64: 1, 32>}, {pipeline_mode = #tpu.pipeline_mode<synchronous>, transform_indices = @transform_3, window_bounds = array<i64: 3, 96, 64>}, {pipeline_mode = #tpu.pipeline_mode<synchronous>, transform_indices = @transform_4, window_bounds = array<i64: 1, 64>}, {pipeline_mode = #tpu.pipeline_mode<synchronous>, transform_indices = @transform_5, window_bounds = array<i64: 64, 128>}, {pipeline_mode = #tpu.pipeline_mode<synchronous>, transform_indices = @transform_6, window_bounds = array<i64: 1, 32>}, {pipeline_mode = #tpu.pipeline_mode<synchronous>, transform_indices = @transform_7, window_bounds = array<i64: 9, 1, 32>}, {pipeline_mode = #tpu.pipeline_mode<synchronous>, transform_indices = @transform_8, window_bounds = array<i64: 1, 1>}, {transform_indices = @transform_9, window_bounds = array<i64: 4, 8, 8>}]} {
    %cst = arith.constant 0.000000e+00 : bf16
    %0 = vector.broadcast %cst : bf16 to vector<1x18x32xbf16>
    %c0 = arith.constant 0 : index
    %c0_0 = arith.constant 0 : index
    %c0_1 = arith.constant 0 : index
    %1 = vector.load %arg11[%c0, %c0_0, %c0_1] : memref<18x18x32xbf16, #tpu.memory_space<vmem>>, vector<1x18x32xbf16>
    tpu.vector_store %arg11[%c0, %c0_0, %c0_1], %0 {strides = array<i32>} : memref<18x18x32xbf16, #tpu.memory_space<vmem>>, vector<1x18x32xbf16>,
    %cst_2 = arith.constant 0.000000e+00 : bf16
    %2 = vector.broadcast %cst_2 : bf16 to vector<1x18x32xbf16>
    %c17 = arith.constant 17 : index
    %c0_3 = arith.constant 0 : index
    %c0_4 = arith.constant 0 : index
    %3 = vector.load %arg11[%c17, %c0_3, %c0_4] : memref<18x18x32xbf16, #tpu.memory_space<vmem>>, vector<1x18x32xbf16>
    tpu.vector_store %arg11[%c17, %c0_3, %c0_4], %2 {strides = array<i32>} : memref<18x18x32xbf16, #tpu.memory_space<vmem>>, vector<1x18x32xbf16>,
    %cst_5 = arith.constant 0.000000e+00 : bf16
    %4 = vector.broadcast %cst_5 : bf16 to vector<18x1x32xbf16>
    %c0_6 = arith.constant 0 : index
    %c0_7 = arith.constant 0 : index
    %c0_8 = arith.constant 0 : index
    %5 = vector.load %arg11[%c0_6, %c0_7, %c0_8] : memref<18x18x32xbf16, #tpu.memory_space<vmem>>, vector<18x1x32xbf16>
    tpu.vector_store %arg11[%c0_6, %c0_7, %c0_8], %4 {strides = array<i32>} : memref<18x18x32xbf16, #tpu.memory_space<vmem>>, vector<18x1x32xbf16>,
    %cst_9 = arith.constant 0.000000e+00 : bf16
    %6 = vector.broadcast %cst_9 : bf16 to vector<18x1x32xbf16>
    %c0_10 = arith.constant 0 : index
    %c17_11 = arith.constant 17 : index
    %c0_12 = arith.constant 0 : index
    %7 = vector.load %arg11[%c0_10, %c17_11, %c0_12] : memref<18x18x32xbf16, #tpu.memory_space<vmem>>, vector<18x1x32xbf16>
    tpu.vector_store %arg11[%c0_10, %c17_11, %c0_12], %6 {strides = array<i32>} : memref<18x18x32xbf16, #tpu.memory_space<vmem>>, vector<18x1x32xbf16>,
    %cst_13 = arith.constant 0.000000e+00 : f32
    %8 = vector.broadcast %cst_13 : f32 to vector<4x1x10x32xf32>
    %c0_14 = arith.constant 0 : index
    %c0_15 = arith.constant 0 : index
    %c0_16 = arith.constant 0 : index
    %c0_17 = arith.constant 0 : index
    %9 = vector.load %arg12[%c0_14, %c0_15, %c0_16, %c0_17] : memref<4x10x10x32xf32, #tpu.memory_space<vmem>>, vector<4x1x10x32xf32>
    tpu.vector_store %arg12[%c0_14, %c0_15, %c0_16, %c0_17], %8 {strides = array<i32>} : memref<4x10x10x32xf32, #tpu.memory_space<vmem>>, vector<4x1x10x32xf32>,
    %cst_18 = arith.constant 0.000000e+00 : f32
    %10 = vector.broadcast %cst_18 : f32 to vector<4x1x10x32xf32>
    %c0_19 = arith.constant 0 : index
    %c9 = arith.constant 9 : index
    %c0_20 = arith.constant 0 : index
    %c0_21 = arith.constant 0 : index
    %11 = vector.load %arg12[%c0_19, %c9, %c0_20, %c0_21] : memref<4x10x10x32xf32, #tpu.memory_space<vmem>>, vector<4x1x10x32xf32>
    tpu.vector_store %arg12[%c0_19, %c9, %c0_20, %c0_21], %10 {strides = array<i32>} : memref<4x10x10x32xf32, #tpu.memory_space<vmem>>, vector<4x1x10x32xf32>,
    %cst_22 = arith.constant 0.000000e+00 : f32
    %12 = vector.broadcast %cst_22 : f32 to vector<4x10x1x32xf32>
    %c0_23 = arith.constant 0 : index
    %c0_24 = arith.constant 0 : index
    %c0_25 = arith.constant 0 : index
    %c0_26 = arith.constant 0 : index
    %13 = vector.load %arg12[%c0_23, %c0_24, %c0_25, %c0_26] : memref<4x10x10x32xf32, #tpu.memory_space<vmem>>, vector<4x10x1x32xf32>
    tpu.vector_store %arg12[%c0_23, %c0_24, %c0_25, %c0_26], %12 {strides = array<i32>} : memref<4x10x10x32xf32, #tpu.memory_space<vmem>>, vector<4x10x1x32xf32>,
    %cst_27 = arith.constant 0.000000e+00 : f32
    %14 = vector.broadcast %cst_27 : f32 to vector<4x10x1x32xf32>
    %c0_28 = arith.constant 0 : index
    %c0_29 = arith.constant 0 : index
    %c9_30 = arith.constant 9 : index
    %c0_31 = arith.constant 0 : index
    %15 = vector.load %arg12[%c0_28, %c0_29, %c9_30, %c0_31] : memref<4x10x10x32xf32, #tpu.memory_space<vmem>>, vector<4x10x1x32xf32>
    tpu.vector_store %arg12[%c0_28, %c0_29, %c9_30, %c0_31], %14 {strides = array<i32>} : memref<4x10x10x32xf32, #tpu.memory_space<vmem>>, vector<4x10x1x32xf32>,
    %c0_32 = arith.constant 0 : index
    %c0_33 = arith.constant 0 : index
    %c0_34 = arith.constant 0 : index
    %16 = vector.load %arg1[%c0_32, %c0_33, %c0_34] : memref<1x256x9xbf16, #tpu.memory_space<vmem>>, vector<1x256x9xbf16>
    %17 = vector.shape_cast %16 : vector<1x256x9xbf16> to vector<256x9xbf16>
    %c0_35 = arith.constant 0 : index
    %c0_36 = arith.constant 0 : index
    %18 = vector.load %arg2[%c0_35, %c0_36] : memref<9x32xbf16, #tpu.memory_space<vmem>>, vector<9x32xbf16>
    %cst_37 = arith.constant dense<0.000000e+00> : vector<256x32xf32>
    %19 = tpu.matmul %17, %18, %cst_37 {dimension_numbers = #tpu.dot_dimension_numbers<[1], [0], [0], [1], [0, 0, 1, 1], [], []>} : vector<256x9xbf16>, vector<9x32xbf16>, vector<256x32xf32> -> vector<256x32xf32>
    %c0_38 = arith.constant 0 : index
    %c0_39 = arith.constant 0 : index
    %20 = vector.load %arg3[%c0_38, %c0_39] : memref<1x32xf32, #tpu.memory_space<vmem>>, vector<1x32xf32>
    %21 = vector.broadcast %20 : vector<1x32xf32> to vector<256x32xf32>
    %22 = arith.addf %19, %21 : vector<256x32xf32>
    %cst_40 = arith.constant 0.000000e+00 : f32
    %23 = vector.broadcast %cst_40 : f32 to vector<256x32xf32>
    %24 = arith.maximumf %22, %23 : vector<256x32xf32>
    %25 = arith.truncf %24 : vector<256x32xf32> to vector<256x32xbf16>
    %26 = vector.shape_cast %25 : vector<256x32xbf16> to vector<16x16x32xbf16>
    %c1 = arith.constant 1 : index
    %c1_41 = arith.constant 1 : index
    %c0_42 = arith.constant 0 : index
    %27 = vector.load %arg11[%c1, %c1_41, %c0_42] : memref<18x18x32xbf16, #tpu.memory_space<vmem>>, vector<16x16x32xbf16>
    tpu.vector_store %arg11[%c1, %c1_41, %c0_42], %26 {strides = array<i32>} : memref<18x18x32xbf16, #tpu.memory_space<vmem>>, vector<16x16x32xbf16>,
    %cst_43 = arith.constant 0.000000e+00 : f32
    %28 = vector.broadcast %cst_43 : f32 to vector<256x64xf32>
    %c0_44 = arith.constant 0 : index
    %c0_45 = arith.constant 0 : index
    %c0_46 = arith.constant 0 : index
    %29 = vector.load %arg11[%c0_44, %c0_45, %c0_46] : memref<18x18x32xbf16, #tpu.memory_space<vmem>>, vector<16x16x32xbf16>
    %c0_47 = arith.constant 0 : index
    %c1_48 = arith.constant 1 : index
    %c0_49 = arith.constant 0 : index
    %30 = vector.load %arg11[%c0_47, %c1_48, %c0_49] : memref<18x18x32xbf16, #tpu.memory_space<vmem>>, vector<16x16x32xbf16>
    %c0_50 = arith.constant 0 : index
    %c2 = arith.constant 2 : index
    %c0_51 = arith.constant 0 : index
    %31 = vector.load %arg11[%c0_50, %c2, %c0_51] : memref<18x18x32xbf16, #tpu.memory_space<vmem>>, vector<16x16x32xbf16>
    %32 = tpu.concatenate %29, %30, %31 in 2 : vector<16x16x32xbf16>, vector<16x16x32xbf16>, vector<16x16x32xbf16> -> vector<16x16x96xbf16>
    %33 = vector.shape_cast %32 : vector<16x16x96xbf16> to vector<256x96xbf16>
    %c0_52 = arith.constant 0 : index
    %c0_53 = arith.constant 0 : index
    %c0_54 = arith.constant 0 : index
    %34 = vector.load %arg4[%c0_52, %c0_53, %c0_54] : memref<3x96x64xbf16, #tpu.memory_space<vmem>>, vector<1x96x64xbf16>
    %35 = vector.shape_cast %34 : vector<1x96x64xbf16> to vector<96x64xbf16>
    %cst_55 = arith.constant dense<0.000000e+00> : vector<256x64xf32>
    %36 = tpu.matmul %33, %35, %cst_55 {dimension_numbers = #tpu.dot_dimension_numbers<[1], [0], [0], [1], [0, 0, 1, 1], [], []>} : vector<256x96xbf16>, vector<96x64xbf16>, vector<256x64xf32> -> vector<256x64xf32>
    %37 = arith.addf %28, %36 : vector<256x64xf32>
    %c1_56 = arith.constant 1 : index
    %c0_57 = arith.constant 0 : index
    %c0_58 = arith.constant 0 : index
    %38 = vector.load %arg11[%c1_56, %c0_57, %c0_58] : memref<18x18x32xbf16, #tpu.memory_space<vmem>>, vector<16x16x32xbf16>
    %c1_59 = arith.constant 1 : index
    %c1_60 = arith.constant 1 : index
    %c0_61 = arith.constant 0 : index
    %39 = vector.load %arg11[%c1_59, %c1_60, %c0_61] : memref<18x18x32xbf16, #tpu.memory_space<vmem>>, vector<16x16x32xbf16>
    %c1_62 = arith.constant 1 : index
    %c2_63 = arith.constant 2 : index
    %c0_64 = arith.constant 0 : index
    %40 = vector.load %arg11[%c1_62, %c2_63, %c0_64] : memref<18x18x32xbf16, #tpu.memory_space<vmem>>, vector<16x16x32xbf16>
    %41 = tpu.concatenate %38, %39, %40 in 2 : vector<16x16x32xbf16>, vector<16x16x32xbf16>, vector<16x16x32xbf16> -> vector<16x16x96xbf16>
    %42 = vector.shape_cast %41 : vector<16x16x96xbf16> to vector<256x96xbf16>
    %c1_65 = arith.constant 1 : index
    %c0_66 = arith.constant 0 : index
    %c0_67 = arith.constant 0 : index
    %43 = vector.load %arg4[%c1_65, %c0_66, %c0_67] : memref<3x96x64xbf16, #tpu.memory_space<vmem>>, vector<1x96x64xbf16>
    %44 = vector.shape_cast %43 : vector<1x96x64xbf16> to vector<96x64xbf16>
    %cst_68 = arith.constant dense<0.000000e+00> : vector<256x64xf32>
    %45 = tpu.matmul %42, %44, %cst_68 {dimension_numbers = #tpu.dot_dimension_numbers<[1], [0], [0], [1], [0, 0, 1, 1], [], []>} : vector<256x96xbf16>, vector<96x64xbf16>, vector<256x64xf32> -> vector<256x64xf32>
    %46 = arith.addf %37, %45 : vector<256x64xf32>
    %c2_69 = arith.constant 2 : index
    %c0_70 = arith.constant 0 : index
    %c0_71 = arith.constant 0 : index
    %47 = vector.load %arg11[%c2_69, %c0_70, %c0_71] : memref<18x18x32xbf16, #tpu.memory_space<vmem>>, vector<16x16x32xbf16>
    %c2_72 = arith.constant 2 : index
    %c1_73 = arith.constant 1 : index
    %c0_74 = arith.constant 0 : index
    %48 = vector.load %arg11[%c2_72, %c1_73, %c0_74] : memref<18x18x32xbf16, #tpu.memory_space<vmem>>, vector<16x16x32xbf16>
    %c2_75 = arith.constant 2 : index
    %c2_76 = arith.constant 2 : index
    %c0_77 = arith.constant 0 : index
    %49 = vector.load %arg11[%c2_75, %c2_76, %c0_77] : memref<18x18x32xbf16, #tpu.memory_space<vmem>>, vector<16x16x32xbf16>
    %50 = tpu.concatenate %47, %48, %49 in 2 : vector<16x16x32xbf16>, vector<16x16x32xbf16>, vector<16x16x32xbf16> -> vector<16x16x96xbf16>
    %51 = vector.shape_cast %50 : vector<16x16x96xbf16> to vector<256x96xbf16>
    %c2_78 = arith.constant 2 : index
    %c0_79 = arith.constant 0 : index
    %c0_80 = arith.constant 0 : index
    %52 = vector.load %arg4[%c2_78, %c0_79, %c0_80] : memref<3x96x64xbf16, #tpu.memory_space<vmem>>, vector<1x96x64xbf16>
    %53 = vector.shape_cast %52 : vector<1x96x64xbf16> to vector<96x64xbf16>
    %cst_81 = arith.constant dense<0.000000e+00> : vector<256x64xf32>
    %54 = tpu.matmul %51, %53, %cst_81 {dimension_numbers = #tpu.dot_dimension_numbers<[1], [0], [0], [1], [0, 0, 1, 1], [], []>} : vector<256x96xbf16>, vector<96x64xbf16>, vector<256x64xf32> -> vector<256x64xf32>
    %55 = arith.addf %46, %54 : vector<256x64xf32>
    %c0_82 = arith.constant 0 : index
    %c0_83 = arith.constant 0 : index
    %56 = vector.load %arg5[%c0_82, %c0_83] : memref<1x64xf32, #tpu.memory_space<vmem>>, vector<1x64xf32>
    %57 = vector.broadcast %56 : vector<1x64xf32> to vector<256x64xf32>
    %58 = arith.addf %55, %57 : vector<256x64xf32>
    %cst_84 = arith.constant 0.000000e+00 : f32
    %59 = vector.broadcast %cst_84 : f32 to vector<256x64xf32>
    %60 = arith.maximumf %58, %59 : vector<256x64xf32>
    %61 = vector.shape_cast %60 : vector<256x64xf32> to vector<128x2x64xf32>
    %62 = vector.extract_strided_slice %61 {offsets = [0, 0, 0], sizes = [128, 1, 64], strides = [1, 1, 1]} : vector<128x2x64xf32> to vector<128x1x64xf32>
    %63 = vector.shape_cast %62 : vector<128x1x64xf32> to vector<128x64xf32>
    %64 = vector.extract_strided_slice %61 {offsets = [0, 1, 0], sizes = [128, 1, 64], strides = [1, 1, 1]} : vector<128x2x64xf32> to vector<128x1x64xf32>
    %65 = vector.shape_cast %64 : vector<128x1x64xf32> to vector<128x64xf32>
    %66 = arith.maximumf %63, %65 : vector<128x64xf32>
    %67 = vector.shape_cast %66 : vector<128x64xf32> to vector<8x16x64xf32>
    %68 = vector.extract_strided_slice %67 {offsets = [0, 0, 0], sizes = [8, 8, 64], strides = [1, 1, 1]} : vector<8x16x64xf32> to vector<8x8x64xf32>
    %69 = vector.extract_strided_slice %67 {offsets = [0, 8, 0], sizes = [8, 8, 64], strides = [1, 1, 1]} : vector<8x16x64xf32> to vector<8x8x64xf32>
    %70 = arith.maximumf %68, %69 : vector<8x8x64xf32>
    %71 = vector.shape_cast %70 : vector<8x8x64xf32> to vector<64x64xf32>
    %72 = arith.truncf %71 : vector<64x64xf32> to vector<64x64xbf16>
    %c0_85 = arith.constant 0 : index
    %c0_86 = arith.constant 0 : index
    %73 = vector.load %arg6[%c0_85, %c0_86] : memref<64x128xbf16, #tpu.memory_space<vmem>>, vector<64x128xbf16>
    %cst_87 = arith.constant dense<0.000000e+00> : vector<64x128xf32>
    %74 = tpu.matmul %72, %73, %cst_87 {dimension_numbers = #tpu.dot_dimension_numbers<[1], [0], [0], [1], [0, 0, 1, 1], [], []>} : vector<64x64xbf16>, vector<64x128xbf16>, vector<64x128xf32> -> vector<64x128xf32>
    %75 = vector.extract_strided_slice %74 {offsets = [0, 0], sizes = [64, 32], strides = [1, 1]} : vector<64x128xf32> to vector<64x32xf32>
    %c0_88 = arith.constant 0 : index
    %c0_89 = arith.constant 0 : index
    %76 = vector.load %arg7[%c0_88, %c0_89] : memref<1x32xf32, #tpu.memory_space<vmem>>, vector<1x32xf32>
    %77 = vector.broadcast %76 : vector<1x32xf32> to vector<64x32xf32>
    %78 = arith.addf %75, %77 : vector<64x32xf32>
    %cst_90 = arith.constant 0.000000e+00 : f32
    %79 = vector.broadcast %cst_90 : f32 to vector<64x32xf32>
    %80 = arith.maximumf %78, %79 : vector<64x32xf32>
    %81 = vector.shape_cast %80 : vector<64x32xf32> to vector<8x8x32xf32>
    %c0_91 = arith.constant 0 : index
    %c1_92 = arith.constant 1 : index
    %c1_93 = arith.constant 1 : index
    %c0_94 = arith.constant 0 : index
    %82 = vector.load %arg12[%c0_91, %c1_92, %c1_93, %c0_94] : memref<4x10x10x32xf32, #tpu.memory_space<vmem>>, vector<1x8x8x32xf32>
    %83 = vector.shape_cast %82 : vector<1x8x8x32xf32> to vector<8x8x32xf32>
    %84 = vector.shape_cast %81 : vector<8x8x32xf32> to vector<1x8x8x32xf32>
    tpu.vector_store %arg12[%c0_91, %c1_92, %c1_93, %c0_94], %84 {strides = array<i32>} : memref<4x10x10x32xf32, #tpu.memory_space<vmem>>, vector<1x8x8x32xf32>,
    %85 = vector.extract_strided_slice %74 {offsets = [0, 32], sizes = [64, 32], strides = [1, 1]} : vector<64x128xf32> to vector<64x32xf32>
    %c0_95 = arith.constant 0 : index
    %c0_96 = arith.constant 0 : index
    %86 = vector.load %arg7[%c0_95, %c0_96] : memref<1x32xf32, #tpu.memory_space<vmem>>, vector<1x32xf32>
    %87 = vector.broadcast %86 : vector<1x32xf32> to vector<64x32xf32>
    %88 = arith.addf %85, %87 : vector<64x32xf32>
    %cst_97 = arith.constant 0.000000e+00 : f32
    %89 = vector.broadcast %cst_97 : f32 to vector<64x32xf32>
    %90 = arith.maximumf %88, %89 : vector<64x32xf32>
    %91 = vector.shape_cast %90 : vector<64x32xf32> to vector<8x8x32xf32>
    %c1_98 = arith.constant 1 : index
    %c1_99 = arith.constant 1 : index
    %c1_100 = arith.constant 1 : index
    %c0_101 = arith.constant 0 : index
    %92 = vector.load %arg12[%c1_98, %c1_99, %c1_100, %c0_101] : memref<4x10x10x32xf32, #tpu.memory_space<vmem>>, vector<1x8x8x32xf32>
    %93 = vector.shape_cast %92 : vector<1x8x8x32xf32> to vector<8x8x32xf32>
    %94 = vector.shape_cast %91 : vector<8x8x32xf32> to vector<1x8x8x32xf32>
    tpu.vector_store %arg12[%c1_98, %c1_99, %c1_100, %c0_101], %94 {strides = array<i32>} : memref<4x10x10x32xf32, #tpu.memory_space<vmem>>, vector<1x8x8x32xf32>,
    %95 = vector.extract_strided_slice %74 {offsets = [0, 64], sizes = [64, 32], strides = [1, 1]} : vector<64x128xf32> to vector<64x32xf32>
    %c0_102 = arith.constant 0 : index
    %c0_103 = arith.constant 0 : index
    %96 = vector.load %arg7[%c0_102, %c0_103] : memref<1x32xf32, #tpu.memory_space<vmem>>, vector<1x32xf32>
    %97 = vector.broadcast %96 : vector<1x32xf32> to vector<64x32xf32>
    %98 = arith.addf %95, %97 : vector<64x32xf32>
    %cst_104 = arith.constant 0.000000e+00 : f32
    %99 = vector.broadcast %cst_104 : f32 to vector<64x32xf32>
    %100 = arith.maximumf %98, %99 : vector<64x32xf32>
    %101 = vector.shape_cast %100 : vector<64x32xf32> to vector<8x8x32xf32>
    %c2_105 = arith.constant 2 : index
    %c1_106 = arith.constant 1 : index
    %c1_107 = arith.constant 1 : index
    %c0_108 = arith.constant 0 : index
    %102 = vector.load %arg12[%c2_105, %c1_106, %c1_107, %c0_108] : memref<4x10x10x32xf32, #tpu.memory_space<vmem>>, vector<1x8x8x32xf32>
    %103 = vector.shape_cast %102 : vector<1x8x8x32xf32> to vector<8x8x32xf32>
    %104 = vector.shape_cast %101 : vector<8x8x32xf32> to vector<1x8x8x32xf32>
    tpu.vector_store %arg12[%c2_105, %c1_106, %c1_107, %c0_108], %104 {strides = array<i32>} : memref<4x10x10x32xf32, #tpu.memory_space<vmem>>, vector<1x8x8x32xf32>,
    %105 = vector.extract_strided_slice %74 {offsets = [0, 96], sizes = [64, 32], strides = [1, 1]} : vector<64x128xf32> to vector<64x32xf32>
    %c0_109 = arith.constant 0 : index
    %c0_110 = arith.constant 0 : index
    %106 = vector.load %arg7[%c0_109, %c0_110] : memref<1x32xf32, #tpu.memory_space<vmem>>, vector<1x32xf32>
    %107 = vector.broadcast %106 : vector<1x32xf32> to vector<64x32xf32>
    %108 = arith.addf %105, %107 : vector<64x32xf32>
    %cst_111 = arith.constant 0.000000e+00 : f32
    %109 = vector.broadcast %cst_111 : f32 to vector<64x32xf32>
    %110 = arith.maximumf %108, %109 : vector<64x32xf32>
    %111 = vector.shape_cast %110 : vector<64x32xf32> to vector<8x8x32xf32>
    %c3 = arith.constant 3 : index
    %c1_112 = arith.constant 1 : index
    %c1_113 = arith.constant 1 : index
    %c0_114 = arith.constant 0 : index
    %112 = vector.load %arg12[%c3, %c1_112, %c1_113, %c0_114] : memref<4x10x10x32xf32, #tpu.memory_space<vmem>>, vector<1x8x8x32xf32>
    %113 = vector.shape_cast %112 : vector<1x8x8x32xf32> to vector<8x8x32xf32>
    %114 = vector.shape_cast %111 : vector<8x8x32xf32> to vector<1x8x8x32xf32>
    tpu.vector_store %arg12[%c3, %c1_112, %c1_113, %c0_114], %114 {strides = array<i32>} : memref<4x10x10x32xf32, #tpu.memory_space<vmem>>, vector<1x8x8x32xf32>,
    %cst_115 = arith.constant 0.000000e+00 : f32
    %115 = vector.broadcast %cst_115 : f32 to vector<8x8x32xf32>
    %c3_116 = arith.constant 3 : index
    %c0_117 = arith.constant 0 : index
    %c0_118 = arith.constant 0 : index
    %c0_119 = arith.constant 0 : index
    %116 = vector.load %arg12[%c3_116, %c0_117, %c0_118, %c0_119] : memref<4x10x10x32xf32, #tpu.memory_space<vmem>>, vector<1x8x8x32xf32>
    %117 = vector.shape_cast %116 : vector<1x8x8x32xf32> to vector<8x8x32xf32>
    %c0_120 = arith.constant 0 : index
    %c0_121 = arith.constant 0 : index
    %c0_122 = arith.constant 0 : index
    %118 = vector.load %arg8[%c0_120, %c0_121, %c0_122] : memref<9x1x32xf32, #tpu.memory_space<vmem>>, vector<1x1x32xf32>
    %119 = vector.shape_cast %118 : vector<1x1x32xf32> to vector<1x32xf32>
    %120 = vector.shape_cast %119 : vector<1x32xf32> to vector<1x1x32xf32>
    %121 = vector.broadcast %120 : vector<1x1x32xf32> to vector<8x8x32xf32>
    %122 = arith.mulf %117, %121 : vector<8x8x32xf32>
    %123 = arith.addf %115, %122 : vector<8x8x32xf32>
    %c2_123 = arith.constant 2 : index
    %c0_124 = arith.constant 0 : index
    %c1_125 = arith.constant 1 : index
    %c0_126 = arith.constant 0 : index
    %124 = vector.load %arg12[%c2_123, %c0_124, %c1_125, %c0_126] : memref<4x10x10x32xf32, #tpu.memory_space<vmem>>, vector<1x8x8x32xf32>
    %125 = vector.shape_cast %124 : vector<1x8x8x32xf32> to vector<8x8x32xf32>
    %c1_127 = arith.constant 1 : index
    %c0_128 = arith.constant 0 : index
    %c0_129 = arith.constant 0 : index
    %126 = vector.load %arg8[%c1_127, %c0_128, %c0_129] : memref<9x1x32xf32, #tpu.memory_space<vmem>>, vector<1x1x32xf32>
    %127 = vector.shape_cast %126 : vector<1x1x32xf32> to vector<1x32xf32>
    %128 = vector.shape_cast %127 : vector<1x32xf32> to vector<1x1x32xf32>
    %129 = vector.broadcast %128 : vector<1x1x32xf32> to vector<8x8x32xf32>
    %130 = arith.mulf %125, %129 : vector<8x8x32xf32>
    %131 = arith.addf %123, %130 : vector<8x8x32xf32>
    %c3_130 = arith.constant 3 : index
    %c0_131 = arith.constant 0 : index
    %c1_132 = arith.constant 1 : index
    %c0_133 = arith.constant 0 : index
    %132 = vector.load %arg12[%c3_130, %c0_131, %c1_132, %c0_133] : memref<4x10x10x32xf32, #tpu.memory_space<vmem>>, vector<1x8x8x32xf32>
    %133 = vector.shape_cast %132 : vector<1x8x8x32xf32> to vector<8x8x32xf32>
    %c2_134 = arith.constant 2 : index
    %c0_135 = arith.constant 0 : index
    %c0_136 = arith.constant 0 : index
    %134 = vector.load %arg8[%c2_134, %c0_135, %c0_136] : memref<9x1x32xf32, #tpu.memory_space<vmem>>, vector<1x1x32xf32>
    %135 = vector.shape_cast %134 : vector<1x1x32xf32> to vector<1x32xf32>
    %136 = vector.shape_cast %135 : vector<1x32xf32> to vector<1x1x32xf32>
    %137 = vector.broadcast %136 : vector<1x1x32xf32> to vector<8x8x32xf32>
    %138 = arith.mulf %133, %137 : vector<8x8x32xf32>
    %139 = arith.addf %131, %138 : vector<8x8x32xf32>
    %c1_137 = arith.constant 1 : index
    %c1_138 = arith.constant 1 : index
    %c0_139 = arith.constant 0 : index
    %c0_140 = arith.constant 0 : index
    %140 = vector.load %arg12[%c1_137, %c1_138, %c0_139, %c0_140] : memref<4x10x10x32xf32, #tpu.memory_space<vmem>>, vector<1x8x8x32xf32>
    %141 = vector.shape_cast %140 : vector<1x8x8x32xf32> to vector<8x8x32xf32>
    %c3_141 = arith.constant 3 : index
    %c0_142 = arith.constant 0 : index
    %c0_143 = arith.constant 0 : index
    %142 = vector.load %arg8[%c3_141, %c0_142, %c0_143] : memref<9x1x32xf32, #tpu.memory_space<vmem>>, vector<1x1x32xf32>
    %143 = vector.shape_cast %142 : vector<1x1x32xf32> to vector<1x32xf32>
    %144 = vector.shape_cast %143 : vector<1x32xf32> to vector<1x1x32xf32>
    %145 = vector.broadcast %144 : vector<1x1x32xf32> to vector<8x8x32xf32>
    %146 = arith.mulf %141, %145 : vector<8x8x32xf32>
    %147 = arith.addf %139, %146 : vector<8x8x32xf32>
    %c0_144 = arith.constant 0 : index
    %c1_145 = arith.constant 1 : index
    %c1_146 = arith.constant 1 : index
    %c0_147 = arith.constant 0 : index
    %148 = vector.load %arg12[%c0_144, %c1_145, %c1_146, %c0_147] : memref<4x10x10x32xf32, #tpu.memory_space<vmem>>, vector<1x8x8x32xf32>
    %149 = vector.shape_cast %148 : vector<1x8x8x32xf32> to vector<8x8x32xf32>
    %c4 = arith.constant 4 : index
    %c0_148 = arith.constant 0 : index
    %c0_149 = arith.constant 0 : index
    %150 = vector.load %arg8[%c4, %c0_148, %c0_149] : memref<9x1x32xf32, #tpu.memory_space<vmem>>, vector<1x1x32xf32>
    %151 = vector.shape_cast %150 : vector<1x1x32xf32> to vector<1x32xf32>
    %152 = vector.shape_cast %151 : vector<1x32xf32> to vector<1x1x32xf32>
    %153 = vector.broadcast %152 : vector<1x1x32xf32> to vector<8x8x32xf32>
    %154 = arith.mulf %149, %153 : vector<8x8x32xf32>
    %155 = arith.addf %147, %154 : vector<8x8x32xf32>
    %c1_150 = arith.constant 1 : index
    %c1_151 = arith.constant 1 : index
    %c1_152 = arith.constant 1 : index
    %c0_153 = arith.constant 0 : index
    %156 = vector.load %arg12[%c1_150, %c1_151, %c1_152, %c0_153] : memref<4x10x10x32xf32, #tpu.memory_space<vmem>>, vector<1x8x8x32xf32>
    %157 = vector.shape_cast %156 : vector<1x8x8x32xf32> to vector<8x8x32xf32>
    %c5 = arith.constant 5 : index
    %c0_154 = arith.constant 0 : index
    %c0_155 = arith.constant 0 : index
    %158 = vector.load %arg8[%c5, %c0_154, %c0_155] : memref<9x1x32xf32, #tpu.memory_space<vmem>>, vector<1x1x32xf32>
    %159 = vector.shape_cast %158 : vector<1x1x32xf32> to vector<1x32xf32>
    %160 = vector.shape_cast %159 : vector<1x32xf32> to vector<1x1x32xf32>
    %161 = vector.broadcast %160 : vector<1x1x32xf32> to vector<8x8x32xf32>
    %162 = arith.mulf %157, %161 : vector<8x8x32xf32>
    %163 = arith.addf %155, %162 : vector<8x8x32xf32>
    %c3_156 = arith.constant 3 : index
    %c1_157 = arith.constant 1 : index
    %c0_158 = arith.constant 0 : index
    %c0_159 = arith.constant 0 : index
    %164 = vector.load %arg12[%c3_156, %c1_157, %c0_158, %c0_159] : memref<4x10x10x32xf32, #tpu.memory_space<vmem>>, vector<1x8x8x32xf32>
    %165 = vector.shape_cast %164 : vector<1x8x8x32xf32> to vector<8x8x32xf32>
    %c6 = arith.constant 6 : index
    %c0_160 = arith.constant 0 : index
    %c0_161 = arith.constant 0 : index
    %166 = vector.load %arg8[%c6, %c0_160, %c0_161] : memref<9x1x32xf32, #tpu.memory_space<vmem>>, vector<1x1x32xf32>
    %167 = vector.shape_cast %166 : vector<1x1x32xf32> to vector<1x32xf32>
    %168 = vector.shape_cast %167 : vector<1x32xf32> to vector<1x1x32xf32>
    %169 = vector.broadcast %168 : vector<1x1x32xf32> to vector<8x8x32xf32>
    %170 = arith.mulf %165, %169 : vector<8x8x32xf32>
    %171 = arith.addf %163, %170 : vector<8x8x32xf32>
    %c2_162 = arith.constant 2 : index
    %c1_163 = arith.constant 1 : index
    %c1_164 = arith.constant 1 : index
    %c0_165 = arith.constant 0 : index
    %172 = vector.load %arg12[%c2_162, %c1_163, %c1_164, %c0_165] : memref<4x10x10x32xf32, #tpu.memory_space<vmem>>, vector<1x8x8x32xf32>
    %173 = vector.shape_cast %172 : vector<1x8x8x32xf32> to vector<8x8x32xf32>
    %c7 = arith.constant 7 : index
    %c0_166 = arith.constant 0 : index
    %c0_167 = arith.constant 0 : index
    %174 = vector.load %arg8[%c7, %c0_166, %c0_167] : memref<9x1x32xf32, #tpu.memory_space<vmem>>, vector<1x1x32xf32>
    %175 = vector.shape_cast %174 : vector<1x1x32xf32> to vector<1x32xf32>
    %176 = vector.shape_cast %175 : vector<1x32xf32> to vector<1x1x32xf32>
    %177 = vector.broadcast %176 : vector<1x1x32xf32> to vector<8x8x32xf32>
    %178 = arith.mulf %173, %177 : vector<8x8x32xf32>
    %179 = arith.addf %171, %178 : vector<8x8x32xf32>
    %c3_168 = arith.constant 3 : index
    %c1_169 = arith.constant 1 : index
    %c1_170 = arith.constant 1 : index
    %c0_171 = arith.constant 0 : index
    %180 = vector.load %arg12[%c3_168, %c1_169, %c1_170, %c0_171] : memref<4x10x10x32xf32, #tpu.memory_space<vmem>>, vector<1x8x8x32xf32>
    %181 = vector.shape_cast %180 : vector<1x8x8x32xf32> to vector<8x8x32xf32>
    %c8 = arith.constant 8 : index
    %c0_172 = arith.constant 0 : index
    %c0_173 = arith.constant 0 : index
    %182 = vector.load %arg8[%c8, %c0_172, %c0_173] : memref<9x1x32xf32, #tpu.memory_space<vmem>>, vector<1x1x32xf32>
    %183 = vector.shape_cast %182 : vector<1x1x32xf32> to vector<1x32xf32>
    %184 = vector.shape_cast %183 : vector<1x32xf32> to vector<1x1x32xf32>
    %185 = vector.broadcast %184 : vector<1x1x32xf32> to vector<8x8x32xf32>
    %186 = arith.mulf %181, %185 : vector<8x8x32xf32>
    %187 = arith.addf %179, %186 : vector<8x8x32xf32>
    %cst_174 = arith.constant dense<0.000000e+00> : vector<8x8xf32>
    %188 = vector.multi_reduction <add>, %187, %cst_174 [2] : vector<8x8x32xf32> to vector<8x8xf32>
    %c0_175 = arith.constant 0 : index
    %c0_176 = arith.constant 0 : index
    %189 = vector.load %arg9[%c0_175, %c0_176] : memref<1x1xf32, #tpu.memory_space<vmem>>, vector<1x1xf32>
    %190 = vector.broadcast %189 : vector<1x1xf32> to vector<8x8xf32>
    %191 = arith.addf %188, %190 : vector<8x8xf32>
    %cst_177 = arith.constant 0.000000e+00 : f32
    %192 = vector.broadcast %cst_177 : f32 to vector<8x8xf32>
    %193 = arith.subf %192, %191 : vector<8x8xf32>
    %194 = math.exp %193 : vector<8x8xf32>
    %cst_178 = arith.constant 1.000000e+00 : f32
    %195 = vector.broadcast %cst_178 : f32 to vector<8x8xf32>
    %196 = arith.addf %195, %194 : vector<8x8xf32>
    %197 = tpu.reciprocal %196 {approx = true} : vector<8x8xf32> -> vector<8x8xf32>
    %c0_179 = arith.constant 0 : index
    %c0_180 = arith.constant 0 : index
    %c0_181 = arith.constant 0 : index
    %198 = vector.load %arg10[%c0_179, %c0_180, %c0_181] : memref<4x8x8xf32, #tpu.memory_space<vmem>>, vector<1x8x8xf32>
    %199 = vector.shape_cast %198 : vector<1x8x8xf32> to vector<8x8xf32>
    %200 = vector.shape_cast %197 : vector<8x8xf32> to vector<1x8x8xf32>
    tpu.vector_store %arg10[%c0_179, %c0_180, %c0_181], %200 {strides = array<i32>} : memref<4x8x8xf32, #tpu.memory_space<vmem>>, vector<1x8x8xf32>,
    %cst_182 = arith.constant 0.000000e+00 : f32
    %201 = vector.broadcast %cst_182 : f32 to vector<8x8x32xf32>
    %c2_183 = arith.constant 2 : index
    %c0_184 = arith.constant 0 : index
    %c1_185 = arith.constant 1 : index
    %c0_186 = arith.constant 0 : index
    %202 = vector.load %arg12[%c2_183, %c0_184, %c1_185, %c0_186] : memref<4x10x10x32xf32, #tpu.memory_space<vmem>>, vector<1x8x8x32xf32>
    %203 = vector.shape_cast %202 : vector<1x8x8x32xf32> to vector<8x8x32xf32>
    %c0_187 = arith.constant 0 : index
    %c0_188 = arith.constant 0 : index
    %c0_189 = arith.constant 0 : index
    %204 = vector.load %arg8[%c0_187, %c0_188, %c0_189] : memref<9x1x32xf32, #tpu.memory_space<vmem>>, vector<1x1x32xf32>
    %205 = vector.shape_cast %204 : vector<1x1x32xf32> to vector<1x32xf32>
    %206 = vector.shape_cast %205 : vector<1x32xf32> to vector<1x1x32xf32>
    %207 = vector.broadcast %206 : vector<1x1x32xf32> to vector<8x8x32xf32>
    %208 = arith.mulf %203, %207 : vector<8x8x32xf32>
    %209 = arith.addf %201, %208 : vector<8x8x32xf32>
    %c3_190 = arith.constant 3 : index
    %c0_191 = arith.constant 0 : index
    %c1_192 = arith.constant 1 : index
    %c0_193 = arith.constant 0 : index
    %210 = vector.load %arg12[%c3_190, %c0_191, %c1_192, %c0_193] : memref<4x10x10x32xf32, #tpu.memory_space<vmem>>, vector<1x8x8x32xf32>
    %211 = vector.shape_cast %210 : vector<1x8x8x32xf32> to vector<8x8x32xf32>
    %c1_194 = arith.constant 1 : index
    %c0_195 = arith.constant 0 : index
    %c0_196 = arith.constant 0 : index
    %212 = vector.load %arg8[%c1_194, %c0_195, %c0_196] : memref<9x1x32xf32, #tpu.memory_space<vmem>>, vector<1x1x32xf32>
    %213 = vector.shape_cast %212 : vector<1x1x32xf32> to vector<1x32xf32>
    %214 = vector.shape_cast %213 : vector<1x32xf32> to vector<1x1x32xf32>
    %215 = vector.broadcast %214 : vector<1x1x32xf32> to vector<8x8x32xf32>
    %216 = arith.mulf %211, %215 : vector<8x8x32xf32>
    %217 = arith.addf %209, %216 : vector<8x8x32xf32>
    %c2_197 = arith.constant 2 : index
    %c0_198 = arith.constant 0 : index
    %c2_199 = arith.constant 2 : index
    %c0_200 = arith.constant 0 : index
    %218 = vector.load %arg12[%c2_197, %c0_198, %c2_199, %c0_200] : memref<4x10x10x32xf32, #tpu.memory_space<vmem>>, vector<1x8x8x32xf32>
    %219 = vector.shape_cast %218 : vector<1x8x8x32xf32> to vector<8x8x32xf32>
    %c2_201 = arith.constant 2 : index
    %c0_202 = arith.constant 0 : index
    %c0_203 = arith.constant 0 : index
    %220 = vector.load %arg8[%c2_201, %c0_202, %c0_203] : memref<9x1x32xf32, #tpu.memory_space<vmem>>, vector<1x1x32xf32>
    %221 = vector.shape_cast %220 : vector<1x1x32xf32> to vector<1x32xf32>
    %222 = vector.shape_cast %221 : vector<1x32xf32> to vector<1x1x32xf32>
    %223 = vector.broadcast %222 : vector<1x1x32xf32> to vector<8x8x32xf32>
    %224 = arith.mulf %219, %223 : vector<8x8x32xf32>
    %225 = arith.addf %217, %224 : vector<8x8x32xf32>
    %c0_204 = arith.constant 0 : index
    %c1_205 = arith.constant 1 : index
    %c1_206 = arith.constant 1 : index
    %c0_207 = arith.constant 0 : index
    %226 = vector.load %arg12[%c0_204, %c1_205, %c1_206, %c0_207] : memref<4x10x10x32xf32, #tpu.memory_space<vmem>>, vector<1x8x8x32xf32>
    %227 = vector.shape_cast %226 : vector<1x8x8x32xf32> to vector<8x8x32xf32>
    %c3_208 = arith.constant 3 : index
    %c0_209 = arith.constant 0 : index
    %c0_210 = arith.constant 0 : index
    %228 = vector.load %arg8[%c3_208, %c0_209, %c0_210] : memref<9x1x32xf32, #tpu.memory_space<vmem>>, vector<1x1x32xf32>
    %229 = vector.shape_cast %228 : vector<1x1x32xf32> to vector<1x32xf32>
    %230 = vector.shape_cast %229 : vector<1x32xf32> to vector<1x1x32xf32>
    %231 = vector.broadcast %230 : vector<1x1x32xf32> to vector<8x8x32xf32>
    %232 = arith.mulf %227, %231 : vector<8x8x32xf32>
    %233 = arith.addf %225, %232 : vector<8x8x32xf32>
    %c1_211 = arith.constant 1 : index
    %c1_212 = arith.constant 1 : index
    %c1_213 = arith.constant 1 : index
    %c0_214 = arith.constant 0 : index
    %234 = vector.load %arg12[%c1_211, %c1_212, %c1_213, %c0_214] : memref<4x10x10x32xf32, #tpu.memory_space<vmem>>, vector<1x8x8x32xf32>
    %235 = vector.shape_cast %234 : vector<1x8x8x32xf32> to vector<8x8x32xf32>
    %c4_215 = arith.constant 4 : index
    %c0_216 = arith.constant 0 : index
    %c0_217 = arith.constant 0 : index
    %236 = vector.load %arg8[%c4_215, %c0_216, %c0_217] : memref<9x1x32xf32, #tpu.memory_space<vmem>>, vector<1x1x32xf32>
    %237 = vector.shape_cast %236 : vector<1x1x32xf32> to vector<1x32xf32>
    %238 = vector.shape_cast %237 : vector<1x32xf32> to vector<1x1x32xf32>
    %239 = vector.broadcast %238 : vector<1x1x32xf32> to vector<8x8x32xf32>
    %240 = arith.mulf %235, %239 : vector<8x8x32xf32>
    %241 = arith.addf %233, %240 : vector<8x8x32xf32>
    %c0_218 = arith.constant 0 : index
    %c1_219 = arith.constant 1 : index
    %c2_220 = arith.constant 2 : index
    %c0_221 = arith.constant 0 : index
    %242 = vector.load %arg12[%c0_218, %c1_219, %c2_220, %c0_221] : memref<4x10x10x32xf32, #tpu.memory_space<vmem>>, vector<1x8x8x32xf32>
    %243 = vector.shape_cast %242 : vector<1x8x8x32xf32> to vector<8x8x32xf32>
    %c5_222 = arith.constant 5 : index
    %c0_223 = arith.constant 0 : index
    %c0_224 = arith.constant 0 : index
    %244 = vector.load %arg8[%c5_222, %c0_223, %c0_224] : memref<9x1x32xf32, #tpu.memory_space<vmem>>, vector<1x1x32xf32>
    %245 = vector.shape_cast %244 : vector<1x1x32xf32> to vector<1x32xf32>
    %246 = vector.shape_cast %245 : vector<1x32xf32> to vector<1x1x32xf32>
    %247 = vector.broadcast %246 : vector<1x1x32xf32> to vector<8x8x32xf32>
    %248 = arith.mulf %243, %247 : vector<8x8x32xf32>
    %249 = arith.addf %241, %248 : vector<8x8x32xf32>
    %c2_225 = arith.constant 2 : index
    %c1_226 = arith.constant 1 : index
    %c1_227 = arith.constant 1 : index
    %c0_228 = arith.constant 0 : index
    %250 = vector.load %arg12[%c2_225, %c1_226, %c1_227, %c0_228] : memref<4x10x10x32xf32, #tpu.memory_space<vmem>>, vector<1x8x8x32xf32>
    %251 = vector.shape_cast %250 : vector<1x8x8x32xf32> to vector<8x8x32xf32>
    %c6_229 = arith.constant 6 : index
    %c0_230 = arith.constant 0 : index
    %c0_231 = arith.constant 0 : index
    %252 = vector.load %arg8[%c6_229, %c0_230, %c0_231] : memref<9x1x32xf32, #tpu.memory_space<vmem>>, vector<1x1x32xf32>
    %253 = vector.shape_cast %252 : vector<1x1x32xf32> to vector<1x32xf32>
    %254 = vector.shape_cast %253 : vector<1x32xf32> to vector<1x1x32xf32>
    %255 = vector.broadcast %254 : vector<1x1x32xf32> to vector<8x8x32xf32>
    %256 = arith.mulf %251, %255 : vector<8x8x32xf32>
    %257 = arith.addf %249, %256 : vector<8x8x32xf32>
    %c3_232 = arith.constant 3 : index
    %c1_233 = arith.constant 1 : index
    %c1_234 = arith.constant 1 : index
    %c0_235 = arith.constant 0 : index
    %258 = vector.load %arg12[%c3_232, %c1_233, %c1_234, %c0_235] : memref<4x10x10x32xf32, #tpu.memory_space<vmem>>, vector<1x8x8x32xf32>
    %259 = vector.shape_cast %258 : vector<1x8x8x32xf32> to vector<8x8x32xf32>
    %c7_236 = arith.constant 7 : index
    %c0_237 = arith.constant 0 : index
    %c0_238 = arith.constant 0 : index
    %260 = vector.load %arg8[%c7_236, %c0_237, %c0_238] : memref<9x1x32xf32, #tpu.memory_space<vmem>>, vector<1x1x32xf32>
    %261 = vector.shape_cast %260 : vector<1x1x32xf32> to vector<1x32xf32>
    %262 = vector.shape_cast %261 : vector<1x32xf32> to vector<1x1x32xf32>
    %263 = vector.broadcast %262 : vector<1x1x32xf32> to vector<8x8x32xf32>
    %264 = arith.mulf %259, %263 : vector<8x8x32xf32>
    %265 = arith.addf %257, %264 : vector<8x8x32xf32>
    %c2_239 = arith.constant 2 : index
    %c1_240 = arith.constant 1 : index
    %c2_241 = arith.constant 2 : index
    %c0_242 = arith.constant 0 : index
    %266 = vector.load %arg12[%c2_239, %c1_240, %c2_241, %c0_242] : memref<4x10x10x32xf32, #tpu.memory_space<vmem>>, vector<1x8x8x32xf32>
    %267 = vector.shape_cast %266 : vector<1x8x8x32xf32> to vector<8x8x32xf32>
    %c8_243 = arith.constant 8 : index
    %c0_244 = arith.constant 0 : index
    %c0_245 = arith.constant 0 : index
    %268 = vector.load %arg8[%c8_243, %c0_244, %c0_245] : memref<9x1x32xf32, #tpu.memory_space<vmem>>, vector<1x1x32xf32>
    %269 = vector.shape_cast %268 : vector<1x1x32xf32> to vector<1x32xf32>
    %270 = vector.shape_cast %269 : vector<1x32xf32> to vector<1x1x32xf32>
    %271 = vector.broadcast %270 : vector<1x1x32xf32> to vector<8x8x32xf32>
    %272 = arith.mulf %267, %271 : vector<8x8x32xf32>
    %273 = arith.addf %265, %272 : vector<8x8x32xf32>
    %cst_246 = arith.constant dense<0.000000e+00> : vector<8x8xf32>
    %274 = vector.multi_reduction <add>, %273, %cst_246 [2] : vector<8x8x32xf32> to vector<8x8xf32>
    %c0_247 = arith.constant 0 : index
    %c0_248 = arith.constant 0 : index
    %275 = vector.load %arg9[%c0_247, %c0_248] : memref<1x1xf32, #tpu.memory_space<vmem>>, vector<1x1xf32>
    %276 = vector.broadcast %275 : vector<1x1xf32> to vector<8x8xf32>
    %277 = arith.addf %274, %276 : vector<8x8xf32>
    %cst_249 = arith.constant 0.000000e+00 : f32
    %278 = vector.broadcast %cst_249 : f32 to vector<8x8xf32>
    %279 = arith.subf %278, %277 : vector<8x8xf32>
    %280 = math.exp %279 : vector<8x8xf32>
    %cst_250 = arith.constant 1.000000e+00 : f32
    %281 = vector.broadcast %cst_250 : f32 to vector<8x8xf32>
    %282 = arith.addf %281, %280 : vector<8x8xf32>
    %283 = tpu.reciprocal %282 {approx = true} : vector<8x8xf32> -> vector<8x8xf32>
    %c1_251 = arith.constant 1 : index
    %c0_252 = arith.constant 0 : index
    %c0_253 = arith.constant 0 : index
    %284 = vector.load %arg10[%c1_251, %c0_252, %c0_253] : memref<4x8x8xf32, #tpu.memory_space<vmem>>, vector<1x8x8xf32>
    %285 = vector.shape_cast %284 : vector<1x8x8xf32> to vector<8x8xf32>
    %286 = vector.shape_cast %283 : vector<8x8xf32> to vector<1x8x8xf32>
    tpu.vector_store %arg10[%c1_251, %c0_252, %c0_253], %286 {strides = array<i32>} : memref<4x8x8xf32, #tpu.memory_space<vmem>>, vector<1x8x8xf32>,
    %cst_254 = arith.constant 0.000000e+00 : f32
    %287 = vector.broadcast %cst_254 : f32 to vector<8x8x32xf32>
    %c1_255 = arith.constant 1 : index
    %c1_256 = arith.constant 1 : index
    %c0_257 = arith.constant 0 : index
    %c0_258 = arith.constant 0 : index
    %288 = vector.load %arg12[%c1_255, %c1_256, %c0_257, %c0_258] : memref<4x10x10x32xf32, #tpu.memory_space<vmem>>, vector<1x8x8x32xf32>
    %289 = vector.shape_cast %288 : vector<1x8x8x32xf32> to vector<8x8x32xf32>
    %c0_259 = arith.constant 0 : index
    %c0_260 = arith.constant 0 : index
    %c0_261 = arith.constant 0 : index
    %290 = vector.load %arg8[%c0_259, %c0_260, %c0_261] : memref<9x1x32xf32, #tpu.memory_space<vmem>>, vector<1x1x32xf32>
    %291 = vector.shape_cast %290 : vector<1x1x32xf32> to vector<1x32xf32>
    %292 = vector.shape_cast %291 : vector<1x32xf32> to vector<1x1x32xf32>
    %293 = vector.broadcast %292 : vector<1x1x32xf32> to vector<8x8x32xf32>
    %294 = arith.mulf %289, %293 : vector<8x8x32xf32>
    %295 = arith.addf %287, %294 : vector<8x8x32xf32>
    %c0_262 = arith.constant 0 : index
    %c1_263 = arith.constant 1 : index
    %c1_264 = arith.constant 1 : index
    %c0_265 = arith.constant 0 : index
    %296 = vector.load %arg12[%c0_262, %c1_263, %c1_264, %c0_265] : memref<4x10x10x32xf32, #tpu.memory_space<vmem>>, vector<1x8x8x32xf32>
    %297 = vector.shape_cast %296 : vector<1x8x8x32xf32> to vector<8x8x32xf32>
    %c1_266 = arith.constant 1 : index
    %c0_267 = arith.constant 0 : index
    %c0_268 = arith.constant 0 : index
    %298 = vector.load %arg8[%c1_266, %c0_267, %c0_268] : memref<9x1x32xf32, #tpu.memory_space<vmem>>, vector<1x1x32xf32>
    %299 = vector.shape_cast %298 : vector<1x1x32xf32> to vector<1x32xf32>
    %300 = vector.shape_cast %299 : vector<1x32xf32> to vector<1x1x32xf32>
    %301 = vector.broadcast %300 : vector<1x1x32xf32> to vector<8x8x32xf32>
    %302 = arith.mulf %297, %301 : vector<8x8x32xf32>
    %303 = arith.addf %295, %302 : vector<8x8x32xf32>
    %c1_269 = arith.constant 1 : index
    %c1_270 = arith.constant 1 : index
    %c1_271 = arith.constant 1 : index
    %c0_272 = arith.constant 0 : index
    %304 = vector.load %arg12[%c1_269, %c1_270, %c1_271, %c0_272] : memref<4x10x10x32xf32, #tpu.memory_space<vmem>>, vector<1x8x8x32xf32>
    %305 = vector.shape_cast %304 : vector<1x8x8x32xf32> to vector<8x8x32xf32>
    %c2_273 = arith.constant 2 : index
    %c0_274 = arith.constant 0 : index
    %c0_275 = arith.constant 0 : index
    %306 = vector.load %arg8[%c2_273, %c0_274, %c0_275] : memref<9x1x32xf32, #tpu.memory_space<vmem>>, vector<1x1x32xf32>
    %307 = vector.shape_cast %306 : vector<1x1x32xf32> to vector<1x32xf32>
    %308 = vector.shape_cast %307 : vector<1x32xf32> to vector<1x1x32xf32>
    %309 = vector.broadcast %308 : vector<1x1x32xf32> to vector<8x8x32xf32>
    %310 = arith.mulf %305, %309 : vector<8x8x32xf32>
    %311 = arith.addf %303, %310 : vector<8x8x32xf32>
    %c3_276 = arith.constant 3 : index
    %c1_277 = arith.constant 1 : index
    %c0_278 = arith.constant 0 : index
    %c0_279 = arith.constant 0 : index
    %312 = vector.load %arg12[%c3_276, %c1_277, %c0_278, %c0_279] : memref<4x10x10x32xf32, #tpu.memory_space<vmem>>, vector<1x8x8x32xf32>
    %313 = vector.shape_cast %312 : vector<1x8x8x32xf32> to vector<8x8x32xf32>
    %c3_280 = arith.constant 3 : index
    %c0_281 = arith.constant 0 : index
    %c0_282 = arith.constant 0 : index
    %314 = vector.load %arg8[%c3_280, %c0_281, %c0_282] : memref<9x1x32xf32, #tpu.memory_space<vmem>>, vector<1x1x32xf32>
    %315 = vector.shape_cast %314 : vector<1x1x32xf32> to vector<1x32xf32>
    %316 = vector.shape_cast %315 : vector<1x32xf32> to vector<1x1x32xf32>
    %317 = vector.broadcast %316 : vector<1x1x32xf32> to vector<8x8x32xf32>
    %318 = arith.mulf %313, %317 : vector<8x8x32xf32>
    %319 = arith.addf %311, %318 : vector<8x8x32xf32>
    %c2_283 = arith.constant 2 : index
    %c1_284 = arith.constant 1 : index
    %c1_285 = arith.constant 1 : index
    %c0_286 = arith.constant 0 : index
    %320 = vector.load %arg12[%c2_283, %c1_284, %c1_285, %c0_286] : memref<4x10x10x32xf32, #tpu.memory_space<vmem>>, vector<1x8x8x32xf32>
    %321 = vector.shape_cast %320 : vector<1x8x8x32xf32> to vector<8x8x32xf32>
    %c4_287 = arith.constant 4 : index
    %c0_288 = arith.constant 0 : index
    %c0_289 = arith.constant 0 : index
    %322 = vector.load %arg8[%c4_287, %c0_288, %c0_289] : memref<9x1x32xf32, #tpu.memory_space<vmem>>, vector<1x1x32xf32>
    %323 = vector.shape_cast %322 : vector<1x1x32xf32> to vector<1x32xf32>
    %324 = vector.shape_cast %323 : vector<1x32xf32> to vector<1x1x32xf32>
    %325 = vector.broadcast %324 : vector<1x1x32xf32> to vector<8x8x32xf32>
    %326 = arith.mulf %321, %325 : vector<8x8x32xf32>
    %327 = arith.addf %319, %326 : vector<8x8x32xf32>
    %c3_290 = arith.constant 3 : index
    %c1_291 = arith.constant 1 : index
    %c1_292 = arith.constant 1 : index
    %c0_293 = arith.constant 0 : index
    %328 = vector.load %arg12[%c3_290, %c1_291, %c1_292, %c0_293] : memref<4x10x10x32xf32, #tpu.memory_space<vmem>>, vector<1x8x8x32xf32>
    %329 = vector.shape_cast %328 : vector<1x8x8x32xf32> to vector<8x8x32xf32>
    %c5_294 = arith.constant 5 : index
    %c0_295 = arith.constant 0 : index
    %c0_296 = arith.constant 0 : index
    %330 = vector.load %arg8[%c5_294, %c0_295, %c0_296] : memref<9x1x32xf32, #tpu.memory_space<vmem>>, vector<1x1x32xf32>
    %331 = vector.shape_cast %330 : vector<1x1x32xf32> to vector<1x32xf32>
    %332 = vector.shape_cast %331 : vector<1x32xf32> to vector<1x1x32xf32>
    %333 = vector.broadcast %332 : vector<1x1x32xf32> to vector<8x8x32xf32>
    %334 = arith.mulf %329, %333 : vector<8x8x32xf32>
    %335 = arith.addf %327, %334 : vector<8x8x32xf32>
    %c1_297 = arith.constant 1 : index
    %c2_298 = arith.constant 2 : index
    %c0_299 = arith.constant 0 : index
    %c0_300 = arith.constant 0 : index
    %336 = vector.load %arg12[%c1_297, %c2_298, %c0_299, %c0_300] : memref<4x10x10x32xf32, #tpu.memory_space<vmem>>, vector<1x8x8x32xf32>
    %337 = vector.shape_cast %336 : vector<1x8x8x32xf32> to vector<8x8x32xf32>
    %c6_301 = arith.constant 6 : index
    %c0_302 = arith.constant 0 : index
    %c0_303 = arith.constant 0 : index
    %338 = vector.load %arg8[%c6_301, %c0_302, %c0_303] : memref<9x1x32xf32, #tpu.memory_space<vmem>>, vector<1x1x32xf32>
    %339 = vector.shape_cast %338 : vector<1x1x32xf32> to vector<1x32xf32>
    %340 = vector.shape_cast %339 : vector<1x32xf32> to vector<1x1x32xf32>
    %341 = vector.broadcast %340 : vector<1x1x32xf32> to vector<8x8x32xf32>
    %342 = arith.mulf %337, %341 : vector<8x8x32xf32>
    %343 = arith.addf %335, %342 : vector<8x8x32xf32>
    %c0_304 = arith.constant 0 : index
    %c2_305 = arith.constant 2 : index
    %c1_306 = arith.constant 1 : index
    %c0_307 = arith.constant 0 : index
    %344 = vector.load %arg12[%c0_304, %c2_305, %c1_306, %c0_307] : memref<4x10x10x32xf32, #tpu.memory_space<vmem>>, vector<1x8x8x32xf32>
    %345 = vector.shape_cast %344 : vector<1x8x8x32xf32> to vector<8x8x32xf32>
    %c7_308 = arith.constant 7 : index
    %c0_309 = arith.constant 0 : index
    %c0_310 = arith.constant 0 : index
    %346 = vector.load %arg8[%c7_308, %c0_309, %c0_310] : memref<9x1x32xf32, #tpu.memory_space<vmem>>, vector<1x1x32xf32>
    %347 = vector.shape_cast %346 : vector<1x1x32xf32> to vector<1x32xf32>
    %348 = vector.shape_cast %347 : vector<1x32xf32> to vector<1x1x32xf32>
    %349 = vector.broadcast %348 : vector<1x1x32xf32> to vector<8x8x32xf32>
    %350 = arith.mulf %345, %349 : vector<8x8x32xf32>
    %351 = arith.addf %343, %350 : vector<8x8x32xf32>
    %c1_311 = arith.constant 1 : index
    %c2_312 = arith.constant 2 : index
    %c1_313 = arith.constant 1 : index
    %c0_314 = arith.constant 0 : index
    %352 = vector.load %arg12[%c1_311, %c2_312, %c1_313, %c0_314] : memref<4x10x10x32xf32, #tpu.memory_space<vmem>>, vector<1x8x8x32xf32>
    %353 = vector.shape_cast %352 : vector<1x8x8x32xf32> to vector<8x8x32xf32>
    %c8_315 = arith.constant 8 : index
    %c0_316 = arith.constant 0 : index
    %c0_317 = arith.constant 0 : index
    %354 = vector.load %arg8[%c8_315, %c0_316, %c0_317] : memref<9x1x32xf32, #tpu.memory_space<vmem>>, vector<1x1x32xf32>
    %355 = vector.shape_cast %354 : vector<1x1x32xf32> to vector<1x32xf32>
    %356 = vector.shape_cast %355 : vector<1x32xf32> to vector<1x1x32xf32>
    %357 = vector.broadcast %356 : vector<1x1x32xf32> to vector<8x8x32xf32>
    %358 = arith.mulf %353, %357 : vector<8x8x32xf32>
    %359 = arith.addf %351, %358 : vector<8x8x32xf32>
    %cst_318 = arith.constant dense<0.000000e+00> : vector<8x8xf32>
    %360 = vector.multi_reduction <add>, %359, %cst_318 [2] : vector<8x8x32xf32> to vector<8x8xf32>
    %c0_319 = arith.constant 0 : index
    %c0_320 = arith.constant 0 : index
    %361 = vector.load %arg9[%c0_319, %c0_320] : memref<1x1xf32, #tpu.memory_space<vmem>>, vector<1x1xf32>
    %362 = vector.broadcast %361 : vector<1x1xf32> to vector<8x8xf32>
    %363 = arith.addf %360, %362 : vector<8x8xf32>
    %cst_321 = arith.constant 0.000000e+00 : f32
    %364 = vector.broadcast %cst_321 : f32 to vector<8x8xf32>
    %365 = arith.subf %364, %363 : vector<8x8xf32>
    %366 = math.exp %365 : vector<8x8xf32>
    %cst_322 = arith.constant 1.000000e+00 : f32
    %367 = vector.broadcast %cst_322 : f32 to vector<8x8xf32>
    %368 = arith.addf %367, %366 : vector<8x8xf32>
    %369 = tpu.reciprocal %368 {approx = true} : vector<8x8xf32> -> vector<8x8xf32>
    %c2_323 = arith.constant 2 : index
    %c0_324 = arith.constant 0 : index
    %c0_325 = arith.constant 0 : index
    %370 = vector.load %arg10[%c2_323, %c0_324, %c0_325] : memref<4x8x8xf32, #tpu.memory_space<vmem>>, vector<1x8x8xf32>
    %371 = vector.shape_cast %370 : vector<1x8x8xf32> to vector<8x8xf32>
    %372 = vector.shape_cast %369 : vector<8x8xf32> to vector<1x8x8xf32>
    tpu.vector_store %arg10[%c2_323, %c0_324, %c0_325], %372 {strides = array<i32>} : memref<4x8x8xf32, #tpu.memory_space<vmem>>, vector<1x8x8xf32>,
    %cst_326 = arith.constant 0.000000e+00 : f32
    %373 = vector.broadcast %cst_326 : f32 to vector<8x8x32xf32>
    %c0_327 = arith.constant 0 : index
    %c1_328 = arith.constant 1 : index
    %c1_329 = arith.constant 1 : index
    %c0_330 = arith.constant 0 : index
    %374 = vector.load %arg12[%c0_327, %c1_328, %c1_329, %c0_330] : memref<4x10x10x32xf32, #tpu.memory_space<vmem>>, vector<1x8x8x32xf32>
    %375 = vector.shape_cast %374 : vector<1x8x8x32xf32> to vector<8x8x32xf32>
    %c0_331 = arith.constant 0 : index
    %c0_332 = arith.constant 0 : index
    %c0_333 = arith.constant 0 : index
    %376 = vector.load %arg8[%c0_331, %c0_332, %c0_333] : memref<9x1x32xf32, #tpu.memory_space<vmem>>, vector<1x1x32xf32>
    %377 = vector.shape_cast %376 : vector<1x1x32xf32> to vector<1x32xf32>
    %378 = vector.shape_cast %377 : vector<1x32xf32> to vector<1x1x32xf32>
    %379 = vector.broadcast %378 : vector<1x1x32xf32> to vector<8x8x32xf32>
    %380 = arith.mulf %375, %379 : vector<8x8x32xf32>
    %381 = arith.addf %373, %380 : vector<8x8x32xf32>
    %c1_334 = arith.constant 1 : index
    %c1_335 = arith.constant 1 : index
    %c1_336 = arith.constant 1 : index
    %c0_337 = arith.constant 0 : index
    %382 = vector.load %arg12[%c1_334, %c1_335, %c1_336, %c0_337] : memref<4x10x10x32xf32, #tpu.memory_space<vmem>>, vector<1x8x8x32xf32>
    %383 = vector.shape_cast %382 : vector<1x8x8x32xf32> to vector<8x8x32xf32>
    %c1_338 = arith.constant 1 : index
    %c0_339 = arith.constant 0 : index
    %c0_340 = arith.constant 0 : index
    %384 = vector.load %arg8[%c1_338, %c0_339, %c0_340] : memref<9x1x32xf32, #tpu.memory_space<vmem>>, vector<1x1x32xf32>
    %385 = vector.shape_cast %384 : vector<1x1x32xf32> to vector<1x32xf32>
    %386 = vector.shape_cast %385 : vector<1x32xf32> to vector<1x1x32xf32>
    %387 = vector.broadcast %386 : vector<1x1x32xf32> to vector<8x8x32xf32>
    %388 = arith.mulf %383, %387 : vector<8x8x32xf32>
    %389 = arith.addf %381, %388 : vector<8x8x32xf32>
    %c0_341 = arith.constant 0 : index
    %c1_342 = arith.constant 1 : index
    %c2_343 = arith.constant 2 : index
    %c0_344 = arith.constant 0 : index
    %390 = vector.load %arg12[%c0_341, %c1_342, %c2_343, %c0_344] : memref<4x10x10x32xf32, #tpu.memory_space<vmem>>, vector<1x8x8x32xf32>
    %391 = vector.shape_cast %390 : vector<1x8x8x32xf32> to vector<8x8x32xf32>
    %c2_345 = arith.constant 2 : index
    %c0_346 = arith.constant 0 : index
    %c0_347 = arith.constant 0 : index
    %392 = vector.load %arg8[%c2_345, %c0_346, %c0_347] : memref<9x1x32xf32, #tpu.memory_space<vmem>>, vector<1x1x32xf32>
    %393 = vector.shape_cast %392 : vector<1x1x32xf32> to vector<1x32xf32>
    %394 = vector.shape_cast %393 : vector<1x32xf32> to vector<1x1x32xf32>
    %395 = vector.broadcast %394 : vector<1x1x32xf32> to vector<8x8x32xf32>
    %396 = arith.mulf %391, %395 : vector<8x8x32xf32>
    %397 = arith.addf %389, %396 : vector<8x8x32xf32>
    %c2_348 = arith.constant 2 : index
    %c1_349 = arith.constant 1 : index
    %c1_350 = arith.constant 1 : index
    %c0_351 = arith.constant 0 : index
    %398 = vector.load %arg12[%c2_348, %c1_349, %c1_350, %c0_351] : memref<4x10x10x32xf32, #tpu.memory_space<vmem>>, vector<1x8x8x32xf32>
    %399 = vector.shape_cast %398 : vector<1x8x8x32xf32> to vector<8x8x32xf32>
    %c3_352 = arith.constant 3 : index
    %c0_353 = arith.constant 0 : index
    %c0_354 = arith.constant 0 : index
    %400 = vector.load %arg8[%c3_352, %c0_353, %c0_354] : memref<9x1x32xf32, #tpu.memory_space<vmem>>, vector<1x1x32xf32>
    %401 = vector.shape_cast %400 : vector<1x1x32xf32> to vector<1x32xf32>
    %402 = vector.shape_cast %401 : vector<1x32xf32> to vector<1x1x32xf32>
    %403 = vector.broadcast %402 : vector<1x1x32xf32> to vector<8x8x32xf32>
    %404 = arith.mulf %399, %403 : vector<8x8x32xf32>
    %405 = arith.addf %397, %404 : vector<8x8x32xf32>
    %c3_355 = arith.constant 3 : index
    %c1_356 = arith.constant 1 : index
    %c1_357 = arith.constant 1 : index
    %c0_358 = arith.constant 0 : index
    %406 = vector.load %arg12[%c3_355, %c1_356, %c1_357, %c0_358] : memref<4x10x10x32xf32, #tpu.memory_space<vmem>>, vector<1x8x8x32xf32>
    %407 = vector.shape_cast %406 : vector<1x8x8x32xf32> to vector<8x8x32xf32>
    %c4_359 = arith.constant 4 : index
    %c0_360 = arith.constant 0 : index
    %c0_361 = arith.constant 0 : index
    %408 = vector.load %arg8[%c4_359, %c0_360, %c0_361] : memref<9x1x32xf32, #tpu.memory_space<vmem>>, vector<1x1x32xf32>
    %409 = vector.shape_cast %408 : vector<1x1x32xf32> to vector<1x32xf32>
    %410 = vector.shape_cast %409 : vector<1x32xf32> to vector<1x1x32xf32>
    %411 = vector.broadcast %410 : vector<1x1x32xf32> to vector<8x8x32xf32>
    %412 = arith.mulf %407, %411 : vector<8x8x32xf32>
    %413 = arith.addf %405, %412 : vector<8x8x32xf32>
    %c2_362 = arith.constant 2 : index
    %c1_363 = arith.constant 1 : index
    %c2_364 = arith.constant 2 : index
    %c0_365 = arith.constant 0 : index
    %414 = vector.load %arg12[%c2_362, %c1_363, %c2_364, %c0_365] : memref<4x10x10x32xf32, #tpu.memory_space<vmem>>, vector<1x8x8x32xf32>
    %415 = vector.shape_cast %414 : vector<1x8x8x32xf32> to vector<8x8x32xf32>
    %c5_366 = arith.constant 5 : index
    %c0_367 = arith.constant 0 : index
    %c0_368 = arith.constant 0 : index
    %416 = vector.load %arg8[%c5_366, %c0_367, %c0_368] : memref<9x1x32xf32, #tpu.memory_space<vmem>>, vector<1x1x32xf32>
    %417 = vector.shape_cast %416 : vector<1x1x32xf32> to vector<1x32xf32>
    %418 = vector.shape_cast %417 : vector<1x32xf32> to vector<1x1x32xf32>
    %419 = vector.broadcast %418 : vector<1x1x32xf32> to vector<8x8x32xf32>
    %420 = arith.mulf %415, %419 : vector<8x8x32xf32>
    %421 = arith.addf %413, %420 : vector<8x8x32xf32>
    %c0_369 = arith.constant 0 : index
    %c2_370 = arith.constant 2 : index
    %c1_371 = arith.constant 1 : index
    %c0_372 = arith.constant 0 : index
    %422 = vector.load %arg12[%c0_369, %c2_370, %c1_371, %c0_372] : memref<4x10x10x32xf32, #tpu.memory_space<vmem>>, vector<1x8x8x32xf32>
    %423 = vector.shape_cast %422 : vector<1x8x8x32xf32> to vector<8x8x32xf32>
    %c6_373 = arith.constant 6 : index
    %c0_374 = arith.constant 0 : index
    %c0_375 = arith.constant 0 : index
    %424 = vector.load %arg8[%c6_373, %c0_374, %c0_375] : memref<9x1x32xf32, #tpu.memory_space<vmem>>, vector<1x1x32xf32>
    %425 = vector.shape_cast %424 : vector<1x1x32xf32> to vector<1x32xf32>
    %426 = vector.shape_cast %425 : vector<1x32xf32> to vector<1x1x32xf32>
    %427 = vector.broadcast %426 : vector<1x1x32xf32> to vector<8x8x32xf32>
    %428 = arith.mulf %423, %427 : vector<8x8x32xf32>
    %429 = arith.addf %421, %428 : vector<8x8x32xf32>
    %c1_376 = arith.constant 1 : index
    %c2_377 = arith.constant 2 : index
    %c1_378 = arith.constant 1 : index
    %c0_379 = arith.constant 0 : index
    %430 = vector.load %arg12[%c1_376, %c2_377, %c1_378, %c0_379] : memref<4x10x10x32xf32, #tpu.memory_space<vmem>>, vector<1x8x8x32xf32>
    %431 = vector.shape_cast %430 : vector<1x8x8x32xf32> to vector<8x8x32xf32>
    %c7_380 = arith.constant 7 : index
    %c0_381 = arith.constant 0 : index
    %c0_382 = arith.constant 0 : index
    %432 = vector.load %arg8[%c7_380, %c0_381, %c0_382] : memref<9x1x32xf32, #tpu.memory_space<vmem>>, vector<1x1x32xf32>
    %433 = vector.shape_cast %432 : vector<1x1x32xf32> to vector<1x32xf32>
    %434 = vector.shape_cast %433 : vector<1x32xf32> to vector<1x1x32xf32>
    %435 = vector.broadcast %434 : vector<1x1x32xf32> to vector<8x8x32xf32>
    %436 = arith.mulf %431, %435 : vector<8x8x32xf32>
    %437 = arith.addf %429, %436 : vector<8x8x32xf32>
    %c0_383 = arith.constant 0 : index
    %c2_384 = arith.constant 2 : index
    %c2_385 = arith.constant 2 : index
    %c0_386 = arith.constant 0 : index
    %438 = vector.load %arg12[%c0_383, %c2_384, %c2_385, %c0_386] : memref<4x10x10x32xf32, #tpu.memory_space<vmem>>, vector<1x8x8x32xf32>
    %439 = vector.shape_cast %438 : vector<1x8x8x32xf32> to vector<8x8x32xf32>
    %c8_387 = arith.constant 8 : index
    %c0_388 = arith.constant 0 : index
    %c0_389 = arith.constant 0 : index
    %440 = vector.load %arg8[%c8_387, %c0_388, %c0_389] : memref<9x1x32xf32, #tpu.memory_space<vmem>>, vector<1x1x32xf32>
    %441 = vector.shape_cast %440 : vector<1x1x32xf32> to vector<1x32xf32>
    %442 = vector.shape_cast %441 : vector<1x32xf32> to vector<1x1x32xf32>
    %443 = vector.broadcast %442 : vector<1x1x32xf32> to vector<8x8x32xf32>
    %444 = arith.mulf %439, %443 : vector<8x8x32xf32>
    %445 = arith.addf %437, %444 : vector<8x8x32xf32>
    %cst_390 = arith.constant dense<0.000000e+00> : vector<8x8xf32>
    %446 = vector.multi_reduction <add>, %445, %cst_390 [2] : vector<8x8x32xf32> to vector<8x8xf32>
    %c0_391 = arith.constant 0 : index
    %c0_392 = arith.constant 0 : index
    %447 = vector.load %arg9[%c0_391, %c0_392] : memref<1x1xf32, #tpu.memory_space<vmem>>, vector<1x1xf32>
    %448 = vector.broadcast %447 : vector<1x1xf32> to vector<8x8xf32>
    %449 = arith.addf %446, %448 : vector<8x8xf32>
    %cst_393 = arith.constant 0.000000e+00 : f32
    %450 = vector.broadcast %cst_393 : f32 to vector<8x8xf32>
    %451 = arith.subf %450, %449 : vector<8x8xf32>
    %452 = math.exp %451 : vector<8x8xf32>
    %cst_394 = arith.constant 1.000000e+00 : f32
    %453 = vector.broadcast %cst_394 : f32 to vector<8x8xf32>
    %454 = arith.addf %453, %452 : vector<8x8xf32>
    %455 = tpu.reciprocal %454 {approx = true} : vector<8x8xf32> -> vector<8x8xf32>
    %c3_395 = arith.constant 3 : index
    %c0_396 = arith.constant 0 : index
    %c0_397 = arith.constant 0 : index
    %456 = vector.load %arg10[%c3_395, %c0_396, %c0_397] : memref<4x8x8xf32, #tpu.memory_space<vmem>>, vector<1x8x8xf32>
    %457 = vector.shape_cast %456 : vector<1x8x8xf32> to vector<8x8xf32>
    %458 = vector.shape_cast %455 : vector<8x8xf32> to vector<1x8x8xf32>
    tpu.vector_store %arg10[%c3_395, %c0_396, %c0_397], %458 {strides = array<i32>} : memref<4x8x8xf32, #tpu.memory_space<vmem>>, vector<1x8x8xf32>,
    return
  }
  func.func @transform_0(%arg0: i32) -> (i32, i32, i32) {
    %c0_i32 = arith.constant 0 : i32
    %c0_i32_0 = arith.constant 0 : i32
    %c0_i32_1 = arith.constant 0 : i32
    return %arg0, %c0_i32, %c0_i32_0 : i32, i32, i32
  }
  func.func @transform_1(%arg0: i32) -> (i32, i32) {
    %c0_i32 = arith.constant 0 : i32
    %c0_i32_0 = arith.constant 0 : i32
    %c0_i32_1 = arith.constant 0 : i32
    return %c0_i32, %c0_i32_0 : i32, i32
  }
  func.func @transform_2(%arg0: i32) -> (i32, i32) {
    %c0_i32 = arith.constant 0 : i32
    %c0_i32_0 = arith.constant 0 : i32
    %c0_i32_1 = arith.constant 0 : i32
    return %c0_i32, %c0_i32_0 : i32, i32
  }
  func.func @transform_3(%arg0: i32) -> (i32, i32, i32) {
    %c0_i32 = arith.constant 0 : i32
    %c0_i32_0 = arith.constant 0 : i32
    %c0_i32_1 = arith.constant 0 : i32
    %c0_i32_2 = arith.constant 0 : i32
    return %c0_i32, %c0_i32_0, %c0_i32_1 : i32, i32, i32
  }
  func.func @transform_4(%arg0: i32) -> (i32, i32) {
    %c0_i32 = arith.constant 0 : i32
    %c0_i32_0 = arith.constant 0 : i32
    %c0_i32_1 = arith.constant 0 : i32
    return %c0_i32, %c0_i32_0 : i32, i32
  }
  func.func @transform_5(%arg0: i32) -> (i32, i32) {
    %c0_i32 = arith.constant 0 : i32
    %c0_i32_0 = arith.constant 0 : i32
    %c0_i32_1 = arith.constant 0 : i32
    return %c0_i32, %c0_i32_0 : i32, i32
  }
  func.func @transform_6(%arg0: i32) -> (i32, i32) {
    %c0_i32 = arith.constant 0 : i32
    %c0_i32_0 = arith.constant 0 : i32
    %c0_i32_1 = arith.constant 0 : i32
    return %c0_i32, %c0_i32_0 : i32, i32
  }
  func.func @transform_7(%arg0: i32) -> (i32, i32, i32) {
    %c0_i32 = arith.constant 0 : i32
    %c0_i32_0 = arith.constant 0 : i32
    %c0_i32_1 = arith.constant 0 : i32
    %c0_i32_2 = arith.constant 0 : i32
    return %c0_i32, %c0_i32_0, %c0_i32_1 : i32, i32, i32
  }
  func.func @transform_8(%arg0: i32) -> (i32, i32) {
    %c0_i32 = arith.constant 0 : i32
    %c0_i32_0 = arith.constant 0 : i32
    %c0_i32_1 = arith.constant 0 : i32
    return %c0_i32, %c0_i32_0 : i32, i32
  }
  func.func @transform_9(%arg0: i32) -> (i32, i32, i32) {
    %c0_i32 = arith.constant 0 : i32
    %c0_i32_0 = arith.constant 0 : i32
    %c0_i32_1 = arith.constant 0 : i32
    return %arg0, %c0_i32, %c0_i32_0 : i32, i32, i32
  }
}

</mosaic_0001>

<llo_original>
// kernel: tpu_custom_call.1
$region0: #{tpu_custom_call.1}
  #allocation0 [shape = 'u32[]', space=smem, size = 0x4, offset = 0x4, fixed_abs, tag = 'smem constant byte address 0x4 - core index']
  #allocation1 [shape = 'u32[144,128]{1,0:T(1,128)}', space=vmem, size = 0x12000, scoped, tag = 'internal scratch']
  #allocation2 [shape = 'bf16[18,18,32]{2,1,0:T(8,128)(2,1)}', space=vmem, size = 0x1b000, scoped, tag = 'scratch operand']
  #allocation3 [shape = 'f32[4,10,10,32]{3,2,1,0:T(8,128)}', space=vmem, size = 0x50000, scoped, tag = 'scratch operand']
  #allocation4 [shape = 'f32[1,1]{1,0:T(1,128)S(1)}', space=vmem, size = 0x200, scoped, tag = 'scoped memory for tpu_custom_call.1']
  %s0 = inlined_call_operand.vmem [shape: bf16[2,256,9], index: 0, kind: input, shape index: {}]
  %s1 = inlined_call_operand.vmem [shape: bf16[9,32], index: 1, kind: input, shape index: {}]
  %s2 = inlined_call_operand.vmem [shape: f32[1,32], index: 2, kind: input, shape index: {}]
  %s3 = inlined_call_operand.vmem [shape: bf16[3,96,64], index: 3, kind: input, shape index: {}]
  %s4 = inlined_call_operand.vmem [shape: f32[1,64], index: 4, kind: input, shape index: {}]
  %s5 = inlined_call_operand.vmem [shape: bf16[64,128], index: 5, kind: input, shape index: {}]
  %s6 = inlined_call_operand.vmem [shape: f32[1,32], index: 6, kind: input, shape index: {}]
  %s7 = inlined_call_operand.vmem [shape: f32[9,1,32], index: 7, kind: input, shape index: {}]
  %s8 = inlined_call_operand.<no memory space> [shape: f32[1,1], index: 8, kind: input, shape index: {}]
  %s9 = inlined_call_operand.hbm [shape: f32[8,8,8], index: 9, kind: output, shape index: {}]
  %s10 = sld [smem:[#allocation0]]
  $region69: #{tpu_custom_call.1} parent=0
    _
  %s12 = ssub.s32 1, %s10
  %s13 = scalar_select 0, %s12, %s10
  %v14 = vstv %s8
  %15 = vst [vmem:[#allocation4] sm:$0x1] %v14
  $region1: #{tpu_custom_call.1} parent=0
    #allocation5 [shape = 'u8[32768]{0}', space=vmem, size = 0x8000, scoped, tag = 'output window, operand 0']
    #allocation6 [shape = 's32[2]{0}', space=sflag, size = 0x8, scoped, tag = 'scoped memory for tpu_custom_call.1']
    %16 = vsyncpa [#allocation6], 0
    %s17 = scalar_lea.sflag [#allocation6], 1
    %18 = vsyncpa %s17, 0
    loop: start=0, step=1, limit=4
    $region2: #{tpu_custom_call.1} parent=1 // loop_pre_header
      _
    $region3: #{tpu_custom_call.1} parent=1 // loop_header
      %s20 = sphi 0, %s24
      %p21 = scmp.ge.s32.totalorder %s20, 4
      %s30 = sphi 0, %s32
      %s33 = sphi 0, %s30
      %s34 = sphi 0, %s33
      %s50 = sphi 0, %s34
      %s54 = sphi 0, %s54
      %s56 = sphi 0, %s54
      %s57 = sphi 0, %s56
      %s71 = sphi 0, %s57
      %s75 = sphi 0, %s75
      %s77 = sphi 0, %s75
      %s78 = sphi 0, %s77
      %s92 = sphi 0, %s78
      %s96 = sphi 0, %s96
      %s98 = sphi 0, %s96
      %s99 = sphi 0, %s98
      %s113 = sphi 0, %s99
      %s117 = sphi 0, %s117
      %s119 = sphi 0, %s117
      %s120 = sphi 0, %s119
      %s134 = sphi 0, %s120
      %s138 = sphi 0, %s138
      %s140 = sphi 0, %s138
      %s141 = sphi 0, %s140
      %s155 = sphi 0, %s141
      %s159 = sphi 0, %s159
      %s161 = sphi 0, %s159
      %s162 = sphi 0, %s161
      %s176 = sphi 0, %s162
      %s180 = sphi 0, %s180
      %s182 = sphi 0, %s180
      %s183 = sphi 0, %s182
      %s197 = sphi 0, %s183
      %s201 = sphi 0, %s201
      %s203 = sphi 0, %s201
      %s204 = sphi 0, %s203
      %s218 = sphi 0, %s204
      %s224 = sphi 0, %s226
      %s227 = sphi 0, %s224
      %s228 = sphi 0, %s227
      %s244 = sphi 0, %s228
    $region4: #{tpu_custom_call.1} parent=1 // loop_header_branch
      %23 = sbr.rel (%p21) target = $region8
    $region5: #{tpu_custom_call.1} parent=1 // loop_body
      %s25 = ssub.s32 %s20, 1
      %s26 = ssub.s32 %s20, 2
      %s27 = sadd.s32 %s20, 1
      %s28 = ssub.s32 %s20, %s27
      %p29 = scmp.eq.s32.totalorder %s28, 0
      %s31 = sadd.s32 %s30, 1
      %s32 = scalar_select %p29, %s30, %s31
      %p35 = pneg %p29
      %p36 = scmp.eq.s32.totalorder %s20, 1
      %p37 = por %p35, %p36
      %p38 = scmp.ne.s32.totalorder %s30, %s33
      %p39 = scmp.eq.s32.totalorder %s20, 0
      %p40 = por %p38, %p39
      %p41 = scmp.ne.s32.totalorder %s30, %s33
      %p42 = scmp.eq.s32.totalorder %s25, 1
      %p43 = por %p41, %p42
      %p44 = scmp.ne.s32.totalorder %s33, %s34
      %p45 = scmp.eq.s32.totalorder %s25, 0
      %p46 = por %p44, %p45
      %p47 = scmp.ne.s32.totalorder %s33, %s34
      %p48 = scmp.eq.s32.totalorder %s26, 1
      %p49 = por %p47, %p48
      %p51 = scmp.ne.s32.totalorder %s34, %s50
      %p52 = scmp.eq.s32.totalorder %s26, 0
      %p53 = por %p51, %p52
      %s55 = sadd.s32 %s54, 1
      %p58 = scmp.eq.s32.totalorder %s20, 1
      %p59 = scmp.ne.s32.totalorder %s54, %s56
      %p60 = scmp.eq.s32.totalorder %s20, 0
      %p61 = por %p59, %p60
      %p62 = scmp.ne.s32.totalorder %s54, %s56
      %p63 = scmp.eq.s32.totalorder %s25, 1
      %p64 = por %p62, %p63
      %p65 = scmp.ne.s32.totalorder %s56, %s57
      %p66 = scmp.eq.s32.totalorder %s25, 0
      %p67 = por %p65, %p66
      %p68 = scmp.ne.s32.totalorder %s56, %s57
      %p69 = scmp.eq.s32.totalorder %s26, 1
      %p70 = por %p68, %p69
      %p72 = scmp.ne.s32.totalorder %s57, %s71
      %p73 = scmp.eq.s32.totalorder %s26, 0
      %p74 = por %p72, %p73
      %s76 = sadd.s32 %s75, 1
      %p79 = scmp.eq.s32.totalorder %s20, 1
      %p80 = scmp.ne.s32.totalorder %s75, %s77
      %p81 = scmp.eq.s32.totalorder %s20, 0
      %p82 = por %p80, %p81
      %p83 = scmp.ne.s32.totalorder %s75, %s77
      %p84 = scmp.eq.s32.totalorder %s25, 1
      %p85 = por %p83, %p84
      %p86 = scmp.ne.s32.totalorder %s77, %s78
      %p87 = scmp.eq.s32.totalorder %s25, 0
      %p88 = por %p86, %p87
      %p89 = scmp.ne.s32.totalorder %s77, %s78
      %p90 = scmp.eq.s32.totalorder %s26, 1
      %p91 = por %p89, %p90
      %p93 = scmp.ne.s32.totalorder %s78, %s92
      %p94 = scmp.eq.s32.totalorder %s26, 0
      %p95 = por %p93, %p94
      %s97 = sadd.s32 %s96, 1
      %p100 = scmp.eq.s32.totalorder %s20, 1
      %p101 = scmp.ne.s32.totalorder %s96, %s98
      %p102 = scmp.eq.s32.totalorder %s20, 0
      %p103 = por %p101, %p102
      %p104 = scmp.ne.s32.totalorder %s96, %s98
      %p105 = scmp.eq.s32.totalorder %s25, 1
      %p106 = por %p104, %p105
      %p107 = scmp.ne.s32.totalorder %s98, %s99
      %p108 = scmp.eq.s32.totalorder %s25, 0
      %p109 = por %p107, %p108
      %p110 = scmp.ne.s32.totalorder %s98, %s99
      %p111 = scmp.eq.s32.totalorder %s26, 1
      %p112 = por %p110, %p111
      %p114 = scmp.ne.s32.totalorder %s99, %s113
      %p115 = scmp.eq.s32.totalorder %s26, 0
      %p116 = por %p114, %p115
      %s118 = sadd.s32 %s117, 1
      %p121 = scmp.eq.s32.totalorder %s20, 1
      %p122 = scmp.ne.s32.totalorder %s117, %s119
      %p123 = scmp.eq.s32.totalorder %s20, 0
      %p124 = por %p122, %p123
      %p125 = scmp.ne.s32.totalorder %s117, %s119
      %p126 = scmp.eq.s32.totalorder %s25, 1
      %p127 = por %p125, %p126
      %p128 = scmp.ne.s32.totalorder %s119, %s120
      %p129 = scmp.eq.s32.totalorder %s25, 0
      %p130 = por %p128, %p129
      %p131 = scmp.ne.s32.totalorder %s119, %s120
      %p132 = scmp.eq.s32.totalorder %s26, 1
      %p133 = por %p131, %p132
      %p135 = scmp.ne.s32.totalorder %s120, %s134
      %p136 = scmp.eq.s32.totalorder %s26, 0
      %p137 = por %p135, %p136
      %s139 = sadd.s32 %s138, 1
      %p142 = scmp.eq.s32.totalorder %s20, 1
      %p143 = scmp.ne.s32.totalorder %s138, %s140
      %p144 = scmp.eq.s32.totalorder %s20, 0
      %p145 = por %p143, %p144
      %p146 = scmp.ne.s32.totalorder %s138, %s140
      %p147 = scmp.eq.s32.totalorder %s25, 1
      %p148 = por %p146, %p147
      %p149 = scmp.ne.s32.totalorder %s140, %s141
      %p150 = scmp.eq.s32.totalorder %s25, 0
      %p151 = por %p149, %p150
      %p152 = scmp.ne.s32.totalorder %s140, %s141
      %p153 = scmp.eq.s32.totalorder %s26, 1
      %p154 = por %p152, %p153
      %p156 = scmp.ne.s32.totalorder %s141, %s155
      %p157 = scmp.eq.s32.totalorder %s26, 0
      %p158 = por %p156, %p157
      %s160 = sadd.s32 %s159, 1
      %p163 = scmp.eq.s32.totalorder %s20, 1
      %p164 = scmp.ne.s32.totalorder %s159, %s161
      %p165 = scmp.eq.s32.totalorder %s20, 0
      %p166 = por %p164, %p165
      %p167 = scmp.ne.s32.totalorder %s159, %s161
      %p168 = scmp.eq.s32.totalorder %s25, 1
      %p169 = por %p167, %p168
      %p170 = scmp.ne.s32.totalorder %s161, %s162
      %p171 = scmp.eq.s32.totalorder %s25, 0
      %p172 = por %p170, %p171
      %p173 = scmp.ne.s32.totalorder %s161, %s162
      %p174 = scmp.eq.s32.totalorder %s26, 1
      %p175 = por %p173, %p174
      %p177 = scmp.ne.s32.totalorder %s162, %s176
      %p178 = scmp.eq.s32.totalorder %s26, 0
      %p179 = por %p177, %p178
      %s181 = sadd.s32 %s180, 1
      %p184 = scmp.eq.s32.totalorder %s20, 1
      %p185 = scmp.ne.s32.totalorder %s180, %s182
      %p186 = scmp.eq.s32.totalorder %s20, 0
      %p187 = por %p185, %p186
      %p188 = scmp.ne.s32.totalorder %s180, %s182
      %p189 = scmp.eq.s32.totalorder %s25, 1
      %p190 = por %p188, %p189
      %p191 = scmp.ne.s32.totalorder %s182, %s183
      %p192 = scmp.eq.s32.totalorder %s25, 0
      %p193 = por %p191, %p192
      %p194 = scmp.ne.s32.totalorder %s182, %s183
      %p195 = scmp.eq.s32.totalorder %s26, 1
      %p196 = por %p194, %p195
      %p198 = scmp.ne.s32.totalorder %s183, %s197
      %p199 = scmp.eq.s32.totalorder %s26, 0
      %p200 = por %p198, %p199
      %s202 = sadd.s32 %s201, 1
      %p205 = scmp.eq.s32.totalorder %s20, 1
      %p206 = scmp.ne.s32.totalorder %s201, %s203
      %p207 = scmp.eq.s32.totalorder %s20, 0
      %p208 = por %p206, %p207
      %p209 = scmp.ne.s32.totalorder %s201, %s203
      %p210 = scmp.eq.s32.totalorder %s25, 1
      %p211 = por %p209, %p210
      %p212 = scmp.ne.s32.totalorder %s203, %s204
      %p213 = scmp.eq.s32.totalorder %s25, 0
      %p214 = por %p212, %p213
      %p215 = scmp.ne.s32.totalorder %s203, %s204
      %p216 = scmp.eq.s32.totalorder %s26, 1
      %p217 = por %p215, %p216
      %p219 = scmp.ne.s32.totalorder %s204, %s218
      %p220 = scmp.eq.s32.totalorder %s26, 0
      %p221 = por %p219, %p220
      %s222 = ssub.s32 %s20, %s27
      %p223 = scmp.eq.s32.totalorder %s222, 0
      %s225 = sadd.s32 %s224, 1
      %s226 = scalar_select %p223, %s224, %s225
      %p229 = pneg %p223
      %p230 = scmp.eq.s32.totalorder %s20, 1
      %p231 = por %p229, %p230
      %p232 = scmp.ne.s32.totalorder %s224, %s227
      %p233 = scmp.eq.s32.totalorder %s20, 0
      %p234 = por %p232, %p233
      %p235 = scmp.ne.s32.totalorder %s224, %s227
      %p236 = scmp.eq.s32.totalorder %s25, 1
      %p237 = por %p235, %p236
      %p238 = scmp.ne.s32.totalorder %s227, %s228
      %p239 = scmp.eq.s32.totalorder %s25, 0
      %p240 = por %p238, %p239
      %p241 = scmp.ne.s32.totalorder %s227, %s228
      %p242 = scmp.eq.s32.totalorder %s26, 1
      %p243 = por %p241, %p242
      %p245 = scmp.ne.s32.totalorder %s228, %s244
      %p246 = scmp.eq.s32.totalorder %s26, 0
      %p247 = por %p245, %p246
      %p248 = scmp.le.s32.totalorder 1, %s20
      %p249 = scmp.lt.s32.totalorder %s20, 3
      %p250 = pnand %p248, %p249
      %p251 = pneg %p250
      // Predicated region
      $region9: #{tpu_custom_call.1} parent=5 // pred_check
        _
      $region10: #{tpu_custom_call.1} parent=5 // pred_check_branch
        %253 = sbr.rel (%p250) target = $region12
      $region11: #{tpu_custom_call.1} parent=5 // pred_region
        %s254 = ssub.s32 %s20, 1
        // Predicated region
        $region13: #{tpu_custom_call.1} parent=11 // pred_check
          %p255 = pneg %p67
        $region14: #{tpu_custom_call.1} parent=11 // pred_check_branch
          %257 = sbr.rel (%p255) target = $region16
        $region15: #{tpu_custom_call.1} parent=11 // pred_region
          _
        $region16: #{tpu_custom_call.1} parent=11 // pred_fallthru
          _
        // Predicated region
        $region17: #{tpu_custom_call.1} parent=11 // pred_check
          %p258 = pneg %p88
        $region18: #{tpu_custom_call.1} parent=11 // pred_check_branch
          %260 = sbr.rel (%p258) target = $region20
        $region19: #{tpu_custom_call.1} parent=11 // pred_region
          _
        $region20: #{tpu_custom_call.1} parent=11 // pred_fallthru
          _
        // Predicated region
        $region21: #{tpu_custom_call.1} parent=11 // pred_check
          %p261 = pneg %p109
        $region22: #{tpu_custom_call.1} parent=11 // pred_check_branch
          %263 = sbr.rel (%p261) target = $region24
        $region23: #{tpu_custom_call.1} parent=11 // pred_region
          _
        $region24: #{tpu_custom_call.1} parent=11 // pred_fallthru
          _
        // Predicated region
        $region25: #{tpu_custom_call.1} parent=11 // pred_check
          %p264 = pneg %p130
        $region26: #{tpu_custom_call.1} parent=11 // pred_check_branch
          %266 = sbr.rel (%p264) target = $region28
        $region27: #{tpu_custom_call.1} parent=11 // pred_region
          _
        $region28: #{tpu_custom_call.1} parent=11 // pred_fallthru
          _
        // Predicated region
        $region29: #{tpu_custom_call.1} parent=11 // pred_check
          %p267 = pneg %p151
        $region30: #{tpu_custom_call.1} parent=11 // pred_check_branch
          %269 = sbr.rel (%p267) target = $region32
        $region31: #{tpu_custom_call.1} parent=11 // pred_region
          _
        $region32: #{tpu_custom_call.1} parent=11 // pred_fallthru
          _
        // Predicated region
        $region33: #{tpu_custom_call.1} parent=11 // pred_check
          %p270 = pneg %p172
        $region34: #{tpu_custom_call.1} parent=11 // pred_check_branch
          %272 = sbr.rel (%p270) target = $region36
        $region35: #{tpu_custom_call.1} parent=11 // pred_region
          _
        $region36: #{tpu_custom_call.1} parent=11 // pred_fallthru
          _
        // Predicated region
        $region37: #{tpu_custom_call.1} parent=11 // pred_check
          %p273 = pneg %p193
        $region38: #{tpu_custom_call.1} parent=11 // pred_check_branch
          %275 = sbr.rel (%p273) target = $region40
        $region39: #{tpu_custom_call.1} parent=11 // pred_region
          _
        $region40: #{tpu_custom_call.1} parent=11 // pred_fallthru
          _
        // Predicated region
        $region41: #{tpu_custom_call.1} parent=11 // pred_check
          %p276 = pneg %p214
        $region42: #{tpu_custom_call.1} parent=11 // pred_check_branch
          %278 = sbr.rel (%p276) target = $region44
        $region43: #{tpu_custom_call.1} parent=11 // pred_region
          _
        $region44: #{tpu_custom_call.1} parent=11 // pred_fallthru
          _
      $region12: #{tpu_custom_call.1} parent=5 // pred_fallthru
        _
      %p279 = scmp.lt.s32.totalorder %s20, 2
      // Predicated region
      $region45: #{tpu_custom_call.1} parent=5 // pred_check
        %p280 = pneg %p279
      $region46: #{tpu_custom_call.1} parent=5 // pred_check_branch
        %282 = sbr.rel (%p280) target = $region48
      $region47: #{tpu_custom_call.1} parent=5 // pred_region
        // Predicated region
        $region49: #{tpu_custom_call.1} parent=47 // pred_check
          %p283 = pneg %p40
        $region50: #{tpu_custom_call.1} parent=47 // pred_check_branch
          %285 = sbr.rel (%p283) target = $region52
        $region51: #{tpu_custom_call.1} parent=47 // pred_region
          %p286 = scmp.lt.s32.totalorder %s20, 1
          %s287 = scalar_select %p286, %s20, 1
          %s288 = smul.addr %s287, 32
          %s289 = smul.addr %s288, 4
          %s290 = scalar_lea.vmem %s0, %s289
        $region52: #{tpu_custom_call.1} parent=47 // pred_fallthru
          _
      $region48: #{tpu_custom_call.1} parent=5 // pred_fallthru
        _
      %p291 = scmp.le.s32.totalorder 1, %s20
      %p292 = scmp.lt.s32.totalorder %s20, 3
      %p293 = pnand %p291, %p292
      %p294 = pneg %p293
      // Predicated region
      $region53: #{tpu_custom_call.1} parent=5 // pred_check
        _
      $region54: #{tpu_custom_call.1} parent=5 // pred_check_branch
        %296 = sbr.rel (%p293) target = $region56
      $region55: #{tpu_custom_call.1} parent=5 // pred_region
        %s297 = ssub.s32 %s20, 1
        %p298 = scmp.lt.s32.totalorder %s25, 1
        %s299 = scalar_select %p298, %s25, 1
        %s300 = smul.addr %s299, 32
        %s301 = smul.addr %s300, 4
        %s302 = scalar_lea.vmem %s0, %s301
        %p303 = pneg %p46
        %p304 = pneg %p43
        %p305 = pneg %p67
        %p306 = pneg %p64
        %p307 = pneg %p88
        %p308 = pneg %p85
        %p309 = pneg %p109
        %p310 = pneg %p106
        %p311 = pneg %p130
        %p312 = pneg %p127
        %p313 = pneg %p151
        %p314 = pneg %p148
        %p315 = pneg %p172
        %p316 = pneg %p169
        %p317 = pneg %p193
        %p318 = pneg %p190
        %p319 = pneg %p214
        %p320 = pneg %p211
        %p321 = pneg %p240
        %p322 = pneg %p237
        %s323 = sand.u32 %s227, 1
        %s324 = scalar_lea.sflag [#allocation6], %s323
        %s325 = sand.u32 %s227, 1
        %s326 = smul.addr %s325, 32
        %s327 = scalar_lea.vmem [#allocation5], %s326
        %p328 = scmp.lt.s32.totalorder %s25, 1
        %s329 = scalar_select %p328, %s25, 1
        %s330 = smul.addr %s329, 32
        %s331 = smul.addr %s330, 4
        %s332 = scalar_lea.vmem %s0, %s331
        %s333 = smul.u32 4, %s25
        %vm335 = vcmask 257024
        %336 = vst.msk [vmem:[#allocation2] sm:$0xf] %vm335, 0
        %337 = vst.msk [vmem:[#allocation2 + $0x4] sm:$0xf] %vm335, 0
        %vm338 = vcmask 253952
        %339 = vst.msk [vmem:[#allocation2 + $0x8] sm:$0x1] %vm338, 0
        %s340 = scalar_lea.vmem [#allocation2], 204
        %341 = vst.msk [vmem:[%s340] sm:$0xf] %vm335, 0
        %342 = vst.msk [vmem:[%s340 + $0x4] sm:$0xf] %vm335, 0
        %343 = vst.msk [vmem:[%s340 + $0x8] sm:$0x1] %vm338, 0
        %vm344 = vcmask 253952
        %vm345 = vsmask.f32 256
        %vm346 = vmand %vm344, %vm345
        %v347 = vld [vmem:[#allocation2] sm:$0x1]
        %v348 = vsel %vm346, 0, %v347
        %349 = vst [vmem:[#allocation2] sm:$0x1] %v348
        %v350 = vld [vmem:[#allocation2 + $0xc] sm:$0x1]
        %v351 = vsel %vm346, 0, %v350
        %352 = vst [vmem:[#allocation2 + $0xc] sm:$0x1] %v351
        %v353 = vld [vmem:[#allocation2 + $0x18] sm:$0x1]
        %v354 = vsel %vm346, 0, %v353
        %355 = vst [vmem:[#allocation2 + $0x18] sm:$0x1] %v354
        %v356 = vld [vmem:[#allocation2 + $0x24] sm:$0x1]
        %v357 = vsel %vm346, 0, %v356
        %358 = vst [vmem:[#allocation2 + $0x24] sm:$0x1] %v357
        %v359 = vld [vmem:[#allocation2 + $0x30] sm:$0x1]
        %v360 = vsel %vm346, 0, %v359
        %361 = vst [vmem:[#allocation2 + $0x30] sm:$0x1] %v360
        %v362 = vld [vmem:[#allocation2 + $0x3c] sm:$0x1]
        %v363 = vsel %vm346, 0, %v362
        %364 = vst [vmem:[#allocation2 + $0x3c] sm:$0x1] %v363
        %v365 = vld [vmem:[#allocation2 + $0x48] sm:$0x1]
        %v366 = vsel %vm346, 0, %v365
        %367 = vst [vmem:[#allocation2 + $0x48] sm:$0x1] %v366
        %v368 = vld [vmem:[#allocation2 + $0x54] sm:$0x1]
        %v369 = vsel %vm346, 0, %v368
        %370 = vst [vmem:[#allocation2 + $0x54] sm:$0x1] %v369
        %v371 = vld [vmem:[#allocation2 + $0x60] sm:$0x1]
        %v372 = vsel %vm346, 0, %v371
        %373 = vst [vmem:[#allocation2 + $0x60] sm:$0x1] %v372
        %v374 = vld [vmem:[#allocation2 + $0x6c] sm:$0x1]
        %v375 = vsel %vm346, 0, %v374
        %376 = vst [vmem:[#allocation2 + $0x6c] sm:$0x1] %v375
        %v377 = vld [vmem:[#allocation2 + $0x78] sm:$0x1]
        %v378 = vsel %vm346, 0, %v377
        %379 = vst [vmem:[#allocation2 + $0x78] sm:$0x1] %v378
        %v380 = vld [vmem:[#allocation2 + $0x84] sm:$0x1]
        %v381 = vsel %vm346, 0, %v380
        %382 = vst [vmem:[#allocation2 + $0x84] sm:$0x1] %v381
        %v383 = vld [vmem:[#allocation2 + $0x90] sm:$0x1]
        %v384 = vsel %vm346, 0, %v383
        %385 = vst [vmem:[#allocation2 + $0x90] sm:$0x1] %v384
        %v386 = vld [vmem:[#allocation2 + $0x9c] sm:$0x1]
        %v387 = vsel %vm346, 0, %v386
        %388 = vst [vmem:[#allocation2 + $0x9c] sm:$0x1] %v387
        %v389 = vld [vmem:[#allocation2 + $0xa8] sm:$0x1]
        %v390 = vsel %vm346, 0, %v389
        %391 = vst [vmem:[#allocation2 + $0xa8] sm:$0x1] %v390
        %v392 = vld [vmem:[#allocation2 + $0xb4] sm:$0x1]
        %v393 = vsel %vm346, 0, %v392
        %394 = vst [vmem:[#allocation2 + $0xb4] sm:$0x1] %v393
        %v395 = vld [vmem:[#allocation2 + $0xc0] sm:$0x1]
        %v396 = vsel %vm346, 0, %v395
        %397 = vst [vmem:[#allocation2 + $0xc0] sm:$0x1] %v396
        %v398 = vld [vmem:[#allocation2 + $0xcc] sm:$0x1]
        %v399 = vsel %vm346, 0, %v398
        %400 = vst [vmem:[#allocation2 + $0xcc] sm:$0x1] %v399
        %vm401 = vsmask.f32 7938
        %vm402 = vmand %vm344, %vm401
        %v403 = vld [vmem:[#allocation2 + $0x8] sm:$0x1]
        %v404 = vsel %vm402, 0, %v403
        %405 = vst [vmem:[#allocation2 + $0x8] sm:$0x1] %v404
        %v406 = vld [vmem:[#allocation2 + $0x14] sm:$0x1]
        %v407 = vsel %vm402, 0, %v406
        %408 = vst [vmem:[#allocation2 + $0x14] sm:$0x1] %v407
        %v409 = vld [vmem:[#allocation2 + $0x20] sm:$0x1]
        %v410 = vsel %vm402, 0, %v409
        %411 = vst [vmem:[#allocation2 + $0x20] sm:$0x1] %v410
        %v412 = vld [vmem:[#allocation2 + $0x2c] sm:$0x1]
        %v413 = vsel %vm402, 0, %v412
        %414 = vst [vmem:[#allocation2 + $0x2c] sm:$0x1] %v413
        %v415 = vld [vmem:[#allocation2 + $0x38] sm:$0x1]
        %v416 = vsel %vm402, 0, %v415
        %417 = vst [vmem:[#allocation2 + $0x38] sm:$0x1] %v416
        %v418 = vld [vmem:[#allocation2 + $0x44] sm:$0x1]
        %v419 = vsel %vm402, 0, %v418
        %420 = vst [vmem:[#allocation2 + $0x44] sm:$0x1] %v419
        %v421 = vld [vmem:[#allocation2 + $0x50] sm:$0x1]
        %v422 = vsel %vm402, 0, %v421
        %423 = vst [vmem:[#allocation2 + $0x50] sm:$0x1] %v422
        %v424 = vld [vmem:[#allocation2 + $0x5c] sm:$0x1]
        %v425 = vsel %vm402, 0, %v424
        %426 = vst [vmem:[#allocation2 + $0x5c] sm:$0x1] %v425
        %v427 = vld [vmem:[#allocation2 + $0x68] sm:$0x1]
        %v428 = vsel %vm402, 0, %v427
        %429 = vst [vmem:[#allocation2 + $0x68] sm:$0x1] %v428
        %v430 = vld [vmem:[#allocation2 + $0x74] sm:$0x1]
        %v431 = vsel %vm402, 0, %v430
        %432 = vst [vmem:[#allocation2 + $0x74] sm:$0x1] %v431
        %v433 = vld [vmem:[#allocation2 + $0x80] sm:$0x1]
        %v434 = vsel %vm402, 0, %v433
        %435 = vst [vmem:[#allocation2 + $0x80] sm:$0x1] %v434
        %v436 = vld [vmem:[#allocation2 + $0x8c] sm:$0x1]
        %v437 = vsel %vm402, 0, %v436
        %438 = vst [vmem:[#allocation2 + $0x8c] sm:$0x1] %v437
        %v439 = vld [vmem:[#allocation2 + $0x98] sm:$0x1]
        %v440 = vsel %vm402, 0, %v439
        %441 = vst [vmem:[#allocation2 + $0x98] sm:$0x1] %v440
        %v442 = vld [vmem:[#allocation2 + $0xa4] sm:$0x1]
        %v443 = vsel %vm402, 0, %v442
        %444 = vst [vmem:[#allocation2 + $0xa4] sm:$0x1] %v443
        %v445 = vld [vmem:[#allocation2 + $0xb0] sm:$0x1]
        %v446 = vsel %vm402, 0, %v445
        %447 = vst [vmem:[#allocation2 + $0xb0] sm:$0x1] %v446
        %v448 = vld [vmem:[#allocation2 + $0xbc] sm:$0x1]
        %v449 = vsel %vm402, 0, %v448
        %450 = vst [vmem:[#allocation2 + $0xbc] sm:$0x1] %v449
        %v451 = vld [vmem:[#allocation2 + $0xc8] sm:$0x1]
        %v452 = vsel %vm402, 0, %v451
        %453 = vst [vmem:[#allocation2 + $0xc8] sm:$0x1] %v452
        %v454 = vld [vmem:[#allocation2 + $0xd4] sm:$0x1]
        %v455 = vsel %vm402, 0, %v454
        %456 = vst [vmem:[#allocation2 + $0xd4] sm:$0x1] %v455
        %vm457 = vcmask 261120
        %458 = vst.msk [vmem:[#allocation3] sm:$0xff] %vm457, 0.0
        %vm459 = vcmask 254976
        %460 = vst.msk [vmem:[#allocation3 + $0x8] sm:$0x3] %vm459, 0.0
        %461 = vst.msk [vmem:[#allocation3 + $0xa0] sm:$0xff] %vm457, 0.0
        %462 = vst.msk [vmem:[#allocation3 + $0xa8] sm:$0x3] %vm459, 0.0
        %463 = vst.msk [vmem:[#allocation3 + $0x140] sm:$0xff] %vm457, 0.0
        %464 = vst.msk [vmem:[#allocation3 + $0x148] sm:$0x3] %vm459, 0.0
        %465 = vst.msk [vmem:[#allocation3 + $0x1e0] sm:$0xff] %vm457, 0.0
        %466 = vst.msk [vmem:[#allocation3 + $0x1e8] sm:$0x3] %vm459, 0.0
        %s467 = scalar_lea.vmem [#allocation3], 144
        %468 = vst.msk [vmem:[%s467] sm:$0xff] %vm457, 0.0
        %469 = vst.msk [vmem:[%s467 + $0x8] sm:$0x3] %vm459, 0.0
        %470 = vst.msk [vmem:[%s467 + $0xa0] sm:$0xff] %vm457, 0.0
        %471 = vst.msk [vmem:[%s467 + $0xa8] sm:$0x3] %vm459, 0.0
        %472 = vst.msk [vmem:[%s467 + $0x140] sm:$0xff] %vm457, 0.0
        %473 = vst.msk [vmem:[%s467 + $0x148] sm:$0x3] %vm459, 0.0
        %474 = vst.msk [vmem:[%s467 + $0x1e0] sm:$0xff] %vm457, 0.0
        %475 = vst.msk [vmem:[%s467 + $0x1e8] sm:$0x3] %vm459, 0.0
        %476 = vst.msk [vmem:[#allocation3] sm:$0x1] %vm338, 0.0
        %477 = vst.msk [vmem:[#allocation3 + $0x10] sm:$0x1] %vm338, 0.0
        %478 = vst.msk [vmem:[#allocation3 + $0x20] sm:$0x1] %vm338, 0.0
        %479 = vst.msk [vmem:[#allocation3 + $0x30] sm:$0x1] %vm338, 0.0
        %480 = vst.msk [vmem:[#allocation3 + $0x40] sm:$0x1] %vm338, 0.0
        %481 = vst.msk [vmem:[#allocation3 + $0x50] sm:$0x1] %vm338, 0.0
        %482 = vst.msk [vmem:[#allocation3 + $0x60] sm:$0x1] %vm338, 0.0
        %483 = vst.msk [vmem:[#allocation3 + $0x70] sm:$0x1] %vm338, 0.0
        %484 = vst.msk [vmem:[#allocation3 + $0x80] sm:$0x1] %vm338, 0.0
        %485 = vst.msk [vmem:[#allocation3 + $0x90] sm:$0x1] %vm338, 0.0
        %486 = vst.msk [vmem:[#allocation3 + $0xa0] sm:$0x1] %vm338, 0.0
        %487 = vst.msk [vmem:[#allocation3 + $0xb0] sm:$0x1] %vm338, 0.0
        %488 = vst.msk [vmem:[#allocation3 + $0xc0] sm:$0x1] %vm338, 0.0
        %489 = vst.msk [vmem:[#allocation3 + $0xd0] sm:$0x1] %vm338, 0.0
        %490 = vst.msk [vmem:[#allocation3 + $0xe0] sm:$0x1] %vm338, 0.0
        %491 = vst.msk [vmem:[#allocation3 + $0xf0] sm:$0x1] %vm338, 0.0
        %492 = vst.msk [vmem:[#allocation3 + $0x100] sm:$0x1] %vm338, 0.0
        %493 = vst.msk [vmem:[#allocation3 + $0x110] sm:$0x1] %vm338, 0.0
        %494 = vst.msk [vmem:[#allocation3 + $0x120] sm:$0x1] %vm338, 0.0
        %495 = vst.msk [vmem:[#allocation3 + $0x130] sm:$0x1] %vm338, 0.0
        %496 = vst.msk [vmem:[#allocation3 + $0x140] sm:$0x1] %vm338, 0.0
        %497 = vst.msk [vmem:[#allocation3 + $0x150] sm:$0x1] %vm338, 0.0
        %498 = vst.msk [vmem:[#allocation3 + $0x160] sm:$0x1] %vm338, 0.0
        %499 = vst.msk [vmem:[#allocation3 + $0x170] sm:$0x1] %vm338, 0.0
        %500 = vst.msk [vmem:[#allocation3 + $0x180] sm:$0x1] %vm338, 0.0
        %501 = vst.msk [vmem:[#allocation3 + $0x190] sm:$0x1] %vm338, 0.0
        %502 = vst.msk [vmem:[#allocation3 + $0x1a0] sm:$0x1] %vm338, 0.0
        %503 = vst.msk [vmem:[#allocation3 + $0x1b0] sm:$0x1] %vm338, 0.0
        %504 = vst.msk [vmem:[#allocation3 + $0x1c0] sm:$0x1] %vm338, 0.0
        %505 = vst.msk [vmem:[#allocation3 + $0x1d0] sm:$0x1] %vm338, 0.0
        %506 = vst.msk [vmem:[#allocation3 + $0x1e0] sm:$0x1] %vm338, 0.0
        %507 = vst.msk [vmem:[#allocation3 + $0x1f0] sm:$0x1] %vm338, 0.0
        %508 = vst.msk [vmem:[#allocation3 + $0x200] sm:$0x1] %vm338, 0.0
        %509 = vst.msk [vmem:[#allocation3 + $0x210] sm:$0x1] %vm338, 0.0
        %510 = vst.msk [vmem:[#allocation3 + $0x220] sm:$0x1] %vm338, 0.0
        %511 = vst.msk [vmem:[#allocation3 + $0x230] sm:$0x1] %vm338, 0.0
        %512 = vst.msk [vmem:[#allocation3 + $0x240] sm:$0x1] %vm338, 0.0
        %513 = vst.msk [vmem:[#allocation3 + $0x250] sm:$0x1] %vm338, 0.0
        %514 = vst.msk [vmem:[#allocation3 + $0x260] sm:$0x1] %vm338, 0.0
        %515 = vst.msk [vmem:[#allocation3 + $0x270] sm:$0x1] %vm338, 0.0
        %516 = vst.msk [vmem:[#allocation3 + $0x9] sm:$0x1] %vm338, 0.0
        %517 = vst.msk [vmem:[#allocation3 + $0x19] sm:$0x1] %vm338, 0.0
        %518 = vst.msk [vmem:[#allocation3 + $0x29] sm:$0x1] %vm338, 0.0
        %519 = vst.msk [vmem:[#allocation3 + $0x39] sm:$0x1] %vm338, 0.0
        %520 = vst.msk [vmem:[#allocation3 + $0x49] sm:$0x1] %vm338, 0.0
        %521 = vst.msk [vmem:[#allocation3 + $0x59] sm:$0x1] %vm338, 0.0
        %522 = vst.msk [vmem:[#allocation3 + $0x69] sm:$0x1] %vm338, 0.0
        %523 = vst.msk [vmem:[#allocation3 + $0x79] sm:$0x1] %vm338, 0.0
        %524 = vst.msk [vmem:[#allocation3 + $0x89] sm:$0x1] %vm338, 0.0
        %525 = vst.msk [vmem:[#allocation3 + $0x99] sm:$0x1] %vm338, 0.0
        %526 = vst.msk [vmem:[#allocation3 + $0xa9] sm:$0x1] %vm338, 0.0
        %527 = vst.msk [vmem:[#allocation3 + $0xb9] sm:$0x1] %vm338, 0.0
        %528 = vst.msk [vmem:[#allocation3 + $0xc9] sm:$0x1] %vm338, 0.0
        %529 = vst.msk [vmem:[#allocation3 + $0xd9] sm:$0x1] %vm338, 0.0
        %530 = vst.msk [vmem:[#allocation3 + $0xe9] sm:$0x1] %vm338, 0.0
        %531 = vst.msk [vmem:[#allocation3 + $0xf9] sm:$0x1] %vm338, 0.0
        %532 = vst.msk [vmem:[#allocation3 + $0x109] sm:$0x1] %vm338, 0.0
        %533 = vst.msk [vmem:[#allocation3 + $0x119] sm:$0x1] %vm338, 0.0
        %534 = vst.msk [vmem:[#allocation3 + $0x129] sm:$0x1] %vm338, 0.0
        %535 = vst.msk [vmem:[#allocation3 + $0x139] sm:$0x1] %vm338, 0.0
        %536 = vst.msk [vmem:[#allocation3 + $0x149] sm:$0x1] %vm338, 0.0
        %537 = vst.msk [vmem:[#allocation3 + $0x159] sm:$0x1] %vm338, 0.0
        %538 = vst.msk [vmem:[#allocation3 + $0x169] sm:$0x1] %vm338, 0.0
        %539 = vst.msk [vmem:[#allocation3 + $0x179] sm:$0x1] %vm338, 0.0
        %540 = vst.msk [vmem:[#allocation3 + $0x189] sm:$0x1] %vm338, 0.0
        %541 = vst.msk [vmem:[#allocation3 + $0x199] sm:$0x1] %vm338, 0.0
        %542 = vst.msk [vmem:[#allocation3 + $0x1a9] sm:$0x1] %vm338, 0.0
        %543 = vst.msk [vmem:[#allocation3 + $0x1b9] sm:$0x1] %vm338, 0.0
        %544 = vst.msk [vmem:[#allocation3 + $0x1c9] sm:$0x1] %vm338, 0.0
        %545 = vst.msk [vmem:[#allocation3 + $0x1d9] sm:$0x1] %vm338, 0.0
        %546 = vst.msk [vmem:[#allocation3 + $0x1e9] sm:$0x1] %vm338, 0.0
        %547 = vst.msk [vmem:[#allocation3 + $0x1f9] sm:$0x1] %vm338, 0.0
        %548 = vst.msk [vmem:[#allocation3 + $0x209] sm:$0x1] %vm338, 0.0
        %549 = vst.msk [vmem:[#allocation3 + $0x219] sm:$0x1] %vm338, 0.0
        %550 = vst.msk [vmem:[#allocation3 + $0x229] sm:$0x1] %vm338, 0.0
        %551 = vst.msk [vmem:[#allocation3 + $0x239] sm:$0x1] %vm338, 0.0
        %552 = vst.msk [vmem:[#allocation3 + $0x249] sm:$0x1] %vm338, 0.0
        %553 = vst.msk [vmem:[#allocation3 + $0x259] sm:$0x1] %vm338, 0.0
        %554 = vst.msk [vmem:[#allocation3 + $0x269] sm:$0x1] %vm338, 0.0
        %555 = vst.msk [vmem:[#allocation3 + $0x279] sm:$0x1] %vm338, 0.0
        %v556 = vld [vmem:[%s332] sm:$0xf]
        %v557 = vld [vmem:[%s332 + $0x4] sm:$0xf]
        %v558 = vld [vmem:[%s332 + $0x8] sm:$0xf]
        %v559 = vld [vmem:[%s332 + $0xc] sm:$0xf]
        %v560 = vld [vmem:[%s332 + $0x10] sm:$0xf]
        %v561 = vld [vmem:[%s332 + $0x14] sm:$0xf]
        %v562 = vld [vmem:[%s332 + $0x18] sm:$0xf]
        %v563 = vld [vmem:[%s332 + $0x1c] sm:$0xf]
        %v564 = vld [vmem:[%s332 + $0x20] sm:$0xf]
        %v565 = vld [vmem:[%s332 + $0x24] sm:$0xf]
        %v566 = vld [vmem:[%s332 + $0x28] sm:$0xf]
        %v567 = vld [vmem:[%s332 + $0x2c] sm:$0xf]
        %v568 = vld [vmem:[%s332 + $0x30] sm:$0xf]
        %v569 = vld [vmem:[%s332 + $0x34] sm:$0xf]
        %v570 = vld [vmem:[%s332 + $0x38] sm:$0xf]
        %v571 = vld [vmem:[%s332 + $0x3c] sm:$0xf]
        %v572 = vld [vmem:[%s332 + $0x40] sm:$0xf]
        %v573 = vld [vmem:[%s332 + $0x44] sm:$0xf]
        %v574 = vld [vmem:[%s332 + $0x48] sm:$0xf]
        %v575 = vld [vmem:[%s332 + $0x4c] sm:$0xf]
        %v576 = vld [vmem:[%s332 + $0x50] sm:$0xf]
        %v577 = vld [vmem:[%s332 + $0x54] sm:$0xf]
        %v578 = vld [vmem:[%s332 + $0x58] sm:$0xf]
        %v579 = vld [vmem:[%s332 + $0x5c] sm:$0xf]
        %v580 = vld [vmem:[%s332 + $0x60] sm:$0xf]
        %v581 = vld [vmem:[%s332 + $0x64] sm:$0xf]
        %v582 = vld [vmem:[%s332 + $0x68] sm:$0xf]
        %v583 = vld [vmem:[%s332 + $0x6c] sm:$0xf]
        %v584 = vld [vmem:[%s332 + $0x70] sm:$0xf]
        %v585 = vld [vmem:[%s332 + $0x74] sm:$0xf]
        %v586 = vld [vmem:[%s332 + $0x78] sm:$0xf]
        %v587 = vld [vmem:[%s332 + $0x7c] sm:$0xf]
        %v588 = vld [vmem:[%s1] sm:$0xf]
        %v589 = vld [vmem:[%s1 + $0x4] sm:$0x1]
        %v590 = vld [vmem:[%s2] sm:$0x1]
        %v592 = vlaneseq
        %v593 = vshrl.u32 %v592, 7
        %v594 = vsub.s32 0, %v593
        %v595 = vrot.slane %v590, %v594
        %v629 = vunpack.c.l.b16 %v556
        %v630 = vunpack.c.l.b16 %v557
        %v631 = vunpack.c.l.b16 %v558
        %v632 = vunpack.c.l.b16 %v559
        %v633 = vunpack.c.l.b16 %v560
        %v634 = vunpack.c.l.b16 %v561
        %v635 = vunpack.c.l.b16 %v562
        %v636 = vunpack.c.l.b16 %v563
        %v637 = vunpack.c.l.b16 %v564
        %v638 = vunpack.c.l.b16 %v565
        %v639 = vunpack.c.l.b16 %v566
        %v640 = vunpack.c.l.b16 %v567
        %v641 = vunpack.c.l.b16 %v568
        %v642 = vunpack.c.l.b16 %v569
        %v643 = vunpack.c.l.b16 %v570
        %v644 = vunpack.c.l.b16 %v571
        %v645 = vunpack.c.l.b16 %v572
        %v646 = vunpack.c.l.b16 %v573
        %v647 = vunpack.c.l.b16 %v574
        %v648 = vunpack.c.l.b16 %v575
        %v649 = vunpack.c.l.b16 %v576
        %v650 = vunpack.c.l.b16 %v577
        %v651 = vunpack.c.l.b16 %v578
        %v652 = vunpack.c.l.b16 %v579
        %v653 = vunpack.c.l.b16 %v580
        %v654 = vunpack.c.l.b16 %v581
        %v655 = vunpack.c.l.b16 %v582
        %v656 = vunpack.c.l.b16 %v583
        %v657 = vunpack.c.l.b16 %v584
        %v658 = vunpack.c.l.b16 %v585
        %v659 = vunpack.c.l.b16 %v586
        %v660 = vunpack.c.l.b16 %v587
        %v661 = vpack.c.b16 %v630, %v629
        %v662 = vpack.c.b16 %v632, %v631
        %v663 = vpack.c.b16 %v634, %v633
        %v664 = vpack.c.b16 %v636, %v635
        %v665 = vpack.c.b16 %v638, %v637
        %v666 = vpack.c.b16 %v640, %v639
        %v667 = vpack.c.b16 %v642, %v641
        %v668 = vpack.c.b16 %v644, %v643
        %v669 = vpack.c.b16 %v646, %v645
        %v670 = vpack.c.b16 %v648, %v647
        %v671 = vpack.c.b16 %v650, %v649
        %v672 = vpack.c.b16 %v652, %v651
        %v673 = vpack.c.b16 %v654, %v653
        %v674 = vpack.c.b16 %v656, %v655
        %v675 = vpack.c.b16 %v658, %v657
        %v676 = vpack.c.b16 %v660, %v659
        %v679 = vunpack.c.l.b16 %v588
        %v680 = vunpack.c.l.b16 %v589
        %v681 = vpack.c.b16 %v680, %v679
        %vm682 = vcmask 72704
        %v684 = vsel %vm682, %v661, 0
        %v687 = vsel %vm682, %v662, 0
        %v690 = vsel %vm682, %v663, 0
        %v693 = vsel %vm682, %v664, 0
        %v696 = vsel %vm682, %v665, 0
        %v699 = vsel %vm682, %v666, 0
        %v702 = vsel %vm682, %v667, 0
        %v705 = vsel %vm682, %v668, 0
        %v708 = vsel %vm682, %v669, 0
        %v711 = vsel %vm682, %v670, 0
        %v714 = vsel %vm682, %v671, 0
        %v717 = vsel %vm682, %v672, 0
        %v720 = vsel %vm682, %v673, 0
        %v723 = vsel %vm682, %v674, 0
        %v726 = vsel %vm682, %v675, 0
        %v729 = vsel %vm682, %v676, 0
        %vm731 = vcmask 1043456
        %vm732 = vcmask 1044480
        %v733 = vsel %vm731, 4294967295, 65535
        %v734 = vsel %vm732, %v733, 0
        %v736 = vand.u32 %v681, %v734
        %738 = vmatprep.subr.bf16.mxu0 0
        %739 = vmatpush1.bf16.msra.mxu0 0
        %740 = vmatprep.subr.bf16.mxu0 0
        %741 = vmatpush1.bf16.msra.mxu0 0
        %742 = vmatprep.subr.bf16.mxu0 0
        %743 = vmatpush1.bf16.msra.mxu0 0
        %744 = vmatprep.subr.bf16.mxu0 0
        %745 = vmatpush1.bf16.msra.mxu0 0
        %746 = vmatprep.subr.bf16.mxu0 0
        %747 = vmatpush1.bf16.msra.mxu0 0
        %748 = vmatprep.subr.bf16.mxu0 0
        %749 = vmatpush1.bf16.msra.mxu0 0
        %750 = vmatprep.subr.bf16.mxu0 0
        %751 = vmatpush1.bf16.msra.mxu0 0
        %752 = vmatprep.subr.bf16.mxu0 0
        %753 = vmatpush1.bf16.msra.mxu0 %v736
        %754 = vmatprep.subr.bf16.mxu0 0
        %755 = vmatpush2.bf16.msra.mxu0 0
        %756 = vmatprep.subr.bf16.mxu0 0
        %757 = vmatpush2.bf16.msra.mxu0 0
        %758 = vmatprep.subr.bf16.mxu0 0
        %759 = vmatpush2.bf16.msra.mxu0 0
        %760 = vmatprep.subr.bf16.mxu0 0
        %761 = vmatpush2.bf16.msra.mxu0 0
        %762 = vmatprep.subr.bf16.mxu0 0
        %763 = vmatpush2.bf16.msra.mxu0 0
        %764 = vmatprep.subr.bf16.mxu0 0
        %765 = vmatpush2.bf16.msra.mxu0 0
        %766 = vmatprep.subr.bf16.mxu0 0
        %767 = vmatpush2.bf16.msra.mxu0 0
        %768 = vmatprep.subr.bf16.mxu0 0
        %769 = vmatpush2.bf16.msra.mxu0 0
        %770 = vmatprep.mubr.bf16.mxu0 0
        %771 = vmatmul.mubr.bf16.gmra.mxu0 %v684
        %v772 = vpop.f32.mrf.mxu0
        %v773 = vadd.f32 %v595, %v772
        %v774 = vpop.f32.mrf.mxu0
        %v775 = vpop.f32.mrf.mxu0
        %v776 = vadd.f32 %v595, %v775
        %v777 = vpop.f32.mrf.mxu0
        %778 = vmatprep.mubr.bf16.mxu0 0
        %779 = vmatmul.mubr.bf16.gmra.mxu0 %v687
        %v780 = vpop.f32.mrf.mxu0
        %v781 = vadd.f32 %v595, %v780
        %v782 = vpop.f32.mrf.mxu0
        %v783 = vpop.f32.mrf.mxu0
        %v784 = vadd.f32 %v595, %v783
        %v785 = vpop.f32.mrf.mxu0
        %786 = vmatprep.mubr.bf16.mxu0 0
        %787 = vmatmul.mubr.bf16.gmra.mxu0 %v690
        %v788 = vpop.f32.mrf.mxu0
        %v789 = vadd.f32 %v595, %v788
        %v790 = vpop.f32.mrf.mxu0
        %v791 = vpop.f32.mrf.mxu0
        %v792 = vadd.f32 %v595, %v791
        %v793 = vpop.f32.mrf.mxu0
        %794 = vmatprep.mubr.bf16.mxu0 0
        %795 = vmatmul.mubr.bf16.gmra.mxu0 %v693
        %v796 = vpop.f32.mrf.mxu0
        %v797 = vadd.f32 %v595, %v796
        %v798 = vpop.f32.mrf.mxu0
        %v799 = vpop.f32.mrf.mxu0
        %v800 = vadd.f32 %v595, %v799
        %v801 = vpop.f32.mrf.mxu0
        %802 = vmatprep.mubr.bf16.mxu0 0
        %803 = vmatmul.mubr.bf16.gmra.mxu0 %v696
        %v804 = vpop.f32.mrf.mxu0
        %v805 = vadd.f32 %v595, %v804
        %v806 = vpop.f32.mrf.mxu0
        %v807 = vpop.f32.mrf.mxu0
        %v808 = vadd.f32 %v595, %v807
        %v809 = vpop.f32.mrf.mxu0
        %810 = vmatprep.mubr.bf16.mxu0 0
        %811 = vmatmul.mubr.bf16.gmra.mxu0 %v699
        %v812 = vpop.f32.mrf.mxu0
        %v813 = vadd.f32 %v595, %v812
        %v814 = vpop.f32.mrf.mxu0
        %v815 = vpop.f32.mrf.mxu0
        %v816 = vadd.f32 %v595, %v815
        %v817 = vpop.f32.mrf.mxu0
        %818 = vmatprep.mubr.bf16.mxu0 0
        %819 = vmatmul.mubr.bf16.gmra.mxu0 %v702
        %v820 = vpop.f32.mrf.mxu0
        %v821 = vadd.f32 %v595, %v820
        %v822 = vpop.f32.mrf.mxu0
        %v823 = vpop.f32.mrf.mxu0
        %v824 = vadd.f32 %v595, %v823
        %v825 = vpop.f32.mrf.mxu0
        %826 = vmatprep.mubr.bf16.mxu0 0
        %827 = vmatmul.mubr.bf16.gmra.mxu0 %v705
        %v828 = vpop.f32.mrf.mxu0
        %v829 = vadd.f32 %v595, %v828
        %v830 = vpop.f32.mrf.mxu0
        %v831 = vpop.f32.mrf.mxu0
        %v832 = vadd.f32 %v595, %v831
        %v833 = vpop.f32.mrf.mxu0
        %834 = vmatprep.mubr.bf16.mxu0 0
        %835 = vmatmul.mubr.bf16.gmra.mxu0 %v708
        %v836 = vpop.f32.mrf.mxu0
        %v837 = vadd.f32 %v595, %v836
        %v838 = vpop.f32.mrf.mxu0
        %v839 = vpop.f32.mrf.mxu0
        %v840 = vadd.f32 %v595, %v839
        %v841 = vpop.f32.mrf.mxu0
        %842 = vmatprep.mubr.bf16.mxu0 0
        %843 = vmatmul.mubr.bf16.gmra.mxu0 %v711
        %v844 = vpop.f32.mrf.mxu0
        %v845 = vadd.f32 %v595, %v844
        %v846 = vpop.f32.mrf.mxu0
        %v847 = vpop.f32.mrf.mxu0
        %v848 = vadd.f32 %v595, %v847
        %v849 = vpop.f32.mrf.mxu0
        %850 = vmatprep.mubr.bf16.mxu0 0
        %851 = vmatmul.mubr.bf16.gmra.mxu0 %v714
        %v852 = vpop.f32.mrf.mxu0
        %v853 = vadd.f32 %v595, %v852
        %v854 = vpop.f32.mrf.mxu0
        %v855 = vpop.f32.mrf.mxu0
        %v856 = vadd.f32 %v595, %v855
        %v857 = vpop.f32.mrf.mxu0
        %858 = vmatprep.mubr.bf16.mxu0 0
        %859 = vmatmul.mubr.bf16.gmra.mxu0 %v717
        %v860 = vpop.f32.mrf.mxu0
        %v861 = vadd.f32 %v595, %v860
        %v862 = vpop.f32.mrf.mxu0
        %v863 = vpop.f32.mrf.mxu0
        %v864 = vadd.f32 %v595, %v863
        %v865 = vpop.f32.mrf.mxu0
        %866 = vmatprep.mubr.bf16.mxu0 0
        %867 = vmatmul.mubr.bf16.gmra.mxu0 %v720
        %v868 = vpop.f32.mrf.mxu0
        %v869 = vadd.f32 %v595, %v868
        %v870 = vpop.f32.mrf.mxu0
        %v871 = vpop.f32.mrf.mxu0
        %v872 = vadd.f32 %v595, %v871
        %v873 = vpop.f32.mrf.mxu0
        %874 = vmatprep.mubr.bf16.mxu0 0
        %875 = vmatmul.mubr.bf16.gmra.mxu0 %v723
        %v876 = vpop.f32.mrf.mxu0
        %v877 = vadd.f32 %v595, %v876
        %v878 = vpop.f32.mrf.mxu0
        %v879 = vpop.f32.mrf.mxu0
        %v880 = vadd.f32 %v595, %v879
        %v881 = vpop.f32.mrf.mxu0
        %882 = vmatprep.mubr.bf16.mxu0 0
        %883 = vmatmul.mubr.bf16.gmra.mxu0 %v726
        %v884 = vpop.f32.mrf.mxu0
        %v885 = vadd.f32 %v595, %v884
        %v886 = vpop.f32.mrf.mxu0
        %v887 = vpop.f32.mrf.mxu0
        %v888 = vadd.f32 %v595, %v887
        %v889 = vpop.f32.mrf.mxu0
        %890 = vmatprep.mubr.bf16.mxu0 0
        %891 = vmatmul.mubr.bf16.gmra.mxu0 %v729
        %v892 = vpop.f32.mrf.mxu0
        %v893 = vadd.f32 %v595, %v892
        %v894 = vpop.f32.mrf.mxu0
        %v895 = vpop.f32.mrf.mxu0
        %v896 = vadd.f32 %v595, %v895
        %v897 = vpop.f32.mrf.mxu0
        %898 = vdwg.mxu0
        %v899 = vmax.f32 %v773, 0.0
        %v900 = vmax.f32 %v776, 0.0
        %v901 = vmax.f32 %v781, 0.0
        %v902 = vmax.f32 %v784, 0.0
        %v903 = vmax.f32 %v789, 0.0
        %v904 = vmax.f32 %v792, 0.0
        %v905 = vmax.f32 %v797, 0.0
        %v906 = vmax.f32 %v800, 0.0
        %v907 = vmax.f32 %v805, 0.0
        %v908 = vmax.f32 %v808, 0.0
        %v909 = vmax.f32 %v813, 0.0
        %v910 = vmax.f32 %v816, 0.0
        %v911 = vmax.f32 %v821, 0.0
        %v912 = vmax.f32 %v824, 0.0
        %v913 = vmax.f32 %v829, 0.0
        %v914 = vmax.f32 %v832, 0.0
        %v915 = vmax.f32 %v837, 0.0
        %v916 = vmax.f32 %v840, 0.0
        %v917 = vmax.f32 %v845, 0.0
        %v918 = vmax.f32 %v848, 0.0
        %v919 = vmax.f32 %v853, 0.0
        %v920 = vmax.f32 %v856, 0.0
        %v921 = vmax.f32 %v861, 0.0
        %v922 = vmax.f32 %v864, 0.0
        %v923 = vmax.f32 %v869, 0.0
        %v924 = vmax.f32 %v872, 0.0
        %v925 = vmax.f32 %v877, 0.0
        %v926 = vmax.f32 %v880, 0.0
        %v927 = vmax.f32 %v885, 0.0
        %v928 = vmax.f32 %v888, 0.0
        %v929 = vmax.f32 %v893, 0.0
        %v930 = vmax.f32 %v896, 0.0
        %v931 = vpack.c.bf16 %v900, %v899
        %v932 = vpack.c.bf16 %v902, %v901
        %v933 = vpack.c.bf16 %v904, %v903
        %v934 = vpack.c.bf16 %v906, %v905
        %v935 = vpack.c.bf16 %v908, %v907
        %v936 = vpack.c.bf16 %v910, %v909
        %v937 = vpack.c.bf16 %v912, %v911
        %v938 = vpack.c.bf16 %v914, %v913
        %v939 = vpack.c.bf16 %v916, %v915
        %v940 = vpack.c.bf16 %v918, %v917
        %v941 = vpack.c.bf16 %v920, %v919
        %v942 = vpack.c.bf16 %v922, %v921
        %v943 = vpack.c.bf16 %v924, %v923
        %v944 = vpack.c.bf16 %v926, %v925
        %v945 = vpack.c.bf16 %v928, %v927
        %v946 = vpack.c.bf16 %v930, %v929
        %v963 = vunpack.c.l.b16 %v931
        %v964 = vunpack.c.h.b16 %v931
        %v965 = vunpack.c.l.b16 %v932
        %v966 = vunpack.c.h.b16 %v932
        %v967 = vunpack.c.l.b16 %v933
        %v968 = vunpack.c.h.b16 %v933
        %v969 = vunpack.c.l.b16 %v934
        %v970 = vunpack.c.h.b16 %v934
        %v971 = vunpack.c.l.b16 %v935
        %v972 = vunpack.c.h.b16 %v935
        %v973 = vunpack.c.l.b16 %v936
        %v974 = vunpack.c.h.b16 %v936
        %v975 = vunpack.c.l.b16 %v937
        %v976 = vunpack.c.h.b16 %v937
        %v977 = vunpack.c.l.b16 %v938
        %v978 = vunpack.c.h.b16 %v938
        %v979 = vunpack.c.l.b16 %v939
        %v980 = vunpack.c.h.b16 %v939
        %v981 = vunpack.c.l.b16 %v940
        %v982 = vunpack.c.h.b16 %v940
        %v983 = vunpack.c.l.b16 %v941
        %v984 = vunpack.c.h.b16 %v941
        %v985 = vunpack.c.l.b16 %v942
        %v986 = vunpack.c.h.b16 %v942
        %v987 = vunpack.c.l.b16 %v943
        %v988 = vunpack.c.h.b16 %v943
        %v989 = vunpack.c.l.b16 %v944
        %v990 = vunpack.c.h.b16 %v944
        %v991 = vunpack.c.l.b16 %v945
        %v992 = vunpack.c.h.b16 %v945
        %v993 = vunpack.c.l.b16 %v946
        %v994 = vunpack.c.h.b16 %v946
        %v995 = vpack.c.b16 %v963, %v963
        %v996 = vpack.c.b16 %v964, %v964
        %v997 = vpack.c.b16 %v965, %v965
        %v998 = vpack.c.b16 %v966, %v966
        %v999 = vpack.c.b16 %v967, %v967
        %v1000 = vpack.c.b16 %v968, %v968
        %v1001 = vpack.c.b16 %v969, %v969
        %v1002 = vpack.c.b16 %v970, %v970
        %v1003 = vpack.c.b16 %v971, %v971
        %v1004 = vpack.c.b16 %v972, %v972
        %v1005 = vpack.c.b16 %v973, %v973
        %v1006 = vpack.c.b16 %v974, %v974
        %v1007 = vpack.c.b16 %v975, %v975
        %v1008 = vpack.c.b16 %v976, %v976
        %v1009 = vpack.c.b16 %v977, %v977
        %v1010 = vpack.c.b16 %v978, %v978
        %v1011 = vpack.c.b16 %v979, %v979
        %v1012 = vpack.c.b16 %v980, %v980
        %v1013 = vpack.c.b16 %v981, %v981
        %v1014 = vpack.c.b16 %v982, %v982
        %v1015 = vpack.c.b16 %v983, %v983
        %v1016 = vpack.c.b16 %v984, %v984
        %v1017 = vpack.c.b16 %v985, %v985
        %v1018 = vpack.c.b16 %v986, %v986
        %v1019 = vpack.c.b16 %v987, %v987
        %v1020 = vpack.c.b16 %v988, %v988
        %v1021 = vpack.c.b16 %v989, %v989
        %v1022 = vpack.c.b16 %v990, %v990
        %v1023 = vpack.c.b16 %v991, %v991
        %v1024 = vpack.c.b16 %v992, %v992
        %v1025 = vpack.c.b16 %v993, %v993
        %v1026 = vpack.c.b16 %v994, %v994
        %vm1027 = vsmask.f32 4368
        %vm1028 = vmor %vm345, %vm1027
        %v1030 = vshrl.u32 %v995, 16
        %v1032 = vrot.slane %v1030, 7
        %v1033 = vshll.u32 %v995, 16
        %v1035 = vor.u32 %v1032, %v1033
        %v1036 = vrot.slane %v1032, 4
        %v1038 = vshrl.u32 %v996, 16
        %v1040 = vrot.slane %v1038, 7
        %v1041 = vshll.u32 %v996, 16
        %v1043 = vor.u32 %v1040, %v1041
        %v1044 = vsel %vm1028, %v1036, %v1043
        %v1045 = vrot.slane %v1040, 4
        %v1047 = vshrl.u32 %v997, 16
        %v1049 = vrot.slane %v1047, 7
        %v1050 = vshll.u32 %v997, 16
        %v1052 = vor.u32 %v1049, %v1050
        %v1053 = vrot.slane %v1049, 4
        %v1055 = vshrl.u32 %v998, 16
        %v1057 = vrot.slane %v1055, 7
        %v1058 = vshll.u32 %v998, 16
        %v1060 = vor.u32 %v1057, %v1058
        %v1061 = vsel %vm1028, %v1053, %v1060
        %v1062 = vrot.slane %v1057, 4
        %v1064 = vshrl.u32 %v999, 16
        %v1066 = vrot.slane %v1064, 7
        %v1067 = vshll.u32 %v999, 16
        %v1069 = vor.u32 %v1066, %v1067
        %v1070 = vrot.slane %v1066, 4
        %v1072 = vshrl.u32 %v1000, 16
        %v1074 = vrot.slane %v1072, 7
        %v1075 = vshll.u32 %v1000, 16
        %v1077 = vor.u32 %v1074, %v1075
        %v1078 = vsel %vm1028, %v1070, %v1077
        %v1079 = vrot.slane %v1074, 4
        %v1081 = vshrl.u32 %v1001, 16
        %v1083 = vrot.slane %v1081, 7
        %v1084 = vshll.u32 %v1001, 16
        %v1086 = vor.u32 %v1083, %v1084
        %v1087 = vrot.slane %v1083, 4
        %v1089 = vshrl.u32 %v1002, 16
        %v1091 = vrot.slane %v1089, 7
        %v1092 = vshll.u32 %v1002, 16
        %v1094 = vor.u32 %v1091, %v1092
        %v1095 = vsel %vm1028, %v1087, %v1094
        %v1096 = vrot.slane %v1091, 4
        %v1098 = vshrl.u32 %v1003, 16
        %v1100 = vrot.slane %v1098, 7
        %v1101 = vshll.u32 %v1003, 16
        %v1103 = vor.u32 %v1100, %v1101
        %v1104 = vrot.slane %v1100, 4
        %v1106 = vshrl.u32 %v1004, 16
        %v1108 = vrot.slane %v1106, 7
        %v1109 = vshll.u32 %v1004, 16
        %v1111 = vor.u32 %v1108, %v1109
        %v1112 = vsel %vm1028, %v1104, %v1111
        %v1113 = vrot.slane %v1108, 4
        %v1115 = vshrl.u32 %v1005, 16
        %v1117 = vrot.slane %v1115, 7
        %v1118 = vshll.u32 %v1005, 16
        %v1120 = vor.u32 %v1117, %v1118
        %v1121 = vrot.slane %v1117, 4
        %v1123 = vshrl.u32 %v1006, 16
        %v1125 = vrot.slane %v1123, 7
        %v1126 = vshll.u32 %v1006, 16
        %v1128 = vor.u32 %v1125, %v1126
        %v1129 = vsel %vm1028, %v1121, %v1128
        %v1130 = vrot.slane %v1125, 4
        %v1132 = vshrl.u32 %v1007, 16
        %v1134 = vrot.slane %v1132, 7
        %v1135 = vshll.u32 %v1007, 16
        %v1137 = vor.u32 %v1134, %v1135
        %v1138 = vrot.slane %v1134, 4
        %v1140 = vshrl.u32 %v1008, 16
        %v1142 = vrot.slane %v1140, 7
        %v1143 = vshll.u32 %v1008, 16
        %v1145 = vor.u32 %v1142, %v1143
        %v1146 = vsel %vm1028, %v1138, %v1145
        %v1147 = vrot.slane %v1142, 4
        %v1149 = vshrl.u32 %v1009, 16
        %v1151 = vrot.slane %v1149, 7
        %v1152 = vshll.u32 %v1009, 16
        %v1154 = vor.u32 %v1151, %v1152
        %v1155 = vrot.slane %v1151, 4
        %v1157 = vshrl.u32 %v1010, 16
        %v1159 = vrot.slane %v1157, 7
        %v1160 = vshll.u32 %v1010, 16
        %v1162 = vor.u32 %v1159, %v1160
        %v1163 = vsel %vm1028, %v1155, %v1162
        %v1164 = vrot.slane %v1159, 4
        %v1166 = vshrl.u32 %v1011, 16
        %v1168 = vrot.slane %v1166, 7
        %v1169 = vshll.u32 %v1011, 16
        %v1171 = vor.u32 %v1168, %v1169
        %v1172 = vrot.slane %v1168, 4
        %v1174 = vshrl.u32 %v1012, 16
        %v1176 = vrot.slane %v1174, 7
        %v1177 = vshll.u32 %v1012, 16
        %v1179 = vor.u32 %v1176, %v1177
        %v1180 = vsel %vm1028, %v1172, %v1179
        %v1181 = vrot.slane %v1176, 4
        %v1183 = vshrl.u32 %v1013, 16
        %v1185 = vrot.slane %v1183, 7
        %v1186 = vshll.u32 %v1013, 16
        %v1188 = vor.u32 %v1185, %v1186
        %v1189 = vrot.slane %v1185, 4
        %v1191 = vshrl.u32 %v1014, 16
        %v1193 = vrot.slane %v1191, 7
        %v1194 = vshll.u32 %v1014, 16
        %v1196 = vor.u32 %v1193, %v1194
        %v1197 = vsel %vm1028, %v1189, %v1196
        %v1198 = vrot.slane %v1193, 4
        %v1200 = vshrl.u32 %v1015, 16
        %v1202 = vrot.slane %v1200, 7
        %v1203 = vshll.u32 %v1015, 16
        %v1205 = vor.u32 %v1202, %v1203
        %v1206 = vrot.slane %v1202, 4
        %v1208 = vshrl.u32 %v1016, 16
        %v1210 = vrot.slane %v1208, 7
        %v1211 = vshll.u32 %v1016, 16
        %v1213 = vor.u32 %v1210, %v1211
        %v1214 = vsel %vm1028, %v1206, %v1213
        %v1215 = vrot.slane %v1210, 4
        %v1217 = vshrl.u32 %v1017, 16
        %v1219 = vrot.slane %v1217, 7
        %v1220 = vshll.u32 %v1017, 16
        %v1222 = vor.u32 %v1219, %v1220
        %v1223 = vrot.slane %v1219, 4
        %v1225 = vshrl.u32 %v1018, 16
        %v1227 = vrot.slane %v1225, 7
        %v1228 = vshll.u32 %v1018, 16
        %v1230 = vor.u32 %v1227, %v1228
        %v1231 = vsel %vm1028, %v1223, %v1230
        %v1232 = vrot.slane %v1227, 4
        %v1234 = vshrl.u32 %v1019, 16
        %v1236 = vrot.slane %v1234, 7
        %v1237 = vshll.u32 %v1019, 16
        %v1239 = vor.u32 %v1236, %v1237
        %v1240 = vrot.slane %v1236, 4
        %v1242 = vshrl.u32 %v1020, 16
        %v1244 = vrot.slane %v1242, 7
        %v1245 = vshll.u32 %v1020, 16
        %v1247 = vor.u32 %v1244, %v1245
        %v1248 = vsel %vm1028, %v1240, %v1247
        %v1249 = vrot.slane %v1244, 4
        %v1251 = vshrl.u32 %v1021, 16
        %v1253 = vrot.slane %v1251, 7
        %v1254 = vshll.u32 %v1021, 16
        %v1256 = vor.u32 %v1253, %v1254
        %v1257 = vrot.slane %v1253, 4
        %v1259 = vshrl.u32 %v1022, 16
        %v1261 = vrot.slane %v1259, 7
        %v1262 = vshll.u32 %v1022, 16
        %v1264 = vor.u32 %v1261, %v1262
        %v1265 = vsel %vm1028, %v1257, %v1264
        %v1266 = vrot.slane %v1261, 4
        %v1268 = vshrl.u32 %v1023, 16
        %v1270 = vrot.slane %v1268, 7
        %v1271 = vshll.u32 %v1023, 16
        %v1273 = vor.u32 %v1270, %v1271
        %v1274 = vrot.slane %v1270, 4
        %v1276 = vshrl.u32 %v1024, 16
        %v1278 = vrot.slane %v1276, 7
        %v1279 = vshll.u32 %v1024, 16
        %v1281 = vor.u32 %v1278, %v1279
        %v1282 = vsel %vm1028, %v1274, %v1281
        %v1283 = vrot.slane %v1278, 4
        %v1285 = vshrl.u32 %v1025, 16
        %v1287 = vrot.slane %v1285, 7
        %v1288 = vshll.u32 %v1025, 16
        %v1290 = vor.u32 %v1287, %v1288
        %v1291 = vrot.slane %v1287, 4
        %v1293 = vshrl.u32 %v1026, 16
        %v1295 = vrot.slane %v1293, 7
        %v1296 = vshll.u32 %v1026, 16
        %v1298 = vor.u32 %v1295, %v1296
        %v1299 = vsel %vm1028, %v1291, %v1298
        %v1300 = vrot.slane %v1295, 4
        %s1349 = scalar_lea.vmem [#allocation2], 12
        %vm1350 = vcmask 257024
        %vm1351 = vmand %vm1350, %vm401
        %v1352 = vld [vmem:[%s1349] sm:$0xf]
        %v1353 = vsel %vm1351, %v1035, %v1352
        %1354 = vst [vmem:[%s1349] sm:$0xf] %v1353
        %1355 = vst.msk [vmem:[%s1349 + $0x4] sm:$0xf] %vm335, %v1044
        %v1356 = vld [vmem:[%s1349 + $0x8] sm:$0x1]
        %v1357 = vsel %vm346, %v1045, %v1356
        %1358 = vst [vmem:[%s1349 + $0x8] sm:$0x1] %v1357
        %v1359 = vld [vmem:[%s1349 + $0xc] sm:$0xf]
        %v1360 = vsel %vm1351, %v1052, %v1359
        %1361 = vst [vmem:[%s1349 + $0xc] sm:$0xf] %v1360
        %1362 = vst.msk [vmem:[%s1349 + $0x10] sm:$0xf] %vm335, %v1061
        %v1363 = vld [vmem:[%s1349 + $0x14] sm:$0x1]
        %v1364 = vsel %vm346, %v1062, %v1363
        %1365 = vst [vmem:[%s1349 + $0x14] sm:$0x1] %v1364
        %v1366 = vld [vmem:[%s1349 + $0x18] sm:$0xf]
        %v1367 = vsel %vm1351, %v1069, %v1366
        %1368 = vst [vmem:[%s1349 + $0x18] sm:$0xf] %v1367
        %1369 = vst.msk [vmem:[%s1349 + $0x1c] sm:$0xf] %vm335, %v1078
        %v1370 = vld [vmem:[%s1349 + $0x20] sm:$0x1]
        %v1371 = vsel %vm346, %v1079, %v1370
        %1372 = vst [vmem:[%s1349 + $0x20] sm:$0x1] %v1371
        %v1373 = vld [vmem:[%s1349 + $0x24] sm:$0xf]
        %v1374 = vsel %vm1351, %v1086, %v1373
        %1375 = vst [vmem:[%s1349 + $0x24] sm:$0xf] %v1374
        %1376 = vst.msk [vmem:[%s1349 + $0x28] sm:$0xf] %vm335, %v1095
        %v1377 = vld [vmem:[%s1349 + $0x2c] sm:$0x1]
        %v1378 = vsel %vm346, %v1096, %v1377
        %1379 = vst [vmem:[%s1349 + $0x2c] sm:$0x1] %v1378
        %v1380 = vld [vmem:[%s1349 + $0x30] sm:$0xf]
        %v1381 = vsel %vm1351, %v1103, %v1380
        %1382 = vst [vmem:[%s1349 + $0x30] sm:$0xf] %v1381
        %1383 = vst.msk [vmem:[%s1349 + $0x34] sm:$0xf] %vm335, %v1112
        %v1384 = vld [vmem:[%s1349 + $0x38] sm:$0x1]
        %v1385 = vsel %vm346, %v1113, %v1384
        %1386 = vst [vmem:[%s1349 + $0x38] sm:$0x1] %v1385
        %v1387 = vld [vmem:[%s1349 + $0x3c] sm:$0xf]
        %v1388 = vsel %vm1351, %v1120, %v1387
        %1389 = vst [vmem:[%s1349 + $0x3c] sm:$0xf] %v1388
        %1390 = vst.msk [vmem:[%s1349 + $0x40] sm:$0xf] %vm335, %v1129
        %v1391 = vld [vmem:[%s1349 + $0x44] sm:$0x1]
        %v1392 = vsel %vm346, %v1130, %v1391
        %1393 = vst [vmem:[%s1349 + $0x44] sm:$0x1] %v1392
        %v1394 = vld [vmem:[%s1349 + $0x48] sm:$0xf]
        %v1395 = vsel %vm1351, %v1137, %v1394
        %1396 = vst [vmem:[%s1349 + $0x48] sm:$0xf] %v1395
        %1397 = vst.msk [vmem:[%s1349 + $0x4c] sm:$0xf] %vm335, %v1146
        %v1398 = vld [vmem:[%s1349 + $0x50] sm:$0x1]
        %v1399 = vsel %vm346, %v1147, %v1398
        %1400 = vst [vmem:[%s1349 + $0x50] sm:$0x1] %v1399
        %v1401 = vld [vmem:[%s1349 + $0x54] sm:$0xf]
        %v1402 = vsel %vm1351, %v1154, %v1401
        %1403 = vst [vmem:[%s1349 + $0x54] sm:$0xf] %v1402
        %1404 = vst.msk [vmem:[%s1349 + $0x58] sm:$0xf] %vm335, %v1163
        %v1405 = vld [vmem:[%s1349 + $0x5c] sm:$0x1]
        %v1406 = vsel %vm346, %v1164, %v1405
        %1407 = vst [vmem:[%s1349 + $0x5c] sm:$0x1] %v1406
        %v1408 = vld [vmem:[%s1349 + $0x60] sm:$0xf]
        %v1409 = vsel %vm1351, %v1171, %v1408
        %1410 = vst [vmem:[%s1349 + $0x60] sm:$0xf] %v1409
        %1411 = vst.msk [vmem:[%s1349 + $0x64] sm:$0xf] %vm335, %v1180
        %v1412 = vld [vmem:[%s1349 + $0x68] sm:$0x1]
        %v1413 = vsel %vm346, %v1181, %v1412
        %1414 = vst [vmem:[%s1349 + $0x68] sm:$0x1] %v1413
        %v1415 = vld [vmem:[%s1349 + $0x6c] sm:$0xf]
        %v1416 = vsel %vm1351, %v1188, %v1415
        %1417 = vst [vmem:[%s1349 + $0x6c] sm:$0xf] %v1416
        %1418 = vst.msk [vmem:[%s1349 + $0x70] sm:$0xf] %vm335, %v1197
        %v1419 = vld [vmem:[%s1349 + $0x74] sm:$0x1]
        %v1420 = vsel %vm346, %v1198, %v1419
        %1421 = vst [vmem:[%s1349 + $0x74] sm:$0x1] %v1420
        %v1422 = vld [vmem:[%s1349 + $0x78] sm:$0xf]
        %v1423 = vsel %vm1351, %v1205, %v1422
        %1424 = vst [vmem:[%s1349 + $0x78] sm:$0xf] %v1423
        %1425 = vst.msk [vmem:[%s1349 + $0x7c] sm:$0xf] %vm335, %v1214
        %v1426 = vld [vmem:[%s1349 + $0x80] sm:$0x1]
        %v1427 = vsel %vm346, %v1215, %v1426
        %1428 = vst [vmem:[%s1349 + $0x80] sm:$0x1] %v1427
        %v1429 = vld [vmem:[%s1349 + $0x84] sm:$0xf]
        %v1430 = vsel %vm1351, %v1222, %v1429
        %1431 = vst [vmem:[%s1349 + $0x84] sm:$0xf] %v1430
        %1432 = vst.msk [vmem:[%s1349 + $0x88] sm:$0xf] %vm335, %v1231
        %v1433 = vld [vmem:[%s1349 + $0x8c] sm:$0x1]
        %v1434 = vsel %vm346, %v1232, %v1433
        %1435 = vst [vmem:[%s1349 + $0x8c] sm:$0x1] %v1434
        %v1436 = vld [vmem:[%s1349 + $0x90] sm:$0xf]
        %v1437 = vsel %vm1351, %v1239, %v1436
        %1438 = vst [vmem:[%s1349 + $0x90] sm:$0xf] %v1437
        %1439 = vst.msk [vmem:[%s1349 + $0x94] sm:$0xf] %vm335, %v1248
        %v1440 = vld [vmem:[%s1349 + $0x98] sm:$0x1]
        %v1441 = vsel %vm346, %v1249, %v1440
        %1442 = vst [vmem:[%s1349 + $0x98] sm:$0x1] %v1441
        %v1443 = vld [vmem:[%s1349 + $0x9c] sm:$0xf]
        %v1444 = vsel %vm1351, %v1256, %v1443
        %1445 = vst [vmem:[%s1349 + $0x9c] sm:$0xf] %v1444
        %1446 = vst.msk [vmem:[%s1349 + $0xa0] sm:$0xf] %vm335, %v1265
        %v1447 = vld [vmem:[%s1349 + $0xa4] sm:$0x1]
        %v1448 = vsel %vm346, %v1266, %v1447
        %1449 = vst [vmem:[%s1349 + $0xa4] sm:$0x1] %v1448
        %v1450 = vld [vmem:[%s1349 + $0xa8] sm:$0xf]
        %v1451 = vsel %vm1351, %v1273, %v1450
        %1452 = vst [vmem:[%s1349 + $0xa8] sm:$0xf] %v1451
        %1453 = vst.msk [vmem:[%s1349 + $0xac] sm:$0xf] %vm335, %v1282
        %v1454 = vld [vmem:[%s1349 + $0xb0] sm:$0x1]
        %v1455 = vsel %vm346, %v1283, %v1454
        %1456 = vst [vmem:[%s1349 + $0xb0] sm:$0x1] %v1455
        %v1457 = vld [vmem:[%s1349 + $0xb4] sm:$0xf]
        %v1458 = vsel %vm1351, %v1290, %v1457
        %1459 = vst [vmem:[%s1349 + $0xb4] sm:$0xf] %v1458
        %1460 = vst.msk [vmem:[%s1349 + $0xb8] sm:$0xf] %vm335, %v1299
        %v1461 = vld [vmem:[%s1349 + $0xbc] sm:$0x1]
        %v1462 = vsel %vm346, %v1300, %v1461
        %1463 = vst [vmem:[%s1349 + $0xbc] sm:$0x1] %v1462
        %v1464 = vld [vmem:[#allocation2] sm:$0xf]
        %v1465 = vld [vmem:[#allocation2 + $0x4] sm:$0xf]
        %v1466 = vld [vmem:[#allocation2 + $0xc] sm:$0xf]
        %v1467 = vld [vmem:[#allocation2 + $0x10] sm:$0xf]
        %v1468 = vld [vmem:[#allocation2 + $0x18] sm:$0xf]
        %v1469 = vld [vmem:[#allocation2 + $0x1c] sm:$0xf]
        %v1470 = vld [vmem:[#allocation2 + $0x24] sm:$0xf]
        %v1471 = vld [vmem:[#allocation2 + $0x28] sm:$0xf]
        %v1472 = vld [vmem:[#allocation2 + $0x30] sm:$0xf]
        %v1473 = vld [vmem:[#allocation2 + $0x34] sm:$0xf]
        %v1474 = vld [vmem:[#allocation2 + $0x3c] sm:$0xf]
        %v1475 = vld [vmem:[#allocation2 + $0x40] sm:$0xf]
        %v1476 = vld [vmem:[#allocation2 + $0x48] sm:$0xf]
        %v1477 = vld [vmem:[#allocation2 + $0x4c] sm:$0xf]
        %v1478 = vld [vmem:[#allocation2 + $0x54] sm:$0xf]
        %v1479 = vld [vmem:[#allocation2 + $0x58] sm:$0xf]
        %v1480 = vld [vmem:[#allocation2 + $0x60] sm:$0xf]
        %v1481 = vld [vmem:[#allocation2 + $0x64] sm:$0xf]
        %v1482 = vld [vmem:[#allocation2 + $0x6c] sm:$0xf]
        %v1483 = vld [vmem:[#allocation2 + $0x70] sm:$0xf]
        %v1484 = vld [vmem:[#allocation2 + $0x78] sm:$0xf]
        %v1485 = vld [vmem:[#allocation2 + $0x7c] sm:$0xf]
        %v1486 = vld [vmem:[#allocation2 + $0x84] sm:$0xf]
        %v1487 = vld [vmem:[#allocation2 + $0x88] sm:$0xf]
        %v1488 = vld [vmem:[#allocation2 + $0x90] sm:$0xf]
        %v1489 = vld [vmem:[#allocation2 + $0x94] sm:$0xf]
        %v1490 = vld [vmem:[#allocation2 + $0x9c] sm:$0xf]
        %v1491 = vld [vmem:[#allocation2 + $0xa0] sm:$0xf]
        %v1492 = vld [vmem:[#allocation2 + $0xa8] sm:$0xf]
        %v1493 = vld [vmem:[#allocation2 + $0xac] sm:$0xf]
        %v1494 = vld [vmem:[#allocation2 + $0xb4] sm:$0xf]
        %v1495 = vld [vmem:[#allocation2 + $0xb8] sm:$0xf]
        %v1496 = vld [vmem:[#allocation2 + $0x8] sm:$0x1]
        %v1497 = vld [vmem:[#allocation2 + $0x14] sm:$0x1]
        %v1498 = vld [vmem:[#allocation2 + $0x20] sm:$0x1]
        %v1499 = vld [vmem:[#allocation2 + $0x2c] sm:$0x1]
        %v1500 = vld [vmem:[#allocation2 + $0x38] sm:$0x1]
        %v1501 = vld [vmem:[#allocation2 + $0x44] sm:$0x1]
        %v1502 = vld [vmem:[#allocation2 + $0x50] sm:$0x1]
        %v1503 = vld [vmem:[#allocation2 + $0x5c] sm:$0x1]
        %v1504 = vld [vmem:[#allocation2 + $0x68] sm:$0x1]
        %v1505 = vld [vmem:[#allocation2 + $0x74] sm:$0x1]
        %v1506 = vld [vmem:[#allocation2 + $0x80] sm:$0x1]
        %v1507 = vld [vmem:[#allocation2 + $0x8c] sm:$0x1]
        %v1508 = vld [vmem:[#allocation2 + $0x98] sm:$0x1]
        %v1509 = vld [vmem:[#allocation2 + $0xa4] sm:$0x1]
        %v1510 = vld [vmem:[#allocation2 + $0xb0] sm:$0x1]
        %v1511 = vld [vmem:[#allocation2 + $0xbc] sm:$0x1]
        %v1512 = vld [vmem:[#allocation2] sm:$0xe]
        %v1513 = vld [vmem:[#allocation2 + $0xc] sm:$0xe]
        %v1514 = vld [vmem:[#allocation2 + $0x18] sm:$0xe]
        %v1515 = vld [vmem:[#allocation2 + $0x24] sm:$0xe]
        %v1516 = vld [vmem:[#allocation2 + $0x30] sm:$0xe]
        %v1517 = vld [vmem:[#allocation2 + $0x3c] sm:$0xe]
        %v1518 = vld [vmem:[#allocation2 + $0x48] sm:$0xe]
        %v1519 = vld [vmem:[#allocation2 + $0x54] sm:$0xe]
        %v1520 = vld [vmem:[#allocation2 + $0x60] sm:$0xe]
        %v1521 = vld [vmem:[#allocation2 + $0x6c] sm:$0xe]
        %v1522 = vld [vmem:[#allocation2 + $0x78] sm:$0xe]
        %v1523 = vld [vmem:[#allocation2 + $0x84] sm:$0xe]
        %v1524 = vld [vmem:[#allocation2 + $0x90] sm:$0xe]
        %v1525 = vld [vmem:[#allocation2 + $0x9c] sm:$0xe]
        %v1526 = vld [vmem:[#allocation2 + $0xa8] sm:$0xe]
        %v1527 = vld [vmem:[#allocation2 + $0xb4] sm:$0xe]
        %v1560 = vunpack.c.l.b16 %v1464
        %v1561 = vunpack.c.l.b16 %v1465
        %v1562 = vunpack.c.l.b16 %v1466
        %v1563 = vunpack.c.l.b16 %v1467
        %v1564 = vunpack.c.l.b16 %v1468
        %v1565 = vunpack.c.l.b16 %v1469
        %v1566 = vunpack.c.l.b16 %v1470
        %v1567 = vunpack.c.l.b16 %v1471
        %v1568 = vunpack.c.l.b16 %v1472
        %v1569 = vunpack.c.l.b16 %v1473
        %v1570 = vunpack.c.l.b16 %v1474
        %v1571 = vunpack.c.l.b16 %v1475
        %v1572 = vunpack.c.l.b16 %v1476
        %v1573 = vunpack.c.l.b16 %v1477
        %v1574 = vunpack.c.l.b16 %v1478
        %v1575 = vunpack.c.l.b16 %v1479
        %v1576 = vunpack.c.l.b16 %v1480
        %v1577 = vunpack.c.l.b16 %v1481
        %v1578 = vunpack.c.l.b16 %v1482
        %v1579 = vunpack.c.l.b16 %v1483
        %v1580 = vunpack.c.l.b16 %v1484
        %v1581 = vunpack.c.l.b16 %v1485
        %v1582 = vunpack.c.l.b16 %v1486
        %v1583 = vunpack.c.l.b16 %v1487
        %v1584 = vunpack.c.l.b16 %v1488
        %v1585 = vunpack.c.l.b16 %v1489
        %v1586 = vunpack.c.l.b16 %v1490
        %v1587 = vunpack.c.l.b16 %v1491
        %v1588 = vunpack.c.l.b16 %v1492
        %v1589 = vunpack.c.l.b16 %v1493
        %v1590 = vunpack.c.l.b16 %v1494
        %v1591 = vunpack.c.l.b16 %v1495
        %v1592 = vpack.c.b16 %v1561, %v1560
        %v1593 = vpack.c.b16 %v1563, %v1562
        %v1594 = vpack.c.b16 %v1565, %v1564
        %v1595 = vpack.c.b16 %v1567, %v1566
        %v1596 = vpack.c.b16 %v1569, %v1568
        %v1597 = vpack.c.b16 %v1571, %v1570
        %v1598 = vpack.c.b16 %v1573, %v1572
        %v1599 = vpack.c.b16 %v1575, %v1574
        %v1600 = vpack.c.b16 %v1577, %v1576
        %v1601 = vpack.c.b16 %v1579, %v1578
        %v1602 = vpack.c.b16 %v1581, %v1580
        %v1603 = vpack.c.b16 %v1583, %v1582
        %v1604 = vpack.c.b16 %v1585, %v1584
        %v1605 = vpack.c.b16 %v1587, %v1586
        %v1606 = vpack.c.b16 %v1589, %v1588
        %v1607 = vpack.c.b16 %v1591, %v1590
        %v1624 = vunpack.c.l.b16 %v1496
        %v1625 = vunpack.c.l.b16 %v1497
        %v1626 = vunpack.c.l.b16 %v1498
        %v1627 = vunpack.c.l.b16 %v1499
        %v1628 = vunpack.c.l.b16 %v1500
        %v1629 = vunpack.c.l.b16 %v1501
        %v1630 = vunpack.c.l.b16 %v1502
        %v1631 = vunpack.c.l.b16 %v1503
        %v1632 = vunpack.c.l.b16 %v1504
        %v1633 = vunpack.c.l.b16 %v1505
        %v1634 = vunpack.c.l.b16 %v1506
        %v1635 = vunpack.c.l.b16 %v1507
        %v1636 = vunpack.c.l.b16 %v1508
        %v1637 = vunpack.c.l.b16 %v1509
        %v1638 = vunpack.c.l.b16 %v1510
        %v1639 = vunpack.c.l.b16 %v1511
        %v1640 = vpack.c.b16 %v1624, %v1624
        %v1641 = vpack.c.b16 %v1625, %v1625
        %v1642 = vpack.c.b16 %v1626, %v1626
        %v1643 = vpack.c.b16 %v1627, %v1627
        %v1644 = vpack.c.b16 %v1628, %v1628
        %v1645 = vpack.c.b16 %v1629, %v1629
        %v1646 = vpack.c.b16 %v1630, %v1630
        %v1647 = vpack.c.b16 %v1631, %v1631
        %v1648 = vpack.c.b16 %v1632, %v1632
        %v1649 = vpack.c.b16 %v1633, %v1633
        %v1650 = vpack.c.b16 %v1634, %v1634
        %v1651 = vpack.c.b16 %v1635, %v1635
        %v1652 = vpack.c.b16 %v1636, %v1636
        %v1653 = vpack.c.b16 %v1637, %v1637
        %v1654 = vpack.c.b16 %v1638, %v1638
        %v1655 = vpack.c.b16 %v1639, %v1639
        %vm1656 = vsmask.f32 7424
        %v1658 = vshrl.u32 %v1592, 16
        %v1660 = vshll.u32 %v1592, 16
        %v1662 = vrot.slane %v1660, 1
        %v1663 = vor.u32 %v1658, %v1662
        %v1665 = vshll.u32 %v1640, 16
        %v1667 = vrot.slane %v1665, 1
        %v1668 = vsel %vm1656, %v1663, %v1667
        %v1670 = vshrl.u32 %v1593, 16
        %v1672 = vshll.u32 %v1593, 16
        %v1674 = vrot.slane %v1672, 1
        %v1675 = vor.u32 %v1670, %v1674
        %v1677 = vshll.u32 %v1641, 16
        %v1679 = vrot.slane %v1677, 1
        %v1680 = vsel %vm1656, %v1675, %v1679
        %v1682 = vshrl.u32 %v1594, 16
        %v1684 = vshll.u32 %v1594, 16
        %v1686 = vrot.slane %v1684, 1
        %v1687 = vor.u32 %v1682, %v1686
        %v1689 = vshll.u32 %v1642, 16
        %v1691 = vrot.slane %v1689, 1
        %v1692 = vsel %vm1656, %v1687, %v1691
        %v1694 = vshrl.u32 %v1595, 16
        %v1696 = vshll.u32 %v1595, 16
        %v1698 = vrot.slane %v1696, 1
        %v1699 = vor.u32 %v1694, %v1698
        %v1701 = vshll.u32 %v1643, 16
        %v1703 = vrot.slane %v1701, 1
        %v1704 = vsel %vm1656, %v1699, %v1703
        %v1706 = vshrl.u32 %v1596, 16
        %v1708 = vshll.u32 %v1596, 16
        %v1710 = vrot.slane %v1708, 1
        %v1711 = vor.u32 %v1706, %v1710
        %v1713 = vshll.u32 %v1644, 16
        %v1715 = vrot.slane %v1713, 1
        %v1716 = vsel %vm1656, %v1711, %v1715
        %v1718 = vshrl.u32 %v1597, 16
        %v1720 = vshll.u32 %v1597, 16
        %v1722 = vrot.slane %v1720, 1
        %v1723 = vor.u32 %v1718, %v1722
        %v1725 = vshll.u32 %v1645, 16
        %v1727 = vrot.slane %v1725, 1
        %v1728 = vsel %vm1656, %v1723, %v1727
        %v1730 = vshrl.u32 %v1598, 16
        %v1732 = vshll.u32 %v1598, 16
        %v1734 = vrot.slane %v1732, 1
        %v1735 = vor.u32 %v1730, %v1734
        %v1737 = vshll.u32 %v1646, 16
        %v1739 = vrot.slane %v1737, 1
        %v1740 = vsel %vm1656, %v1735, %v1739
        %v1742 = vshrl.u32 %v1599, 16
        %v1744 = vshll.u32 %v1599, 16
        %v1746 = vrot.slane %v1744, 1
        %v1747 = vor.u32 %v1742, %v1746
        %v1749 = vshll.u32 %v1647, 16
        %v1751 = vrot.slane %v1749, 1
        %v1752 = vsel %vm1656, %v1747, %v1751
        %v1754 = vshrl.u32 %v1600, 16
        %v1756 = vshll.u32 %v1600, 16
        %v1758 = vrot.slane %v1756, 1
        %v1759 = vor.u32 %v1754, %v1758
        %v1761 = vshll.u32 %v1648, 16
        %v1763 = vrot.slane %v1761, 1
        %v1764 = vsel %vm1656, %v1759, %v1763
        %v1766 = vshrl.u32 %v1601, 16
        %v1768 = vshll.u32 %v1601, 16
        %v1770 = vrot.slane %v1768, 1
        %v1771 = vor.u32 %v1766, %v1770
        %v1773 = vshll.u32 %v1649, 16
        %v1775 = vrot.slane %v1773, 1
        %v1776 = vsel %vm1656, %v1771, %v1775
        %v1778 = vshrl.u32 %v1602, 16
        %v1780 = vshll.u32 %v1602, 16
        %v1782 = vrot.slane %v1780, 1
        %v1783 = vor.u32 %v1778, %v1782
        %v1785 = vshll.u32 %v1650, 16
        %v1787 = vrot.slane %v1785, 1
        %v1788 = vsel %vm1656, %v1783, %v1787
        %v1790 = vshrl.u32 %v1603, 16
        %v1792 = vshll.u32 %v1603, 16
        %v1794 = vrot.slane %v1792, 1
        %v1795 = vor.u32 %v1790, %v1794
        %v1797 = vshll.u32 %v1651, 16
        %v1799 = vrot.slane %v1797, 1
        %v1800 = vsel %vm1656, %v1795, %v1799
        %v1802 = vshrl.u32 %v1604, 16
        %v1804 = vshll.u32 %v1604, 16
        %v1806 = vrot.slane %v1804, 1
        %v1807 = vor.u32 %v1802, %v1806
        %v1809 = vshll.u32 %v1652, 16
        %v1811 = vrot.slane %v1809, 1
        %v1812 = vsel %vm1656, %v1807, %v1811
        %v1814 = vshrl.u32 %v1605, 16
        %v1816 = vshll.u32 %v1605, 16
        %v1818 = vrot.slane %v1816, 1
        %v1819 = vor.u32 %v1814, %v1818
        %v1821 = vshll.u32 %v1653, 16
        %v1823 = vrot.slane %v1821, 1
        %v1824 = vsel %vm1656, %v1819, %v1823
        %v1826 = vshrl.u32 %v1606, 16
        %v1828 = vshll.u32 %v1606, 16
        %v1830 = vrot.slane %v1828, 1
        %v1831 = vor.u32 %v1826, %v1830
        %v1833 = vshll.u32 %v1654, 16
        %v1835 = vrot.slane %v1833, 1
        %v1836 = vsel %vm1656, %v1831, %v1835
        %v1838 = vshrl.u32 %v1607, 16
        %v1840 = vshll.u32 %v1607, 16
        %v1842 = vrot.slane %v1840, 1
        %v1843 = vor.u32 %v1838, %v1842
        %v1845 = vshll.u32 %v1655, 16
        %v1847 = vrot.slane %v1845, 1
        %v1848 = vsel %vm1656, %v1843, %v1847
        %1849 = vrot.lane.b32.xlu0 %v1668, 32
        %v1850 = vpop.permute.xlu0 %1849
        %1851 = vrot.lane.b32.xlu0 %v1680, 32
        %v1852 = vpop.permute.xlu0 %1851
        %1853 = vrot.lane.b32.xlu0 %v1692, 32
        %v1854 = vpop.permute.xlu0 %1853
        %1855 = vrot.lane.b32.xlu0 %v1704, 32
        %v1856 = vpop.permute.xlu0 %1855
        %1857 = vrot.lane.b32.xlu0 %v1716, 32
        %v1858 = vpop.permute.xlu0 %1857
        %1859 = vrot.lane.b32.xlu0 %v1728, 32
        %v1860 = vpop.permute.xlu0 %1859
        %1861 = vrot.lane.b32.xlu0 %v1740, 32
        %v1862 = vpop.permute.xlu0 %1861
        %1863 = vrot.lane.b32.xlu0 %v1752, 32
        %v1864 = vpop.permute.xlu0 %1863
        %1865 = vrot.lane.b32.xlu0 %v1764, 32
        %v1866 = vpop.permute.xlu0 %1865
        %1867 = vrot.lane.b32.xlu0 %v1776, 32
        %v1868 = vpop.permute.xlu0 %1867
        %1869 = vrot.lane.b32.xlu0 %v1788, 32
        %v1870 = vpop.permute.xlu0 %1869
        %1871 = vrot.lane.b32.xlu0 %v1800, 32
        %v1872 = vpop.permute.xlu0 %1871
        %1873 = vrot.lane.b32.xlu0 %v1812, 32
        %v1874 = vpop.permute.xlu0 %1873
        %1875 = vrot.lane.b32.xlu0 %v1824, 32
        %v1876 = vpop.permute.xlu0 %1875
        %1877 = vrot.lane.b32.xlu0 %v1836, 32
        %v1878 = vpop.permute.xlu0 %1877
        %1879 = vrot.lane.b32.xlu0 %v1848, 32
        %v1880 = vpop.permute.xlu0 %1879
        %v1897 = vunpack.c.l.b16 %v1512
        %v1898 = vunpack.c.l.b16 %v1513
        %v1899 = vunpack.c.l.b16 %v1514
        %v1900 = vunpack.c.l.b16 %v1515
        %v1901 = vunpack.c.l.b16 %v1516
        %v1902 = vunpack.c.l.b16 %v1517
        %v1903 = vunpack.c.l.b16 %v1518
        %v1904 = vunpack.c.l.b16 %v1519
        %v1905 = vunpack.c.l.b16 %v1520
        %v1906 = vunpack.c.l.b16 %v1521
        %v1907 = vunpack.c.l.b16 %v1522
        %v1908 = vunpack.c.l.b16 %v1523
        %v1909 = vunpack.c.l.b16 %v1524
        %v1910 = vunpack.c.l.b16 %v1525
        %v1911 = vunpack.c.l.b16 %v1526
        %v1912 = vunpack.c.l.b16 %v1527
        %v1913 = vpack.c.b16 %v1561, %v1897
        %v1914 = vpack.c.b16 %v1563, %v1898
        %v1915 = vpack.c.b16 %v1565, %v1899
        %v1916 = vpack.c.b16 %v1567, %v1900
        %v1917 = vpack.c.b16 %v1569, %v1901
        %v1918 = vpack.c.b16 %v1571, %v1902
        %v1919 = vpack.c.b16 %v1573, %v1903
        %v1920 = vpack.c.b16 %v1575, %v1904
        %v1921 = vpack.c.b16 %v1577, %v1905
        %v1922 = vpack.c.b16 %v1579, %v1906
        %v1923 = vpack.c.b16 %v1581, %v1907
        %v1924 = vpack.c.b16 %v1583, %v1908
        %v1925 = vpack.c.b16 %v1585, %v1909
        %v1926 = vpack.c.b16 %v1587, %v1910
        %v1927 = vpack.c.b16 %v1589, %v1911
        %v1928 = vpack.c.b16 %v1591, %v1912
        %vm1929 = vcmask 1046528
        %v1930 = vrot.slane %v1913, 1
        %v1931 = vrot.slane %v1640, 1
        %v1932 = vsel %vm1929, %v1930, %v1931
        %v1933 = vrot.slane %v1914, 1
        %v1934 = vrot.slane %v1641, 1
        %v1935 = vsel %vm1929, %v1933, %v1934
        %v1936 = vrot.slane %v1915, 1
        %v1937 = vrot.slane %v1642, 1
        %v1938 = vsel %vm1929, %v1936, %v1937
        %v1939 = vrot.slane %v1916, 1
        %v1940 = vrot.slane %v1643, 1
        %v1941 = vsel %vm1929, %v1939, %v1940
        %v1942 = vrot.slane %v1917, 1
        %v1943 = vrot.slane %v1644, 1
        %v1944 = vsel %vm1929, %v1942, %v1943
        %v1945 = vrot.slane %v1918, 1
        %v1946 = vrot.slane %v1645, 1
        %v1947 = vsel %vm1929, %v1945, %v1946
        %v1948 = vrot.slane %v1919, 1
        %v1949 = vrot.slane %v1646, 1
        %v1950 = vsel %vm1929, %v1948, %v1949
        %v1951 = vrot.slane %v1920, 1
        %v1952 = vrot.slane %v1647, 1
        %v1953 = vsel %vm1929, %v1951, %v1952
        %v1954 = vrot.slane %v1921, 1
        %v1955 = vrot.slane %v1648, 1
        %v1956 = vsel %vm1929, %v1954, %v1955
        %v1957 = vrot.slane %v1922, 1
        %v1958 = vrot.slane %v1649, 1
        %v1959 = vsel %vm1929, %v1957, %v1958
        %v1960 = vrot.slane %v1923, 1
        %v1961 = vrot.slane %v1650, 1
        %v1962 = vsel %vm1929, %v1960, %v1961
        %v1963 = vrot.slane %v1924, 1
        %v1964 = vrot.slane %v1651, 1
        %v1965 = vsel %vm1929, %v1963, %v1964
        %v1966 = vrot.slane %v1925, 1
        %v1967 = vrot.slane %v1652, 1
        %v1968 = vsel %vm1929, %v1966, %v1967
        %v1969 = vrot.slane %v1926, 1
        %v1970 = vrot.slane %v1653, 1
        %v1971 = vsel %vm1929, %v1969, %v1970
        %v1972 = vrot.slane %v1927, 1
        %v1973 = vrot.slane %v1654, 1
        %v1974 = vsel %vm1929, %v1972, %v1973
        %v1975 = vrot.slane %v1928, 1
        %v1976 = vrot.slane %v1655, 1
        %v1977 = vsel %vm1929, %v1975, %v1976
        %1978 = vrot.lane.b32.xlu0 %v1932, 64
        %v1979 = vpop.permute.xlu0 %1978
        %1980 = vrot.lane.b32.xlu0 %v1935, 64
        %v1981 = vpop.permute.xlu0 %1980
        %1982 = vrot.lane.b32.xlu0 %v1938, 64
        %v1983 = vpop.permute.xlu0 %1982
        %1984 = vrot.lane.b32.xlu0 %v1941, 64
        %v1985 = vpop.permute.xlu0 %1984
        %1986 = vrot.lane.b32.xlu0 %v1944, 64
        %v1987 = vpop.permute.xlu0 %1986
        %1988 = vrot.lane.b32.xlu0 %v1947, 64
        %v1989 = vpop.permute.xlu0 %1988
        %1990 = vrot.lane.b32.xlu0 %v1950, 64
        %v1991 = vpop.permute.xlu0 %1990
        %1992 = vrot.lane.b32.xlu0 %v1953, 64
        %v1993 = vpop.permute.xlu0 %1992
        %1994 = vrot.lane.b32.xlu0 %v1956, 64
        %v1995 = vpop.permute.xlu0 %1994
        %1996 = vrot.lane.b32.xlu0 %v1959, 64
        %v1997 = vpop.permute.xlu0 %1996
        %1998 = vrot.lane.b32.xlu0 %v1962, 64
        %v1999 = vpop.permute.xlu0 %1998
        %2000 = vrot.lane.b32.xlu0 %v1965, 64
        %v2001 = vpop.permute.xlu0 %2000
        %2002 = vrot.lane.b32.xlu0 %v1968, 64
        %v2003 = vpop.permute.xlu0 %2002
        %2004 = vrot.lane.b32.xlu0 %v1971, 64
        %v2005 = vpop.permute.xlu0 %2004
        %2006 = vrot.lane.b32.xlu0 %v1974, 64
        %v2007 = vpop.permute.xlu0 %2006
        %2008 = vrot.lane.b32.xlu0 %v1977, 64
        %v2009 = vpop.permute.xlu0 %2008
        %v2011 = vsel %vm457, %v1592, %v1850
        %v2013 = vsel %vm457, %v1593, %v1852
        %v2015 = vsel %vm457, %v1594, %v1854
        %v2017 = vsel %vm457, %v1595, %v1856
        %v2019 = vsel %vm457, %v1596, %v1858
        %v2021 = vsel %vm457, %v1597, %v1860
        %v2023 = vsel %vm457, %v1598, %v1862
        %v2025 = vsel %vm457, %v1599, %v1864
        %v2027 = vsel %vm457, %v1600, %v1866
        %v2029 = vsel %vm457, %v1601, %v1868
        %v2031 = vsel %vm457, %v1602, %v1870
        %v2033 = vsel %vm457, %v1603, %v1872
        %v2035 = vsel %vm457, %v1604, %v1874
        %v2037 = vsel %vm457, %v1605, %v1876
        %v2039 = vsel %vm457, %v1606, %v1878
        %v2041 = vsel %vm457, %v1607, %v1880
        %vm2042 = vcmask 523264
        %v2044 = vsel %vm2042, %v2011, %v1979
        %v2046 = vsel %vm2042, %v2013, %v1981
        %v2048 = vsel %vm2042, %v2015, %v1983
        %v2050 = vsel %vm2042, %v2017, %v1985
        %v2052 = vsel %vm2042, %v2019, %v1987
        %v2054 = vsel %vm2042, %v2021, %v1989
        %v2056 = vsel %vm2042, %v2023, %v1991
        %v2058 = vsel %vm2042, %v2025, %v1993
        %v2060 = vsel %vm2042, %v2027, %v1995
        %v2062 = vsel %vm2042, %v2029, %v1997
        %v2064 = vsel %vm2042, %v2031, %v1999
        %v2066 = vsel %vm2042, %v2033, %v2001
        %v2068 = vsel %vm2042, %v2035, %v2003
        %v2070 = vsel %vm2042, %v2037, %v2005
        %v2072 = vsel %vm2042, %v2039, %v2007
        %v2074 = vsel %vm2042, %v2041, %v2009
        %v2075 = vld [vmem:[%s3] sm:$0xf]
        %v2076 = vld [vmem:[%s3 + $0x4] sm:$0xf]
        %v2077 = vld [vmem:[%s3 + $0x8] sm:$0xf]
        %v2078 = vld [vmem:[%s3 + $0xc] sm:$0xf]
        %v2079 = vld [vmem:[%s3 + $0x10] sm:$0xf]
        %v2080 = vld [vmem:[%s3 + $0x14] sm:$0xf]
        %v2081 = vld [vmem:[%s3 + $0x18] sm:$0xf]
        %v2082 = vld [vmem:[%s3 + $0x1c] sm:$0xf]
        %v2083 = vld [vmem:[%s3 + $0x20] sm:$0xf]
        %v2084 = vld [vmem:[%s3 + $0x24] sm:$0xf]
        %v2085 = vld [vmem:[%s3 + $0x28] sm:$0xf]
        %v2086 = vld [vmem:[%s3 + $0x2c] sm:$0xf]
        %v2087 = vld [vmem:[%s1349] sm:$0xf]
        %v2088 = vld [vmem:[%s1349 + $0x4] sm:$0xf]
        %v2089 = vld [vmem:[%s1349 + $0xc] sm:$0xf]
        %v2090 = vld [vmem:[%s1349 + $0x10] sm:$0xf]
        %v2091 = vld [vmem:[%s1349 + $0x18] sm:$0xf]
        %v2092 = vld [vmem:[%s1349 + $0x1c] sm:$0xf]
        %v2093 = vld [vmem:[%s1349 + $0x24] sm:$0xf]
        %v2094 = vld [vmem:[%s1349 + $0x28] sm:$0xf]
        %v2095 = vld [vmem:[%s1349 + $0x30] sm:$0xf]
        %v2096 = vld [vmem:[%s1349 + $0x34] sm:$0xf]
        %v2097 = vld [vmem:[%s1349 + $0x3c] sm:$0xf]
        %v2098 = vld [vmem:[%s1349 + $0x40] sm:$0xf]
        %v2099 = vld [vmem:[%s1349 + $0x48] sm:$0xf]
        %v2100 = vld [vmem:[%s1349 + $0x4c] sm:$0xf]
        %v2101 = vld [vmem:[%s1349 + $0x54] sm:$0xf]
        %v2102 = vld [vmem:[%s1349 + $0x58] sm:$0xf]
        %v2103 = vld [vmem:[%s1349 + $0x60] sm:$0xf]
        %v2104 = vld [vmem:[%s1349 + $0x64] sm:$0xf]
        %v2105 = vld [vmem:[%s1349 + $0x6c] sm:$0xf]
        %v2106 = vld [vmem:[%s1349 + $0x70] sm:$0xf]
        %v2107 = vld [vmem:[%s1349 + $0x78] sm:$0xf]
        %v2108 = vld [vmem:[%s1349 + $0x7c] sm:$0xf]
        %v2109 = vld [vmem:[%s1349 + $0x84] sm:$0xf]
        %v2110 = vld [vmem:[%s1349 + $0x88] sm:$0xf]
        %v2111 = vld [vmem:[%s1349 + $0x90] sm:$0xf]
        %v2112 = vld [vmem:[%s1349 + $0x94] sm:$0xf]
        %v2113 = vld [vmem:[%s1349 + $0x9c] sm:$0xf]
        %v2114 = vld [vmem:[%s1349 + $0xa0] sm:$0xf]
        %v2115 = vld [vmem:[%s1349 + $0xa8] sm:$0xf]
        %v2116 = vld [vmem:[%s1349 + $0xac] sm:$0xf]
        %v2117 = vld [vmem:[%s1349 + $0xb4] sm:$0xf]
        %v2118 = vld [vmem:[%s1349 + $0xb8] sm:$0xf]
        %v2119 = vld [vmem:[%s1349 + $0x8] sm:$0x1]
        %v2120 = vld [vmem:[%s1349 + $0x14] sm:$0x1]
        %v2121 = vld [vmem:[%s1349 + $0x20] sm:$0x1]
        %v2122 = vld [vmem:[%s1349 + $0x2c] sm:$0x1]
        %v2123 = vld [vmem:[%s1349 + $0x38] sm:$0x1]
        %v2124 = vld [vmem:[%s1349 + $0x44] sm:$0x1]
        %v2125 = vld [vmem:[%s1349 + $0x50] sm:$0x1]
        %v2126 = vld [vmem:[%s1349 + $0x5c] sm:$0x1]
        %v2127 = vld [vmem:[%s1349 + $0x68] sm:$0x1]
        %v2128 = vld [vmem:[%s1349 + $0x74] sm:$0x1]
        %v2129 = vld [vmem:[%s1349 + $0x80] sm:$0x1]
        %v2130 = vld [vmem:[%s1349 + $0x8c] sm:$0x1]
        %v2131 = vld [vmem:[%s1349 + $0x98] sm:$0x1]
        %v2132 = vld [vmem:[%s1349 + $0xa4] sm:$0x1]
        %v2133 = vld [vmem:[%s1349 + $0xb0] sm:$0x1]
        %v2134 = vld [vmem:[%s1349 + $0xbc] sm:$0x1]
        %v2135 = vld [vmem:[%s1349] sm:$0xe]
        %v2136 = vld [vmem:[%s1349 + $0xc] sm:$0xe]
        %v2137 = vld [vmem:[%s1349 + $0x18] sm:$0xe]
        %v2138 = vld [vmem:[%s1349 + $0x24] sm:$0xe]
        %v2139 = vld [vmem:[%s1349 + $0x30] sm:$0xe]
        %v2140 = vld [vmem:[%s1349 + $0x3c] sm:$0xe]
        %v2141 = vld [vmem:[%s1349 + $0x48] sm:$0xe]
        %v2142 = vld [vmem:[%s1349 + $0x54] sm:$0xe]
        %v2143 = vld [vmem:[%s1349 + $0x60] sm:$0xe]
        %v2144 = vld [vmem:[%s1349 + $0x6c] sm:$0xe]
        %v2145 = vld [vmem:[%s1349 + $0x78] sm:$0xe]
        %v2146 = vld [vmem:[%s1349 + $0x84] sm:$0xe]
        %v2147 = vld [vmem:[%s1349 + $0x90] sm:$0xe]
        %v2148 = vld [vmem:[%s1349 + $0x9c] sm:$0xe]
        %v2149 = vld [vmem:[%s1349 + $0xa8] sm:$0xe]
        %v2150 = vld [vmem:[%s1349 + $0xb4] sm:$0xe]
        %v2183 = vunpack.c.l.b16 %v2087
        %v2184 = vunpack.c.l.b16 %v2088
        %v2185 = vunpack.c.l.b16 %v2089
        %v2186 = vunpack.c.l.b16 %v2090
        %v2187 = vunpack.c.l.b16 %v2091
        %v2188 = vunpack.c.l.b16 %v2092
        %v2189 = vunpack.c.l.b16 %v2093
        %v2190 = vunpack.c.l.b16 %v2094
        %v2191 = vunpack.c.l.b16 %v2095
        %v2192 = vunpack.c.l.b16 %v2096
        %v2193 = vunpack.c.l.b16 %v2097
        %v2194 = vunpack.c.l.b16 %v2098
        %v2195 = vunpack.c.l.b16 %v2099
        %v2196 = vunpack.c.l.b16 %v2100
        %v2197 = vunpack.c.l.b16 %v2101
        %v2198 = vunpack.c.l.b16 %v2102
        %v2199 = vunpack.c.l.b16 %v2103
        %v2200 = vunpack.c.l.b16 %v2104
        %v2201 = vunpack.c.l.b16 %v2105
        %v2202 = vunpack.c.l.b16 %v2106
        %v2203 = vunpack.c.l.b16 %v2107
        %v2204 = vunpack.c.l.b16 %v2108
        %v2205 = vunpack.c.l.b16 %v2109
        %v2206 = vunpack.c.l.b16 %v2110
        %v2207 = vunpack.c.l.b16 %v2111
        %v2208 = vunpack.c.l.b16 %v2112
        %v2209 = vunpack.c.l.b16 %v2113
        %v2210 = vunpack.c.l.b16 %v2114
        %v2211 = vunpack.c.l.b16 %v2115
        %v2212 = vunpack.c.l.b16 %v2116
        %v2213 = vunpack.c.l.b16 %v2117
        %v2214 = vunpack.c.l.b16 %v2118
        %v2215 = vpack.c.b16 %v2184, %v2183
        %v2216 = vpack.c.b16 %v2186, %v2185
        %v2217 = vpack.c.b16 %v2188, %v2187
        %v2218 = vpack.c.b16 %v2190, %v2189
        %v2219 = vpack.c.b16 %v2192, %v2191
        %v2220 = vpack.c.b16 %v2194, %v2193
        %v2221 = vpack.c.b16 %v2196, %v2195
        %v2222 = vpack.c.b16 %v2198, %v2197
        %v2223 = vpack.c.b16 %v2200, %v2199
        %v2224 = vpack.c.b16 %v2202, %v2201
        %v2225 = vpack.c.b16 %v2204, %v2203
        %v2226 = vpack.c.b16 %v2206, %v2205
        %v2227 = vpack.c.b16 %v2208, %v2207
        %v2228 = vpack.c.b16 %v2210, %v2209
        %v2229 = vpack.c.b16 %v2212, %v2211
        %v2230 = vpack.c.b16 %v2214, %v2213
        %v2247 = vunpack.c.l.b16 %v2119
        %v2248 = vunpack.c.l.b16 %v2120
        %v2249 = vunpack.c.l.b16 %v2121
        %v2250 = vunpack.c.l.b16 %v2122
        %v2251 = vunpack.c.l.b16 %v2123
        %v2252 = vunpack.c.l.b16 %v2124
        %v2253 = vunpack.c.l.b16 %v2125
        %v2254 = vunpack.c.l.b16 %v2126
        %v2255 = vunpack.c.l.b16 %v2127
        %v2256 = vunpack.c.l.b16 %v2128
        %v2257 = vunpack.c.l.b16 %v2129
        %v2258 = vunpack.c.l.b16 %v2130
        %v2259 = vunpack.c.l.b16 %v2131
        %v2260 = vunpack.c.l.b16 %v2132
        %v2261 = vunpack.c.l.b16 %v2133
        %v2262 = vunpack.c.l.b16 %v2134
        %v2263 = vpack.c.b16 %v2247, %v2247
        %v2264 = vpack.c.b16 %v2248, %v2248
        %v2265 = vpack.c.b16 %v2249, %v2249
        %v2266 = vpack.c.b16 %v2250, %v2250
        %v2267 = vpack.c.b16 %v2251, %v2251
        %v2268 = vpack.c.b16 %v2252, %v2252
        %v2269 = vpack.c.b16 %v2253, %v2253
        %v2270 = vpack.c.b16 %v2254, %v2254
        %v2271 = vpack.c.b16 %v2255, %v2255
        %v2272 = vpack.c.b16 %v2256, %v2256
        %v2273 = vpack.c.b16 %v2257, %v2257
        %v2274 = vpack.c.b16 %v2258, %v2258
        %v2275 = vpack.c.b16 %v2259, %v2259
        %v2276 = vpack.c.b16 %v2260, %v2260
        %v2277 = vpack.c.b16 %v2261, %v2261
        %v2278 = vpack.c.b16 %v2262, %v2262
        %v2280 = vshrl.u32 %v2215, 16
        %v2282 = vshll.u32 %v2215, 16
        %v2284 = vrot.slane %v2282, 1
        %v2285 = vor.u32 %v2280, %v2284
        %v2287 = vshll.u32 %v2263, 16
        %v2289 = vrot.slane %v2287, 1
        %v2290 = vsel %vm1656, %v2285, %v2289
        %v2292 = vshrl.u32 %v2216, 16
        %v2294 = vshll.u32 %v2216, 16
        %v2296 = vrot.slane %v2294, 1
        %v2297 = vor.u32 %v2292, %v2296
        %v2299 = vshll.u32 %v2264, 16
        %v2301 = vrot.slane %v2299, 1
        %v2302 = vsel %vm1656, %v2297, %v2301
        %v2304 = vshrl.u32 %v2217, 16
        %v2306 = vshll.u32 %v2217, 16
        %v2308 = vrot.slane %v2306, 1
        %v2309 = vor.u32 %v2304, %v2308
        %v2311 = vshll.u32 %v2265, 16
        %v2313 = vrot.slane %v2311, 1
        %v2314 = vsel %vm1656, %v2309, %v2313
        %v2316 = vshrl.u32 %v2218, 16
        %v2318 = vshll.u32 %v2218, 16
        %v2320 = vrot.slane %v2318, 1
        %v2321 = vor.u32 %v2316, %v2320
        %v2323 = vshll.u32 %v2266, 16
        %v2325 = vrot.slane %v2323, 1
        %v2326 = vsel %vm1656, %v2321, %v2325
        %v2328 = vshrl.u32 %v2219, 16
        %v2330 = vshll.u32 %v2219, 16
        %v2332 = vrot.slane %v2330, 1
        %v2333 = vor.u32 %v2328, %v2332
        %v2335 = vshll.u32 %v2267, 16
        %v2337 = vrot.slane %v2335, 1
        %v2338 = vsel %vm1656, %v2333, %v2337
        %v2340 = vshrl.u32 %v2220, 16
        %v2342 = vshll.u32 %v2220, 16
        %v2344 = vrot.slane %v2342, 1
        %v2345 = vor.u32 %v2340, %v2344
        %v2347 = vshll.u32 %v2268, 16
        %v2349 = vrot.slane %v2347, 1
        %v2350 = vsel %vm1656, %v2345, %v2349
        %v2352 = vshrl.u32 %v2221, 16
        %v2354 = vshll.u32 %v2221, 16
        %v2356 = vrot.slane %v2354, 1
        %v2357 = vor.u32 %v2352, %v2356
        %v2359 = vshll.u32 %v2269, 16
        %v2361 = vrot.slane %v2359, 1
        %v2362 = vsel %vm1656, %v2357, %v2361
        %v2364 = vshrl.u32 %v2222, 16
        %v2366 = vshll.u32 %v2222, 16
        %v2368 = vrot.slane %v2366, 1
        %v2369 = vor.u32 %v2364, %v2368
        %v2371 = vshll.u32 %v2270, 16
        %v2373 = vrot.slane %v2371, 1
        %v2374 = vsel %vm1656, %v2369, %v2373
        %v2376 = vshrl.u32 %v2223, 16
        %v2378 = vshll.u32 %v2223, 16
        %v2380 = vrot.slane %v2378, 1
        %v2381 = vor.u32 %v2376, %v2380
        %v2383 = vshll.u32 %v2271, 16
        %v2385 = vrot.slane %v2383, 1
        %v2386 = vsel %vm1656, %v2381, %v2385
        %v2388 = vshrl.u32 %v2224, 16
        %v2390 = vshll.u32 %v2224, 16
        %v2392 = vrot.slane %v2390, 1
        %v2393 = vor.u32 %v2388, %v2392
        %v2395 = vshll.u32 %v2272, 16
        %v2397 = vrot.slane %v2395, 1
        %v2398 = vsel %vm1656, %v2393, %v2397
        %v2400 = vshrl.u32 %v2225, 16
        %v2402 = vshll.u32 %v2225, 16
        %v2404 = vrot.slane %v2402, 1
        %v2405 = vor.u32 %v2400, %v2404
        %v2407 = vshll.u32 %v2273, 16
        %v2409 = vrot.slane %v2407, 1
        %v2410 = vsel %vm1656, %v2405, %v2409
        %v2412 = vshrl.u32 %v2226, 16
        %v2414 = vshll.u32 %v2226, 16
        %v2416 = vrot.slane %v2414, 1
        %v2417 = vor.u32 %v2412, %v2416
        %v2419 = vshll.u32 %v2274, 16
        %v2421 = vrot.slane %v2419, 1
        %v2422 = vsel %vm1656, %v2417, %v2421
        %v2424 = vshrl.u32 %v2227, 16
        %v2426 = vshll.u32 %v2227, 16
        %v2428 = vrot.slane %v2426, 1
        %v2429 = vor.u32 %v2424, %v2428
        %v2431 = vshll.u32 %v2275, 16
        %v2433 = vrot.slane %v2431, 1
        %v2434 = vsel %vm1656, %v2429, %v2433
        %v2436 = vshrl.u32 %v2228, 16
        %v2438 = vshll.u32 %v2228, 16
        %v2440 = vrot.slane %v2438, 1
        %v2441 = vor.u32 %v2436, %v2440
        %v2443 = vshll.u32 %v2276, 16
        %v2445 = vrot.slane %v2443, 1
        %v2446 = vsel %vm1656, %v2441, %v2445
        %v2448 = vshrl.u32 %v2229, 16
        %v2450 = vshll.u32 %v2229, 16
        %v2452 = vrot.slane %v2450, 1
        %v2453 = vor.u32 %v2448, %v2452
        %v2455 = vshll.u32 %v2277, 16
        %v2457 = vrot.slane %v2455, 1
        %v2458 = vsel %vm1656, %v2453, %v2457
        %v2460 = vshrl.u32 %v2230, 16
        %v2462 = vshll.u32 %v2230, 16
        %v2464 = vrot.slane %v2462, 1
        %v2465 = vor.u32 %v2460, %v2464
        %v2467 = vshll.u32 %v2278, 16
        %v2469 = vrot.slane %v2467, 1
        %v2470 = vsel %vm1656, %v2465, %v2469
        %2471 = vrot.lane.b32.xlu0 %v2290, 32
        %v2472 = vpop.permute.xlu0 %2471
        %2473 = vrot.lane.b32.xlu0 %v2302, 32
        %v2474 = vpop.permute.xlu0 %2473
        %2475 = vrot.lane.b32.xlu0 %v2314, 32
        %v2476 = vpop.permute.xlu0 %2475
        %2477 = vrot.lane.b32.xlu0 %v2326, 32
        %v2478 = vpop.permute.xlu0 %2477
        %2479 = vrot.lane.b32.xlu0 %v2338, 32
        %v2480 = vpop.permute.xlu0 %2479
        %2481 = vrot.lane.b32.xlu0 %v2350, 32
        %v2482 = vpop.permute.xlu0 %2481
        %2483 = vrot.lane.b32.xlu0 %v2362, 32
        %v2484 = vpop.permute.xlu0 %2483
        %2485 = vrot.lane.b32.xlu0 %v2374, 32
        %v2486 = vpop.permute.xlu0 %2485
        %2487 = vrot.lane.b32.xlu0 %v2386, 32
        %v2488 = vpop.permute.xlu0 %2487
        %2489 = vrot.lane.b32.xlu0 %v2398, 32
        %v2490 = vpop.permute.xlu0 %2489
        %2491 = vrot.lane.b32.xlu0 %v2410, 32
        %v2492 = vpop.permute.xlu0 %2491
        %2493 = vrot.lane.b32.xlu0 %v2422, 32
        %v2494 = vpop.permute.xlu0 %2493
        %2495 = vrot.lane.b32.xlu0 %v2434, 32
        %v2496 = vpop.permute.xlu0 %2495
        %2497 = vrot.lane.b32.xlu0 %v2446, 32
        %v2498 = vpop.permute.xlu0 %2497
        %2499 = vrot.lane.b32.xlu0 %v2458, 32
        %v2500 = vpop.permute.xlu0 %2499
        %2501 = vrot.lane.b32.xlu0 %v2470, 32
        %v2502 = vpop.permute.xlu0 %2501
        %v2519 = vunpack.c.l.b16 %v2135
        %v2520 = vunpack.c.l.b16 %v2136
        %v2521 = vunpack.c.l.b16 %v2137
        %v2522 = vunpack.c.l.b16 %v2138
        %v2523 = vunpack.c.l.b16 %v2139
        %v2524 = vunpack.c.l.b16 %v2140
        %v2525 = vunpack.c.l.b16 %v2141
        %v2526 = vunpack.c.l.b16 %v2142
        %v2527 = vunpack.c.l.b16 %v2143
        %v2528 = vunpack.c.l.b16 %v2144
        %v2529 = vunpack.c.l.b16 %v2145
        %v2530 = vunpack.c.l.b16 %v2146
        %v2531 = vunpack.c.l.b16 %v2147
        %v2532 = vunpack.c.l.b16 %v2148
        %v2533 = vunpack.c.l.b16 %v2149
        %v2534 = vunpack.c.l.b16 %v2150
        %v2535 = vpack.c.b16 %v2184, %v2519
        %v2536 = vpack.c.b16 %v2186, %v2520
        %v2537 = vpack.c.b16 %v2188, %v2521
        %v2538 = vpack.c.b16 %v2190, %v2522
        %v2539 = vpack.c.b16 %v2192, %v2523
        %v2540 = vpack.c.b16 %v2194, %v2524
        %v2541 = vpack.c.b16 %v2196, %v2525
        %v2542 = vpack.c.b16 %v2198, %v2526
        %v2543 = vpack.c.b16 %v2200, %v2527
        %v2544 = vpack.c.b16 %v2202, %v2528
        %v2545 = vpack.c.b16 %v2204, %v2529
        %v2546 = vpack.c.b16 %v2206, %v2530
        %v2547 = vpack.c.b16 %v2208, %v2531
        %v2548 = vpack.c.b16 %v2210, %v2532
        %v2549 = vpack.c.b16 %v2212, %v2533
        %v2550 = vpack.c.b16 %v2214, %v2534
        %v2551 = vrot.slane %v2535, 1
        %v2552 = vrot.slane %v2263, 1
        %v2553 = vsel %vm1929, %v2551, %v2552
        %v2554 = vrot.slane %v2536, 1
        %v2555 = vrot.slane %v2264, 1
        %v2556 = vsel %vm1929, %v2554, %v2555
        %v2557 = vrot.slane %v2537, 1
        %v2558 = vrot.slane %v2265, 1
        %v2559 = vsel %vm1929, %v2557, %v2558
        %v2560 = vrot.slane %v2538, 1
        %v2561 = vrot.slane %v2266, 1
        %v2562 = vsel %vm1929, %v2560, %v2561
        %v2563 = vrot.slane %v2539, 1
        %v2564 = vrot.slane %v2267, 1
        %v2565 = vsel %vm1929, %v2563, %v2564
        %v2566 = vrot.slane %v2540, 1
        %v2567 = vrot.slane %v2268, 1
        %v2568 = vsel %vm1929, %v2566, %v2567
        %v2569 = vrot.slane %v2541, 1
        %v2570 = vrot.slane %v2269, 1
        %v2571 = vsel %vm1929, %v2569, %v2570
        %v2572 = vrot.slane %v2542, 1
        %v2573 = vrot.slane %v2270, 1
        %v2574 = vsel %vm1929, %v2572, %v2573
        %v2575 = vrot.slane %v2543, 1
        %v2576 = vrot.slane %v2271, 1
        %v2577 = vsel %vm1929, %v2575, %v2576
        %v2578 = vrot.slane %v2544, 1
        %v2579 = vrot.slane %v2272, 1
        %v2580 = vsel %vm1929, %v2578, %v2579
        %v2581 = vrot.slane %v2545, 1
        %v2582 = vrot.slane %v2273, 1
        %v2583 = vsel %vm1929, %v2581, %v2582
        %v2584 = vrot.slane %v2546, 1
        %v2585 = vrot.slane %v2274, 1
        %v2586 = vsel %vm1929, %v2584, %v2585
        %v2587 = vrot.slane %v2547, 1
        %v2588 = vrot.slane %v2275, 1
        %v2589 = vsel %vm1929, %v2587, %v2588
        %v2590 = vrot.slane %v2548, 1
        %v2591 = vrot.slane %v2276, 1
        %v2592 = vsel %vm1929, %v2590, %v2591
        %v2593 = vrot.slane %v2549, 1
        %v2594 = vrot.slane %v2277, 1
        %v2595 = vsel %vm1929, %v2593, %v2594
        %v2596 = vrot.slane %v2550, 1
        %v2597 = vrot.slane %v2278, 1
        %v2598 = vsel %vm1929, %v2596, %v2597
        %2599 = vrot.lane.b32.xlu0 %v2553, 64
        %v2600 = vpop.permute.xlu0 %2599
        %2601 = vrot.lane.b32.xlu0 %v2556, 64
        %v2602 = vpop.permute.xlu0 %2601
        %2603 = vrot.lane.b32.xlu0 %v2559, 64
        %v2604 = vpop.permute.xlu0 %2603
        %2605 = vrot.lane.b32.xlu0 %v2562, 64
        %v2606 = vpop.permute.xlu0 %2605
        %2607 = vrot.lane.b32.xlu0 %v2565, 64
        %v2608 = vpop.permute.xlu0 %2607
        %2609 = vrot.lane.b32.xlu0 %v2568, 64
        %v2610 = vpop.permute.xlu0 %2609
        %2611 = vrot.lane.b32.xlu0 %v2571, 64
        %v2612 = vpop.permute.xlu0 %2611
        %2613 = vrot.lane.b32.xlu0 %v2574, 64
        %v2614 = vpop.permute.xlu0 %2613
        %2615 = vrot.lane.b32.xlu0 %v2577, 64
        %v2616 = vpop.permute.xlu0 %2615
        %2617 = vrot.lane.b32.xlu0 %v2580, 64
        %v2618 = vpop.permute.xlu0 %2617
        %2619 = vrot.lane.b32.xlu0 %v2583, 64
        %v2620 = vpop.permute.xlu0 %2619
        %2621 = vrot.lane.b32.xlu0 %v2586, 64
        %v2622 = vpop.permute.xlu0 %2621
        %2623 = vrot.lane.b32.xlu0 %v2589, 64
        %v2624 = vpop.permute.xlu0 %2623
        %2625 = vrot.lane.b32.xlu0 %v2592, 64
        %v2626 = vpop.permute.xlu0 %2625
        %2627 = vrot.lane.b32.xlu0 %v2595, 64
        %v2628 = vpop.permute.xlu0 %2627
        %2629 = vrot.lane.b32.xlu0 %v2598, 64
        %v2630 = vpop.permute.xlu0 %2629
        %v2632 = vsel %vm457, %v2215, %v2472
        %v2634 = vsel %vm457, %v2216, %v2474
        %v2636 = vsel %vm457, %v2217, %v2476
        %v2638 = vsel %vm457, %v2218, %v2478
        %v2640 = vsel %vm457, %v2219, %v2480
        %v2642 = vsel %vm457, %v2220, %v2482
        %v2644 = vsel %vm457, %v2221, %v2484
        %v2646 = vsel %vm457, %v2222, %v2486
        %v2648 = vsel %vm457, %v2223, %v2488
        %v2650 = vsel %vm457, %v2224, %v2490
        %v2652 = vsel %vm457, %v2225, %v2492
        %v2654 = vsel %vm457, %v2226, %v2494
        %v2656 = vsel %vm457, %v2227, %v2496
        %v2658 = vsel %vm457, %v2228, %v2498
        %v2660 = vsel %vm457, %v2229, %v2500
        %v2662 = vsel %vm457, %v2230, %v2502
        %v2664 = vsel %vm2042, %v2632, %v2600
        %v2666 = vsel %vm2042, %v2634, %v2602
        %v2668 = vsel %vm2042, %v2636, %v2604
        %v2670 = vsel %vm2042, %v2638, %v2606
        %v2672 = vsel %vm2042, %v2640, %v2608
        %v2674 = vsel %vm2042, %v2642, %v2610
        %v2676 = vsel %vm2042, %v2644, %v2612
        %v2678 = vsel %vm2042, %v2646, %v2614
        %v2680 = vsel %vm2042, %v2648, %v2616
        %v2682 = vsel %vm2042, %v2650, %v2618
        %v2684 = vsel %vm2042, %v2652, %v2620
        %v2686 = vsel %vm2042, %v2654, %v2622
        %v2688 = vsel %vm2042, %v2656, %v2624
        %v2690 = vsel %vm2042, %v2658, %v2626
        %v2692 = vsel %vm2042, %v2660, %v2628
        %v2694 = vsel %vm2042, %v2662, %v2630
        %s2695 = scalar_lea.vmem %s3, 48
        %v2696 = vld [vmem:[%s2695] sm:$0xf]
        %v2697 = vld [vmem:[%s2695 + $0x4] sm:$0xf]
        %v2698 = vld [vmem:[%s2695 + $0x8] sm:$0xf]
        %v2699 = vld [vmem:[%s2695 + $0xc] sm:$0xf]
        %v2700 = vld [vmem:[%s2695 + $0x10] sm:$0xf]
        %v2701 = vld [vmem:[%s2695 + $0x14] sm:$0xf]
        %v2702 = vld [vmem:[%s2695 + $0x18] sm:$0xf]
        %v2703 = vld [vmem:[%s2695 + $0x1c] sm:$0xf]
        %v2704 = vld [vmem:[%s2695 + $0x20] sm:$0xf]
        %v2705 = vld [vmem:[%s2695 + $0x24] sm:$0xf]
        %v2706 = vld [vmem:[%s2695 + $0x28] sm:$0xf]
        %v2707 = vld [vmem:[%s2695 + $0x2c] sm:$0xf]
        %v2720 = vunpack.c.l.b16 %v2696
        %v2721 = vunpack.c.l.b16 %v2697
        %v2722 = vunpack.c.l.b16 %v2698
        %v2723 = vunpack.c.l.b16 %v2699
        %v2724 = vunpack.c.l.b16 %v2700
        %v2725 = vunpack.c.l.b16 %v2701
        %v2726 = vunpack.c.l.b16 %v2702
        %v2727 = vunpack.c.l.b16 %v2703
        %v2728 = vunpack.c.l.b16 %v2704
        %v2729 = vunpack.c.l.b16 %v2705
        %v2730 = vunpack.c.l.b16 %v2706
        %v2731 = vunpack.c.l.b16 %v2707
        %v2732 = vpack.c.b16 %v2721, %v2720
        %v2733 = vpack.c.b16 %v2723, %v2722
        %v2734 = vpack.c.b16 %v2725, %v2724
        %v2735 = vpack.c.b16 %v2727, %v2726
        %v2736 = vpack.c.b16 %v2729, %v2728
        %v2737 = vpack.c.b16 %v2731, %v2730
        %vm2744 = vcmask 785408
        %v2745 = vsel %vm2744, %v2664, 0
        %v2747 = vsel %vm2744, %v2666, 0
        %v2749 = vsel %vm2744, %v2668, 0
        %v2751 = vsel %vm2744, %v2670, 0
        %v2753 = vsel %vm2744, %v2672, 0
        %v2755 = vsel %vm2744, %v2674, 0
        %v2757 = vsel %vm2744, %v2676, 0
        %v2759 = vsel %vm2744, %v2678, 0
        %v2761 = vsel %vm2744, %v2680, 0
        %v2763 = vsel %vm2744, %v2682, 0
        %v2765 = vsel %vm2744, %v2684, 0
        %v2767 = vsel %vm2744, %v2686, 0
        %v2769 = vsel %vm2744, %v2688, 0
        %v2771 = vsel %vm2744, %v2690, 0
        %v2773 = vsel %vm2744, %v2692, 0
        %v2775 = vsel %vm2744, %v2694, 0
        %2777 = vmatprep.subr.bf16.mxu0 0
        %2778 = vmatpush1.bf16.msra.mxu0 0
        %2779 = vmatprep.subr.bf16.mxu0 0
        %2780 = vmatpush1.bf16.msra.mxu0 0
        %2781 = vmatprep.subr.bf16.mxu0 0
        %2782 = vmatpush1.bf16.msra.mxu0 %v2737
        %2783 = vmatprep.subr.bf16.mxu0 0
        %2784 = vmatpush1.bf16.msra.mxu0 %v2736
        %2785 = vmatprep.subr.bf16.mxu0 0
        %2786 = vmatpush1.bf16.msra.mxu0 %v2735
        %2787 = vmatprep.subr.bf16.mxu0 0
        %2788 = vmatpush1.bf16.msra.mxu0 %v2734
        %2789 = vmatprep.subr.bf16.mxu0 0
        %2790 = vmatpush1.bf16.msra.mxu0 %v2733
        %2791 = vmatprep.subr.bf16.mxu0 0
        %2792 = vmatpush1.bf16.msra.mxu0 %v2732
        %2793 = vmatprep.subr.bf16.mxu0 0
        %2794 = vmatpush2.bf16.msra.mxu0 0
        %2795 = vmatprep.subr.bf16.mxu0 0
        %2796 = vmatpush2.bf16.msra.mxu0 0
        %2797 = vmatprep.subr.bf16.mxu0 0
        %2798 = vmatpush2.bf16.msra.mxu0 0
        %2799 = vmatprep.subr.bf16.mxu0 0
        %2800 = vmatpush2.bf16.msra.mxu0 0
        %2801 = vmatprep.subr.bf16.mxu0 0
        %2802 = vmatpush2.bf16.msra.mxu0 0
        %2803 = vmatprep.subr.bf16.mxu0 0
        %2804 = vmatpush2.bf16.msra.mxu0 0
        %2805 = vmatprep.subr.bf16.mxu0 0
        %2806 = vmatpush2.bf16.msra.mxu0 0
        %2807 = vmatprep.subr.bf16.mxu0 0
        %2808 = vmatpush2.bf16.msra.mxu0 0
        %2809 = vmatprep.mubr.bf16.mxu0 0
        %2810 = vmatmul.mubr.bf16.gmra.mxu0 %v2745
        %v2811 = vpop.f32.mrf.mxu0
        %v2812 = vadd.f32 0.0, %v2811
        %v2813 = vpop.f32.mrf.mxu0
        %v2814 = vpop.f32.mrf.mxu0
        %v2815 = vadd.f32 0.0, %v2814
        %v2816 = vpop.f32.mrf.mxu0
        %2817 = vmatprep.mubr.bf16.mxu0 0
        %2818 = vmatmul.mubr.bf16.gmra.mxu0 %v2747
        %v2819 = vpop.f32.mrf.mxu0
        %v2820 = vadd.f32 0.0, %v2819
        %v2821 = vpop.f32.mrf.mxu0
        %v2822 = vpop.f32.mrf.mxu0
        %v2823 = vadd.f32 0.0, %v2822
        %v2824 = vpop.f32.mrf.mxu0
        %2825 = vmatprep.mubr.bf16.mxu0 0
        %2826 = vmatmul.mubr.bf16.gmra.mxu0 %v2749
        %v2827 = vpop.f32.mrf.mxu0
        %v2828 = vadd.f32 0.0, %v2827
        %v2829 = vpop.f32.mrf.mxu0
        %v2830 = vpop.f32.mrf.mxu0
        %v2831 = vadd.f32 0.0, %v2830
        %v2832 = vpop.f32.mrf.mxu0
        %2833 = vmatprep.mubr.bf16.mxu0 0
        %2834 = vmatmul.mubr.bf16.gmra.mxu0 %v2751
        %v2835 = vpop.f32.mrf.mxu0
        %v2836 = vadd.f32 0.0, %v2835
        %v2837 = vpop.f32.mrf.mxu0
        %v2838 = vpop.f32.mrf.mxu0
        %v2839 = vadd.f32 0.0, %v2838
        %v2840 = vpop.f32.mrf.mxu0
        %2841 = vmatprep.mubr.bf16.mxu0 0
        %2842 = vmatmul.mubr.bf16.gmra.mxu0 %v2753
        %v2843 = vpop.f32.mrf.mxu0
        %v2844 = vadd.f32 0.0, %v2843
        %v2845 = vpop.f32.mrf.mxu0
        %v2846 = vpop.f32.mrf.mxu0
        %v2847 = vadd.f32 0.0, %v2846
        %v2848 = vpop.f32.mrf.mxu0
        %2849 = vmatprep.mubr.bf16.mxu0 0
        %2850 = vmatmul.mubr.bf16.gmra.mxu0 %v2755
        %v2851 = vpop.f32.mrf.mxu0
        %v2852 = vadd.f32 0.0, %v2851
        %v2853 = vpop.f32.mrf.mxu0
        %v2854 = vpop.f32.mrf.mxu0
        %v2855 = vadd.f32 0.0, %v2854
        %v2856 = vpop.f32.mrf.mxu0
        %2857 = vmatprep.mubr.bf16.mxu0 0
        %2858 = vmatmul.mubr.bf16.gmra.mxu0 %v2757
        %v2859 = vpop.f32.mrf.mxu0
        %v2860 = vadd.f32 0.0, %v2859
        %v2861 = vpop.f32.mrf.mxu0
        %v2862 = vpop.f32.mrf.mxu0
        %v2863 = vadd.f32 0.0, %v2862
        %v2864 = vpop.f32.mrf.mxu0
        %2865 = vmatprep.mubr.bf16.mxu0 0
        %2866 = vmatmul.mubr.bf16.gmra.mxu0 %v2759
        %v2867 = vpop.f32.mrf.mxu0
        %v2868 = vadd.f32 0.0, %v2867
        %v2869 = vpop.f32.mrf.mxu0
        %v2870 = vpop.f32.mrf.mxu0
        %v2871 = vadd.f32 0.0, %v2870
        %v2872 = vpop.f32.mrf.mxu0
        %2873 = vmatprep.mubr.bf16.mxu0 0
        %2874 = vmatmul.mubr.bf16.gmra.mxu0 %v2761
        %v2875 = vpop.f32.mrf.mxu0
        %v2876 = vadd.f32 0.0, %v2875
        %v2877 = vpop.f32.mrf.mxu0
        %v2878 = vpop.f32.mrf.mxu0
        %v2879 = vadd.f32 0.0, %v2878
        %v2880 = vpop.f32.mrf.mxu0
        %2881 = vmatprep.mubr.bf16.mxu0 0
        %2882 = vmatmul.mubr.bf16.gmra.mxu0 %v2763
        %v2883 = vpop.f32.mrf.mxu0
        %v2884 = vadd.f32 0.0, %v2883
        %v2885 = vpop.f32.mrf.mxu0
        %v2886 = vpop.f32.mrf.mxu0
        %v2887 = vadd.f32 0.0, %v2886
        %v2888 = vpop.f32.mrf.mxu0
        %2889 = vmatprep.mubr.bf16.mxu0 0
        %2890 = vmatmul.mubr.bf16.gmra.mxu0 %v2765
        %v2891 = vpop.f32.mrf.mxu0
        %v2892 = vadd.f32 0.0, %v2891
        %v2893 = vpop.f32.mrf.mxu0
        %v2894 = vpop.f32.mrf.mxu0
        %v2895 = vadd.f32 0.0, %v2894
        %v2896 = vpop.f32.mrf.mxu0
        %2897 = vmatprep.mubr.bf16.mxu0 0
        %2898 = vmatmul.mubr.bf16.gmra.mxu0 %v2767
        %v2899 = vpop.f32.mrf.mxu0
        %v2900 = vadd.f32 0.0, %v2899
        %v2901 = vpop.f32.mrf.mxu0
        %v2902 = vpop.f32.mrf.mxu0
        %v2903 = vadd.f32 0.0, %v2902
        %v2904 = vpop.f32.mrf.mxu0
        %2905 = vmatprep.mubr.bf16.mxu0 0
        %2906 = vmatmul.mubr.bf16.gmra.mxu0 %v2769
        %v2907 = vpop.f32.mrf.mxu0
        %v2908 = vadd.f32 0.0, %v2907
        %v2909 = vpop.f32.mrf.mxu0
        %v2910 = vpop.f32.mrf.mxu0
        %v2911 = vadd.f32 0.0, %v2910
        %v2912 = vpop.f32.mrf.mxu0
        %2913 = vmatprep.mubr.bf16.mxu0 0
        %2914 = vmatmul.mubr.bf16.gmra.mxu0 %v2771
        %v2915 = vpop.f32.mrf.mxu0
        %v2916 = vadd.f32 0.0, %v2915
        %v2917 = vpop.f32.mrf.mxu0
        %v2918 = vpop.f32.mrf.mxu0
        %v2919 = vadd.f32 0.0, %v2918
        %v2920 = vpop.f32.mrf.mxu0
        %2921 = vmatprep.mubr.bf16.mxu0 0
        %2922 = vmatmul.mubr.bf16.gmra.mxu0 %v2773
        %v2923 = vpop.f32.mrf.mxu0
        %v2924 = vadd.f32 0.0, %v2923
        %v2925 = vpop.f32.mrf.mxu0
        %v2926 = vpop.f32.mrf.mxu0
        %v2927 = vadd.f32 0.0, %v2926
        %v2928 = vpop.f32.mrf.mxu0
        %2929 = vmatprep.mubr.bf16.mxu0 0
        %2930 = vmatmul.mubr.bf16.gmra.mxu0 %v2775
        %v2931 = vpop.f32.mrf.mxu0
        %v2932 = vadd.f32 0.0, %v2931
        %v2933 = vpop.f32.mrf.mxu0
        %v2934 = vpop.f32.mrf.mxu0
        %v2935 = vadd.f32 0.0, %v2934
        %v2936 = vpop.f32.mrf.mxu0
        %2937 = vdwg.mxu0
        %v2950 = vunpack.c.l.b16 %v2075
        %v2951 = vunpack.c.l.b16 %v2076
        %v2952 = vunpack.c.l.b16 %v2077
        %v2953 = vunpack.c.l.b16 %v2078
        %v2954 = vunpack.c.l.b16 %v2079
        %v2955 = vunpack.c.l.b16 %v2080
        %v2956 = vunpack.c.l.b16 %v2081
        %v2957 = vunpack.c.l.b16 %v2082
        %v2958 = vunpack.c.l.b16 %v2083
        %v2959 = vunpack.c.l.b16 %v2084
        %v2960 = vunpack.c.l.b16 %v2085
        %v2961 = vunpack.c.l.b16 %v2086
        %v2962 = vpack.c.b16 %v2951, %v2950
        %v2963 = vpack.c.b16 %v2953, %v2952
        %v2964 = vpack.c.b16 %v2955, %v2954
        %v2965 = vpack.c.b16 %v2957, %v2956
        %v2966 = vpack.c.b16 %v2959, %v2958
        %v2967 = vpack.c.b16 %v2961, %v2960
        %v2974 = vsel %vm2744, %v2044, 0
        %v2976 = vsel %vm2744, %v2046, 0
        %v2978 = vsel %vm2744, %v2048, 0
        %v2980 = vsel %vm2744, %v2050, 0
        %v2982 = vsel %vm2744, %v2052, 0
        %v2984 = vsel %vm2744, %v2054, 0
        %v2986 = vsel %vm2744, %v2056, 0
        %v2988 = vsel %vm2744, %v2058, 0
        %v2990 = vsel %vm2744, %v2060, 0
        %v2992 = vsel %vm2744, %v2062, 0
        %v2994 = vsel %vm2744, %v2064, 0
        %v2996 = vsel %vm2744, %v2066, 0
        %v2998 = vsel %vm2744, %v2068, 0
        %v3000 = vsel %vm2744, %v2070, 0
        %v3002 = vsel %vm2744, %v2072, 0
        %v3004 = vsel %vm2744, %v2074, 0
        %3006 = vmatprep.subr.bf16.mxu0 0
        %3007 = vmatpush1.bf16.msra.mxu0 0
        %3008 = vmatprep.subr.bf16.mxu0 0
        %3009 = vmatpush1.bf16.msra.mxu0 0
        %3010 = vmatprep.subr.bf16.mxu0 0
        %3011 = vmatpush1.bf16.msra.mxu0 %v2967
        %3012 = vmatprep.subr.bf16.mxu0 0
        %3013 = vmatpush1.bf16.msra.mxu0 %v2966
        %3014 = vmatprep.subr.bf16.mxu0 0
        %3015 = vmatpush1.bf16.msra.mxu0 %v2965
        %3016 = vmatprep.subr.bf16.mxu0 0
        %3017 = vmatpush1.bf16.msra.mxu0 %v2964
        %3018 = vmatprep.subr.bf16.mxu0 0
        %3019 = vmatpush1.bf16.msra.mxu0 %v2963
        %3020 = vmatprep.subr.bf16.mxu0 0
        %3021 = vmatpush1.bf16.msra.mxu0 %v2962
        %3022 = vmatprep.subr.bf16.mxu0 0
        %3023 = vmatpush2.bf16.msra.mxu0 0
        %3024 = vmatprep.subr.bf16.mxu0 0
        %3025 = vmatpush2.bf16.msra.mxu0 0
        %3026 = vmatprep.subr.bf16.mxu0 0
        %3027 = vmatpush2.bf16.msra.mxu0 0
        %3028 = vmatprep.subr.bf16.mxu0 0
        %3029 = vmatpush2.bf16.msra.mxu0 0
        %3030 = vmatprep.subr.bf16.mxu0 0
        %3031 = vmatpush2.bf16.msra.mxu0 0
        %3032 = vmatprep.subr.bf16.mxu0 0
        %3033 = vmatpush2.bf16.msra.mxu0 0
        %3034 = vmatprep.subr.bf16.mxu0 0
        %3035 = vmatpush2.bf16.msra.mxu0 0
        %3036 = vmatprep.subr.bf16.mxu0 0
        %3037 = vmatpush2.bf16.msra.mxu0 0
        %3038 = vmatprep.mubr.bf16.mxu0 0
        %3039 = vmatmul.mubr.bf16.gmra.mxu0 %v2974
        %v3040 = vpop.f32.mrf.mxu0
        %v3041 = vadd.f32 %v2812, %v3040
        %v3042 = vpop.f32.mrf.mxu0
        %v3043 = vpop.f32.mrf.mxu0
        %v3044 = vadd.f32 %v2815, %v3043
        %v3045 = vpop.f32.mrf.mxu0
        %3046 = vmatprep.mubr.bf16.mxu0 0
        %3047 = vmatmul.mubr.bf16.gmra.mxu0 %v2976
        %v3048 = vpop.f32.mrf.mxu0
        %v3049 = vadd.f32 %v2820, %v3048
        %v3050 = vpop.f32.mrf.mxu0
        %v3051 = vpop.f32.mrf.mxu0
        %v3052 = vadd.f32 %v2823, %v3051
        %v3053 = vpop.f32.mrf.mxu0
        %3054 = vmatprep.mubr.bf16.mxu0 0
        %3055 = vmatmul.mubr.bf16.gmra.mxu0 %v2978
        %v3056 = vpop.f32.mrf.mxu0
        %v3057 = vadd.f32 %v2828, %v3056
        %v3058 = vpop.f32.mrf.mxu0
        %v3059 = vpop.f32.mrf.mxu0
        %v3060 = vadd.f32 %v2831, %v3059
        %v3061 = vpop.f32.mrf.mxu0
        %3062 = vmatprep.mubr.bf16.mxu0 0
        %3063 = vmatmul.mubr.bf16.gmra.mxu0 %v2980
        %v3064 = vpop.f32.mrf.mxu0
        %v3065 = vadd.f32 %v2836, %v3064
        %v3066 = vpop.f32.mrf.mxu0
        %v3067 = vpop.f32.mrf.mxu0
        %v3068 = vadd.f32 %v2839, %v3067
        %v3069 = vpop.f32.mrf.mxu0
        %3070 = vmatprep.mubr.bf16.mxu0 0
        %3071 = vmatmul.mubr.bf16.gmra.mxu0 %v2982
        %v3072 = vpop.f32.mrf.mxu0
        %v3073 = vadd.f32 %v2844, %v3072
        %v3074 = vpop.f32.mrf.mxu0
        %v3075 = vpop.f32.mrf.mxu0
        %v3076 = vadd.f32 %v2847, %v3075
        %v3077 = vpop.f32.mrf.mxu0
        %3078 = vmatprep.mubr.bf16.mxu0 0
        %3079 = vmatmul.mubr.bf16.gmra.mxu0 %v2984
        %v3080 = vpop.f32.mrf.mxu0
        %v3081 = vadd.f32 %v2852, %v3080
        %v3082 = vpop.f32.mrf.mxu0
        %v3083 = vpop.f32.mrf.mxu0
        %v3084 = vadd.f32 %v2855, %v3083
        %v3085 = vpop.f32.mrf.mxu0
        %3086 = vmatprep.mubr.bf16.mxu0 0
        %3087 = vmatmul.mubr.bf16.gmra.mxu0 %v2986
        %v3088 = vpop.f32.mrf.mxu0
        %v3089 = vadd.f32 %v2860, %v3088
        %v3090 = vpop.f32.mrf.mxu0
        %v3091 = vpop.f32.mrf.mxu0
        %v3092 = vadd.f32 %v2863, %v3091
        %v3093 = vpop.f32.mrf.mxu0
        %3094 = vmatprep.mubr.bf16.mxu0 0
        %3095 = vmatmul.mubr.bf16.gmra.mxu0 %v2988
        %v3096 = vpop.f32.mrf.mxu0
        %v3097 = vadd.f32 %v2868, %v3096
        %v3098 = vpop.f32.mrf.mxu0
        %v3099 = vpop.f32.mrf.mxu0
        %v3100 = vadd.f32 %v2871, %v3099
        %v3101 = vpop.f32.mrf.mxu0
        %3102 = vmatprep.mubr.bf16.mxu0 0
        %3103 = vmatmul.mubr.bf16.gmra.mxu0 %v2990
        %v3104 = vpop.f32.mrf.mxu0
        %v3105 = vadd.f32 %v2876, %v3104
        %v3106 = vpop.f32.mrf.mxu0
        %v3107 = vpop.f32.mrf.mxu0
        %v3108 = vadd.f32 %v2879, %v3107
        %v3109 = vpop.f32.mrf.mxu0
        %3110 = vmatprep.mubr.bf16.mxu0 0
        %3111 = vmatmul.mubr.bf16.gmra.mxu0 %v2992
        %v3112 = vpop.f32.mrf.mxu0
        %v3113 = vadd.f32 %v2884, %v3112
        %v3114 = vpop.f32.mrf.mxu0
        %v3115 = vpop.f32.mrf.mxu0
        %v3116 = vadd.f32 %v2887, %v3115
        %v3117 = vpop.f32.mrf.mxu0
        %3118 = vmatprep.mubr.bf16.mxu0 0
        %3119 = vmatmul.mubr.bf16.gmra.mxu0 %v2994
        %v3120 = vpop.f32.mrf.mxu0
        %v3121 = vadd.f32 %v2892, %v3120
        %v3122 = vpop.f32.mrf.mxu0
        %v3123 = vpop.f32.mrf.mxu0
        %v3124 = vadd.f32 %v2895, %v3123
        %v3125 = vpop.f32.mrf.mxu0
        %3126 = vmatprep.mubr.bf16.mxu0 0
        %3127 = vmatmul.mubr.bf16.gmra.mxu0 %v2996
        %v3128 = vpop.f32.mrf.mxu0
        %v3129 = vadd.f32 %v2900, %v3128
        %v3130 = vpop.f32.mrf.mxu0
        %v3131 = vpop.f32.mrf.mxu0
        %v3132 = vadd.f32 %v2903, %v3131
        %v3133 = vpop.f32.mrf.mxu0
        %3134 = vmatprep.mubr.bf16.mxu0 0
        %3135 = vmatmul.mubr.bf16.gmra.mxu0 %v2998
        %v3136 = vpop.f32.mrf.mxu0
        %v3137 = vadd.f32 %v2908, %v3136
        %v3138 = vpop.f32.mrf.mxu0
        %v3139 = vpop.f32.mrf.mxu0
        %v3140 = vadd.f32 %v2911, %v3139
        %v3141 = vpop.f32.mrf.mxu0
        %3142 = vmatprep.mubr.bf16.mxu0 0
        %3143 = vmatmul.mubr.bf16.gmra.mxu0 %v3000
        %v3144 = vpop.f32.mrf.mxu0
        %v3145 = vadd.f32 %v2916, %v3144
        %v3146 = vpop.f32.mrf.mxu0
        %v3147 = vpop.f32.mrf.mxu0
        %v3148 = vadd.f32 %v2919, %v3147
        %v3149 = vpop.f32.mrf.mxu0
        %3150 = vmatprep.mubr.bf16.mxu0 0
        %3151 = vmatmul.mubr.bf16.gmra.mxu0 %v3002
        %v3152 = vpop.f32.mrf.mxu0
        %v3153 = vadd.f32 %v2924, %v3152
        %v3154 = vpop.f32.mrf.mxu0
        %v3155 = vpop.f32.mrf.mxu0
        %v3156 = vadd.f32 %v2927, %v3155
        %v3157 = vpop.f32.mrf.mxu0
        %3158 = vmatprep.mubr.bf16.mxu0 0
        %3159 = vmatmul.mubr.bf16.gmra.mxu0 %v3004
        %v3160 = vpop.f32.mrf.mxu0
        %v3161 = vadd.f32 %v2932, %v3160
        %v3162 = vpop.f32.mrf.mxu0
        %v3163 = vpop.f32.mrf.mxu0
        %v3164 = vadd.f32 %v2935, %v3163
        %v3165 = vpop.f32.mrf.mxu0
        %3166 = vdwg.mxu0
        %s3167 = scalar_lea.vmem [#allocation2], 24
        %v3168 = vld [vmem:[%s3167] sm:$0xf]
        %v3169 = vld [vmem:[%s3167 + $0x4] sm:$0xf]
        %v3170 = vld [vmem:[%s3167 + $0xc] sm:$0xf]
        %v3171 = vld [vmem:[%s3167 + $0x10] sm:$0xf]
        %v3172 = vld [vmem:[%s3167 + $0x18] sm:$0xf]
        %v3173 = vld [vmem:[%s3167 + $0x1c] sm:$0xf]
        %v3174 = vld [vmem:[%s3167 + $0x24] sm:$0xf]
        %v3175 = vld [vmem:[%s3167 + $0x28] sm:$0xf]
        %v3176 = vld [vmem:[%s3167 + $0x30] sm:$0xf]
        %v3177 = vld [vmem:[%s3167 + $0x34] sm:$0xf]
        %v3178 = vld [vmem:[%s3167 + $0x3c] sm:$0xf]
        %v3179 = vld [vmem:[%s3167 + $0x40] sm:$0xf]
        %v3180 = vld [vmem:[%s3167 + $0x48] sm:$0xf]
        %v3181 = vld [vmem:[%s3167 + $0x4c] sm:$0xf]
        %v3182 = vld [vmem:[%s3167 + $0x54] sm:$0xf]
        %v3183 = vld [vmem:[%s3167 + $0x58] sm:$0xf]
        %v3184 = vld [vmem:[%s3167 + $0x60] sm:$0xf]
        %v3185 = vld [vmem:[%s3167 + $0x64] sm:$0xf]
        %v3186 = vld [vmem:[%s3167 + $0x6c] sm:$0xf]
        %v3187 = vld [vmem:[%s3167 + $0x70] sm:$0xf]
        %v3188 = vld [vmem:[%s3167 + $0x78] sm:$0xf]
        %v3189 = vld [vmem:[%s3167 + $0x7c] sm:$0xf]
        %v3190 = vld [vmem:[%s3167 + $0x84] sm:$0xf]
        %v3191 = vld [vmem:[%s3167 + $0x88] sm:$0xf]
        %v3192 = vld [vmem:[%s3167 + $0x90] sm:$0xf]
        %v3193 = vld [vmem:[%s3167 + $0x94] sm:$0xf]
        %v3194 = vld [vmem:[%s3167 + $0x9c] sm:$0xf]
        %v3195 = vld [vmem:[%s3167 + $0xa0] sm:$0xf]
        %v3196 = vld [vmem:[%s3167 + $0xa8] sm:$0xf]
        %v3197 = vld [vmem:[%s3167 + $0xac] sm:$0xf]
        %v3198 = vld [vmem:[%s3167 + $0xb4] sm:$0xf]
        %v3199 = vld [vmem:[%s3167 + $0xb8] sm:$0xf]
        %v3200 = vld [vmem:[%s3167 + $0x8] sm:$0x1]
        %v3201 = vld [vmem:[%s3167 + $0x14] sm:$0x1]
        %v3202 = vld [vmem:[%s3167 + $0x20] sm:$0x1]
        %v3203 = vld [vmem:[%s3167 + $0x2c] sm:$0x1]
        %v3204 = vld [vmem:[%s3167 + $0x38] sm:$0x1]
        %v3205 = vld [vmem:[%s3167 + $0x44] sm:$0x1]
        %v3206 = vld [vmem:[%s3167 + $0x50] sm:$0x1]
        %v3207 = vld [vmem:[%s3167 + $0x5c] sm:$0x1]
        %v3208 = vld [vmem:[%s3167 + $0x68] sm:$0x1]
        %v3209 = vld [vmem:[%s3167 + $0x74] sm:$0x1]
        %v3210 = vld [vmem:[%s3167 + $0x80] sm:$0x1]
        %v3211 = vld [vmem:[%s3167 + $0x8c] sm:$0x1]
        %v3212 = vld [vmem:[%s3167 + $0x98] sm:$0x1]
        %v3213 = vld [vmem:[%s3167 + $0xa4] sm:$0x1]
        %v3214 = vld [vmem:[%s3167 + $0xb0] sm:$0x1]
        %v3215 = vld [vmem:[%s3167 + $0xbc] sm:$0x1]
        %v3216 = vld [vmem:[%s3167] sm:$0xe]
        %v3217 = vld [vmem:[%s3167 + $0xc] sm:$0xe]
        %v3218 = vld [vmem:[%s3167 + $0x18] sm:$0xe]
        %v3219 = vld [vmem:[%s3167 + $0x24] sm:$0xe]
        %v3220 = vld [vmem:[%s3167 + $0x30] sm:$0xe]
        %v3221 = vld [vmem:[%s3167 + $0x3c] sm:$0xe]
        %v3222 = vld [vmem:[%s3167 + $0x48] sm:$0xe]
        %v3223 = vld [vmem:[%s3167 + $0x54] sm:$0xe]
        %v3224 = vld [vmem:[%s3167 + $0x60] sm:$0xe]
        %v3225 = vld [vmem:[%s3167 + $0x6c] sm:$0xe]
        %v3226 = vld [vmem:[%s3167 + $0x78] sm:$0xe]
        %v3227 = vld [vmem:[%s3167 + $0x84] sm:$0xe]
        %v3228 = vld [vmem:[%s3167 + $0x90] sm:$0xe]
        %v3229 = vld [vmem:[%s3167 + $0x9c] sm:$0xe]
        %v3230 = vld [vmem:[%s3167 + $0xa8] sm:$0xe]
        %v3231 = vld [vmem:[%s3167 + $0xb4] sm:$0xe]
        %v3264 = vunpack.c.l.b16 %v3168
        %v3265 = vunpack.c.l.b16 %v3169
        %v3266 = vunpack.c.l.b16 %v3170
        %v3267 = vunpack.c.l.b16 %v3171
        %v3268 = vunpack.c.l.b16 %v3172
        %v3269 = vunpack.c.l.b16 %v3173
        %v3270 = vunpack.c.l.b16 %v3174
        %v3271 = vunpack.c.l.b16 %v3175
        %v3272 = vunpack.c.l.b16 %v3176
        %v3273 = vunpack.c.l.b16 %v3177
        %v3274 = vunpack.c.l.b16 %v3178
        %v3275 = vunpack.c.l.b16 %v3179
        %v3276 = vunpack.c.l.b16 %v3180
        %v3277 = vunpack.c.l.b16 %v3181
        %v3278 = vunpack.c.l.b16 %v3182
        %v3279 = vunpack.c.l.b16 %v3183
        %v3280 = vunpack.c.l.b16 %v3184
        %v3281 = vunpack.c.l.b16 %v3185
        %v3282 = vunpack.c.l.b16 %v3186
        %v3283 = vunpack.c.l.b16 %v3187
        %v3284 = vunpack.c.l.b16 %v3188
        %v3285 = vunpack.c.l.b16 %v3189
        %v3286 = vunpack.c.l.b16 %v3190
        %v3287 = vunpack.c.l.b16 %v3191
        %v3288 = vunpack.c.l.b16 %v3192
        %v3289 = vunpack.c.l.b16 %v3193
        %v3290 = vunpack.c.l.b16 %v3194
        %v3291 = vunpack.c.l.b16 %v3195
        %v3292 = vunpack.c.l.b16 %v3196
        %v3293 = vunpack.c.l.b16 %v3197
        %v3294 = vunpack.c.l.b16 %v3198
        %v3295 = vunpack.c.l.b16 %v3199
        %v3296 = vpack.c.b16 %v3265, %v3264
        %v3297 = vpack.c.b16 %v3267, %v3266
        %v3298 = vpack.c.b16 %v3269, %v3268
        %v3299 = vpack.c.b16 %v3271, %v3270
        %v3300 = vpack.c.b16 %v3273, %v3272
        %v3301 = vpack.c.b16 %v3275, %v3274
        %v3302 = vpack.c.b16 %v3277, %v3276
        %v3303 = vpack.c.b16 %v3279, %v3278
        %v3304 = vpack.c.b16 %v3281, %v3280
        %v3305 = vpack.c.b16 %v3283, %v3282
        %v3306 = vpack.c.b16 %v3285, %v3284
        %v3307 = vpack.c.b16 %v3287, %v3286
        %v3308 = vpack.c.b16 %v3289, %v3288
        %v3309 = vpack.c.b16 %v3291, %v3290
        %v3310 = vpack.c.b16 %v3293, %v3292
        %v3311 = vpack.c.b16 %v3295, %v3294
        %v3328 = vunpack.c.l.b16 %v3200
        %v3329 = vunpack.c.l.b16 %v3201
        %v3330 = vunpack.c.l.b16 %v3202
        %v3331 = vunpack.c.l.b16 %v3203
        %v3332 = vunpack.c.l.b16 %v3204
        %v3333 = vunpack.c.l.b16 %v3205
        %v3334 = vunpack.c.l.b16 %v3206
        %v3335 = vunpack.c.l.b16 %v3207
        %v3336 = vunpack.c.l.b16 %v3208
        %v3337 = vunpack.c.l.b16 %v3209
        %v3338 = vunpack.c.l.b16 %v3210
        %v3339 = vunpack.c.l.b16 %v3211
        %v3340 = vunpack.c.l.b16 %v3212
        %v3341 = vunpack.c.l.b16 %v3213
        %v3342 = vunpack.c.l.b16 %v3214
        %v3343 = vunpack.c.l.b16 %v3215
        %v3344 = vpack.c.b16 %v3328, %v3328
        %v3345 = vpack.c.b16 %v3329, %v3329
        %v3346 = vpack.c.b16 %v3330, %v3330
        %v3347 = vpack.c.b16 %v3331, %v3331
        %v3348 = vpack.c.b16 %v3332, %v3332
        %v3349 = vpack.c.b16 %v3333, %v3333
        %v3350 = vpack.c.b16 %v3334, %v3334
        %v3351 = vpack.c.b16 %v3335, %v3335
        %v3352 = vpack.c.b16 %v3336, %v3336
        %v3353 = vpack.c.b16 %v3337, %v3337
        %v3354 = vpack.c.b16 %v3338, %v3338
        %v3355 = vpack.c.b16 %v3339, %v3339
        %v3356 = vpack.c.b16 %v3340, %v3340
        %v3357 = vpack.c.b16 %v3341, %v3341
        %v3358 = vpack.c.b16 %v3342, %v3342
        %v3359 = vpack.c.b16 %v3343, %v3343
        %v3361 = vshrl.u32 %v3296, 16
        %v3363 = vshll.u32 %v3296, 16
        %v3365 = vrot.slane %v3363, 1
        %v3366 = vor.u32 %v3361, %v3365
        %v3368 = vshll.u32 %v3344, 16
        %v3370 = vrot.slane %v3368, 1
        %v3371 = vsel %vm1656, %v3366, %v3370
        %v3373 = vshrl.u32 %v3297, 16
        %v3375 = vshll.u32 %v3297, 16
        %v3377 = vrot.slane %v3375, 1
        %v3378 = vor.u32 %v3373, %v3377
        %v3380 = vshll.u32 %v3345, 16
        %v3382 = vrot.slane %v3380, 1
        %v3383 = vsel %vm1656, %v3378, %v3382
        %v3385 = vshrl.u32 %v3298, 16
        %v3387 = vshll.u32 %v3298, 16
        %v3389 = vrot.slane %v3387, 1
        %v3390 = vor.u32 %v3385, %v3389
        %v3392 = vshll.u32 %v3346, 16
        %v3394 = vrot.slane %v3392, 1
        %v3395 = vsel %vm1656, %v3390, %v3394
        %v3397 = vshrl.u32 %v3299, 16
        %v3399 = vshll.u32 %v3299, 16
        %v3401 = vrot.slane %v3399, 1
        %v3402 = vor.u32 %v3397, %v3401
        %v3404 = vshll.u32 %v3347, 16
        %v3406 = vrot.slane %v3404, 1
        %v3407 = vsel %vm1656, %v3402, %v3406
        %v3409 = vshrl.u32 %v3300, 16
        %v3411 = vshll.u32 %v3300, 16
        %v3413 = vrot.slane %v3411, 1
        %v3414 = vor.u32 %v3409, %v3413
        %v3416 = vshll.u32 %v3348, 16
        %v3418 = vrot.slane %v3416, 1
        %v3419 = vsel %vm1656, %v3414, %v3418
        %v3421 = vshrl.u32 %v3301, 16
        %v3423 = vshll.u32 %v3301, 16
        %v3425 = vrot.slane %v3423, 1
        %v3426 = vor.u32 %v3421, %v3425
        %v3428 = vshll.u32 %v3349, 16
        %v3430 = vrot.slane %v3428, 1
        %v3431 = vsel %vm1656, %v3426, %v3430
        %v3433 = vshrl.u32 %v3302, 16
        %v3435 = vshll.u32 %v3302, 16
        %v3437 = vrot.slane %v3435, 1
        %v3438 = vor.u32 %v3433, %v3437
        %v3440 = vshll.u32 %v3350, 16
        %v3442 = vrot.slane %v3440, 1
        %v3443 = vsel %vm1656, %v3438, %v3442
        %v3445 = vshrl.u32 %v3303, 16
        %v3447 = vshll.u32 %v3303, 16
        %v3449 = vrot.slane %v3447, 1
        %v3450 = vor.u32 %v3445, %v3449
        %v3452 = vshll.u32 %v3351, 16
        %v3454 = vrot.slane %v3452, 1
        %v3455 = vsel %vm1656, %v3450, %v3454
        %v3457 = vshrl.u32 %v3304, 16
        %v3459 = vshll.u32 %v3304, 16
        %v3461 = vrot.slane %v3459, 1
        %v3462 = vor.u32 %v3457, %v3461
        %v3464 = vshll.u32 %v3352, 16
        %v3466 = vrot.slane %v3464, 1
        %v3467 = vsel %vm1656, %v3462, %v3466
        %v3469 = vshrl.u32 %v3305, 16
        %v3471 = vshll.u32 %v3305, 16
        %v3473 = vrot.slane %v3471, 1
        %v3474 = vor.u32 %v3469, %v3473
        %v3476 = vshll.u32 %v3353, 16
        %v3478 = vrot.slane %v3476, 1
        %v3479 = vsel %vm1656, %v3474, %v3478
        %v3481 = vshrl.u32 %v3306, 16
        %v3483 = vshll.u32 %v3306, 16
        %v3485 = vrot.slane %v3483, 1
        %v3486 = vor.u32 %v3481, %v3485
        %v3488 = vshll.u32 %v3354, 16
        %v3490 = vrot.slane %v3488, 1
        %v3491 = vsel %vm1656, %v3486, %v3490
        %v3493 = vshrl.u32 %v3307, 16
        %v3495 = vshll.u32 %v3307, 16
        %v3497 = vrot.slane %v3495, 1
        %v3498 = vor.u32 %v3493, %v3497
        %v3500 = vshll.u32 %v3355, 16
        %v3502 = vrot.slane %v3500, 1
        %v3503 = vsel %vm1656, %v3498, %v3502
        %v3505 = vshrl.u32 %v3308, 16
        %v3507 = vshll.u32 %v3308, 16
        %v3509 = vrot.slane %v3507, 1
        %v3510 = vor.u32 %v3505, %v3509
        %v3512 = vshll.u32 %v3356, 16
        %v3514 = vrot.slane %v3512, 1
        %v3515 = vsel %vm1656, %v3510, %v3514
        %v3517 = vshrl.u32 %v3309, 16
        %v3519 = vshll.u32 %v3309, 16
        %v3521 = vrot.slane %v3519, 1
        %v3522 = vor.u32 %v3517, %v3521
        %v3524 = vshll.u32 %v3357, 16
        %v3526 = vrot.slane %v3524, 1
        %v3527 = vsel %vm1656, %v3522, %v3526
        %v3529 = vshrl.u32 %v3310, 16
        %v3531 = vshll.u32 %v3310, 16
        %v3533 = vrot.slane %v3531, 1
        %v3534 = vor.u32 %v3529, %v3533
        %v3536 = vshll.u32 %v3358, 16
        %v3538 = vrot.slane %v3536, 1
        %v3539 = vsel %vm1656, %v3534, %v3538
        %v3541 = vshrl.u32 %v3311, 16
        %v3543 = vshll.u32 %v3311, 16
        %v3545 = vrot.slane %v3543, 1
        %v3546 = vor.u32 %v3541, %v3545
        %v3548 = vshll.u32 %v3359, 16
        %v3550 = vrot.slane %v3548, 1
        %v3551 = vsel %vm1656, %v3546, %v3550
        %3552 = vrot.lane.b32.xlu0 %v3371, 32
        %v3553 = vpop.permute.xlu0 %3552
        %3554 = vrot.lane.b32.xlu0 %v3383, 32
        %v3555 = vpop.permute.xlu0 %3554
        %3556 = vrot.lane.b32.xlu0 %v3395, 32
        %v3557 = vpop.permute.xlu0 %3556
        %3558 = vrot.lane.b32.xlu0 %v3407, 32
        %v3559 = vpop.permute.xlu0 %3558
        %3560 = vrot.lane.b32.xlu0 %v3419, 32
        %v3561 = vpop.permute.xlu0 %3560
        %3562 = vrot.lane.b32.xlu0 %v3431, 32
        %v3563 = vpop.permute.xlu0 %3562
        %3564 = vrot.lane.b32.xlu0 %v3443, 32
        %v3565 = vpop.permute.xlu0 %3564
        %3566 = vrot.lane.b32.xlu0 %v3455, 32
        %v3567 = vpop.permute.xlu0 %3566
        %3568 = vrot.lane.b32.xlu0 %v3467, 32
        %v3569 = vpop.permute.xlu0 %3568
        %3570 = vrot.lane.b32.xlu0 %v3479, 32
        %v3571 = vpop.permute.xlu0 %3570
        %3572 = vrot.lane.b32.xlu0 %v3491, 32
        %v3573 = vpop.permute.xlu0 %3572
        %3574 = vrot.lane.b32.xlu0 %v3503, 32
        %v3575 = vpop.permute.xlu0 %3574
        %3576 = vrot.lane.b32.xlu0 %v3515, 32
        %v3577 = vpop.permute.xlu0 %3576
        %3578 = vrot.lane.b32.xlu0 %v3527, 32
        %v3579 = vpop.permute.xlu0 %3578
        %3580 = vrot.lane.b32.xlu0 %v3539, 32
        %v3581 = vpop.permute.xlu0 %3580
        %3582 = vrot.lane.b32.xlu0 %v3551, 32
        %v3583 = vpop.permute.xlu0 %3582
        %v3600 = vunpack.c.l.b16 %v3216
        %v3601 = vunpack.c.l.b16 %v3217
        %v3602 = vunpack.c.l.b16 %v3218
        %v3603 = vunpack.c.l.b16 %v3219
        %v3604 = vunpack.c.l.b16 %v3220
        %v3605 = vunpack.c.l.b16 %v3221
        %v3606 = vunpack.c.l.b16 %v3222
        %v3607 = vunpack.c.l.b16 %v3223
        %v3608 = vunpack.c.l.b16 %v3224
        %v3609 = vunpack.c.l.b16 %v3225
        %v3610 = vunpack.c.l.b16 %v3226
        %v3611 = vunpack.c.l.b16 %v3227
        %v3612 = vunpack.c.l.b16 %v3228
        %v3613 = vunpack.c.l.b16 %v3229
        %v3614 = vunpack.c.l.b16 %v3230
        %v3615 = vunpack.c.l.b16 %v3231
        %v3616 = vpack.c.b16 %v3265, %v3600
        %v3617 = vpack.c.b16 %v3267, %v3601
        %v3618 = vpack.c.b16 %v3269, %v3602
        %v3619 = vpack.c.b16 %v3271, %v3603
        %v3620 = vpack.c.b16 %v3273, %v3604
        %v3621 = vpack.c.b16 %v3275, %v3605
        %v3622 = vpack.c.b16 %v3277, %v3606
        %v3623 = vpack.c.b16 %v3279, %v3607
        %v3624 = vpack.c.b16 %v3281, %v3608
        %v3625 = vpack.c.b16 %v3283, %v3609
        %v3626 = vpack.c.b16 %v3285, %v3610
        %v3627 = vpack.c.b16 %v3287, %v3611
        %v3628 = vpack.c.b16 %v3289, %v3612
        %v3629 = vpack.c.b16 %v3291, %v3613
        %v3630 = vpack.c.b16 %v3293, %v3614
        %v3631 = vpack.c.b16 %v3295, %v3615
        %v3632 = vrot.slane %v3616, 1
        %v3633 = vrot.slane %v3344, 1
        %v3634 = vsel %vm1929, %v3632, %v3633
        %v3635 = vrot.slane %v3617, 1
        %v3636 = vrot.slane %v3345, 1
        %v3637 = vsel %vm1929, %v3635, %v3636
        %v3638 = vrot.slane %v3618, 1
        %v3639 = vrot.slane %v3346, 1
        %v3640 = vsel %vm1929, %v3638, %v3639
        %v3641 = vrot.slane %v3619, 1
        %v3642 = vrot.slane %v3347, 1
        %v3643 = vsel %vm1929, %v3641, %v3642
        %v3644 = vrot.slane %v3620, 1
        %v3645 = vrot.slane %v3348, 1
        %v3646 = vsel %vm1929, %v3644, %v3645
        %v3647 = vrot.slane %v3621, 1
        %v3648 = vrot.slane %v3349, 1
        %v3649 = vsel %vm1929, %v3647, %v3648
        %v3650 = vrot.slane %v3622, 1
        %v3651 = vrot.slane %v3350, 1
        %v3652 = vsel %vm1929, %v3650, %v3651
        %v3653 = vrot.slane %v3623, 1
        %v3654 = vrot.slane %v3351, 1
        %v3655 = vsel %vm1929, %v3653, %v3654
        %v3656 = vrot.slane %v3624, 1
        %v3657 = vrot.slane %v3352, 1
        %v3658 = vsel %vm1929, %v3656, %v3657
        %v3659 = vrot.slane %v3625, 1
        %v3660 = vrot.slane %v3353, 1
        %v3661 = vsel %vm1929, %v3659, %v3660
        %v3662 = vrot.slane %v3626, 1
        %v3663 = vrot.slane %v3354, 1
        %v3664 = vsel %vm1929, %v3662, %v3663
        %v3665 = vrot.slane %v3627, 1
        %v3666 = vrot.slane %v3355, 1
        %v3667 = vsel %vm1929, %v3665, %v3666
        %v3668 = vrot.slane %v3628, 1
        %v3669 = vrot.slane %v3356, 1
        %v3670 = vsel %vm1929, %v3668, %v3669
        %v3671 = vrot.slane %v3629, 1
        %v3672 = vrot.slane %v3357, 1
        %v3673 = vsel %vm1929, %v3671, %v3672
        %v3674 = vrot.slane %v3630, 1
        %v3675 = vrot.slane %v3358, 1
        %v3676 = vsel %vm1929, %v3674, %v3675
        %v3677 = vrot.slane %v3631, 1
        %v3678 = vrot.slane %v3359, 1
        %v3679 = vsel %vm1929, %v3677, %v3678
        %3680 = vrot.lane.b32.xlu0 %v3634, 64
        %v3681 = vpop.permute.xlu0 %3680
        %3682 = vrot.lane.b32.xlu0 %v3637, 64
        %v3683 = vpop.permute.xlu0 %3682
        %3684 = vrot.lane.b32.xlu0 %v3640, 64
        %v3685 = vpop.permute.xlu0 %3684
        %3686 = vrot.lane.b32.xlu0 %v3643, 64
        %v3687 = vpop.permute.xlu0 %3686
        %3688 = vrot.lane.b32.xlu0 %v3646, 64
        %v3689 = vpop.permute.xlu0 %3688
        %3690 = vrot.lane.b32.xlu0 %v3649, 64
        %v3691 = vpop.permute.xlu0 %3690
        %3692 = vrot.lane.b32.xlu0 %v3652, 64
        %v3693 = vpop.permute.xlu0 %3692
        %3694 = vrot.lane.b32.xlu0 %v3655, 64
        %v3695 = vpop.permute.xlu0 %3694
        %3696 = vrot.lane.b32.xlu0 %v3658, 64
        %v3697 = vpop.permute.xlu0 %3696
        %3698 = vrot.lane.b32.xlu0 %v3661, 64
        %v3699 = vpop.permute.xlu0 %3698
        %3700 = vrot.lane.b32.xlu0 %v3664, 64
        %v3701 = vpop.permute.xlu0 %3700
        %3702 = vrot.lane.b32.xlu0 %v3667, 64
        %v3703 = vpop.permute.xlu0 %3702
        %3704 = vrot.lane.b32.xlu0 %v3670, 64
        %v3705 = vpop.permute.xlu0 %3704
        %3706 = vrot.lane.b32.xlu0 %v3673, 64
        %v3707 = vpop.permute.xlu0 %3706
        %3708 = vrot.lane.b32.xlu0 %v3676, 64
        %v3709 = vpop.permute.xlu0 %3708
        %3710 = vrot.lane.b32.xlu0 %v3679, 64
        %v3711 = vpop.permute.xlu0 %3710
        %v3713 = vsel %vm457, %v3296, %v3553
        %v3715 = vsel %vm457, %v3297, %v3555
        %v3717 = vsel %vm457, %v3298, %v3557
        %v3719 = vsel %vm457, %v3299, %v3559
        %v3721 = vsel %vm457, %v3300, %v3561
        %v3723 = vsel %vm457, %v3301, %v3563
        %v3725 = vsel %vm457, %v3302, %v3565
        %v3727 = vsel %vm457, %v3303, %v3567
        %v3729 = vsel %vm457, %v3304, %v3569
        %v3731 = vsel %vm457, %v3305, %v3571
        %v3733 = vsel %vm457, %v3306, %v3573
        %v3735 = vsel %vm457, %v3307, %v3575
        %v3737 = vsel %vm457, %v3308, %v3577
        %v3739 = vsel %vm457, %v3309, %v3579
        %v3741 = vsel %vm457, %v3310, %v3581
        %v3743 = vsel %vm457, %v3311, %v3583
        %v3745 = vsel %vm2042, %v3713, %v3681
        %v3747 = vsel %vm2042, %v3715, %v3683
        %v3749 = vsel %vm2042, %v3717, %v3685
        %v3751 = vsel %vm2042, %v3719, %v3687
        %v3753 = vsel %vm2042, %v3721, %v3689
        %v3755 = vsel %vm2042, %v3723, %v3691
        %v3757 = vsel %vm2042, %v3725, %v3693
        %v3759 = vsel %vm2042, %v3727, %v3695
        %v3761 = vsel %vm2042, %v3729, %v3697
        %v3763 = vsel %vm2042, %v3731, %v3699
        %v3765 = vsel %vm2042, %v3733, %v3701
        %v3767 = vsel %vm2042, %v3735, %v3703
        %v3769 = vsel %vm2042, %v3737, %v3705
        %v3771 = vsel %vm2042, %v3739, %v3707
        %v3773 = vsel %vm2042, %v3741, %v3709
        %v3775 = vsel %vm2042, %v3743, %v3711
        %s3776 = scalar_lea.vmem %s3, 96
        %v3777 = vld [vmem:[%s3776] sm:$0xf]
        %v3778 = vld [vmem:[%s3776 + $0x4] sm:$0xf]
        %v3779 = vld [vmem:[%s3776 + $0x8] sm:$0xf]
        %v3780 = vld [vmem:[%s3776 + $0xc] sm:$0xf]
        %v3781 = vld [vmem:[%s3776 + $0x10] sm:$0xf]
        %v3782 = vld [vmem:[%s3776 + $0x14] sm:$0xf]
        %v3783 = vld [vmem:[%s3776 + $0x18] sm:$0xf]
        %v3784 = vld [vmem:[%s3776 + $0x1c] sm:$0xf]
        %v3785 = vld [vmem:[%s3776 + $0x20] sm:$0xf]
        %v3786 = vld [vmem:[%s3776 + $0x24] sm:$0xf]
        %v3787 = vld [vmem:[%s3776 + $0x28] sm:$0xf]
        %v3788 = vld [vmem:[%s3776 + $0x2c] sm:$0xf]
        %v3801 = vunpack.c.l.b16 %v3777
        %v3802 = vunpack.c.l.b16 %v3778
        %v3803 = vunpack.c.l.b16 %v3779
        %v3804 = vunpack.c.l.b16 %v3780
        %v3805 = vunpack.c.l.b16 %v3781
        %v3806 = vunpack.c.l.b16 %v3782
        %v3807 = vunpack.c.l.b16 %v3783
        %v3808 = vunpack.c.l.b16 %v3784
        %v3809 = vunpack.c.l.b16 %v3785
        %v3810 = vunpack.c.l.b16 %v3786
        %v3811 = vunpack.c.l.b16 %v3787
        %v3812 = vunpack.c.l.b16 %v3788
        %v3813 = vpack.c.b16 %v3802, %v3801
        %v3814 = vpack.c.b16 %v3804, %v3803
        %v3815 = vpack.c.b16 %v3806, %v3805
        %v3816 = vpack.c.b16 %v3808, %v3807
        %v3817 = vpack.c.b16 %v3810, %v3809
        %v3818 = vpack.c.b16 %v3812, %v3811
        %v3825 = vsel %vm2744, %v3745, 0
        %v3827 = vsel %vm2744, %v3747, 0
        %v3829 = vsel %vm2744, %v3749, 0
        %v3831 = vsel %vm2744, %v3751, 0
        %v3833 = vsel %vm2744, %v3753, 0
        %v3835 = vsel %vm2744, %v3755, 0
        %v3837 = vsel %vm2744, %v3757, 0
        %v3839 = vsel %vm2744, %v3759, 0
        %v3841 = vsel %vm2744, %v3761, 0
        %v3843 = vsel %vm2744, %v3763, 0
        %v3845 = vsel %vm2744, %v3765, 0
        %v3847 = vsel %vm2744, %v3767, 0
        %v3849 = vsel %vm2744, %v3769, 0
        %v3851 = vsel %vm2744, %v3771, 0
        %v3853 = vsel %vm2744, %v3773, 0
        %v3855 = vsel %vm2744, %v3775, 0
        %3857 = vmatprep.subr.bf16.mxu0 0
        %3858 = vmatpush1.bf16.msra.mxu0 0
        %3859 = vmatprep.subr.bf16.mxu0 0
        %3860 = vmatpush1.bf16.msra.mxu0 0
        %3861 = vmatprep.subr.bf16.mxu0 0
        %3862 = vmatpush1.bf16.msra.mxu0 %v3818
        %3863 = vmatprep.subr.bf16.mxu0 0
        %3864 = vmatpush1.bf16.msra.mxu0 %v3817
        %3865 = vmatprep.subr.bf16.mxu0 0
        %3866 = vmatpush1.bf16.msra.mxu0 %v3816
        %3867 = vmatprep.subr.bf16.mxu0 0
        %3868 = vmatpush1.bf16.msra.mxu0 %v3815
        %3869 = vmatprep.subr.bf16.mxu0 0
        %3870 = vmatpush1.bf16.msra.mxu0 %v3814
        %3871 = vmatprep.subr.bf16.mxu0 0
        %3872 = vmatpush1.bf16.msra.mxu0 %v3813
        %3873 = vmatprep.subr.bf16.mxu0 0
        %3874 = vmatpush2.bf16.msra.mxu0 0
        %3875 = vmatprep.subr.bf16.mxu0 0
        %3876 = vmatpush2.bf16.msra.mxu0 0
        %3877 = vmatprep.subr.bf16.mxu0 0
        %3878 = vmatpush2.bf16.msra.mxu0 0
        %3879 = vmatprep.subr.bf16.mxu0 0
        %3880 = vmatpush2.bf16.msra.mxu0 0
        %3881 = vmatprep.subr.bf16.mxu0 0
        %3882 = vmatpush2.bf16.msra.mxu0 0
        %3883 = vmatprep.subr.bf16.mxu0 0
        %3884 = vmatpush2.bf16.msra.mxu0 0
        %3885 = vmatprep.subr.bf16.mxu0 0
        %3886 = vmatpush2.bf16.msra.mxu0 0
        %3887 = vmatprep.subr.bf16.mxu0 0
        %3888 = vmatpush2.bf16.msra.mxu0 0
        %3889 = vmatprep.mubr.bf16.mxu0 0
        %3890 = vmatmul.mubr.bf16.gmra.mxu0 %v3825
        %v3891 = vpop.f32.mrf.mxu0
        %v3892 = vadd.f32 0.0, %v3891
        %v3893 = vpop.f32.mrf.mxu0
        %v3894 = vpop.f32.mrf.mxu0
        %v3895 = vadd.f32 0.0, %v3894
        %v3896 = vpop.f32.mrf.mxu0
        %3897 = vmatprep.mubr.bf16.mxu0 0
        %3898 = vmatmul.mubr.bf16.gmra.mxu0 %v3827
        %v3899 = vpop.f32.mrf.mxu0
        %v3900 = vadd.f32 0.0, %v3899
        %v3901 = vpop.f32.mrf.mxu0
        %v3902 = vpop.f32.mrf.mxu0
        %v3903 = vadd.f32 0.0, %v3902
        %v3904 = vpop.f32.mrf.mxu0
        %3905 = vmatprep.mubr.bf16.mxu0 0
        %3906 = vmatmul.mubr.bf16.gmra.mxu0 %v3829
        %v3907 = vpop.f32.mrf.mxu0
        %v3908 = vadd.f32 0.0, %v3907
        %v3909 = vpop.f32.mrf.mxu0
        %v3910 = vpop.f32.mrf.mxu0
        %v3911 = vadd.f32 0.0, %v3910
        %v3912 = vpop.f32.mrf.mxu0
        %3913 = vmatprep.mubr.bf16.mxu0 0
        %3914 = vmatmul.mubr.bf16.gmra.mxu0 %v3831
        %v3915 = vpop.f32.mrf.mxu0
        %v3916 = vadd.f32 0.0, %v3915
        %v3917 = vpop.f32.mrf.mxu0
        %v3918 = vpop.f32.mrf.mxu0
        %v3919 = vadd.f32 0.0, %v3918
        %v3920 = vpop.f32.mrf.mxu0
        %3921 = vmatprep.mubr.bf16.mxu0 0
        %3922 = vmatmul.mubr.bf16.gmra.mxu0 %v3833
        %v3923 = vpop.f32.mrf.mxu0
        %v3924 = vadd.f32 0.0, %v3923
        %v3925 = vpop.f32.mrf.mxu0
        %v3926 = vpop.f32.mrf.mxu0
        %v3927 = vadd.f32 0.0, %v3926
        %v3928 = vpop.f32.mrf.mxu0
        %3929 = vmatprep.mubr.bf16.mxu0 0
        %3930 = vmatmul.mubr.bf16.gmra.mxu0 %v3835
        %v3931 = vpop.f32.mrf.mxu0
        %v3932 = vadd.f32 0.0, %v3931
        %v3933 = vpop.f32.mrf.mxu0
        %v3934 = vpop.f32.mrf.mxu0
        %v3935 = vadd.f32 0.0, %v3934
        %v3936 = vpop.f32.mrf.mxu0
        %3937 = vmatprep.mubr.bf16.mxu0 0
        %3938 = vmatmul.mubr.bf16.gmra.mxu0 %v3837
        %v3939 = vpop.f32.mrf.mxu0
        %v3940 = vadd.f32 0.0, %v3939
        %v3941 = vpop.f32.mrf.mxu0
        %v3942 = vpop.f32.mrf.mxu0
        %v3943 = vadd.f32 0.0, %v3942
        %v3944 = vpop.f32.mrf.mxu0
        %3945 = vmatprep.mubr.bf16.mxu0 0
        %3946 = vmatmul.mubr.bf16.gmra.mxu0 %v3839
        %v3947 = vpop.f32.mrf.mxu0
        %v3948 = vadd.f32 0.0, %v3947
        %v3949 = vpop.f32.mrf.mxu0
        %v3950 = vpop.f32.mrf.mxu0
        %v3951 = vadd.f32 0.0, %v3950
        %v3952 = vpop.f32.mrf.mxu0
        %3953 = vmatprep.mubr.bf16.mxu0 0
        %3954 = vmatmul.mubr.bf16.gmra.mxu0 %v3841
        %v3955 = vpop.f32.mrf.mxu0
        %v3956 = vadd.f32 0.0, %v3955
        %v3957 = vpop.f32.mrf.mxu0
        %v3958 = vpop.f32.mrf.mxu0
        %v3959 = vadd.f32 0.0, %v3958
        %v3960 = vpop.f32.mrf.mxu0
        %3961 = vmatprep.mubr.bf16.mxu0 0
        %3962 = vmatmul.mubr.bf16.gmra.mxu0 %v3843
        %v3963 = vpop.f32.mrf.mxu0
        %v3964 = vadd.f32 0.0, %v3963
        %v3965 = vpop.f32.mrf.mxu0
        %v3966 = vpop.f32.mrf.mxu0
        %v3967 = vadd.f32 0.0, %v3966
        %v3968 = vpop.f32.mrf.mxu0
        %3969 = vmatprep.mubr.bf16.mxu0 0
        %3970 = vmatmul.mubr.bf16.gmra.mxu0 %v3845
        %v3971 = vpop.f32.mrf.mxu0
        %v3972 = vadd.f32 0.0, %v3971
        %v3973 = vpop.f32.mrf.mxu0
        %v3974 = vpop.f32.mrf.mxu0
        %v3975 = vadd.f32 0.0, %v3974
        %v3976 = vpop.f32.mrf.mxu0
        %3977 = vmatprep.mubr.bf16.mxu0 0
        %3978 = vmatmul.mubr.bf16.gmra.mxu0 %v3847
        %v3979 = vpop.f32.mrf.mxu0
        %v3980 = vadd.f32 0.0, %v3979
        %v3981 = vpop.f32.mrf.mxu0
        %v3982 = vpop.f32.mrf.mxu0
        %v3983 = vadd.f32 0.0, %v3982
        %v3984 = vpop.f32.mrf.mxu0
        %3985 = vmatprep.mubr.bf16.mxu0 0
        %3986 = vmatmul.mubr.bf16.gmra.mxu0 %v3849
        %v3987 = vpop.f32.mrf.mxu0
        %v3988 = vadd.f32 0.0, %v3987
        %v3989 = vpop.f32.mrf.mxu0
        %v3990 = vpop.f32.mrf.mxu0
        %v3991 = vadd.f32 0.0, %v3990
        %v3992 = vpop.f32.mrf.mxu0
        %3993 = vmatprep.mubr.bf16.mxu0 0
        %3994 = vmatmul.mubr.bf16.gmra.mxu0 %v3851
        %v3995 = vpop.f32.mrf.mxu0
        %v3996 = vadd.f32 0.0, %v3995
        %v3997 = vpop.f32.mrf.mxu0
        %v3998 = vpop.f32.mrf.mxu0
        %v3999 = vadd.f32 0.0, %v3998
        %v4000 = vpop.f32.mrf.mxu0
        %4001 = vmatprep.mubr.bf16.mxu0 0
        %4002 = vmatmul.mubr.bf16.gmra.mxu0 %v3853
        %v4003 = vpop.f32.mrf.mxu0
        %v4004 = vadd.f32 0.0, %v4003
        %v4005 = vpop.f32.mrf.mxu0
        %v4006 = vpop.f32.mrf.mxu0
        %v4007 = vadd.f32 0.0, %v4006
        %v4008 = vpop.f32.mrf.mxu0
        %4009 = vmatprep.mubr.bf16.mxu0 0
        %4010 = vmatmul.mubr.bf16.gmra.mxu0 %v3855
        %v4011 = vpop.f32.mrf.mxu0
        %v4012 = vadd.f32 0.0, %v4011
        %v4013 = vpop.f32.mrf.mxu0
        %v4014 = vpop.f32.mrf.mxu0
        %v4015 = vadd.f32 0.0, %v4014
        %v4016 = vpop.f32.mrf.mxu0
        %4017 = vdwg.mxu0
        %v4018 = vadd.f32 %v3041, %v3892
        %v4019 = vadd.f32 %v3044, %v3895
        %v4020 = vadd.f32 %v3049, %v3900
        %v4021 = vadd.f32 %v3052, %v3903
        %v4022 = vadd.f32 %v3057, %v3908
        %v4023 = vadd.f32 %v3060, %v3911
        %v4024 = vadd.f32 %v3065, %v3916
        %v4025 = vadd.f32 %v3068, %v3919
        %v4026 = vadd.f32 %v3073, %v3924
        %v4027 = vadd.f32 %v3076, %v3927
        %v4028 = vadd.f32 %v3081, %v3932
        %v4029 = vadd.f32 %v3084, %v3935
        %v4030 = vadd.f32 %v3089, %v3940
        %v4031 = vadd.f32 %v3092, %v3943
        %v4032 = vadd.f32 %v3097, %v3948
        %v4033 = vadd.f32 %v3100, %v3951
        %v4034 = vadd.f32 %v3105, %v3956
        %v4035 = vadd.f32 %v3108, %v3959
        %v4036 = vadd.f32 %v3113, %v3964
        %v4037 = vadd.f32 %v3116, %v3967
        %v4038 = vadd.f32 %v3121, %v3972
        %v4039 = vadd.f32 %v3124, %v3975
        %v4040 = vadd.f32 %v3129, %v3980
        %v4041 = vadd.f32 %v3132, %v3983
        %v4042 = vadd.f32 %v3137, %v3988
        %v4043 = vadd.f32 %v3140, %v3991
        %v4044 = vadd.f32 %v3145, %v3996
        %v4045 = vadd.f32 %v3148, %v3999
        %v4046 = vadd.f32 %v3153, %v4004
        %v4047 = vadd.f32 %v3156, %v4007
        %v4048 = vadd.f32 %v3161, %v4012
        %v4049 = vadd.f32 %v3164, %v4015
        %v4050 = vld [vmem:[%s4] sm:$0x1]
        %v4052 = vlaneseq
        %v4053 = vshrl.u32 %v4052, 7
        %v4054 = vsub.s32 0, %v4053
        %v4055 = vrot.slane %v4050, %v4054
        %v4057 = vadd.f32 %v4018, %v4055
        %v4058 = vadd.f32 %v4019, %v4055
        %v4059 = vadd.f32 %v4020, %v4055
        %v4060 = vadd.f32 %v4021, %v4055
        %v4061 = vadd.f32 %v4022, %v4055
        %v4062 = vadd.f32 %v4023, %v4055
        %v4063 = vadd.f32 %v4024, %v4055
        %v4064 = vadd.f32 %v4025, %v4055
        %v4065 = vadd.f32 %v4026, %v4055
        %v4066 = vadd.f32 %v4027, %v4055
        %v4067 = vadd.f32 %v4028, %v4055
        %v4068 = vadd.f32 %v4029, %v4055
        %v4069 = vadd.f32 %v4030, %v4055
        %v4070 = vadd.f32 %v4031, %v4055
        %v4071 = vadd.f32 %v4032, %v4055
        %v4072 = vadd.f32 %v4033, %v4055
        %v4073 = vadd.f32 %v4034, %v4055
        %v4074 = vadd.f32 %v4035, %v4055
        %v4075 = vadd.f32 %v4036, %v4055
        %v4076 = vadd.f32 %v4037, %v4055
        %v4077 = vadd.f32 %v4038, %v4055
        %v4078 = vadd.f32 %v4039, %v4055
        %v4079 = vadd.f32 %v4040, %v4055
        %v4080 = vadd.f32 %v4041, %v4055
        %v4081 = vadd.f32 %v4042, %v4055
        %v4082 = vadd.f32 %v4043, %v4055
        %v4083 = vadd.f32 %v4044, %v4055
        %v4084 = vadd.f32 %v4045, %v4055
        %v4085 = vadd.f32 %v4046, %v4055
        %v4086 = vadd.f32 %v4047, %v4055
        %v4087 = vadd.f32 %v4048, %v4055
        %v4088 = vadd.f32 %v4049, %v4055
        %v4089 = vmax.f32 %v4057, 0.0
        %v4090 = vmax.f32 %v4058, 0.0
        %v4091 = vmax.f32 %v4059, 0.0
        %v4092 = vmax.f32 %v4060, 0.0
        %v4093 = vmax.f32 %v4061, 0.0
        %v4094 = vmax.f32 %v4062, 0.0
        %v4095 = vmax.f32 %v4063, 0.0
        %v4096 = vmax.f32 %v4064, 0.0
        %v4097 = vmax.f32 %v4065, 0.0
        %v4098 = vmax.f32 %v4066, 0.0
        %v4099 = vmax.f32 %v4067, 0.0
        %v4100 = vmax.f32 %v4068, 0.0
        %v4101 = vmax.f32 %v4069, 0.0
        %v4102 = vmax.f32 %v4070, 0.0
        %v4103 = vmax.f32 %v4071, 0.0
        %v4104 = vmax.f32 %v4072, 0.0
        %v4105 = vmax.f32 %v4073, 0.0
        %v4106 = vmax.f32 %v4074, 0.0
        %v4107 = vmax.f32 %v4075, 0.0
        %v4108 = vmax.f32 %v4076, 0.0
        %v4109 = vmax.f32 %v4077, 0.0
        %v4110 = vmax.f32 %v4078, 0.0
        %v4111 = vmax.f32 %v4079, 0.0
        %v4112 = vmax.f32 %v4080, 0.0
        %v4113 = vmax.f32 %v4081, 0.0
        %v4114 = vmax.f32 %v4082, 0.0
        %v4115 = vmax.f32 %v4083, 0.0
        %v4116 = vmax.f32 %v4084, 0.0
        %v4117 = vmax.f32 %v4085, 0.0
        %v4118 = vmax.f32 %v4086, 0.0
        %v4119 = vmax.f32 %v4087, 0.0
        %v4120 = vmax.f32 %v4088, 0.0
        %v4153 = vcombine.high %v4089, %v4089
        %v4155 = vunpack.c.l.s4 1983009808
        %v4156 = vunpack.c.0.s8 %v4155
        %v4157 = vlaneseq
        %v4158 = vshrl.u32 %v4157, 7
        %v4159 = vsub.s32 %v4156, %v4158
        %v4160 = vrot.slane %v4089, %v4159
        %v4162 = vunpack.c.l.s4 1983009808
        %v4163 = vunpack.c.0.s8 %v4162
        %v4164 = vlaneseq
        %v4165 = vshrl.u32 %v4164, 7
        %v4166 = vsub.s32 %v4163, %v4165
        %v4167 = vrot.slane %v4153, %v4166
        %v4168 = vcombine.high %v4160, %v4160
        %v4169 = vcombine.high %v4167, %v4167
        %v4170 = vcombine.high %v4090, %v4090
        %v4172 = vunpack.c.l.s4 1983009808
        %v4173 = vunpack.c.0.s8 %v4172
        %v4174 = vlaneseq
        %v4175 = vshrl.u32 %v4174, 7
        %v4176 = vsub.s32 %v4173, %v4175
        %v4177 = vrot.slane %v4090, %v4176
        %v4179 = vunpack.c.l.s4 1983009808
        %v4180 = vunpack.c.0.s8 %v4179
        %v4181 = vlaneseq
        %v4182 = vshrl.u32 %v4181, 7
        %v4183 = vsub.s32 %v4180, %v4182
        %v4184 = vrot.slane %v4170, %v4183
        %v4185 = vcombine.high %v4177, %v4177
        %v4186 = vcombine.high %v4184, %v4184
        %v4187 = vcombine.high %v4091, %v4091
        %v4189 = vunpack.c.l.s4 1983009808
        %v4190 = vunpack.c.0.s8 %v4189
        %v4191 = vlaneseq
        %v4192 = vshrl.u32 %v4191, 7
        %v4193 = vsub.s32 %v4190, %v4192
        %v4194 = vrot.slane %v4091, %v4193
        %v4196 = vunpack.c.l.s4 1983009808
        %v4197 = vunpack.c.0.s8 %v4196
        %v4198 = vlaneseq
        %v4199 = vshrl.u32 %v4198, 7
        %v4200 = vsub.s32 %v4197, %v4199
        %v4201 = vrot.slane %v4187, %v4200
        %v4202 = vcombine.high %v4194, %v4194
        %v4203 = vcombine.high %v4201, %v4201
        %v4204 = vcombine.high %v4092, %v4092
        %v4206 = vunpack.c.l.s4 1983009808
        %v4207 = vunpack.c.0.s8 %v4206
        %v4208 = vlaneseq
        %v4209 = vshrl.u32 %v4208, 7
        %v4210 = vsub.s32 %v4207, %v4209
        %v4211 = vrot.slane %v4092, %v4210
        %v4213 = vunpack.c.l.s4 1983009808
        %v4214 = vunpack.c.0.s8 %v4213
        %v4215 = vlaneseq
        %v4216 = vshrl.u32 %v4215, 7
        %v4217 = vsub.s32 %v4214, %v4216
        %v4218 = vrot.slane %v4204, %v4217
        %v4219 = vcombine.high %v4211, %v4211
        %v4220 = vcombine.high %v4218, %v4218
        %v4221 = vcombine.high %v4093, %v4093
        %v4223 = vunpack.c.l.s4 1983009808
        %v4224 = vunpack.c.0.s8 %v4223
        %v4225 = vlaneseq
        %v4226 = vshrl.u32 %v4225, 7
        %v4227 = vsub.s32 %v4224, %v4226
        %v4228 = vrot.slane %v4093, %v4227
        %v4230 = vunpack.c.l.s4 1983009808
        %v4231 = vunpack.c.0.s8 %v4230
        %v4232 = vlaneseq
        %v4233 = vshrl.u32 %v4232, 7
        %v4234 = vsub.s32 %v4231, %v4233
        %v4235 = vrot.slane %v4221, %v4234
        %v4236 = vcombine.high %v4228, %v4228
        %v4237 = vcombine.high %v4235, %v4235
        %v4238 = vcombine.high %v4094, %v4094
        %v4240 = vunpack.c.l.s4 1983009808
        %v4241 = vunpack.c.0.s8 %v4240
        %v4242 = vlaneseq
        %v4243 = vshrl.u32 %v4242, 7
        %v4244 = vsub.s32 %v4241, %v4243
        %v4245 = vrot.slane %v4094, %v4244
        %v4247 = vunpack.c.l.s4 1983009808
        %v4248 = vunpack.c.0.s8 %v4247
        %v4249 = vlaneseq
        %v4250 = vshrl.u32 %v4249, 7
        %v4251 = vsub.s32 %v4248, %v4250
        %v4252 = vrot.slane %v4238, %v4251
        %v4253 = vcombine.high %v4245, %v4245
        %v4254 = vcombine.high %v4252, %v4252
        %v4255 = vcombine.high %v4095, %v4095
        %v4257 = vunpack.c.l.s4 1983009808
        %v4258 = vunpack.c.0.s8 %v4257
        %v4259 = vlaneseq
        %v4260 = vshrl.u32 %v4259, 7
        %v4261 = vsub.s32 %v4258, %v4260
        %v4262 = vrot.slane %v4095, %v4261
        %v4264 = vunpack.c.l.s4 1983009808
        %v4265 = vunpack.c.0.s8 %v4264
        %v4266 = vlaneseq
        %v4267 = vshrl.u32 %v4266, 7
        %v4268 = vsub.s32 %v4265, %v4267
        %v4269 = vrot.slane %v4255, %v4268
        %v4270 = vcombine.high %v4262, %v4262
        %v4271 = vcombine.high %v4269, %v4269
        %v4272 = vcombine.high %v4096, %v4096
        %v4274 = vunpack.c.l.s4 1983009808
        %v4275 = vunpack.c.0.s8 %v4274
        %v4276 = vlaneseq
        %v4277 = vshrl.u32 %v4276, 7
        %v4278 = vsub.s32 %v4275, %v4277
        %v4279 = vrot.slane %v4096, %v4278
        %v4281 = vunpack.c.l.s4 1983009808
        %v4282 = vunpack.c.0.s8 %v4281
        %v4283 = vlaneseq
        %v4284 = vshrl.u32 %v4283, 7
        %v4285 = vsub.s32 %v4282, %v4284
        %v4286 = vrot.slane %v4272, %v4285
        %v4287 = vcombine.high %v4279, %v4279
        %v4288 = vcombine.high %v4286, %v4286
        %v4289 = vcombine.high %v4097, %v4097
        %v4291 = vunpack.c.l.s4 1983009808
        %v4292 = vunpack.c.0.s8 %v4291
        %v4293 = vlaneseq
        %v4294 = vshrl.u32 %v4293, 7
        %v4295 = vsub.s32 %v4292, %v4294
        %v4296 = vrot.slane %v4097, %v4295
        %v4298 = vunpack.c.l.s4 1983009808
        %v4299 = vunpack.c.0.s8 %v4298
        %v4300 = vlaneseq
        %v4301 = vshrl.u32 %v4300, 7
        %v4302 = vsub.s32 %v4299, %v4301
        %v4303 = vrot.slane %v4289, %v4302
        %v4304 = vcombine.high %v4296, %v4296
        %v4305 = vcombine.high %v4303, %v4303
        %v4306 = vcombine.high %v4098, %v4098
        %v4308 = vunpack.c.l.s4 1983009808
        %v4309 = vunpack.c.0.s8 %v4308
        %v4310 = vlaneseq
        %v4311 = vshrl.u32 %v4310, 7
        %v4312 = vsub.s32 %v4309, %v4311
        %v4313 = vrot.slane %v4098, %v4312
        %v4315 = vunpack.c.l.s4 1983009808
        %v4316 = vunpack.c.0.s8 %v4315
        %v4317 = vlaneseq
        %v4318 = vshrl.u32 %v4317, 7
        %v4319 = vsub.s32 %v4316, %v4318
        %v4320 = vrot.slane %v4306, %v4319
        %v4321 = vcombine.high %v4313, %v4313
        %v4322 = vcombine.high %v4320, %v4320
        %v4323 = vcombine.high %v4099, %v4099
        %v4325 = vunpack.c.l.s4 1983009808
        %v4326 = vunpack.c.0.s8 %v4325
        %v4327 = vlaneseq
        %v4328 = vshrl.u32 %v4327, 7
        %v4329 = vsub.s32 %v4326, %v4328
        %v4330 = vrot.slane %v4099, %v4329
        %v4332 = vunpack.c.l.s4 1983009808
        %v4333 = vunpack.c.0.s8 %v4332
        %v4334 = vlaneseq
        %v4335 = vshrl.u32 %v4334, 7
        %v4336 = vsub.s32 %v4333, %v4335
        %v4337 = vrot.slane %v4323, %v4336
        %v4338 = vcombine.high %v4330, %v4330
        %v4339 = vcombine.high %v4337, %v4337
        %v4340 = vcombine.high %v4100, %v4100
        %v4342 = vunpack.c.l.s4 1983009808
        %v4343 = vunpack.c.0.s8 %v4342
        %v4344 = vlaneseq
        %v4345 = vshrl.u32 %v4344, 7
        %v4346 = vsub.s32 %v4343, %v4345
        %v4347 = vrot.slane %v4100, %v4346
        %v4349 = vunpack.c.l.s4 1983009808
        %v4350 = vunpack.c.0.s8 %v4349
        %v4351 = vlaneseq
        %v4352 = vshrl.u32 %v4351, 7
        %v4353 = vsub.s32 %v4350, %v4352
        %v4354 = vrot.slane %v4340, %v4353
        %v4355 = vcombine.high %v4347, %v4347
        %v4356 = vcombine.high %v4354, %v4354
        %v4357 = vcombine.high %v4101, %v4101
        %v4359 = vunpack.c.l.s4 1983009808
        %v4360 = vunpack.c.0.s8 %v4359
        %v4361 = vlaneseq
        %v4362 = vshrl.u32 %v4361, 7
        %v4363 = vsub.s32 %v4360, %v4362
        %v4364 = vrot.slane %v4101, %v4363
        %v4366 = vunpack.c.l.s4 1983009808
        %v4367 = vunpack.c.0.s8 %v4366
        %v4368 = vlaneseq
        %v4369 = vshrl.u32 %v4368, 7
        %v4370 = vsub.s32 %v4367, %v4369
        %v4371 = vrot.slane %v4357, %v4370
        %v4372 = vcombine.high %v4364, %v4364
        %v4373 = vcombine.high %v4371, %v4371
        %v4374 = vcombine.high %v4102, %v4102
        %v4376 = vunpack.c.l.s4 1983009808
        %v4377 = vunpack.c.0.s8 %v4376
        %v4378 = vlaneseq
        %v4379 = vshrl.u32 %v4378, 7
        %v4380 = vsub.s32 %v4377, %v4379
        %v4381 = vrot.slane %v4102, %v4380
        %v4383 = vunpack.c.l.s4 1983009808
        %v4384 = vunpack.c.0.s8 %v4383
        %v4385 = vlaneseq
        %v4386 = vshrl.u32 %v4385, 7
        %v4387 = vsub.s32 %v4384, %v4386
        %v4388 = vrot.slane %v4374, %v4387
        %v4389 = vcombine.high %v4381, %v4381
        %v4390 = vcombine.high %v4388, %v4388
        %v4391 = vcombine.high %v4103, %v4103
        %v4393 = vunpack.c.l.s4 1983009808
        %v4394 = vunpack.c.0.s8 %v4393
        %v4395 = vlaneseq
        %v4396 = vshrl.u32 %v4395, 7
        %v4397 = vsub.s32 %v4394, %v4396
        %v4398 = vrot.slane %v4103, %v4397
        %v4400 = vunpack.c.l.s4 1983009808
        %v4401 = vunpack.c.0.s8 %v4400
        %v4402 = vlaneseq
        %v4403 = vshrl.u32 %v4402, 7
        %v4404 = vsub.s32 %v4401, %v4403
        %v4405 = vrot.slane %v4391, %v4404
        %v4406 = vcombine.high %v4398, %v4398
        %v4407 = vcombine.high %v4405, %v4405
        %v4408 = vcombine.high %v4104, %v4104
        %v4410 = vunpack.c.l.s4 1983009808
        %v4411 = vunpack.c.0.s8 %v4410
        %v4412 = vlaneseq
        %v4413 = vshrl.u32 %v4412, 7
        %v4414 = vsub.s32 %v4411, %v4413
        %v4415 = vrot.slane %v4104, %v4414
        %v4417 = vunpack.c.l.s4 1983009808
        %v4418 = vunpack.c.0.s8 %v4417
        %v4419 = vlaneseq
        %v4420 = vshrl.u32 %v4419, 7
        %v4421 = vsub.s32 %v4418, %v4420
        %v4422 = vrot.slane %v4408, %v4421
        %v4423 = vcombine.high %v4415, %v4415
        %v4424 = vcombine.high %v4422, %v4422
        %v4425 = vcombine.high %v4105, %v4105
        %v4427 = vunpack.c.l.s4 1983009808
        %v4428 = vunpack.c.0.s8 %v4427
        %v4429 = vlaneseq
        %v4430 = vshrl.u32 %v4429, 7
        %v4431 = vsub.s32 %v4428, %v4430
        %v4432 = vrot.slane %v4105, %v4431
        %v4434 = vunpack.c.l.s4 1983009808
        %v4435 = vunpack.c.0.s8 %v4434
        %v4436 = vlaneseq
        %v4437 = vshrl.u32 %v4436, 7
        %v4438 = vsub.s32 %v4435, %v4437
        %v4439 = vrot.slane %v4425, %v4438
        %v4440 = vcombine.high %v4432, %v4432
        %v4441 = vcombine.high %v4439, %v4439
        %v4442 = vcombine.high %v4106, %v4106
        %v4444 = vunpack.c.l.s4 1983009808
        %v4445 = vunpack.c.0.s8 %v4444
        %v4446 = vlaneseq
        %v4447 = vshrl.u32 %v4446, 7
        %v4448 = vsub.s32 %v4445, %v4447
        %v4449 = vrot.slane %v4106, %v4448
        %v4451 = vunpack.c.l.s4 1983009808
        %v4452 = vunpack.c.0.s8 %v4451
        %v4453 = vlaneseq
        %v4454 = vshrl.u32 %v4453, 7
        %v4455 = vsub.s32 %v4452, %v4454
        %v4456 = vrot.slane %v4442, %v4455
        %v4457 = vcombine.high %v4449, %v4449
        %v4458 = vcombine.high %v4456, %v4456
        %v4459 = vcombine.high %v4107, %v4107
        %v4461 = vunpack.c.l.s4 1983009808
        %v4462 = vunpack.c.0.s8 %v4461
        %v4463 = vlaneseq
        %v4464 = vshrl.u32 %v4463, 7
        %v4465 = vsub.s32 %v4462, %v4464
        %v4466 = vrot.slane %v4107, %v4465
        %v4468 = vunpack.c.l.s4 1983009808
        %v4469 = vunpack.c.0.s8 %v4468
        %v4470 = vlaneseq
        %v4471 = vshrl.u32 %v4470, 7
        %v4472 = vsub.s32 %v4469, %v4471
        %v4473 = vrot.slane %v4459, %v4472
        %v4474 = vcombine.high %v4466, %v4466
        %v4475 = vcombine.high %v4473, %v4473
        %v4476 = vcombine.high %v4108, %v4108
        %v4478 = vunpack.c.l.s4 1983009808
        %v4479 = vunpack.c.0.s8 %v4478
        %v4480 = vlaneseq
        %v4481 = vshrl.u32 %v4480, 7
        %v4482 = vsub.s32 %v4479, %v4481
        %v4483 = vrot.slane %v4108, %v4482
        %v4485 = vunpack.c.l.s4 1983009808
        %v4486 = vunpack.c.0.s8 %v4485
        %v4487 = vlaneseq
        %v4488 = vshrl.u32 %v4487, 7
        %v4489 = vsub.s32 %v4486, %v4488
        %v4490 = vrot.slane %v4476, %v4489
        %v4491 = vcombine.high %v4483, %v4483
        %v4492 = vcombine.high %v4490, %v4490
        %v4493 = vcombine.high %v4109, %v4109
        %v4495 = vunpack.c.l.s4 1983009808
        %v4496 = vunpack.c.0.s8 %v4495
        %v4497 = vlaneseq
        %v4498 = vshrl.u32 %v4497, 7
        %v4499 = vsub.s32 %v4496, %v4498
        %v4500 = vrot.slane %v4109, %v4499
        %v4502 = vunpack.c.l.s4 1983009808
        %v4503 = vunpack.c.0.s8 %v4502
        %v4504 = vlaneseq
        %v4505 = vshrl.u32 %v4504, 7
        %v4506 = vsub.s32 %v4503, %v4505
        %v4507 = vrot.slane %v4493, %v4506
        %v4508 = vcombine.high %v4500, %v4500
        %v4509 = vcombine.high %v4507, %v4507
        %v4510 = vcombine.high %v4110, %v4110
        %v4512 = vunpack.c.l.s4 1983009808
        %v4513 = vunpack.c.0.s8 %v4512
        %v4514 = vlaneseq
        %v4515 = vshrl.u32 %v4514, 7
        %v4516 = vsub.s32 %v4513, %v4515
        %v4517 = vrot.slane %v4110, %v4516
        %v4519 = vunpack.c.l.s4 1983009808
        %v4520 = vunpack.c.0.s8 %v4519
        %v4521 = vlaneseq
        %v4522 = vshrl.u32 %v4521, 7
        %v4523 = vsub.s32 %v4520, %v4522
        %v4524 = vrot.slane %v4510, %v4523
        %v4525 = vcombine.high %v4517, %v4517
        %v4526 = vcombine.high %v4524, %v4524
        %v4527 = vcombine.high %v4111, %v4111
        %v4529 = vunpack.c.l.s4 1983009808
        %v4530 = vunpack.c.0.s8 %v4529
        %v4531 = vlaneseq
        %v4532 = vshrl.u32 %v4531, 7
        %v4533 = vsub.s32 %v4530, %v4532
        %v4534 = vrot.slane %v4111, %v4533
        %v4536 = vunpack.c.l.s4 1983009808
        %v4537 = vunpack.c.0.s8 %v4536
        %v4538 = vlaneseq
        %v4539 = vshrl.u32 %v4538, 7
        %v4540 = vsub.s32 %v4537, %v4539
        %v4541 = vrot.slane %v4527, %v4540
        %v4542 = vcombine.high %v4534, %v4534
        %v4543 = vcombine.high %v4541, %v4541
        %v4544 = vcombine.high %v4112, %v4112
        %v4546 = vunpack.c.l.s4 1983009808
        %v4547 = vunpack.c.0.s8 %v4546
        %v4548 = vlaneseq
        %v4549 = vshrl.u32 %v4548, 7
        %v4550 = vsub.s32 %v4547, %v4549
        %v4551 = vrot.slane %v4112, %v4550
        %v4553 = vunpack.c.l.s4 1983009808
        %v4554 = vunpack.c.0.s8 %v4553
        %v4555 = vlaneseq
        %v4556 = vshrl.u32 %v4555, 7
        %v4557 = vsub.s32 %v4554, %v4556
        %v4558 = vrot.slane %v4544, %v4557
        %v4559 = vcombine.high %v4551, %v4551
        %v4560 = vcombine.high %v4558, %v4558
        %v4561 = vcombine.high %v4113, %v4113
        %v4563 = vunpack.c.l.s4 1983009808
        %v4564 = vunpack.c.0.s8 %v4563
        %v4565 = vlaneseq
        %v4566 = vshrl.u32 %v4565, 7
        %v4567 = vsub.s32 %v4564, %v4566
        %v4568 = vrot.slane %v4113, %v4567
        %v4570 = vunpack.c.l.s4 1983009808
        %v4571 = vunpack.c.0.s8 %v4570
        %v4572 = vlaneseq
        %v4573 = vshrl.u32 %v4572, 7
        %v4574 = vsub.s32 %v4571, %v4573
        %v4575 = vrot.slane %v4561, %v4574
        %v4576 = vcombine.high %v4568, %v4568
        %v4577 = vcombine.high %v4575, %v4575
        %v4578 = vcombine.high %v4114, %v4114
        %v4580 = vunpack.c.l.s4 1983009808
        %v4581 = vunpack.c.0.s8 %v4580
        %v4582 = vlaneseq
        %v4583 = vshrl.u32 %v4582, 7
        %v4584 = vsub.s32 %v4581, %v4583
        %v4585 = vrot.slane %v4114, %v4584
        %v4587 = vunpack.c.l.s4 1983009808
        %v4588 = vunpack.c.0.s8 %v4587
        %v4589 = vlaneseq
        %v4590 = vshrl.u32 %v4589, 7
        %v4591 = vsub.s32 %v4588, %v4590
        %v4592 = vrot.slane %v4578, %v4591
        %v4593 = vcombine.high %v4585, %v4585
        %v4594 = vcombine.high %v4592, %v4592
        %v4595 = vcombine.high %v4115, %v4115
        %v4597 = vunpack.c.l.s4 1983009808
        %v4598 = vunpack.c.0.s8 %v4597
        %v4599 = vlaneseq
        %v4600 = vshrl.u32 %v4599, 7
        %v4601 = vsub.s32 %v4598, %v4600
        %v4602 = vrot.slane %v4115, %v4601
        %v4604 = vunpack.c.l.s4 1983009808
        %v4605 = vunpack.c.0.s8 %v4604
        %v4606 = vlaneseq
        %v4607 = vshrl.u32 %v4606, 7
        %v4608 = vsub.s32 %v4605, %v4607
        %v4609 = vrot.slane %v4595, %v4608
        %v4610 = vcombine.high %v4602, %v4602
        %v4611 = vcombine.high %v4609, %v4609
        %v4612 = vcombine.high %v4116, %v4116
        %v4614 = vunpack.c.l.s4 1983009808
        %v4615 = vunpack.c.0.s8 %v4614
        %v4616 = vlaneseq
        %v4617 = vshrl.u32 %v4616, 7
        %v4618 = vsub.s32 %v4615, %v4617
        %v4619 = vrot.slane %v4116, %v4618
        %v4621 = vunpack.c.l.s4 1983009808
        %v4622 = vunpack.c.0.s8 %v4621
        %v4623 = vlaneseq
        %v4624 = vshrl.u32 %v4623, 7
        %v4625 = vsub.s32 %v4622, %v4624
        %v4626 = vrot.slane %v4612, %v4625
        %v4627 = vcombine.high %v4619, %v4619
        %v4628 = vcombine.high %v4626, %v4626
        %v4629 = vcombine.high %v4117, %v4117
        %v4631 = vunpack.c.l.s4 1983009808
        %v4632 = vunpack.c.0.s8 %v4631
        %v4633 = vlaneseq
        %v4634 = vshrl.u32 %v4633, 7
        %v4635 = vsub.s32 %v4632, %v4634
        %v4636 = vrot.slane %v4117, %v4635
        %v4638 = vunpack.c.l.s4 1983009808
        %v4639 = vunpack.c.0.s8 %v4638
        %v4640 = vlaneseq
        %v4641 = vshrl.u32 %v4640, 7
        %v4642 = vsub.s32 %v4639, %v4641
        %v4643 = vrot.slane %v4629, %v4642
        %v4644 = vcombine.high %v4636, %v4636
        %v4645 = vcombine.high %v4643, %v4643
        %v4646 = vcombine.high %v4118, %v4118
        %v4648 = vunpack.c.l.s4 1983009808
        %v4649 = vunpack.c.0.s8 %v4648
        %v4650 = vlaneseq
        %v4651 = vshrl.u32 %v4650, 7
        %v4652 = vsub.s32 %v4649, %v4651
        %v4653 = vrot.slane %v4118, %v4652
        %v4655 = vunpack.c.l.s4 1983009808
        %v4656 = vunpack.c.0.s8 %v4655
        %v4657 = vlaneseq
        %v4658 = vshrl.u32 %v4657, 7
        %v4659 = vsub.s32 %v4656, %v4658
        %v4660 = vrot.slane %v4646, %v4659
        %v4661 = vcombine.high %v4653, %v4653
        %v4662 = vcombine.high %v4660, %v4660
        %v4663 = vcombine.high %v4119, %v4119
        %v4665 = vunpack.c.l.s4 1983009808
        %v4666 = vunpack.c.0.s8 %v4665
        %v4667 = vlaneseq
        %v4668 = vshrl.u32 %v4667, 7
        %v4669 = vsub.s32 %v4666, %v4668
        %v4670 = vrot.slane %v4119, %v4669
        %v4672 = vunpack.c.l.s4 1983009808
        %v4673 = vunpack.c.0.s8 %v4672
        %v4674 = vlaneseq
        %v4675 = vshrl.u32 %v4674, 7
        %v4676 = vsub.s32 %v4673, %v4675
        %v4677 = vrot.slane %v4663, %v4676
        %v4678 = vcombine.high %v4670, %v4670
        %v4679 = vcombine.high %v4677, %v4677
        %v4680 = vcombine.high %v4120, %v4120
        %v4682 = vunpack.c.l.s4 1983009808
        %v4683 = vunpack.c.0.s8 %v4682
        %v4684 = vlaneseq
        %v4685 = vshrl.u32 %v4684, 7
        %v4686 = vsub.s32 %v4683, %v4685
        %v4687 = vrot.slane %v4120, %v4686
        %v4689 = vunpack.c.l.s4 1983009808
        %v4690 = vunpack.c.0.s8 %v4689
        %v4691 = vlaneseq
        %v4692 = vshrl.u32 %v4691, 7
        %v4693 = vsub.s32 %v4690, %v4692
        %v4694 = vrot.slane %v4680, %v4693
        %v4695 = vcombine.high %v4687, %v4687
        %v4696 = vcombine.high %v4694, %v4694
        %v4825 = vrot.slane %v4160, 7
        %v4826 = vrot.slane %v4825, 2
        %v4827 = vrot.slane %v4168, 7
        %v4828 = vrot.slane %v4827, 2
        %v4829 = vrot.slane %v4167, 7
        %v4830 = vrot.slane %v4829, 2
        %v4831 = vrot.slane %v4169, 7
        %v4832 = vrot.slane %v4831, 2
        %v4833 = vrot.slane %v4177, 7
        %v4834 = vrot.slane %v4833, 2
        %v4835 = vrot.slane %v4185, 7
        %v4836 = vrot.slane %v4835, 2
        %v4837 = vrot.slane %v4184, 7
        %v4838 = vrot.slane %v4837, 2
        %v4839 = vrot.slane %v4186, 7
        %v4840 = vrot.slane %v4839, 2
        %v4841 = vrot.slane %v4194, 7
        %v4842 = vrot.slane %v4841, 2
        %v4843 = vrot.slane %v4202, 7
        %v4844 = vrot.slane %v4843, 2
        %v4845 = vrot.slane %v4201, 7
        %v4846 = vrot.slane %v4845, 2
        %v4847 = vrot.slane %v4203, 7
        %v4848 = vrot.slane %v4847, 2
        %v4849 = vrot.slane %v4211, 7
        %v4850 = vrot.slane %v4849, 2
        %v4851 = vrot.slane %v4219, 7
        %v4852 = vrot.slane %v4851, 2
        %v4853 = vrot.slane %v4218, 7
        %v4854 = vrot.slane %v4853, 2
        %v4855 = vrot.slane %v4220, 7
        %v4856 = vrot.slane %v4855, 2
        %v4857 = vrot.slane %v4228, 7
        %v4858 = vrot.slane %v4857, 2
        %v4859 = vrot.slane %v4236, 7
        %v4860 = vrot.slane %v4859, 2
        %v4861 = vrot.slane %v4235, 7
        %v4862 = vrot.slane %v4861, 2
        %v4863 = vrot.slane %v4237, 7
        %v4864 = vrot.slane %v4863, 2
        %v4865 = vrot.slane %v4245, 7
        %v4866 = vrot.slane %v4865, 2
        %v4867 = vrot.slane %v4253, 7
        %v4868 = vrot.slane %v4867, 2
        %v4869 = vrot.slane %v4252, 7
        %v4870 = vrot.slane %v4869, 2
        %v4871 = vrot.slane %v4254, 7
        %v4872 = vrot.slane %v4871, 2
        %v4873 = vrot.slane %v4262, 7
        %v4874 = vrot.slane %v4873, 2
        %v4875 = vrot.slane %v4270, 7
        %v4876 = vrot.slane %v4875, 2
        %v4877 = vrot.slane %v4269, 7
        %v4878 = vrot.slane %v4877, 2
        %v4879 = vrot.slane %v4271, 7
        %v4880 = vrot.slane %v4879, 2
        %v4881 = vrot.slane %v4279, 7
        %v4882 = vrot.slane %v4881, 2
        %v4883 = vrot.slane %v4287, 7
        %v4884 = vrot.slane %v4883, 2
        %v4885 = vrot.slane %v4286, 7
        %v4886 = vrot.slane %v4885, 2
        %v4887 = vrot.slane %v4288, 7
        %v4888 = vrot.slane %v4887, 2
        %v4889 = vrot.slane %v4296, 7
        %v4890 = vrot.slane %v4889, 2
        %v4891 = vrot.slane %v4304, 7
        %v4892 = vrot.slane %v4891, 2
        %v4893 = vrot.slane %v4303, 7
        %v4894 = vrot.slane %v4893, 2
        %v4895 = vrot.slane %v4305, 7
        %v4896 = vrot.slane %v4895, 2
        %v4897 = vrot.slane %v4313, 7
        %v4898 = vrot.slane %v4897, 2
        %v4899 = vrot.slane %v4321, 7
        %v4900 = vrot.slane %v4899, 2
        %v4901 = vrot.slane %v4320, 7
        %v4902 = vrot.slane %v4901, 2
        %v4903 = vrot.slane %v4322, 7
        %v4904 = vrot.slane %v4903, 2
        %v4905 = vrot.slane %v4330, 7
        %v4906 = vrot.slane %v4905, 2
        %v4907 = vrot.slane %v4338, 7
        %v4908 = vrot.slane %v4907, 2
        %v4909 = vrot.slane %v4337, 7
        %v4910 = vrot.slane %v4909, 2
        %v4911 = vrot.slane %v4339, 7
        %v4912 = vrot.slane %v4911, 2
        %v4913 = vrot.slane %v4347, 7
        %v4914 = vrot.slane %v4913, 2
        %v4915 = vrot.slane %v4355, 7
        %v4916 = vrot.slane %v4915, 2
        %v4917 = vrot.slane %v4354, 7
        %v4918 = vrot.slane %v4917, 2
        %v4919 = vrot.slane %v4356, 7
        %v4920 = vrot.slane %v4919, 2
        %v4921 = vrot.slane %v4364, 7
        %v4922 = vrot.slane %v4921, 2
        %v4923 = vrot.slane %v4372, 7
        %v4924 = vrot.slane %v4923, 2
        %v4925 = vrot.slane %v4371, 7
        %v4926 = vrot.slane %v4925, 2
        %v4927 = vrot.slane %v4373, 7
        %v4928 = vrot.slane %v4927, 2
        %v4929 = vrot.slane %v4381, 7
        %v4930 = vrot.slane %v4929, 2
        %v4931 = vrot.slane %v4389, 7
        %v4932 = vrot.slane %v4931, 2
        %v4933 = vrot.slane %v4388, 7
        %v4934 = vrot.slane %v4933, 2
        %v4935 = vrot.slane %v4390, 7
        %v4936 = vrot.slane %v4935, 2
        %v4937 = vrot.slane %v4398, 7
        %v4938 = vrot.slane %v4937, 2
        %v4939 = vrot.slane %v4406, 7
        %v4940 = vrot.slane %v4939, 2
        %v4941 = vrot.slane %v4405, 7
        %v4942 = vrot.slane %v4941, 2
        %v4943 = vrot.slane %v4407, 7
        %v4944 = vrot.slane %v4943, 2
        %v4945 = vrot.slane %v4415, 7
        %v4946 = vrot.slane %v4945, 2
        %v4947 = vrot.slane %v4423, 7
        %v4948 = vrot.slane %v4947, 2
        %v4949 = vrot.slane %v4422, 7
        %v4950 = vrot.slane %v4949, 2
        %v4951 = vrot.slane %v4424, 7
        %v4952 = vrot.slane %v4951, 2
        %v4953 = vrot.slane %v4432, 7
        %v4954 = vrot.slane %v4953, 2
        %v4955 = vrot.slane %v4440, 7
        %v4956 = vrot.slane %v4955, 2
        %v4957 = vrot.slane %v4439, 7
        %v4958 = vrot.slane %v4957, 2
        %v4959 = vrot.slane %v4441, 7
        %v4960 = vrot.slane %v4959, 2
        %v4961 = vrot.slane %v4449, 7
        %v4962 = vrot.slane %v4961, 2
        %v4963 = vrot.slane %v4457, 7
        %v4964 = vrot.slane %v4963, 2
        %v4965 = vrot.slane %v4456, 7
        %v4966 = vrot.slane %v4965, 2
        %v4967 = vrot.slane %v4458, 7
        %v4968 = vrot.slane %v4967, 2
        %v4969 = vrot.slane %v4466, 7
        %v4970 = vrot.slane %v4969, 2
        %v4971 = vrot.slane %v4474, 7
        %v4972 = vrot.slane %v4971, 2
        %v4973 = vrot.slane %v4473, 7
        %v4974 = vrot.slane %v4973, 2
        %v4975 = vrot.slane %v4475, 7
        %v4976 = vrot.slane %v4975, 2
        %v4977 = vrot.slane %v4483, 7
        %v4978 = vrot.slane %v4977, 2
        %v4979 = vrot.slane %v4491, 7
        %v4980 = vrot.slane %v4979, 2
        %v4981 = vrot.slane %v4490, 7
        %v4982 = vrot.slane %v4981, 2
        %v4983 = vrot.slane %v4492, 7
        %v4984 = vrot.slane %v4983, 2
        %v4985 = vrot.slane %v4500, 7
        %v4986 = vrot.slane %v4985, 2
        %v4987 = vrot.slane %v4508, 7
        %v4988 = vrot.slane %v4987, 2
        %v4989 = vrot.slane %v4507, 7
        %v4990 = vrot.slane %v4989, 2
        %v4991 = vrot.slane %v4509, 7
        %v4992 = vrot.slane %v4991, 2
        %v4993 = vrot.slane %v4517, 7
        %v4994 = vrot.slane %v4993, 2
        %v4995 = vrot.slane %v4525, 7
        %v4996 = vrot.slane %v4995, 2
        %v4997 = vrot.slane %v4524, 7
        %v4998 = vrot.slane %v4997, 2
        %v4999 = vrot.slane %v4526, 7
        %v5000 = vrot.slane %v4999, 2
        %v5001 = vrot.slane %v4534, 7
        %v5002 = vrot.slane %v5001, 2
        %v5003 = vrot.slane %v4542, 7
        %v5004 = vrot.slane %v5003, 2
        %v5005 = vrot.slane %v4541, 7
        %v5006 = vrot.slane %v5005, 2
        %v5007 = vrot.slane %v4543, 7
        %v5008 = vrot.slane %v5007, 2
        %v5009 = vrot.slane %v4551, 7
        %v5010 = vrot.slane %v5009, 2
        %v5011 = vrot.slane %v4559, 7
        %v5012 = vrot.slane %v5011, 2
        %v5013 = vrot.slane %v4558, 7
        %v5014 = vrot.slane %v5013, 2
        %v5015 = vrot.slane %v4560, 7
        %v5016 = vrot.slane %v5015, 2
        %v5017 = vrot.slane %v4568, 7
        %v5018 = vrot.slane %v5017, 2
        %v5019 = vrot.slane %v4576, 7
        %v5020 = vrot.slane %v5019, 2
        %v5021 = vrot.slane %v4575, 7
        %v5022 = vrot.slane %v5021, 2
        %v5023 = vrot.slane %v4577, 7
        %v5024 = vrot.slane %v5023, 2
        %v5025 = vrot.slane %v4585, 7
        %v5026 = vrot.slane %v5025, 2
        %v5027 = vrot.slane %v4593, 7
        %v5028 = vrot.slane %v5027, 2
        %v5029 = vrot.slane %v4592, 7
        %v5030 = vrot.slane %v5029, 2
        %v5031 = vrot.slane %v4594, 7
        %v5032 = vrot.slane %v5031, 2
        %v5033 = vrot.slane %v4602, 7
        %v5034 = vrot.slane %v5033, 2
        %v5035 = vrot.slane %v4610, 7
        %v5036 = vrot.slane %v5035, 2
        %v5037 = vrot.slane %v4609, 7
        %v5038 = vrot.slane %v5037, 2
        %v5039 = vrot.slane %v4611, 7
        %v5040 = vrot.slane %v5039, 2
        %v5041 = vrot.slane %v4619, 7
        %v5042 = vrot.slane %v5041, 2
        %v5043 = vrot.slane %v4627, 7
        %v5044 = vrot.slane %v5043, 2
        %v5045 = vrot.slane %v4626, 7
        %v5046 = vrot.slane %v5045, 2
        %v5047 = vrot.slane %v4628, 7
        %v5048 = vrot.slane %v5047, 2
        %v5049 = vrot.slane %v4636, 7
        %v5050 = vrot.slane %v5049, 2
        %v5051 = vrot.slane %v4644, 7
        %v5052 = vrot.slane %v5051, 2
        %v5053 = vrot.slane %v4643, 7
        %v5054 = vrot.slane %v5053, 2
        %v5055 = vrot.slane %v4645, 7
        %v5056 = vrot.slane %v5055, 2
        %v5057 = vrot.slane %v4653, 7
        %v5058 = vrot.slane %v5057, 2
        %v5059 = vrot.slane %v4661, 7
        %v5060 = vrot.slane %v5059, 2
        %v5061 = vrot.slane %v4660, 7
        %v5062 = vrot.slane %v5061, 2
        %v5063 = vrot.slane %v4662, 7
        %v5064 = vrot.slane %v5063, 2
        %v5065 = vrot.slane %v4670, 7
        %v5066 = vrot.slane %v5065, 2
        %v5067 = vrot.slane %v4678, 7
        %v5068 = vrot.slane %v5067, 2
        %v5069 = vrot.slane %v4677, 7
        %v5070 = vrot.slane %v5069, 2
        %v5071 = vrot.slane %v4679, 7
        %v5072 = vrot.slane %v5071, 2
        %v5073 = vrot.slane %v4687, 7
        %v5074 = vrot.slane %v5073, 2
        %v5075 = vrot.slane %v4695, 7
        %v5076 = vrot.slane %v5075, 2
        %v5077 = vrot.slane %v4694, 7
        %v5078 = vrot.slane %v5077, 2
        %v5079 = vrot.slane %v4696, 7
        %v5080 = vrot.slane %v5079, 2
        %v5209 = vmax.f32 %v4160, %v4826
        %v5210 = vmax.f32 %v4168, %v4828
        %v5211 = vmax.f32 %v4167, %v4830
        %v5212 = vmax.f32 %v4169, %v4832
        %v5213 = vmax.f32 %v4177, %v4834
        %v5214 = vmax.f32 %v4185, %v4836
        %v5215 = vmax.f32 %v4184, %v4838
        %v5216 = vmax.f32 %v4186, %v4840
        %v5217 = vmax.f32 %v4194, %v4842
        %v5218 = vmax.f32 %v4202, %v4844
        %v5219 = vmax.f32 %v4201, %v4846
        %v5220 = vmax.f32 %v4203, %v4848
        %v5221 = vmax.f32 %v4211, %v4850
        %v5222 = vmax.f32 %v4219, %v4852
        %v5223 = vmax.f32 %v4218, %v4854
        %v5224 = vmax.f32 %v4220, %v4856
        %v5225 = vmax.f32 %v4228, %v4858
        %v5226 = vmax.f32 %v4236, %v4860
        %v5227 = vmax.f32 %v4235, %v4862
        %v5228 = vmax.f32 %v4237, %v4864
        %v5229 = vmax.f32 %v4245, %v4866
        %v5230 = vmax.f32 %v4253, %v4868
        %v5231 = vmax.f32 %v4252, %v4870
        %v5232 = vmax.f32 %v4254, %v4872
        %v5233 = vmax.f32 %v4262, %v4874
        %v5234 = vmax.f32 %v4270, %v4876
        %v5235 = vmax.f32 %v4269, %v4878
        %v5236 = vmax.f32 %v4271, %v4880
        %v5237 = vmax.f32 %v4279, %v4882
        %v5238 = vmax.f32 %v4287, %v4884
        %v5239 = vmax.f32 %v4286, %v4886
        %v5240 = vmax.f32 %v4288, %v4888
        %v5241 = vmax.f32 %v4296, %v4890
        %v5242 = vmax.f32 %v4304, %v4892
        %v5243 = vmax.f32 %v4303, %v4894
        %v5244 = vmax.f32 %v4305, %v4896
        %v5245 = vmax.f32 %v4313, %v4898
        %v5246 = vmax.f32 %v4321, %v4900
        %v5247 = vmax.f32 %v4320, %v4902
        %v5248 = vmax.f32 %v4322, %v4904
        %v5249 = vmax.f32 %v4330, %v4906
        %v5250 = vmax.f32 %v4338, %v4908
        %v5251 = vmax.f32 %v4337, %v4910
        %v5252 = vmax.f32 %v4339, %v4912
        %v5253 = vmax.f32 %v4347, %v4914
        %v5254 = vmax.f32 %v4355, %v4916
        %v5255 = vmax.f32 %v4354, %v4918
        %v5256 = vmax.f32 %v4356, %v4920
        %v5257 = vmax.f32 %v4364, %v4922
        %v5258 = vmax.f32 %v4372, %v4924
        %v5259 = vmax.f32 %v4371, %v4926
        %v5260 = vmax.f32 %v4373, %v4928
        %v5261 = vmax.f32 %v4381, %v4930
        %v5262 = vmax.f32 %v4389, %v4932
        %v5263 = vmax.f32 %v4388, %v4934
        %v5264 = vmax.f32 %v4390, %v4936
        %v5265 = vmax.f32 %v4398, %v4938
        %v5266 = vmax.f32 %v4406, %v4940
        %v5267 = vmax.f32 %v4405, %v4942
        %v5268 = vmax.f32 %v4407, %v4944
        %v5269 = vmax.f32 %v4415, %v4946
        %v5270 = vmax.f32 %v4423, %v4948
        %v5271 = vmax.f32 %v4422, %v4950
        %v5272 = vmax.f32 %v4424, %v4952
        %v5273 = vmax.f32 %v4432, %v4954
        %v5274 = vmax.f32 %v4440, %v4956
        %v5275 = vmax.f32 %v4439, %v4958
        %v5276 = vmax.f32 %v4441, %v4960
        %v5277 = vmax.f32 %v4449, %v4962
        %v5278 = vmax.f32 %v4457, %v4964
        %v5279 = vmax.f32 %v4456, %v4966
        %v5280 = vmax.f32 %v4458, %v4968
        %v5281 = vmax.f32 %v4466, %v4970
        %v5282 = vmax.f32 %v4474, %v4972
        %v5283 = vmax.f32 %v4473, %v4974
        %v5284 = vmax.f32 %v4475, %v4976
        %v5285 = vmax.f32 %v4483, %v4978
        %v5286 = vmax.f32 %v4491, %v4980
        %v5287 = vmax.f32 %v4490, %v4982
        %v5288 = vmax.f32 %v4492, %v4984
        %v5289 = vmax.f32 %v4500, %v4986
        %v5290 = vmax.f32 %v4508, %v4988
        %v5291 = vmax.f32 %v4507, %v4990
        %v5292 = vmax.f32 %v4509, %v4992
        %v5293 = vmax.f32 %v4517, %v4994
        %v5294 = vmax.f32 %v4525, %v4996
        %v5295 = vmax.f32 %v4524, %v4998
        %v5296 = vmax.f32 %v4526, %v5000
        %v5297 = vmax.f32 %v4534, %v5002
        %v5298 = vmax.f32 %v4542, %v5004
        %v5299 = vmax.f32 %v4541, %v5006
        %v5300 = vmax.f32 %v4543, %v5008
        %v5301 = vmax.f32 %v4551, %v5010
        %v5302 = vmax.f32 %v4559, %v5012
        %v5303 = vmax.f32 %v4558, %v5014
        %v5304 = vmax.f32 %v4560, %v5016
        %v5305 = vmax.f32 %v4568, %v5018
        %v5306 = vmax.f32 %v4576, %v5020
        %v5307 = vmax.f32 %v4575, %v5022
        %v5308 = vmax.f32 %v4577, %v5024
        %v5309 = vmax.f32 %v4585, %v5026
        %v5310 = vmax.f32 %v4593, %v5028
        %v5311 = vmax.f32 %v4592, %v5030
        %v5312 = vmax.f32 %v4594, %v5032
        %v5313 = vmax.f32 %v4602, %v5034
        %v5314 = vmax.f32 %v4610, %v5036
        %v5315 = vmax.f32 %v4609, %v5038
        %v5316 = vmax.f32 %v4611, %v5040
        %v5317 = vmax.f32 %v4619, %v5042
        %v5318 = vmax.f32 %v4627, %v5044
        %v5319 = vmax.f32 %v4626, %v5046
        %v5320 = vmax.f32 %v4628, %v5048
        %v5321 = vmax.f32 %v4636, %v5050
        %v5322 = vmax.f32 %v4644, %v5052
        %v5323 = vmax.f32 %v4643, %v5054
        %v5324 = vmax.f32 %v4645, %v5056
        %v5325 = vmax.f32 %v4653, %v5058
        %v5326 = vmax.f32 %v4661, %v5060
        %v5327 = vmax.f32 %v4660, %v5062
        %v5328 = vmax.f32 %v4662, %v5064
        %v5329 = vmax.f32 %v4670, %v5066
        %v5330 = vmax.f32 %v4678, %v5068
        %v5331 = vmax.f32 %v4677, %v5070
        %v5332 = vmax.f32 %v4679, %v5072
        %v5333 = vmax.f32 %v4687, %v5074
        %v5334 = vmax.f32 %v4695, %v5076
        %v5335 = vmax.f32 %v4694, %v5078
        %v5336 = vmax.f32 %v4696, %v5080
        %v5337 = vmax.f32 %v5209, %v5217
        %v5338 = vmax.f32 %v5210, %v5218
        %v5339 = vmax.f32 %v5211, %v5219
        %v5340 = vmax.f32 %v5212, %v5220
        %v5341 = vmax.f32 %v5213, %v5221
        %v5342 = vmax.f32 %v5214, %v5222
        %v5343 = vmax.f32 %v5215, %v5223
        %v5344 = vmax.f32 %v5216, %v5224
        %v5345 = vmax.f32 %v5225, %v5233
        %v5346 = vmax.f32 %v5226, %v5234
        %v5347 = vmax.f32 %v5227, %v5235
        %v5348 = vmax.f32 %v5228, %v5236
        %v5349 = vmax.f32 %v5229, %v5237
        %v5350 = vmax.f32 %v5230, %v5238
        %v5351 = vmax.f32 %v5231, %v5239
        %v5352 = vmax.f32 %v5232, %v5240
        %v5353 = vmax.f32 %v5241, %v5249
        %v5354 = vmax.f32 %v5242, %v5250
        %v5355 = vmax.f32 %v5243, %v5251
        %v5356 = vmax.f32 %v5244, %v5252
        %v5357 = vmax.f32 %v5245, %v5253
        %v5358 = vmax.f32 %v5246, %v5254
        %v5359 = vmax.f32 %v5247, %v5255
        %v5360 = vmax.f32 %v5248, %v5256
        %v5361 = vmax.f32 %v5257, %v5265
        %v5362 = vmax.f32 %v5258, %v5266
        %v5363 = vmax.f32 %v5259, %v5267
        %v5364 = vmax.f32 %v5260, %v5268
        %v5365 = vmax.f32 %v5261, %v5269
        %v5366 = vmax.f32 %v5262, %v5270
        %v5367 = vmax.f32 %v5263, %v5271
        %v5368 = vmax.f32 %v5264, %v5272
        %v5369 = vmax.f32 %v5273, %v5281
        %v5370 = vmax.f32 %v5274, %v5282
        %v5371 = vmax.f32 %v5275, %v5283
        %v5372 = vmax.f32 %v5276, %v5284
        %v5373 = vmax.f32 %v5277, %v5285
        %v5374 = vmax.f32 %v5278, %v5286
        %v5375 = vmax.f32 %v5279, %v5287
        %v5376 = vmax.f32 %v5280, %v5288
        %v5377 = vmax.f32 %v5289, %v5297
        %v5378 = vmax.f32 %v5290, %v5298
        %v5379 = vmax.f32 %v5291, %v5299
        %v5380 = vmax.f32 %v5292, %v5300
        %v5381 = vmax.f32 %v5293, %v5301
        %v5382 = vmax.f32 %v5294, %v5302
        %v5383 = vmax.f32 %v5295, %v5303
        %v5384 = vmax.f32 %v5296, %v5304
        %v5385 = vmax.f32 %v5305, %v5313
        %v5386 = vmax.f32 %v5306, %v5314
        %v5387 = vmax.f32 %v5307, %v5315
        %v5388 = vmax.f32 %v5308, %v5316
        %v5389 = vmax.f32 %v5309, %v5317
        %v5390 = vmax.f32 %v5310, %v5318
        %v5391 = vmax.f32 %v5311, %v5319
        %v5392 = vmax.f32 %v5312, %v5320
        %v5393 = vmax.f32 %v5321, %v5329
        %v5394 = vmax.f32 %v5322, %v5330
        %v5395 = vmax.f32 %v5323, %v5331
        %v5396 = vmax.f32 %v5324, %v5332
        %v5397 = vmax.f32 %v5325, %v5333
        %v5398 = vmax.f32 %v5326, %v5334
        %v5399 = vmax.f32 %v5327, %v5335
        %v5400 = vmax.f32 %v5328, %v5336
        %v5401 = vpack.c.bf16 %v5337, %v5337
        %v5402 = vpack.c.bf16 %v5338, %v5338
        %v5403 = vpack.c.bf16 %v5339, %v5339
        %v5404 = vpack.c.bf16 %v5340, %v5340
        %v5405 = vpack.c.bf16 %v5341, %v5341
        %v5406 = vpack.c.bf16 %v5342, %v5342
        %v5407 = vpack.c.bf16 %v5343, %v5343
        %v5408 = vpack.c.bf16 %v5344, %v5344
        %v5409 = vpack.c.bf16 %v5345, %v5345
        %v5410 = vpack.c.bf16 %v5346, %v5346
        %v5411 = vpack.c.bf16 %v5347, %v5347
        %v5412 = vpack.c.bf16 %v5348, %v5348
        %v5413 = vpack.c.bf16 %v5349, %v5349
        %v5414 = vpack.c.bf16 %v5350, %v5350
        %v5415 = vpack.c.bf16 %v5351, %v5351
        %v5416 = vpack.c.bf16 %v5352, %v5352
        %v5417 = vpack.c.bf16 %v5353, %v5353
        %v5418 = vpack.c.bf16 %v5354, %v5354
        %v5419 = vpack.c.bf16 %v5355, %v5355
        %v5420 = vpack.c.bf16 %v5356, %v5356
        %v5421 = vpack.c.bf16 %v5357, %v5357
        %v5422 = vpack.c.bf16 %v5358, %v5358
        %v5423 = vpack.c.bf16 %v5359, %v5359
        %v5424 = vpack.c.bf16 %v5360, %v5360
        %v5425 = vpack.c.bf16 %v5361, %v5361
        %v5426 = vpack.c.bf16 %v5362, %v5362
        %v5427 = vpack.c.bf16 %v5363, %v5363
        %v5428 = vpack.c.bf16 %v5364, %v5364
        %v5429 = vpack.c.bf16 %v5365, %v5365
        %v5430 = vpack.c.bf16 %v5366, %v5366
        %v5431 = vpack.c.bf16 %v5367, %v5367
        %v5432 = vpack.c.bf16 %v5368, %v5368
        %v5433 = vpack.c.bf16 %v5369, %v5369
        %v5434 = vpack.c.bf16 %v5370, %v5370
        %v5435 = vpack.c.bf16 %v5371, %v5371
        %v5436 = vpack.c.bf16 %v5372, %v5372
        %v5437 = vpack.c.bf16 %v5373, %v5373
        %v5438 = vpack.c.bf16 %v5374, %v5374
        %v5439 = vpack.c.bf16 %v5375, %v5375
        %v5440 = vpack.c.bf16 %v5376, %v5376
        %v5441 = vpack.c.bf16 %v5377, %v5377
        %v5442 = vpack.c.bf16 %v5378, %v5378
        %v5443 = vpack.c.bf16 %v5379, %v5379
        %v5444 = vpack.c.bf16 %v5380, %v5380
        %v5445 = vpack.c.bf16 %v5381, %v5381
        %v5446 = vpack.c.bf16 %v5382, %v5382
        %v5447 = vpack.c.bf16 %v5383, %v5383
        %v5448 = vpack.c.bf16 %v5384, %v5384
        %v5449 = vpack.c.bf16 %v5385, %v5385
        %v5450 = vpack.c.bf16 %v5386, %v5386
        %v5451 = vpack.c.bf16 %v5387, %v5387
        %v5452 = vpack.c.bf16 %v5388, %v5388
        %v5453 = vpack.c.bf16 %v5389, %v5389
        %v5454 = vpack.c.bf16 %v5390, %v5390
        %v5455 = vpack.c.bf16 %v5391, %v5391
        %v5456 = vpack.c.bf16 %v5392, %v5392
        %v5457 = vpack.c.bf16 %v5393, %v5393
        %v5458 = vpack.c.bf16 %v5394, %v5394
        %v5459 = vpack.c.bf16 %v5395, %v5395
        %v5460 = vpack.c.bf16 %v5396, %v5396
        %v5461 = vpack.c.bf16 %v5397, %v5397
        %v5462 = vpack.c.bf16 %v5398, %v5398
        %v5463 = vpack.c.bf16 %v5399, %v5399
        %v5464 = vpack.c.bf16 %v5400, %v5400
        %v5465 = vld [vmem:[%s5] sm:$0xf]
        %v5466 = vld [vmem:[%s5 + $0x4] sm:$0xf]
        %v5467 = vld [vmem:[%s5 + $0x8] sm:$0xf]
        %v5468 = vld [vmem:[%s5 + $0xc] sm:$0xf]
        %v5469 = vld [vmem:[%s5 + $0x10] sm:$0xf]
        %v5470 = vld [vmem:[%s5 + $0x14] sm:$0xf]
        %v5471 = vld [vmem:[%s5 + $0x18] sm:$0xf]
        %v5472 = vld [vmem:[%s5 + $0x1c] sm:$0xf]
        %v5537 = vunpack.c.l.b16 %v5401
        %v5538 = vunpack.c.l.b16 %v5402
        %v5539 = vunpack.c.l.b16 %v5403
        %v5540 = vunpack.c.l.b16 %v5404
        %v5541 = vunpack.c.l.b16 %v5405
        %v5542 = vunpack.c.l.b16 %v5406
        %v5543 = vunpack.c.l.b16 %v5407
        %v5544 = vunpack.c.l.b16 %v5408
        %v5545 = vunpack.c.l.b16 %v5409
        %v5546 = vunpack.c.l.b16 %v5410
        %v5547 = vunpack.c.l.b16 %v5411
        %v5548 = vunpack.c.l.b16 %v5412
        %v5549 = vunpack.c.l.b16 %v5413
        %v5550 = vunpack.c.l.b16 %v5414
        %v5551 = vunpack.c.l.b16 %v5415
        %v5552 = vunpack.c.l.b16 %v5416
        %v5553 = vunpack.c.l.b16 %v5417
        %v5554 = vunpack.c.l.b16 %v5418
        %v5555 = vunpack.c.l.b16 %v5419
        %v5556 = vunpack.c.l.b16 %v5420
        %v5557 = vunpack.c.l.b16 %v5421
        %v5558 = vunpack.c.l.b16 %v5422
        %v5559 = vunpack.c.l.b16 %v5423
        %v5560 = vunpack.c.l.b16 %v5424
        %v5561 = vunpack.c.l.b16 %v5425
        %v5562 = vunpack.c.l.b16 %v5426
        %v5563 = vunpack.c.l.b16 %v5427
        %v5564 = vunpack.c.l.b16 %v5428
        %v5565 = vunpack.c.l.b16 %v5429
        %v5566 = vunpack.c.l.b16 %v5430
        %v5567 = vunpack.c.l.b16 %v5431
        %v5568 = vunpack.c.l.b16 %v5432
        %v5569 = vunpack.c.l.b16 %v5433
        %v5570 = vunpack.c.l.b16 %v5434
        %v5571 = vunpack.c.l.b16 %v5435
        %v5572 = vunpack.c.l.b16 %v5436
        %v5573 = vunpack.c.l.b16 %v5437
        %v5574 = vunpack.c.l.b16 %v5438
        %v5575 = vunpack.c.l.b16 %v5439
        %v5576 = vunpack.c.l.b16 %v5440
        %v5577 = vunpack.c.l.b16 %v5441
        %v5578 = vunpack.c.l.b16 %v5442
        %v5579 = vunpack.c.l.b16 %v5443
        %v5580 = vunpack.c.l.b16 %v5444
        %v5581 = vunpack.c.l.b16 %v5445
        %v5582 = vunpack.c.l.b16 %v5446
        %v5583 = vunpack.c.l.b16 %v5447
        %v5584 = vunpack.c.l.b16 %v5448
        %v5585 = vunpack.c.l.b16 %v5449
        %v5586 = vunpack.c.l.b16 %v5450
        %v5587 = vunpack.c.l.b16 %v5451
        %v5588 = vunpack.c.l.b16 %v5452
        %v5589 = vunpack.c.l.b16 %v5453
        %v5590 = vunpack.c.l.b16 %v5454
        %v5591 = vunpack.c.l.b16 %v5455
        %v5592 = vunpack.c.l.b16 %v5456
        %v5593 = vunpack.c.l.b16 %v5457
        %v5594 = vunpack.c.l.b16 %v5458
        %v5595 = vunpack.c.l.b16 %v5459
        %v5596 = vunpack.c.l.b16 %v5460
        %v5597 = vunpack.c.l.b16 %v5461
        %v5598 = vunpack.c.l.b16 %v5462
        %v5599 = vunpack.c.l.b16 %v5463
        %v5600 = vunpack.c.l.b16 %v5464
        %v5601 = vrot.slane %v5538, 7
        %vm5602 = vcmask 1041409
        %v5603 = vsel %vm5602, %v5601, %v5537
        %v5604 = vrot.slane %v5539, 6
        %vm5605 = vcmask 1042434
        %v5606 = vsel %vm5605, %v5604, %v5603
        %v5607 = vrot.slane %v5540, 5
        %vm5608 = vcmask 1043459
        %v5609 = vsel %vm5608, %v5607, %v5606
        %v5610 = vrot.slane %v5541, 4
        %vm5611 = vcmask 1044484
        %v5612 = vsel %vm5611, %v5610, %v5609
        %v5613 = vrot.slane %v5542, 3
        %vm5614 = vcmask 1045509
        %v5615 = vsel %vm5614, %v5613, %v5612
        %v5616 = vrot.slane %v5543, 2
        %vm5617 = vcmask 1046534
        %v5618 = vsel %vm5617, %v5616, %v5615
        %v5619 = vrot.slane %v5544, 1
        %vm5620 = vcmask 1047559
        %v5621 = vsel %vm5620, %v5619, %v5618
        %v5622 = vrot.slane %v5546, 7
        %v5623 = vsel %vm5602, %v5622, %v5545
        %v5624 = vrot.slane %v5547, 6
        %v5625 = vsel %vm5605, %v5624, %v5623
        %v5626 = vrot.slane %v5548, 5
        %v5627 = vsel %vm5608, %v5626, %v5625
        %v5628 = vrot.slane %v5549, 4
        %v5629 = vsel %vm5611, %v5628, %v5627
        %v5630 = vrot.slane %v5550, 3
        %v5631 = vsel %vm5614, %v5630, %v5629
        %v5632 = vrot.slane %v5551, 2
        %v5633 = vsel %vm5617, %v5632, %v5631
        %v5634 = vrot.slane %v5552, 1
        %v5635 = vsel %vm5620, %v5634, %v5633
        %v5636 = vrot.slane %v5554, 7
        %v5637 = vsel %vm5602, %v5636, %v5553
        %v5638 = vrot.slane %v5555, 6
        %v5639 = vsel %vm5605, %v5638, %v5637
        %v5640 = vrot.slane %v5556, 5
        %v5641 = vsel %vm5608, %v5640, %v5639
        %v5642 = vrot.slane %v5557, 4
        %v5643 = vsel %vm5611, %v5642, %v5641
        %v5644 = vrot.slane %v5558, 3
        %v5645 = vsel %vm5614, %v5644, %v5643
        %v5646 = vrot.slane %v5559, 2
        %v5647 = vsel %vm5617, %v5646, %v5645
        %v5648 = vrot.slane %v5560, 1
        %v5649 = vsel %vm5620, %v5648, %v5647
        %v5650 = vrot.slane %v5562, 7
        %v5651 = vsel %vm5602, %v5650, %v5561
        %v5652 = vrot.slane %v5563, 6
        %v5653 = vsel %vm5605, %v5652, %v5651
        %v5654 = vrot.slane %v5564, 5
        %v5655 = vsel %vm5608, %v5654, %v5653
        %v5656 = vrot.slane %v5565, 4
        %v5657 = vsel %vm5611, %v5656, %v5655
        %v5658 = vrot.slane %v5566, 3
        %v5659 = vsel %vm5614, %v5658, %v5657
        %v5660 = vrot.slane %v5567, 2
        %v5661 = vsel %vm5617, %v5660, %v5659
        %v5662 = vrot.slane %v5568, 1
        %v5663 = vsel %vm5620, %v5662, %v5661
        %v5664 = vrot.slane %v5570, 7
        %v5665 = vsel %vm5602, %v5664, %v5569
        %v5666 = vrot.slane %v5571, 6
        %v5667 = vsel %vm5605, %v5666, %v5665
        %v5668 = vrot.slane %v5572, 5
        %v5669 = vsel %vm5608, %v5668, %v5667
        %v5670 = vrot.slane %v5573, 4
        %v5671 = vsel %vm5611, %v5670, %v5669
        %v5672 = vrot.slane %v5574, 3
        %v5673 = vsel %vm5614, %v5672, %v5671
        %v5674 = vrot.slane %v5575, 2
        %v5675 = vsel %vm5617, %v5674, %v5673
        %v5676 = vrot.slane %v5576, 1
        %v5677 = vsel %vm5620, %v5676, %v5675
        %v5678 = vrot.slane %v5578, 7
        %v5679 = vsel %vm5602, %v5678, %v5577
        %v5680 = vrot.slane %v5579, 6
        %v5681 = vsel %vm5605, %v5680, %v5679
        %v5682 = vrot.slane %v5580, 5
        %v5683 = vsel %vm5608, %v5682, %v5681
        %v5684 = vrot.slane %v5581, 4
        %v5685 = vsel %vm5611, %v5684, %v5683
        %v5686 = vrot.slane %v5582, 3
        %v5687 = vsel %vm5614, %v5686, %v5685
        %v5688 = vrot.slane %v5583, 2
        %v5689 = vsel %vm5617, %v5688, %v5687
        %v5690 = vrot.slane %v5584, 1
        %v5691 = vsel %vm5620, %v5690, %v5689
        %v5692 = vrot.slane %v5586, 7
        %v5693 = vsel %vm5602, %v5692, %v5585
        %v5694 = vrot.slane %v5587, 6
        %v5695 = vsel %vm5605, %v5694, %v5693
        %v5696 = vrot.slane %v5588, 5
        %v5697 = vsel %vm5608, %v5696, %v5695
        %v5698 = vrot.slane %v5589, 4
        %v5699 = vsel %vm5611, %v5698, %v5697
        %v5700 = vrot.slane %v5590, 3
        %v5701 = vsel %vm5614, %v5700, %v5699
        %v5702 = vrot.slane %v5591, 2
        %v5703 = vsel %vm5617, %v5702, %v5701
        %v5704 = vrot.slane %v5592, 1
        %v5705 = vsel %vm5620, %v5704, %v5703
        %v5706 = vrot.slane %v5594, 7
        %v5707 = vsel %vm5602, %v5706, %v5593
        %v5708 = vrot.slane %v5595, 6
        %v5709 = vsel %vm5605, %v5708, %v5707
        %v5710 = vrot.slane %v5596, 5
        %v5711 = vsel %vm5608, %v5710, %v5709
        %v5712 = vrot.slane %v5597, 4
        %v5713 = vsel %vm5611, %v5712, %v5711
        %v5714 = vrot.slane %v5598, 3
        %v5715 = vsel %vm5614, %v5714, %v5713
        %v5716 = vrot.slane %v5599, 2
        %v5717 = vsel %vm5617, %v5716, %v5715
        %v5718 = vrot.slane %v5600, 1
        %v5719 = vsel %vm5620, %v5718, %v5717
        %v5720 = vpack.c.b16 %v5635, %v5621
        %v5721 = vpack.c.b16 %v5663, %v5649
        %v5722 = vpack.c.b16 %v5691, %v5677
        %v5723 = vpack.c.b16 %v5719, %v5705
        %v5732 = vunpack.c.l.b16 %v5465
        %v5733 = vunpack.c.l.b16 %v5466
        %v5734 = vunpack.c.l.b16 %v5467
        %v5735 = vunpack.c.l.b16 %v5468
        %v5736 = vunpack.c.l.b16 %v5469
        %v5737 = vunpack.c.l.b16 %v5470
        %v5738 = vunpack.c.l.b16 %v5471
        %v5739 = vunpack.c.l.b16 %v5472
        %v5740 = vpack.c.b16 %v5733, %v5732
        %v5741 = vpack.c.b16 %v5735, %v5734
        %v5742 = vpack.c.b16 %v5737, %v5736
        %v5743 = vpack.c.b16 %v5739, %v5738
        %v5749 = vsel %vm2042, %v5720, 0
        %v5752 = vsel %vm2042, %v5721, 0
        %v5755 = vsel %vm2042, %v5722, 0
        %v5758 = vsel %vm2042, %v5723, 0
        %5760 = vmatprep.subr.bf16.mxu0 0
        %5761 = vmatpush1.bf16.msra.mxu0 0
        %5762 = vmatprep.subr.bf16.mxu0 0
        %5763 = vmatpush1.bf16.msra.mxu0 0
        %5764 = vmatprep.subr.bf16.mxu0 0
        %5765 = vmatpush1.bf16.msra.mxu0 0
        %5766 = vmatprep.subr.bf16.mxu0 0
        %5767 = vmatpush1.bf16.msra.mxu0 0
        %5768 = vmatprep.subr.bf16.mxu0 0
        %5769 = vmatpush1.bf16.msra.mxu0 %v5743
        %5770 = vmatprep.subr.bf16.mxu0 0
        %5771 = vmatpush1.bf16.msra.mxu0 %v5742
        %5772 = vmatprep.subr.bf16.mxu0 0
        %5773 = vmatpush1.bf16.msra.mxu0 %v5741
        %5774 = vmatprep.subr.bf16.mxu0 0
        %5775 = vmatpush1.bf16.msra.mxu0 %v5740
        %5776 = vmatprep.subr.bf16.mxu0 0
        %5777 = vmatpush2.bf16.msra.mxu0 0
        %5778 = vmatprep.subr.bf16.mxu0 0
        %5779 = vmatpush2.bf16.msra.mxu0 0
        %5780 = vmatprep.subr.bf16.mxu0 0
        %5781 = vmatpush2.bf16.msra.mxu0 0
        %5782 = vmatprep.subr.bf16.mxu0 0
        %5783 = vmatpush2.bf16.msra.mxu0 0
        %5784 = vmatprep.subr.bf16.mxu0 0
        %5785 = vmatpush2.bf16.msra.mxu0 0
        %5786 = vmatprep.subr.bf16.mxu0 0
        %5787 = vmatpush2.bf16.msra.mxu0 0
        %5788 = vmatprep.subr.bf16.mxu0 0
        %5789 = vmatpush2.bf16.msra.mxu0 0
        %5790 = vmatprep.subr.bf16.mxu0 0
        %5791 = vmatpush2.bf16.msra.mxu0 0
        %5792 = vmatprep.mubr.bf16.mxu0 0
        %5793 = vmatmul.mubr.bf16.gmra.mxu0 %v5749
        %v5794 = vpop.f32.mrf.mxu0
        %v5795 = vadd.f32 0.0, %v5794
        %v5796 = vpop.f32.mrf.mxu0
        %v5797 = vpop.f32.mrf.mxu0
        %v5798 = vadd.f32 0.0, %v5797
        %v5799 = vpop.f32.mrf.mxu0
        %5800 = vmatprep.mubr.bf16.mxu0 0
        %5801 = vmatmul.mubr.bf16.gmra.mxu0 %v5752
        %v5802 = vpop.f32.mrf.mxu0
        %v5803 = vadd.f32 0.0, %v5802
        %v5804 = vpop.f32.mrf.mxu0
        %v5805 = vpop.f32.mrf.mxu0
        %v5806 = vadd.f32 0.0, %v5805
        %v5807 = vpop.f32.mrf.mxu0
        %5808 = vmatprep.mubr.bf16.mxu0 0
        %5809 = vmatmul.mubr.bf16.gmra.mxu0 %v5755
        %v5810 = vpop.f32.mrf.mxu0
        %v5811 = vadd.f32 0.0, %v5810
        %v5812 = vpop.f32.mrf.mxu0
        %v5813 = vpop.f32.mrf.mxu0
        %v5814 = vadd.f32 0.0, %v5813
        %v5815 = vpop.f32.mrf.mxu0
        %5816 = vmatprep.mubr.bf16.mxu0 0
        %5817 = vmatmul.mubr.bf16.gmra.mxu0 %v5758
        %v5818 = vpop.f32.mrf.mxu0
        %v5819 = vadd.f32 0.0, %v5818
        %v5820 = vpop.f32.mrf.mxu0
        %v5821 = vpop.f32.mrf.mxu0
        %v5822 = vadd.f32 0.0, %v5821
        %v5823 = vpop.f32.mrf.mxu0
        %5824 = vdwg.mxu0
        %v5825 = vld [vmem:[%s6] sm:$0x1]
        %v5827 = vlaneseq
        %v5828 = vshrl.u32 %v5827, 7
        %v5829 = vsub.s32 0, %v5828
        %v5830 = vrot.slane %v5825, %v5829
        %v5832 = vadd.f32 %v5795, %v5830
        %v5833 = vadd.f32 %v5798, %v5830
        %v5834 = vadd.f32 %v5803, %v5830
        %v5835 = vadd.f32 %v5806, %v5830
        %v5836 = vadd.f32 %v5811, %v5830
        %v5837 = vadd.f32 %v5814, %v5830
        %v5838 = vadd.f32 %v5819, %v5830
        %v5839 = vadd.f32 %v5822, %v5830
        %v5840 = vmax.f32 %v5832, 0.0
        %v5841 = vmax.f32 %v5833, 0.0
        %v5842 = vmax.f32 %v5834, 0.0
        %v5843 = vmax.f32 %v5835, 0.0
        %v5844 = vmax.f32 %v5836, 0.0
        %v5845 = vmax.f32 %v5837, 0.0
        %v5846 = vmax.f32 %v5838, 0.0
        %v5847 = vmax.f32 %v5839, 0.0
        %s5848 = scalar_lea.vmem [#allocation3], 16
        %5849 = vst.msk [vmem:[%s5848 + $0x1] sm:$0xff] %vm457, %v5840
        %5850 = vst.msk [vmem:[%s5848 + $0x11] sm:$0xff] %vm457, %v5841
        %5851 = vst.msk [vmem:[%s5848 + $0x21] sm:$0xff] %vm457, %v5842
        %5852 = vst.msk [vmem:[%s5848 + $0x31] sm:$0xff] %vm457, %v5843
        %5853 = vst.msk [vmem:[%s5848 + $0x41] sm:$0xff] %vm457, %v5844
        %5854 = vst.msk [vmem:[%s5848 + $0x51] sm:$0xff] %vm457, %v5845
        %5855 = vst.msk [vmem:[%s5848 + $0x61] sm:$0xff] %vm457, %v5846
        %5856 = vst.msk [vmem:[%s5848 + $0x71] sm:$0xff] %vm457, %v5847
        %v5857 = vld [vmem:[%s6] sm:$0x1]
        %v5859 = vlaneseq
        %v5860 = vshrl.u32 %v5859, 7
        %v5861 = vsub.s32 0, %v5860
        %v5862 = vrot.slane %v5857, %v5861
        %5863 = vrot.lane.b32.xlu0 %v5862, 32
        %v5864 = vpop.permute.xlu0 %5863
        %v5866 = vadd.f32 %v5795, %v5864
        %v5867 = vadd.f32 %v5798, %v5864
        %v5868 = vadd.f32 %v5803, %v5864
        %v5869 = vadd.f32 %v5806, %v5864
        %v5870 = vadd.f32 %v5811, %v5864
        %v5871 = vadd.f32 %v5814, %v5864
        %v5872 = vadd.f32 %v5819, %v5864
        %v5873 = vadd.f32 %v5822, %v5864
        %v5874 = vmax.f32 %v5866, 0.0
        %v5875 = vmax.f32 %v5867, 0.0
        %v5876 = vmax.f32 %v5868, 0.0
        %v5877 = vmax.f32 %v5869, 0.0
        %v5878 = vmax.f32 %v5870, 0.0
        %v5879 = vmax.f32 %v5871, 0.0
        %v5880 = vmax.f32 %v5872, 0.0
        %v5881 = vmax.f32 %v5873, 0.0
        %5890 = vrot.lane.b32.xlu0 %v5874, 96
        %v5891 = vpop.permute.xlu0 %5890
        %5892 = vrot.lane.b32.xlu0 %v5875, 96
        %v5893 = vpop.permute.xlu0 %5892
        %5894 = vrot.lane.b32.xlu0 %v5876, 96
        %v5895 = vpop.permute.xlu0 %5894
        %5896 = vrot.lane.b32.xlu0 %v5877, 96
        %v5897 = vpop.permute.xlu0 %5896
        %5898 = vrot.lane.b32.xlu0 %v5878, 96
        %v5899 = vpop.permute.xlu0 %5898
        %5900 = vrot.lane.b32.xlu0 %v5879, 96
        %v5901 = vpop.permute.xlu0 %5900
        %5902 = vrot.lane.b32.xlu0 %v5880, 96
        %v5903 = vpop.permute.xlu0 %5902
        %5904 = vrot.lane.b32.xlu0 %v5881, 96
        %v5905 = vpop.permute.xlu0 %5904
        %s5914 = scalar_lea.vmem [#allocation3], 176
        %5915 = vst.msk [vmem:[%s5914 + $0x1] sm:$0xff] %vm457, %v5891
        %5916 = vst.msk [vmem:[%s5914 + $0x11] sm:$0xff] %vm457, %v5893
        %5917 = vst.msk [vmem:[%s5914 + $0x21] sm:$0xff] %vm457, %v5895
        %5918 = vst.msk [vmem:[%s5914 + $0x31] sm:$0xff] %vm457, %v5897
        %5919 = vst.msk [vmem:[%s5914 + $0x41] sm:$0xff] %vm457, %v5899
        %5920 = vst.msk [vmem:[%s5914 + $0x51] sm:$0xff] %vm457, %v5901
        %5921 = vst.msk [vmem:[%s5914 + $0x61] sm:$0xff] %vm457, %v5903
        %5922 = vst.msk [vmem:[%s5914 + $0x71] sm:$0xff] %vm457, %v5905
        %v5923 = vld [vmem:[%s6] sm:$0x1]
        %v5925 = vlaneseq
        %v5926 = vshrl.u32 %v5925, 7
        %v5927 = vsub.s32 0, %v5926
        %v5928 = vrot.slane %v5923, %v5927
        %5929 = vrot.lane.b32.xlu0 %v5928, 64
        %v5930 = vpop.permute.xlu0 %5929
        %v5932 = vadd.f32 %v5795, %v5930
        %v5933 = vadd.f32 %v5798, %v5930
        %v5934 = vadd.f32 %v5803, %v5930
        %v5935 = vadd.f32 %v5806, %v5930
        %v5936 = vadd.f32 %v5811, %v5930
        %v5937 = vadd.f32 %v5814, %v5930
        %v5938 = vadd.f32 %v5819, %v5930
        %v5939 = vadd.f32 %v5822, %v5930
        %v5940 = vmax.f32 %v5932, 0.0
        %v5941 = vmax.f32 %v5933, 0.0
        %v5942 = vmax.f32 %v5934, 0.0
        %v5943 = vmax.f32 %v5935, 0.0
        %v5944 = vmax.f32 %v5936, 0.0
        %v5945 = vmax.f32 %v5937, 0.0
        %v5946 = vmax.f32 %v5938, 0.0
        %v5947 = vmax.f32 %v5939, 0.0
        %5956 = vrot.lane.b32.xlu0 %v5940, 64
        %v5957 = vpop.permute.xlu0 %5956
        %5958 = vrot.lane.b32.xlu0 %v5941, 64
        %v5959 = vpop.permute.xlu0 %5958
        %5960 = vrot.lane.b32.xlu0 %v5942, 64
        %v5961 = vpop.permute.xlu0 %5960
        %5962 = vrot.lane.b32.xlu0 %v5943, 64
        %v5963 = vpop.permute.xlu0 %5962
        %5964 = vrot.lane.b32.xlu0 %v5944, 64
        %v5965 = vpop.permute.xlu0 %5964
        %5966 = vrot.lane.b32.xlu0 %v5945, 64
        %v5967 = vpop.permute.xlu0 %5966
        %5968 = vrot.lane.b32.xlu0 %v5946, 64
        %v5969 = vpop.permute.xlu0 %5968
        %5970 = vrot.lane.b32.xlu0 %v5947, 64
        %v5971 = vpop.permute.xlu0 %5970
        %s5980 = scalar_lea.vmem [#allocation3], 336
        %5981 = vst.msk [vmem:[%s5980 + $0x1] sm:$0xff] %vm457, %v5957
        %5982 = vst.msk [vmem:[%s5980 + $0x11] sm:$0xff] %vm457, %v5959
        %5983 = vst.msk [vmem:[%s5980 + $0x21] sm:$0xff] %vm457, %v5961
        %5984 = vst.msk [vmem:[%s5980 + $0x31] sm:$0xff] %vm457, %v5963
        %5985 = vst.msk [vmem:[%s5980 + $0x41] sm:$0xff] %vm457, %v5965
        %5986 = vst.msk [vmem:[%s5980 + $0x51] sm:$0xff] %vm457, %v5967
        %5987 = vst.msk [vmem:[%s5980 + $0x61] sm:$0xff] %vm457, %v5969
        %5988 = vst.msk [vmem:[%s5980 + $0x71] sm:$0xff] %vm457, %v5971
        %v5989 = vld [vmem:[%s6] sm:$0x1]
        %v5991 = vlaneseq
        %v5992 = vshrl.u32 %v5991, 7
        %v5993 = vsub.s32 0, %v5992
        %v5994 = vrot.slane %v5989, %v5993
        %5995 = vrot.lane.b32.xlu0 %v5994, 96
        %v5996 = vpop.permute.xlu0 %5995
        %v5998 = vadd.f32 %v5795, %v5996
        %v5999 = vadd.f32 %v5798, %v5996
        %v6000 = vadd.f32 %v5803, %v5996
        %v6001 = vadd.f32 %v5806, %v5996
        %v6002 = vadd.f32 %v5811, %v5996
        %v6003 = vadd.f32 %v5814, %v5996
        %v6004 = vadd.f32 %v5819, %v5996
        %v6005 = vadd.f32 %v5822, %v5996
        %v6006 = vmax.f32 %v5998, 0.0
        %v6007 = vmax.f32 %v5999, 0.0
        %v6008 = vmax.f32 %v6000, 0.0
        %v6009 = vmax.f32 %v6001, 0.0
        %v6010 = vmax.f32 %v6002, 0.0
        %v6011 = vmax.f32 %v6003, 0.0
        %v6012 = vmax.f32 %v6004, 0.0
        %v6013 = vmax.f32 %v6005, 0.0
        %6022 = vrot.lane.b32.xlu0 %v6006, 32
        %v6023 = vpop.permute.xlu0 %6022
        %6024 = vrot.lane.b32.xlu0 %v6007, 32
        %v6025 = vpop.permute.xlu0 %6024
        %6026 = vrot.lane.b32.xlu0 %v6008, 32
        %v6027 = vpop.permute.xlu0 %6026
        %6028 = vrot.lane.b32.xlu0 %v6009, 32
        %v6029 = vpop.permute.xlu0 %6028
        %6030 = vrot.lane.b32.xlu0 %v6010, 32
        %v6031 = vpop.permute.xlu0 %6030
        %6032 = vrot.lane.b32.xlu0 %v6011, 32
        %v6033 = vpop.permute.xlu0 %6032
        %6034 = vrot.lane.b32.xlu0 %v6012, 32
        %v6035 = vpop.permute.xlu0 %6034
        %6036 = vrot.lane.b32.xlu0 %v6013, 32
        %v6037 = vpop.permute.xlu0 %6036
        %s6046 = scalar_lea.vmem [#allocation3], 496
        %6047 = vst.msk [vmem:[%s6046 + $0x1] sm:$0xff] %vm457, %v6023
        %6048 = vst.msk [vmem:[%s6046 + $0x11] sm:$0xff] %vm457, %v6025
        %6049 = vst.msk [vmem:[%s6046 + $0x21] sm:$0xff] %vm457, %v6027
        %6050 = vst.msk [vmem:[%s6046 + $0x31] sm:$0xff] %vm457, %v6029
        %6051 = vst.msk [vmem:[%s6046 + $0x41] sm:$0xff] %vm457, %v6031
        %6052 = vst.msk [vmem:[%s6046 + $0x51] sm:$0xff] %vm457, %v6033
        %6053 = vst.msk [vmem:[%s6046 + $0x61] sm:$0xff] %vm457, %v6035
        %6054 = vst.msk [vmem:[%s6046 + $0x71] sm:$0xff] %vm457, %v6037
        %s6055 = scalar_lea.vmem [#allocation3], 480
        %v6056 = vld [vmem:[%s6055] sm:$0xff]
        %v6057 = vld [vmem:[%s6055 + $0x10] sm:$0xff]
        %v6058 = vld [vmem:[%s6055 + $0x20] sm:$0xff]
        %v6059 = vld [vmem:[%s6055 + $0x30] sm:$0xff]
        %v6060 = vld [vmem:[%s6055 + $0x40] sm:$0xff]
        %v6061 = vld [vmem:[%s6055 + $0x50] sm:$0xff]
        %v6062 = vld [vmem:[%s6055 + $0x60] sm:$0xff]
        %v6063 = vld [vmem:[%s6055 + $0x70] sm:$0xff]
        %v6064 = vld [vmem:[%s7] sm:$0x1]
        %v6066 = vlaneseq
        %v6067 = vshrl.u32 %v6066, 7
        %v6068 = vsub.s32 0, %v6067
        %v6069 = vrot.slane %v6064, %v6068
        %v6071 = vmul.f32 %v6056, %v6069
        %v6072 = vmul.f32 %v6057, %v6069
        %v6073 = vmul.f32 %v6058, %v6069
        %v6074 = vmul.f32 %v6059, %v6069
        %v6075 = vmul.f32 %v6060, %v6069
        %v6076 = vmul.f32 %v6061, %v6069
        %v6077 = vmul.f32 %v6062, %v6069
        %v6078 = vmul.f32 %v6063, %v6069
        %v6079 = vadd.f32 %v6071, 0.0
        %v6080 = vadd.f32 %v6072, 0.0
        %v6081 = vadd.f32 %v6073, 0.0
        %v6082 = vadd.f32 %v6074, 0.0
        %v6083 = vadd.f32 %v6075, 0.0
        %v6084 = vadd.f32 %v6076, 0.0
        %v6085 = vadd.f32 %v6077, 0.0
        %v6086 = vadd.f32 %v6078, 0.0
        %s6087 = scalar_lea.vmem [#allocation3], 320
        %v6088 = vld [vmem:[%s6087 + $0x1] sm:$0xff]
        %v6089 = vld [vmem:[%s6087 + $0x11] sm:$0xff]
        %v6090 = vld [vmem:[%s6087 + $0x21] sm:$0xff]
        %v6091 = vld [vmem:[%s6087 + $0x31] sm:$0xff]
        %v6092 = vld [vmem:[%s6087 + $0x41] sm:$0xff]
        %v6093 = vld [vmem:[%s6087 + $0x51] sm:$0xff]
        %v6094 = vld [vmem:[%s6087 + $0x61] sm:$0xff]
        %v6095 = vld [vmem:[%s6087 + $0x71] sm:$0xff]
        %s6096 = scalar_lea.vmem %s7, 1
        %v6097 = vld [vmem:[%s6096] sm:$0x1]
        %v6099 = vlaneseq
        %v6100 = vshrl.u32 %v6099, 7
        %v6101 = vsub.s32 0, %v6100
        %v6102 = vrot.slane %v6097, %v6101
        %v6104 = vmul.f32 %v6088, %v6102
        %v6105 = vmul.f32 %v6089, %v6102
        %v6106 = vmul.f32 %v6090, %v6102
        %v6107 = vmul.f32 %v6091, %v6102
        %v6108 = vmul.f32 %v6092, %v6102
        %v6109 = vmul.f32 %v6093, %v6102
        %v6110 = vmul.f32 %v6094, %v6102
        %v6111 = vmul.f32 %v6095, %v6102
        %v6112 = vadd.f32 %v6079, %v6104
        %v6113 = vadd.f32 %v6080, %v6105
        %v6114 = vadd.f32 %v6081, %v6106
        %v6115 = vadd.f32 %v6082, %v6107
        %v6116 = vadd.f32 %v6083, %v6108
        %v6117 = vadd.f32 %v6084, %v6109
        %v6118 = vadd.f32 %v6085, %v6110
        %v6119 = vadd.f32 %v6086, %v6111
        %v6120 = vld [vmem:[%s6055 + $0x1] sm:$0xff]
        %v6121 = vld [vmem:[%s6055 + $0x11] sm:$0xff]
        %v6122 = vld [vmem:[%s6055 + $0x21] sm:$0xff]
        %v6123 = vld [vmem:[%s6055 + $0x31] sm:$0xff]
        %v6124 = vld [vmem:[%s6055 + $0x41] sm:$0xff]
        %v6125 = vld [vmem:[%s6055 + $0x51] sm:$0xff]
        %v6126 = vld [vmem:[%s6055 + $0x61] sm:$0xff]
        %v6127 = vld [vmem:[%s6055 + $0x71] sm:$0xff]
        %s6128 = scalar_lea.vmem %s7, 2
        %v6129 = vld [vmem:[%s6128] sm:$0x1]
        %v6131 = vlaneseq
        %v6132 = vshrl.u32 %v6131, 7
        %v6133 = vsub.s32 0, %v6132
        %v6134 = vrot.slane %v6129, %v6133
        %v6136 = vmul.f32 %v6120, %v6134
        %v6137 = vmul.f32 %v6121, %v6134
        %v6138 = vmul.f32 %v6122, %v6134
        %v6139 = vmul.f32 %v6123, %v6134
        %v6140 = vmul.f32 %v6124, %v6134
        %v6141 = vmul.f32 %v6125, %v6134
        %v6142 = vmul.f32 %v6126, %v6134
        %v6143 = vmul.f32 %v6127, %v6134
        %v6144 = vadd.f32 %v6112, %v6136
        %v6145 = vadd.f32 %v6113, %v6137
        %v6146 = vadd.f32 %v6114, %v6138
        %v6147 = vadd.f32 %v6115, %v6139
        %v6148 = vadd.f32 %v6116, %v6140
        %v6149 = vadd.f32 %v6117, %v6141
        %v6150 = vadd.f32 %v6118, %v6142
        %v6151 = vadd.f32 %v6119, %v6143
        %v6152 = vld [vmem:[%s5914] sm:$0xff]
        %v6153 = vld [vmem:[%s5914 + $0x10] sm:$0xff]
        %v6154 = vld [vmem:[%s5914 + $0x20] sm:$0xff]
        %v6155 = vld [vmem:[%s5914 + $0x30] sm:$0xff]
        %v6156 = vld [vmem:[%s5914 + $0x40] sm:$0xff]
        %v6157 = vld [vmem:[%s5914 + $0x50] sm:$0xff]
        %v6158 = vld [vmem:[%s5914 + $0x60] sm:$0xff]
        %v6159 = vld [vmem:[%s5914 + $0x70] sm:$0xff]
        %s6160 = scalar_lea.vmem %s7, 3
        %v6161 = vld [vmem:[%s6160] sm:$0x1]
        %v6163 = vlaneseq
        %v6164 = vshrl.u32 %v6163, 7
        %v6165 = vsub.s32 0, %v6164
        %v6166 = vrot.slane %v6161, %v6165
        %v6168 = vmul.f32 %v6152, %v6166
        %v6169 = vmul.f32 %v6153, %v6166
        %v6170 = vmul.f32 %v6154, %v6166
        %v6171 = vmul.f32 %v6155, %v6166
        %v6172 = vmul.f32 %v6156, %v6166
        %v6173 = vmul.f32 %v6157, %v6166
        %v6174 = vmul.f32 %v6158, %v6166
        %v6175 = vmul.f32 %v6159, %v6166
        %v6176 = vadd.f32 %v6144, %v6168
        %v6177 = vadd.f32 %v6145, %v6169
        %v6178 = vadd.f32 %v6146, %v6170
        %v6179 = vadd.f32 %v6147, %v6171
        %v6180 = vadd.f32 %v6148, %v6172
        %v6181 = vadd.f32 %v6149, %v6173
        %v6182 = vadd.f32 %v6150, %v6174
        %v6183 = vadd.f32 %v6151, %v6175
        %v6184 = vld [vmem:[%s5848 + $0x1] sm:$0xff]
        %v6185 = vld [vmem:[%s5848 + $0x11] sm:$0xff]
        %v6186 = vld [vmem:[%s5848 + $0x21] sm:$0xff]
        %v6187 = vld [vmem:[%s5848 + $0x31] sm:$0xff]
        %v6188 = vld [vmem:[%s5848 + $0x41] sm:$0xff]
        %v6189 = vld [vmem:[%s5848 + $0x51] sm:$0xff]
        %v6190 = vld [vmem:[%s5848 + $0x61] sm:$0xff]
        %v6191 = vld [vmem:[%s5848 + $0x71] sm:$0xff]
        %s6192 = scalar_lea.vmem %s7, 4
        %v6193 = vld [vmem:[%s6192] sm:$0x1]
        %v6195 = vlaneseq
        %v6196 = vshrl.u32 %v6195, 7
        %v6197 = vsub.s32 0, %v6196
        %v6198 = vrot.slane %v6193, %v6197
        %v6200 = vmul.f32 %v6184, %v6198
        %v6201 = vmul.f32 %v6185, %v6198
        %v6202 = vmul.f32 %v6186, %v6198
        %v6203 = vmul.f32 %v6187, %v6198
        %v6204 = vmul.f32 %v6188, %v6198
        %v6205 = vmul.f32 %v6189, %v6198
        %v6206 = vmul.f32 %v6190, %v6198
        %v6207 = vmul.f32 %v6191, %v6198
        %v6208 = vadd.f32 %v6176, %v6200
        %v6209 = vadd.f32 %v6177, %v6201
        %v6210 = vadd.f32 %v6178, %v6202
        %v6211 = vadd.f32 %v6179, %v6203
        %v6212 = vadd.f32 %v6180, %v6204
        %v6213 = vadd.f32 %v6181, %v6205
        %v6214 = vadd.f32 %v6182, %v6206
        %v6215 = vadd.f32 %v6183, %v6207
        %v6216 = vld [vmem:[%s5914 + $0x1] sm:$0xff]
        %v6217 = vld [vmem:[%s5914 + $0x11] sm:$0xff]
        %v6218 = vld [vmem:[%s5914 + $0x21] sm:$0xff]
        %v6219 = vld [vmem:[%s5914 + $0x31] sm:$0xff]
        %v6220 = vld [vmem:[%s5914 + $0x41] sm:$0xff]
        %v6221 = vld [vmem:[%s5914 + $0x51] sm:$0xff]
        %v6222 = vld [vmem:[%s5914 + $0x61] sm:$0xff]
        %v6223 = vld [vmem:[%s5914 + $0x71] sm:$0xff]
        %s6224 = scalar_lea.vmem %s7, 5
        %v6225 = vld [vmem:[%s6224] sm:$0x1]
        %v6227 = vlaneseq
        %v6228 = vshrl.u32 %v6227, 7
        %v6229 = vsub.s32 0, %v6228
        %v6230 = vrot.slane %v6225, %v6229
        %v6232 = vmul.f32 %v6216, %v6230
        %v6233 = vmul.f32 %v6217, %v6230
        %v6234 = vmul.f32 %v6218, %v6230
        %v6235 = vmul.f32 %v6219, %v6230
        %v6236 = vmul.f32 %v6220, %v6230
        %v6237 = vmul.f32 %v6221, %v6230
        %v6238 = vmul.f32 %v6222, %v6230
        %v6239 = vmul.f32 %v6223, %v6230
        %v6240 = vadd.f32 %v6208, %v6232
        %v6241 = vadd.f32 %v6209, %v6233
        %v6242 = vadd.f32 %v6210, %v6234
        %v6243 = vadd.f32 %v6211, %v6235
        %v6244 = vadd.f32 %v6212, %v6236
        %v6245 = vadd.f32 %v6213, %v6237
        %v6246 = vadd.f32 %v6214, %v6238
        %v6247 = vadd.f32 %v6215, %v6239
        %v6248 = vld [vmem:[%s6046] sm:$0xff]
        %v6249 = vld [vmem:[%s6046 + $0x10] sm:$0xff]
        %v6250 = vld [vmem:[%s6046 + $0x20] sm:$0xff]
        %v6251 = vld [vmem:[%s6046 + $0x30] sm:$0xff]
        %v6252 = vld [vmem:[%s6046 + $0x40] sm:$0xff]
        %v6253 = vld [vmem:[%s6046 + $0x50] sm:$0xff]
        %v6254 = vld [vmem:[%s6046 + $0x60] sm:$0xff]
        %v6255 = vld [vmem:[%s6046 + $0x70] sm:$0xff]
        %s6256 = scalar_lea.vmem %s7, 6
        %v6257 = vld [vmem:[%s6256] sm:$0x1]
        %v6259 = vlaneseq
        %v6260 = vshrl.u32 %v6259, 7
        %v6261 = vsub.s32 0, %v6260
        %v6262 = vrot.slane %v6257, %v6261
        %v6264 = vmul.f32 %v6248, %v6262
        %v6265 = vmul.f32 %v6249, %v6262
        %v6266 = vmul.f32 %v6250, %v6262
        %v6267 = vmul.f32 %v6251, %v6262
        %v6268 = vmul.f32 %v6252, %v6262
        %v6269 = vmul.f32 %v6253, %v6262
        %v6270 = vmul.f32 %v6254, %v6262
        %v6271 = vmul.f32 %v6255, %v6262
        %v6272 = vadd.f32 %v6240, %v6264
        %v6273 = vadd.f32 %v6241, %v6265
        %v6274 = vadd.f32 %v6242, %v6266
        %v6275 = vadd.f32 %v6243, %v6267
        %v6276 = vadd.f32 %v6244, %v6268
        %v6277 = vadd.f32 %v6245, %v6269
        %v6278 = vadd.f32 %v6246, %v6270
        %v6279 = vadd.f32 %v6247, %v6271
        %v6280 = vld [vmem:[%s5980 + $0x1] sm:$0xff]
        %v6281 = vld [vmem:[%s5980 + $0x11] sm:$0xff]
        %v6282 = vld [vmem:[%s5980 + $0x21] sm:$0xff]
        %v6283 = vld [vmem:[%s5980 + $0x31] sm:$0xff]
        %v6284 = vld [vmem:[%s5980 + $0x41] sm:$0xff]
        %v6285 = vld [vmem:[%s5980 + $0x51] sm:$0xff]
        %v6286 = vld [vmem:[%s5980 + $0x61] sm:$0xff]
        %v6287 = vld [vmem:[%s5980 + $0x71] sm:$0xff]
        %s6288 = scalar_lea.vmem %s7, 7
        %v6289 = vld [vmem:[%s6288] sm:$0x1]
        %v6291 = vlaneseq
        %v6292 = vshrl.u32 %v6291, 7
        %v6293 = vsub.s32 0, %v6292
        %v6294 = vrot.slane %v6289, %v6293
        %v6296 = vmul.f32 %v6280, %v6294
        %v6297 = vmul.f32 %v6281, %v6294
        %v6298 = vmul.f32 %v6282, %v6294
        %v6299 = vmul.f32 %v6283, %v6294
        %v6300 = vmul.f32 %v6284, %v6294
        %v6301 = vmul.f32 %v6285, %v6294
        %v6302 = vmul.f32 %v6286, %v6294
        %v6303 = vmul.f32 %v6287, %v6294
        %v6304 = vadd.f32 %v6272, %v6296
        %v6305 = vadd.f32 %v6273, %v6297
        %v6306 = vadd.f32 %v6274, %v6298
        %v6307 = vadd.f32 %v6275, %v6299
        %v6308 = vadd.f32 %v6276, %v6300
        %v6309 = vadd.f32 %v6277, %v6301
        %v6310 = vadd.f32 %v6278, %v6302
        %v6311 = vadd.f32 %v6279, %v6303
        %v6312 = vld [vmem:[%s6046 + $0x1] sm:$0xff]
        %v6313 = vld [vmem:[%s6046 + $0x11] sm:$0xff]
        %v6314 = vld [vmem:[%s6046 + $0x21] sm:$0xff]
        %v6315 = vld [vmem:[%s6046 + $0x31] sm:$0xff]
        %v6316 = vld [vmem:[%s6046 + $0x41] sm:$0xff]
        %v6317 = vld [vmem:[%s6046 + $0x51] sm:$0xff]
        %v6318 = vld [vmem:[%s6046 + $0x61] sm:$0xff]
        %v6319 = vld [vmem:[%s6046 + $0x71] sm:$0xff]
        %s6320 = scalar_lea.vmem %s7, 8
        %v6321 = vld [vmem:[%s6320] sm:$0x1]
        %v6323 = vlaneseq
        %v6324 = vshrl.u32 %v6323, 7
        %v6325 = vsub.s32 0, %v6324
        %v6326 = vrot.slane %v6321, %v6325
        %v6328 = vmul.f32 %v6312, %v6326
        %v6329 = vmul.f32 %v6313, %v6326
        %v6330 = vmul.f32 %v6314, %v6326
        %v6331 = vmul.f32 %v6315, %v6326
        %v6332 = vmul.f32 %v6316, %v6326
        %v6333 = vmul.f32 %v6317, %v6326
        %v6334 = vmul.f32 %v6318, %v6326
        %v6335 = vmul.f32 %v6319, %v6326
        %v6336 = vadd.f32 %v6304, %v6328
        %v6337 = vadd.f32 %v6305, %v6329
        %v6338 = vadd.f32 %v6306, %v6330
        %v6339 = vadd.f32 %v6307, %v6331
        %v6340 = vadd.f32 %v6308, %v6332
        %v6341 = vadd.f32 %v6309, %v6333
        %v6342 = vadd.f32 %v6310, %v6334
        %v6343 = vadd.f32 %v6311, %v6335
        %v6344 = vsel %vm457, %v6336, 0.0
        %6345 = vadd.xlane.f32.xlu0 %v6344
        %v6346 = vpop.xlane.xlu0 %6345
        %v6347 = vsel %vm457, %v6337, 0.0
        %6348 = vadd.xlane.f32.xlu0 %v6347
        %v6349 = vpop.xlane.xlu0 %6348
        %v6350 = vsel %vm457, %v6338, 0.0
        %6351 = vadd.xlane.f32.xlu0 %v6350
        %v6352 = vpop.xlane.xlu0 %6351
        %v6353 = vsel %vm457, %v6339, 0.0
        %6354 = vadd.xlane.f32.xlu0 %v6353
        %v6355 = vpop.xlane.xlu0 %6354
        %v6356 = vsel %vm457, %v6340, 0.0
        %6357 = vadd.xlane.f32.xlu0 %v6356
        %v6358 = vpop.xlane.xlu0 %6357
        %v6359 = vsel %vm457, %v6341, 0.0
        %6360 = vadd.xlane.f32.xlu0 %v6359
        %v6361 = vpop.xlane.xlu0 %6360
        %v6362 = vsel %vm457, %v6342, 0.0
        %6363 = vadd.xlane.f32.xlu0 %v6362
        %v6364 = vpop.xlane.xlu0 %6363
        %v6365 = vsel %vm457, %v6343, 0.0
        %6366 = vadd.xlane.f32.xlu0 %v6365
        %v6367 = vpop.xlane.xlu0 %6366
        %v6368 = vld [vmem:[#allocation4] sm:$0x1]
        %v6370 = vlaneseq
        %v6371 = vshrl.u32 %v6370, 7
        %v6372 = vsub.s32 0, %v6371
        %v6373 = vrot.slane %v6368, %v6372
        %6374 = vset.pattern.permute.xlu0 0
        %6375 = vperm.xlu0 %6374, %v6373
        %v6376 = vpop.permute.xlu0 %6375
        %v6378 = vadd.f32 %v6346, %v6376
        %v6379 = vadd.f32 %v6349, %v6376
        %v6380 = vadd.f32 %v6352, %v6376
        %v6381 = vadd.f32 %v6355, %v6376
        %v6382 = vadd.f32 %v6358, %v6376
        %v6383 = vadd.f32 %v6361, %v6376
        %v6384 = vadd.f32 %v6364, %v6376
        %v6385 = vadd.f32 %v6367, %v6376
        %v6386 = vsub.f32 0.0, %v6378
        %v6387 = vsub.f32 0.0, %v6379
        %v6388 = vsub.f32 0.0, %v6380
        %v6389 = vsub.f32 0.0, %v6381
        %v6390 = vsub.f32 0.0, %v6382
        %v6391 = vsub.f32 0.0, %v6383
        %v6392 = vsub.f32 0.0, %v6384
        %v6393 = vsub.f32 0.0, %v6385
        %v6394 = vmul.f32 %v6386, 1.442695
        %v6395 = vpow.pop %v6394
        %v6396 = vmul.f32 %v6387, 1.442695
        %v6397 = vpow.pop %v6396
        %v6398 = vmul.f32 %v6388, 1.442695
        %v6399 = vpow.pop %v6398
        %v6400 = vmul.f32 %v6389, 1.442695
        %v6401 = vpow.pop %v6400
        %v6402 = vmul.f32 %v6390, 1.442695
        %v6403 = vpow.pop %v6402
        %v6404 = vmul.f32 %v6391, 1.442695
        %v6405 = vpow.pop %v6404
        %v6406 = vmul.f32 %v6392, 1.442695
        %v6407 = vpow.pop %v6406
        %v6408 = vmul.f32 %v6393, 1.442695
        %v6409 = vpow.pop %v6408
        %v6410 = vadd.f32 %v6395, 1.0
        %v6411 = vadd.f32 %v6397, 1.0
        %v6412 = vadd.f32 %v6399, 1.0
        %v6413 = vadd.f32 %v6401, 1.0
        %v6414 = vadd.f32 %v6403, 1.0
        %v6415 = vadd.f32 %v6405, 1.0
        %v6416 = vadd.f32 %v6407, 1.0
        %v6417 = vadd.f32 %v6409, 1.0
        %v6418 = vrcp.pop %v6410
        %v6419 = vrcp.pop %v6411
        %v6420 = vrcp.pop %v6412
        %v6421 = vrcp.pop %v6413
        %v6422 = vrcp.pop %v6414
        %v6423 = vrcp.pop %v6415
        %v6424 = vrcp.pop %v6416
        %v6425 = vrcp.pop %v6417
        %v6434 = vlaneseq
        %v6435 = vand.u32 %v6434, 127
        %v6436 = vlaneseq
        %v6437 = vshrl.u32 %v6436, 7
        %v6438 = vsub.s32 %v6435, %v6437
        %v6439 = vrot.slane %v6418, %v6438
        %v6440 = vlaneseq
        %v6441 = vshrl.u32 %v6440, 7
        %v6442 = vsub.s32 %v6435, %v6441
        %v6443 = vrot.slane %v6419, %v6442
        %v6444 = vlaneseq
        %v6445 = vshrl.u32 %v6444, 7
        %v6446 = vsub.s32 %v6435, %v6445
        %v6447 = vrot.slane %v6420, %v6446
        %v6448 = vlaneseq
        %v6449 = vshrl.u32 %v6448, 7
        %v6450 = vsub.s32 %v6435, %v6449
        %v6451 = vrot.slane %v6421, %v6450
        %v6452 = vlaneseq
        %v6453 = vshrl.u32 %v6452, 7
        %v6454 = vsub.s32 %v6435, %v6453
        %v6455 = vrot.slane %v6422, %v6454
        %v6456 = vlaneseq
        %v6457 = vshrl.u32 %v6456, 7
        %v6458 = vsub.s32 %v6435, %v6457
        %v6459 = vrot.slane %v6423, %v6458
        %v6460 = vlaneseq
        %v6461 = vshrl.u32 %v6460, 7
        %v6462 = vsub.s32 %v6435, %v6461
        %v6463 = vrot.slane %v6424, %v6462
        %v6464 = vlaneseq
        %v6465 = vshrl.u32 %v6464, 7
        %v6466 = vsub.s32 %v6435, %v6465
        %v6467 = vrot.slane %v6425, %v6466
        %v6468 = vsel %vm5602, %v6443, %v6439
        %v6469 = vsel %vm5605, %v6447, %v6468
        %v6470 = vsel %vm5608, %v6451, %v6469
        %v6471 = vsel %vm5611, %v6455, %v6470
        %v6472 = vsel %vm5614, %v6459, %v6471
        %v6473 = vsel %vm5617, %v6463, %v6472
        %v6474 = vsel %vm5620, %v6467, %v6473
        %vm6476 = vcmask 64512
        %6477 = vst.msk [vmem:[%s327] sm:$0xff] %vm6476, %v6474
        %v6478 = vld [vmem:[%s6087 + $0x1] sm:$0xff]
        %v6479 = vld [vmem:[%s6087 + $0x11] sm:$0xff]
        %v6480 = vld [vmem:[%s6087 + $0x21] sm:$0xff]
        %v6481 = vld [vmem:[%s6087 + $0x31] sm:$0xff]
        %v6482 = vld [vmem:[%s6087 + $0x41] sm:$0xff]
        %v6483 = vld [vmem:[%s6087 + $0x51] sm:$0xff]
        %v6484 = vld [vmem:[%s6087 + $0x61] sm:$0xff]
        %v6485 = vld [vmem:[%s6087 + $0x71] sm:$0xff]
        %v6486 = vld [vmem:[%s7] sm:$0x1]
        %v6488 = vlaneseq
        %v6489 = vshrl.u32 %v6488, 7
        %v6490 = vsub.s32 0, %v6489
        %v6491 = vrot.slane %v6486, %v6490
        %v6493 = vmul.f32 %v6478, %v6491
        %v6494 = vmul.f32 %v6479, %v6491
        %v6495 = vmul.f32 %v6480, %v6491
        %v6496 = vmul.f32 %v6481, %v6491
        %v6497 = vmul.f32 %v6482, %v6491
        %v6498 = vmul.f32 %v6483, %v6491
        %v6499 = vmul.f32 %v6484, %v6491
        %v6500 = vmul.f32 %v6485, %v6491
        %v6501 = vadd.f32 %v6493, 0.0
        %v6502 = vadd.f32 %v6494, 0.0
        %v6503 = vadd.f32 %v6495, 0.0
        %v6504 = vadd.f32 %v6496, 0.0
        %v6505 = vadd.f32 %v6497, 0.0
        %v6506 = vadd.f32 %v6498, 0.0
        %v6507 = vadd.f32 %v6499, 0.0
        %v6508 = vadd.f32 %v6500, 0.0
        %v6509 = vld [vmem:[%s6055 + $0x1] sm:$0xff]
        %v6510 = vld [vmem:[%s6055 + $0x11] sm:$0xff]
        %v6511 = vld [vmem:[%s6055 + $0x21] sm:$0xff]
        %v6512 = vld [vmem:[%s6055 + $0x31] sm:$0xff]
        %v6513 = vld [vmem:[%s6055 + $0x41] sm:$0xff]
        %v6514 = vld [vmem:[%s6055 + $0x51] sm:$0xff]
        %v6515 = vld [vmem:[%s6055 + $0x61] sm:$0xff]
        %v6516 = vld [vmem:[%s6055 + $0x71] sm:$0xff]
        %v6517 = vld [vmem:[%s6096] sm:$0x1]
        %v6519 = vlaneseq
        %v6520 = vshrl.u32 %v6519, 7
        %v6521 = vsub.s32 0, %v6520
        %v6522 = vrot.slane %v6517, %v6521
        %v6524 = vmul.f32 %v6509, %v6522
        %v6525 = vmul.f32 %v6510, %v6522
        %v6526 = vmul.f32 %v6511, %v6522
        %v6527 = vmul.f32 %v6512, %v6522
        %v6528 = vmul.f32 %v6513, %v6522
        %v6529 = vmul.f32 %v6514, %v6522
        %v6530 = vmul.f32 %v6515, %v6522
        %v6531 = vmul.f32 %v6516, %v6522
        %v6532 = vadd.f32 %v6501, %v6524
        %v6533 = vadd.f32 %v6502, %v6525
        %v6534 = vadd.f32 %v6503, %v6526
        %v6535 = vadd.f32 %v6504, %v6527
        %v6536 = vadd.f32 %v6505, %v6528
        %v6537 = vadd.f32 %v6506, %v6529
        %v6538 = vadd.f32 %v6507, %v6530
        %v6539 = vadd.f32 %v6508, %v6531
        %v6540 = vld [vmem:[%s6087 + $0x2] sm:$0xff]
        %v6541 = vld [vmem:[%s6087 + $0x12] sm:$0xff]
        %v6542 = vld [vmem:[%s6087 + $0x22] sm:$0xff]
        %v6543 = vld [vmem:[%s6087 + $0x32] sm:$0xff]
        %v6544 = vld [vmem:[%s6087 + $0x42] sm:$0xff]
        %v6545 = vld [vmem:[%s6087 + $0x52] sm:$0xff]
        %v6546 = vld [vmem:[%s6087 + $0x62] sm:$0xff]
        %v6547 = vld [vmem:[%s6087 + $0x72] sm:$0xff]
        %v6548 = vld [vmem:[%s6128] sm:$0x1]
        %v6550 = vlaneseq
        %v6551 = vshrl.u32 %v6550, 7
        %v6552 = vsub.s32 0, %v6551
        %v6553 = vrot.slane %v6548, %v6552
        %v6555 = vmul.f32 %v6540, %v6553
        %v6556 = vmul.f32 %v6541, %v6553
        %v6557 = vmul.f32 %v6542, %v6553
        %v6558 = vmul.f32 %v6543, %v6553
        %v6559 = vmul.f32 %v6544, %v6553
        %v6560 = vmul.f32 %v6545, %v6553
        %v6561 = vmul.f32 %v6546, %v6553
        %v6562 = vmul.f32 %v6547, %v6553
        %v6563 = vadd.f32 %v6532, %v6555
        %v6564 = vadd.f32 %v6533, %v6556
        %v6565 = vadd.f32 %v6534, %v6557
        %v6566 = vadd.f32 %v6535, %v6558
        %v6567 = vadd.f32 %v6536, %v6559
        %v6568 = vadd.f32 %v6537, %v6560
        %v6569 = vadd.f32 %v6538, %v6561
        %v6570 = vadd.f32 %v6539, %v6562
        %v6571 = vld [vmem:[%s5848 + $0x1] sm:$0xff]
        %v6572 = vld [vmem:[%s5848 + $0x11] sm:$0xff]
        %v6573 = vld [vmem:[%s5848 + $0x21] sm:$0xff]
        %v6574 = vld [vmem:[%s5848 + $0x31] sm:$0xff]
        %v6575 = vld [vmem:[%s5848 + $0x41] sm:$0xff]
        %v6576 = vld [vmem:[%s5848 + $0x51] sm:$0xff]
        %v6577 = vld [vmem:[%s5848 + $0x61] sm:$0xff]
        %v6578 = vld [vmem:[%s5848 + $0x71] sm:$0xff]
        %v6579 = vld [vmem:[%s6160] sm:$0x1]
        %v6581 = vlaneseq
        %v6582 = vshrl.u32 %v6581, 7
        %v6583 = vsub.s32 0, %v6582
        %v6584 = vrot.slane %v6579, %v6583
        %v6586 = vmul.f32 %v6571, %v6584
        %v6587 = vmul.f32 %v6572, %v6584
        %v6588 = vmul.f32 %v6573, %v6584
        %v6589 = vmul.f32 %v6574, %v6584
        %v6590 = vmul.f32 %v6575, %v6584
        %v6591 = vmul.f32 %v6576, %v6584
        %v6592 = vmul.f32 %v6577, %v6584
        %v6593 = vmul.f32 %v6578, %v6584
        %v6594 = vadd.f32 %v6563, %v6586
        %v6595 = vadd.f32 %v6564, %v6587
        %v6596 = vadd.f32 %v6565, %v6588
        %v6597 = vadd.f32 %v6566, %v6589
        %v6598 = vadd.f32 %v6567, %v6590
        %v6599 = vadd.f32 %v6568, %v6591
        %v6600 = vadd.f32 %v6569, %v6592
        %v6601 = vadd.f32 %v6570, %v6593
        %v6602 = vld [vmem:[%s5914 + $0x1] sm:$0xff]
        %v6603 = vld [vmem:[%s5914 + $0x11] sm:$0xff]
        %v6604 = vld [vmem:[%s5914 + $0x21] sm:$0xff]
        %v6605 = vld [vmem:[%s5914 + $0x31] sm:$0xff]
        %v6606 = vld [vmem:[%s5914 + $0x41] sm:$0xff]
        %v6607 = vld [vmem:[%s5914 + $0x51] sm:$0xff]
        %v6608 = vld [vmem:[%s5914 + $0x61] sm:$0xff]
        %v6609 = vld [vmem:[%s5914 + $0x71] sm:$0xff]
        %v6610 = vld [vmem:[%s6192] sm:$0x1]
        %v6612 = vlaneseq
        %v6613 = vshrl.u32 %v6612, 7
        %v6614 = vsub.s32 0, %v6613
        %v6615 = vrot.slane %v6610, %v6614
        %v6617 = vmul.f32 %v6602, %v6615
        %v6618 = vmul.f32 %v6603, %v6615
        %v6619 = vmul.f32 %v6604, %v6615
        %v6620 = vmul.f32 %v6605, %v6615
        %v6621 = vmul.f32 %v6606, %v6615
        %v6622 = vmul.f32 %v6607, %v6615
        %v6623 = vmul.f32 %v6608, %v6615
        %v6624 = vmul.f32 %v6609, %v6615
        %v6625 = vadd.f32 %v6594, %v6617
        %v6626 = vadd.f32 %v6595, %v6618
        %v6627 = vadd.f32 %v6596, %v6619
        %v6628 = vadd.f32 %v6597, %v6620
        %v6629 = vadd.f32 %v6598, %v6621
        %v6630 = vadd.f32 %v6599, %v6622
        %v6631 = vadd.f32 %v6600, %v6623
        %v6632 = vadd.f32 %v6601, %v6624
        %v6633 = vld [vmem:[%s5848 + $0x2] sm:$0xff]
        %v6634 = vld [vmem:[%s5848 + $0x12] sm:$0xff]
        %v6635 = vld [vmem:[%s5848 + $0x22] sm:$0xff]
        %v6636 = vld [vmem:[%s5848 + $0x32] sm:$0xff]
        %v6637 = vld [vmem:[%s5848 + $0x42] sm:$0xff]
        %v6638 = vld [vmem:[%s5848 + $0x52] sm:$0xff]
        %v6639 = vld [vmem:[%s5848 + $0x62] sm:$0xff]
        %v6640 = vld [vmem:[%s5848 + $0x72] sm:$0xff]
        %v6641 = vld [vmem:[%s6224] sm:$0x1]
        %v6643 = vlaneseq
        %v6644 = vshrl.u32 %v6643, 7
        %v6645 = vsub.s32 0, %v6644
        %v6646 = vrot.slane %v6641, %v6645
        %v6648 = vmul.f32 %v6633, %v6646
        %v6649 = vmul.f32 %v6634, %v6646
        %v6650 = vmul.f32 %v6635, %v6646
        %v6651 = vmul.f32 %v6636, %v6646
        %v6652 = vmul.f32 %v6637, %v6646
        %v6653 = vmul.f32 %v6638, %v6646
        %v6654 = vmul.f32 %v6639, %v6646
        %v6655 = vmul.f32 %v6640, %v6646
        %v6656 = vadd.f32 %v6625, %v6648
        %v6657 = vadd.f32 %v6626, %v6649
        %v6658 = vadd.f32 %v6627, %v6650
        %v6659 = vadd.f32 %v6628, %v6651
        %v6660 = vadd.f32 %v6629, %v6652
        %v6661 = vadd.f32 %v6630, %v6653
        %v6662 = vadd.f32 %v6631, %v6654
        %v6663 = vadd.f32 %v6632, %v6655
        %v6664 = vld [vmem:[%s5980 + $0x1] sm:$0xff]
        %v6665 = vld [vmem:[%s5980 + $0x11] sm:$0xff]
        %v6666 = vld [vmem:[%s5980 + $0x21] sm:$0xff]
        %v6667 = vld [vmem:[%s5980 + $0x31] sm:$0xff]
        %v6668 = vld [vmem:[%s5980 + $0x41] sm:$0xff]
        %v6669 = vld [vmem:[%s5980 + $0x51] sm:$0xff]
        %v6670 = vld [vmem:[%s5980 + $0x61] sm:$0xff]
        %v6671 = vld [vmem:[%s5980 + $0x71] sm:$0xff]
        %v6672 = vld [vmem:[%s6256] sm:$0x1]
        %v6674 = vlaneseq
        %v6675 = vshrl.u32 %v6674, 7
        %v6676 = vsub.s32 0, %v6675
        %v6677 = vrot.slane %v6672, %v6676
        %v6679 = vmul.f32 %v6664, %v6677
        %v6680 = vmul.f32 %v6665, %v6677
        %v6681 = vmul.f32 %v6666, %v6677
        %v6682 = vmul.f32 %v6667, %v6677
        %v6683 = vmul.f32 %v6668, %v6677
        %v6684 = vmul.f32 %v6669, %v6677
        %v6685 = vmul.f32 %v6670, %v6677
        %v6686 = vmul.f32 %v6671, %v6677
        %v6687 = vadd.f32 %v6656, %v6679
        %v6688 = vadd.f32 %v6657, %v6680
        %v6689 = vadd.f32 %v6658, %v6681
        %v6690 = vadd.f32 %v6659, %v6682
        %v6691 = vadd.f32 %v6660, %v6683
        %v6692 = vadd.f32 %v6661, %v6684
        %v6693 = vadd.f32 %v6662, %v6685
        %v6694 = vadd.f32 %v6663, %v6686
        %v6695 = vld [vmem:[%s6046 + $0x1] sm:$0xff]
        %v6696 = vld [vmem:[%s6046 + $0x11] sm:$0xff]
        %v6697 = vld [vmem:[%s6046 + $0x21] sm:$0xff]
        %v6698 = vld [vmem:[%s6046 + $0x31] sm:$0xff]
        %v6699 = vld [vmem:[%s6046 + $0x41] sm:$0xff]
        %v6700 = vld [vmem:[%s6046 + $0x51] sm:$0xff]
        %v6701 = vld [vmem:[%s6046 + $0x61] sm:$0xff]
        %v6702 = vld [vmem:[%s6046 + $0x71] sm:$0xff]
        %v6703 = vld [vmem:[%s6288] sm:$0x1]
        %v6705 = vlaneseq
        %v6706 = vshrl.u32 %v6705, 7
        %v6707 = vsub.s32 0, %v6706
        %v6708 = vrot.slane %v6703, %v6707
        %v6710 = vmul.f32 %v6695, %v6708
        %v6711 = vmul.f32 %v6696, %v6708
        %v6712 = vmul.f32 %v6697, %v6708
        %v6713 = vmul.f32 %v6698, %v6708
        %v6714 = vmul.f32 %v6699, %v6708
        %v6715 = vmul.f32 %v6700, %v6708
        %v6716 = vmul.f32 %v6701, %v6708
        %v6717 = vmul.f32 %v6702, %v6708
        %v6718 = vadd.f32 %v6687, %v6710
        %v6719 = vadd.f32 %v6688, %v6711
        %v6720 = vadd.f32 %v6689, %v6712
        %v6721 = vadd.f32 %v6690, %v6713
        %v6722 = vadd.f32 %v6691, %v6714
        %v6723 = vadd.f32 %v6692, %v6715
        %v6724 = vadd.f32 %v6693, %v6716
        %v6725 = vadd.f32 %v6694, %v6717
        %v6726 = vld [vmem:[%s5980 + $0x2] sm:$0xff]
        %v6727 = vld [vmem:[%s5980 + $0x12] sm:$0xff]
        %v6728 = vld [vmem:[%s5980 + $0x22] sm:$0xff]
        %v6729 = vld [vmem:[%s5980 + $0x32] sm:$0xff]
        %v6730 = vld [vmem:[%s5980 + $0x42] sm:$0xff]
        %v6731 = vld [vmem:[%s5980 + $0x52] sm:$0xff]
        %v6732 = vld [vmem:[%s5980 + $0x62] sm:$0xff]
        %v6733 = vld [vmem:[%s5980 + $0x72] sm:$0xff]
        %v6734 = vld [vmem:[%s6320] sm:$0x1]
        %v6736 = vlaneseq
        %v6737 = vshrl.u32 %v6736, 7
        %v6738 = vsub.s32 0, %v6737
        %v6739 = vrot.slane %v6734, %v6738
        %v6741 = vmul.f32 %v6726, %v6739
        %v6742 = vmul.f32 %v6727, %v6739
        %v6743 = vmul.f32 %v6728, %v6739
        %v6744 = vmul.f32 %v6729, %v6739
        %v6745 = vmul.f32 %v6730, %v6739
        %v6746 = vmul.f32 %v6731, %v6739
        %v6747 = vmul.f32 %v6732, %v6739
        %v6748 = vmul.f32 %v6733, %v6739
        %v6749 = vadd.f32 %v6718, %v6741
        %v6750 = vadd.f32 %v6719, %v6742
        %v6751 = vadd.f32 %v6720, %v6743
        %v6752 = vadd.f32 %v6721, %v6744
        %v6753 = vadd.f32 %v6722, %v6745
        %v6754 = vadd.f32 %v6723, %v6746
        %v6755 = vadd.f32 %v6724, %v6747
        %v6756 = vadd.f32 %v6725, %v6748
        %v6757 = vsel %vm457, %v6749, 0.0
        %6758 = vadd.xlane.f32.xlu0 %v6757
        %v6759 = vpop.xlane.xlu0 %6758
        %v6760 = vsel %vm457, %v6750, 0.0
        %6761 = vadd.xlane.f32.xlu0 %v6760
        %v6762 = vpop.xlane.xlu0 %6761
        %v6763 = vsel %vm457, %v6751, 0.0
        %6764 = vadd.xlane.f32.xlu0 %v6763
        %v6765 = vpop.xlane.xlu0 %6764
        %v6766 = vsel %vm457, %v6752, 0.0
        %6767 = vadd.xlane.f32.xlu0 %v6766
        %v6768 = vpop.xlane.xlu0 %6767
        %v6769 = vsel %vm457, %v6753, 0.0
        %6770 = vadd.xlane.f32.xlu0 %v6769
        %v6771 = vpop.xlane.xlu0 %6770
        %v6772 = vsel %vm457, %v6754, 0.0
        %6773 = vadd.xlane.f32.xlu0 %v6772
        %v6774 = vpop.xlane.xlu0 %6773
        %v6775 = vsel %vm457, %v6755, 0.0
        %6776 = vadd.xlane.f32.xlu0 %v6775
        %v6777 = vpop.xlane.xlu0 %6776
        %v6778 = vsel %vm457, %v6756, 0.0
        %6779 = vadd.xlane.f32.xlu0 %v6778
        %v6780 = vpop.xlane.xlu0 %6779
        %v6781 = vld [vmem:[#allocation4] sm:$0x1]
        %v6783 = vlaneseq
        %v6784 = vshrl.u32 %v6783, 7
        %v6785 = vsub.s32 0, %v6784
        %v6786 = vrot.slane %v6781, %v6785
        %6787 = vset.pattern.permute.xlu0 0
        %6788 = vperm.xlu0 %6787, %v6786
        %v6789 = vpop.permute.xlu0 %6788
        %v6791 = vadd.f32 %v6759, %v6789
        %v6792 = vadd.f32 %v6762, %v6789
        %v6793 = vadd.f32 %v6765, %v6789
        %v6794 = vadd.f32 %v6768, %v6789
        %v6795 = vadd.f32 %v6771, %v6789
        %v6796 = vadd.f32 %v6774, %v6789
        %v6797 = vadd.f32 %v6777, %v6789
        %v6798 = vadd.f32 %v6780, %v6789
        %v6799 = vsub.f32 0.0, %v6791
        %v6800 = vsub.f32 0.0, %v6792
        %v6801 = vsub.f32 0.0, %v6793
        %v6802 = vsub.f32 0.0, %v6794
        %v6803 = vsub.f32 0.0, %v6795
        %v6804 = vsub.f32 0.0, %v6796
        %v6805 = vsub.f32 0.0, %v6797
        %v6806 = vsub.f32 0.0, %v6798
        %v6807 = vmul.f32 %v6799, 1.442695
        %v6808 = vpow.pop %v6807
        %v6809 = vmul.f32 %v6800, 1.442695
        %v6810 = vpow.pop %v6809
        %v6811 = vmul.f32 %v6801, 1.442695
        %v6812 = vpow.pop %v6811
        %v6813 = vmul.f32 %v6802, 1.442695
        %v6814 = vpow.pop %v6813
        %v6815 = vmul.f32 %v6803, 1.442695
        %v6816 = vpow.pop %v6815
        %v6817 = vmul.f32 %v6804, 1.442695
        %v6818 = vpow.pop %v6817
        %v6819 = vmul.f32 %v6805, 1.442695
        %v6820 = vpow.pop %v6819
        %v6821 = vmul.f32 %v6806, 1.442695
        %v6822 = vpow.pop %v6821
        %v6823 = vadd.f32 %v6808, 1.0
        %v6824 = vadd.f32 %v6810, 1.0
        %v6825 = vadd.f32 %v6812, 1.0
        %v6826 = vadd.f32 %v6814, 1.0
        %v6827 = vadd.f32 %v6816, 1.0
        %v6828 = vadd.f32 %v6818, 1.0
        %v6829 = vadd.f32 %v6820, 1.0
        %v6830 = vadd.f32 %v6822, 1.0
        %v6831 = vrcp.pop %v6823
        %v6832 = vrcp.pop %v6824
        %v6833 = vrcp.pop %v6825
        %v6834 = vrcp.pop %v6826
        %v6835 = vrcp.pop %v6827
        %v6836 = vrcp.pop %v6828
        %v6837 = vrcp.pop %v6829
        %v6838 = vrcp.pop %v6830
        %v6847 = vlaneseq
        %v6848 = vshrl.u32 %v6847, 7
        %v6849 = vsub.s32 %v6435, %v6848
        %v6850 = vrot.slane %v6831, %v6849
        %v6851 = vlaneseq
        %v6852 = vshrl.u32 %v6851, 7
        %v6853 = vsub.s32 %v6435, %v6852
        %v6854 = vrot.slane %v6832, %v6853
        %v6855 = vlaneseq
        %v6856 = vshrl.u32 %v6855, 7
        %v6857 = vsub.s32 %v6435, %v6856
        %v6858 = vrot.slane %v6833, %v6857
        %v6859 = vlaneseq
        %v6860 = vshrl.u32 %v6859, 7
        %v6861 = vsub.s32 %v6435, %v6860
        %v6862 = vrot.slane %v6834, %v6861
        %v6863 = vlaneseq
        %v6864 = vshrl.u32 %v6863, 7
        %v6865 = vsub.s32 %v6435, %v6864
        %v6866 = vrot.slane %v6835, %v6865
        %v6867 = vlaneseq
        %v6868 = vshrl.u32 %v6867, 7
        %v6869 = vsub.s32 %v6435, %v6868
        %v6870 = vrot.slane %v6836, %v6869
        %v6871 = vlaneseq
        %v6872 = vshrl.u32 %v6871, 7
        %v6873 = vsub.s32 %v6435, %v6872
        %v6874 = vrot.slane %v6837, %v6873
        %v6875 = vlaneseq
        %v6876 = vshrl.u32 %v6875, 7
        %v6877 = vsub.s32 %v6435, %v6876
        %v6878 = vrot.slane %v6838, %v6877
        %v6879 = vsel %vm5602, %v6854, %v6850
        %v6880 = vsel %vm5605, %v6858, %v6879
        %v6881 = vsel %vm5608, %v6862, %v6880
        %v6882 = vsel %vm5611, %v6866, %v6881
        %v6883 = vsel %vm5614, %v6870, %v6882
        %v6884 = vsel %vm5617, %v6874, %v6883
        %v6885 = vsel %vm5620, %v6878, %v6884
        %s6887 = scalar_lea.vmem %s327, 8 [#allocation5]
        %6888 = vst.msk [vmem:[%s6887] sm:$0xff] %vm6476, %v6885
        %v6889 = vld [vmem:[%s5914] sm:$0xff]
        %v6890 = vld [vmem:[%s5914 + $0x10] sm:$0xff]
        %v6891 = vld [vmem:[%s5914 + $0x20] sm:$0xff]
        %v6892 = vld [vmem:[%s5914 + $0x30] sm:$0xff]
        %v6893 = vld [vmem:[%s5914 + $0x40] sm:$0xff]
        %v6894 = vld [vmem:[%s5914 + $0x50] sm:$0xff]
        %v6895 = vld [vmem:[%s5914 + $0x60] sm:$0xff]
        %v6896 = vld [vmem:[%s5914 + $0x70] sm:$0xff]
        %v6897 = vld [vmem:[%s7] sm:$0x1]
        %v6899 = vlaneseq
        %v6900 = vshrl.u32 %v6899, 7
        %v6901 = vsub.s32 0, %v6900
        %v6902 = vrot.slane %v6897, %v6901
        %v6904 = vmul.f32 %v6889, %v6902
        %v6905 = vmul.f32 %v6890, %v6902
        %v6906 = vmul.f32 %v6891, %v6902
        %v6907 = vmul.f32 %v6892, %v6902
        %v6908 = vmul.f32 %v6893, %v6902
        %v6909 = vmul.f32 %v6894, %v6902
        %v6910 = vmul.f32 %v6895, %v6902
        %v6911 = vmul.f32 %v6896, %v6902
        %v6912 = vadd.f32 %v6904, 0.0
        %v6913 = vadd.f32 %v6905, 0.0
        %v6914 = vadd.f32 %v6906, 0.0
        %v6915 = vadd.f32 %v6907, 0.0
        %v6916 = vadd.f32 %v6908, 0.0
        %v6917 = vadd.f32 %v6909, 0.0
        %v6918 = vadd.f32 %v6910, 0.0
        %v6919 = vadd.f32 %v6911, 0.0
        %v6920 = vld [vmem:[%s5848 + $0x1] sm:$0xff]
        %v6921 = vld [vmem:[%s5848 + $0x11] sm:$0xff]
        %v6922 = vld [vmem:[%s5848 + $0x21] sm:$0xff]
        %v6923 = vld [vmem:[%s5848 + $0x31] sm:$0xff]
        %v6924 = vld [vmem:[%s5848 + $0x41] sm:$0xff]
        %v6925 = vld [vmem:[%s5848 + $0x51] sm:$0xff]
        %v6926 = vld [vmem:[%s5848 + $0x61] sm:$0xff]
        %v6927 = vld [vmem:[%s5848 + $0x71] sm:$0xff]
        %v6928 = vld [vmem:[%s6096] sm:$0x1]
        %v6930 = vlaneseq
        %v6931 = vshrl.u32 %v6930, 7
        %v6932 = vsub.s32 0, %v6931
        %v6933 = vrot.slane %v6928, %v6932
        %v6935 = vmul.f32 %v6920, %v6933
        %v6936 = vmul.f32 %v6921, %v6933
        %v6937 = vmul.f32 %v6922, %v6933
        %v6938 = vmul.f32 %v6923, %v6933
        %v6939 = vmul.f32 %v6924, %v6933
        %v6940 = vmul.f32 %v6925, %v6933
        %v6941 = vmul.f32 %v6926, %v6933
        %v6942 = vmul.f32 %v6927, %v6933
        %v6943 = vadd.f32 %v6912, %v6935
        %v6944 = vadd.f32 %v6913, %v6936
        %v6945 = vadd.f32 %v6914, %v6937
        %v6946 = vadd.f32 %v6915, %v6938
        %v6947 = vadd.f32 %v6916, %v6939
        %v6948 = vadd.f32 %v6917, %v6940
        %v6949 = vadd.f32 %v6918, %v6941
        %v6950 = vadd.f32 %v6919, %v6942
        %v6951 = vld [vmem:[%s5914 + $0x1] sm:$0xff]
        %v6952 = vld [vmem:[%s5914 + $0x11] sm:$0xff]
        %v6953 = vld [vmem:[%s5914 + $0x21] sm:$0xff]
        %v6954 = vld [vmem:[%s5914 + $0x31] sm:$0xff]
        %v6955 = vld [vmem:[%s5914 + $0x41] sm:$0xff]
        %v6956 = vld [vmem:[%s5914 + $0x51] sm:$0xff]
        %v6957 = vld [vmem:[%s5914 + $0x61] sm:$0xff]
        %v6958 = vld [vmem:[%s5914 + $0x71] sm:$0xff]
        %v6959 = vld [vmem:[%s6128] sm:$0x1]
        %v6961 = vlaneseq
        %v6962 = vshrl.u32 %v6961, 7
        %v6963 = vsub.s32 0, %v6962
        %v6964 = vrot.slane %v6959, %v6963
        %v6966 = vmul.f32 %v6951, %v6964
        %v6967 = vmul.f32 %v6952, %v6964
        %v6968 = vmul.f32 %v6953, %v6964
        %v6969 = vmul.f32 %v6954, %v6964
        %v6970 = vmul.f32 %v6955, %v6964
        %v6971 = vmul.f32 %v6956, %v6964
        %v6972 = vmul.f32 %v6957, %v6964
        %v6973 = vmul.f32 %v6958, %v6964
        %v6974 = vadd.f32 %v6943, %v6966
        %v6975 = vadd.f32 %v6944, %v6967
        %v6976 = vadd.f32 %v6945, %v6968
        %v6977 = vadd.f32 %v6946, %v6969
        %v6978 = vadd.f32 %v6947, %v6970
        %v6979 = vadd.f32 %v6948, %v6971
        %v6980 = vadd.f32 %v6949, %v6972
        %v6981 = vadd.f32 %v6950, %v6973
        %v6982 = vld [vmem:[%s6046] sm:$0xff]
        %v6983 = vld [vmem:[%s6046 + $0x10] sm:$0xff]
        %v6984 = vld [vmem:[%s6046 + $0x20] sm:$0xff]
        %v6985 = vld [vmem:[%s6046 + $0x30] sm:$0xff]
        %v6986 = vld [vmem:[%s6046 + $0x40] sm:$0xff]
        %v6987 = vld [vmem:[%s6046 + $0x50] sm:$0xff]
        %v6988 = vld [vmem:[%s6046 + $0x60] sm:$0xff]
        %v6989 = vld [vmem:[%s6046 + $0x70] sm:$0xff]
        %v6990 = vld [vmem:[%s6160] sm:$0x1]
        %v6992 = vlaneseq
        %v6993 = vshrl.u32 %v6992, 7
        %v6994 = vsub.s32 0, %v6993
        %v6995 = vrot.slane %v6990, %v6994
        %v6997 = vmul.f32 %v6982, %v6995
        %v6998 = vmul.f32 %v6983, %v6995
        %v6999 = vmul.f32 %v6984, %v6995
        %v7000 = vmul.f32 %v6985, %v6995
        %v7001 = vmul.f32 %v6986, %v6995
        %v7002 = vmul.f32 %v6987, %v6995
        %v7003 = vmul.f32 %v6988, %v6995
        %v7004 = vmul.f32 %v6989, %v6995
        %v7005 = vadd.f32 %v6974, %v6997
        %v7006 = vadd.f32 %v6975, %v6998
        %v7007 = vadd.f32 %v6976, %v6999
        %v7008 = vadd.f32 %v6977, %v7000
        %v7009 = vadd.f32 %v6978, %v7001
        %v7010 = vadd.f32 %v6979, %v7002
        %v7011 = vadd.f32 %v6980, %v7003
        %v7012 = vadd.f32 %v6981, %v7004
        %v7013 = vld [vmem:[%s5980 + $0x1] sm:$0xff]
        %v7014 = vld [vmem:[%s5980 + $0x11] sm:$0xff]
        %v7015 = vld [vmem:[%s5980 + $0x21] sm:$0xff]
        %v7016 = vld [vmem:[%s5980 + $0x31] sm:$0xff]
        %v7017 = vld [vmem:[%s5980 + $0x41] sm:$0xff]
        %v7018 = vld [vmem:[%s5980 + $0x51] sm:$0xff]
        %v7019 = vld [vmem:[%s5980 + $0x61] sm:$0xff]
        %v7020 = vld [vmem:[%s5980 + $0x71] sm:$0xff]
        %v7021 = vld [vmem:[%s6192] sm:$0x1]
        %v7023 = vlaneseq
        %v7024 = vshrl.u32 %v7023, 7
        %v7025 = vsub.s32 0, %v7024
        %v7026 = vrot.slane %v7021, %v7025
        %v7028 = vmul.f32 %v7013, %v7026
        %v7029 = vmul.f32 %v7014, %v7026
        %v7030 = vmul.f32 %v7015, %v7026
        %v7031 = vmul.f32 %v7016, %v7026
        %v7032 = vmul.f32 %v7017, %v7026
        %v7033 = vmul.f32 %v7018, %v7026
        %v7034 = vmul.f32 %v7019, %v7026
        %v7035 = vmul.f32 %v7020, %v7026
        %v7036 = vadd.f32 %v7005, %v7028
        %v7037 = vadd.f32 %v7006, %v7029
        %v7038 = vadd.f32 %v7007, %v7030
        %v7039 = vadd.f32 %v7008, %v7031
        %v7040 = vadd.f32 %v7009, %v7032
        %v7041 = vadd.f32 %v7010, %v7033
        %v7042 = vadd.f32 %v7011, %v7034
        %v7043 = vadd.f32 %v7012, %v7035
        %v7044 = vld [vmem:[%s6046 + $0x1] sm:$0xff]
        %v7045 = vld [vmem:[%s6046 + $0x11] sm:$0xff]
        %v7046 = vld [vmem:[%s6046 + $0x21] sm:$0xff]
        %v7047 = vld [vmem:[%s6046 + $0x31] sm:$0xff]
        %v7048 = vld [vmem:[%s6046 + $0x41] sm:$0xff]
        %v7049 = vld [vmem:[%s6046 + $0x51] sm:$0xff]
        %v7050 = vld [vmem:[%s6046 + $0x61] sm:$0xff]
        %v7051 = vld [vmem:[%s6046 + $0x71] sm:$0xff]
        %v7052 = vld [vmem:[%s6224] sm:$0x1]
        %v7054 = vlaneseq
        %v7055 = vshrl.u32 %v7054, 7
        %v7056 = vsub.s32 0, %v7055
        %v7057 = vrot.slane %v7052, %v7056
        %v7059 = vmul.f32 %v7044, %v7057
        %v7060 = vmul.f32 %v7045, %v7057
        %v7061 = vmul.f32 %v7046, %v7057
        %v7062 = vmul.f32 %v7047, %v7057
        %v7063 = vmul.f32 %v7048, %v7057
        %v7064 = vmul.f32 %v7049, %v7057
        %v7065 = vmul.f32 %v7050, %v7057
        %v7066 = vmul.f32 %v7051, %v7057
        %v7067 = vadd.f32 %v7036, %v7059
        %v7068 = vadd.f32 %v7037, %v7060
        %v7069 = vadd.f32 %v7038, %v7061
        %v7070 = vadd.f32 %v7039, %v7062
        %v7071 = vadd.f32 %v7040, %v7063
        %v7072 = vadd.f32 %v7041, %v7064
        %v7073 = vadd.f32 %v7042, %v7065
        %v7074 = vadd.f32 %v7043, %v7066
        %s7075 = scalar_lea.vmem [#allocation3], 192
        %v7076 = vld [vmem:[%s7075] sm:$0xff]
        %v7077 = vld [vmem:[%s7075 + $0x10] sm:$0xff]
        %v7078 = vld [vmem:[%s7075 + $0x20] sm:$0xff]
        %v7079 = vld [vmem:[%s7075 + $0x30] sm:$0xff]
        %v7080 = vld [vmem:[%s7075 + $0x40] sm:$0xff]
        %v7081 = vld [vmem:[%s7075 + $0x50] sm:$0xff]
        %v7082 = vld [vmem:[%s7075 + $0x60] sm:$0xff]
        %v7083 = vld [vmem:[%s7075 + $0x70] sm:$0xff]
        %v7084 = vld [vmem:[%s6256] sm:$0x1]
        %v7086 = vlaneseq
        %v7087 = vshrl.u32 %v7086, 7
        %v7088 = vsub.s32 0, %v7087
        %v7089 = vrot.slane %v7084, %v7088
        %v7091 = vmul.f32 %v7076, %v7089
        %v7092 = vmul.f32 %v7077, %v7089
        %v7093 = vmul.f32 %v7078, %v7089
        %v7094 = vmul.f32 %v7079, %v7089
        %v7095 = vmul.f32 %v7080, %v7089
        %v7096 = vmul.f32 %v7081, %v7089
        %v7097 = vmul.f32 %v7082, %v7089
        %v7098 = vmul.f32 %v7083, %v7089
        %v7099 = vadd.f32 %v7067, %v7091
        %v7100 = vadd.f32 %v7068, %v7092
        %v7101 = vadd.f32 %v7069, %v7093
        %v7102 = vadd.f32 %v7070, %v7094
        %v7103 = vadd.f32 %v7071, %v7095
        %v7104 = vadd.f32 %v7072, %v7096
        %v7105 = vadd.f32 %v7073, %v7097
        %v7106 = vadd.f32 %v7074, %v7098
        %s7107 = scalar_lea.vmem [#allocation3], 32
        %v7108 = vld [vmem:[%s7107 + $0x1] sm:$0xff]
        %v7109 = vld [vmem:[%s7107 + $0x11] sm:$0xff]
        %v7110 = vld [vmem:[%s7107 + $0x21] sm:$0xff]
        %v7111 = vld [vmem:[%s7107 + $0x31] sm:$0xff]
        %v7112 = vld [vmem:[%s7107 + $0x41] sm:$0xff]
        %v7113 = vld [vmem:[%s7107 + $0x51] sm:$0xff]
        %v7114 = vld [vmem:[%s7107 + $0x61] sm:$0xff]
        %v7115 = vld [vmem:[%s7107 + $0x71] sm:$0xff]
        %v7116 = vld [vmem:[%s6288] sm:$0x1]
        %v7118 = vlaneseq
        %v7119 = vshrl.u32 %v7118, 7
        %v7120 = vsub.s32 0, %v7119
        %v7121 = vrot.slane %v7116, %v7120
        %v7123 = vmul.f32 %v7108, %v7121
        %v7124 = vmul.f32 %v7109, %v7121
        %v7125 = vmul.f32 %v7110, %v7121
        %v7126 = vmul.f32 %v7111, %v7121
        %v7127 = vmul.f32 %v7112, %v7121
        %v7128 = vmul.f32 %v7113, %v7121
        %v7129 = vmul.f32 %v7114, %v7121
        %v7130 = vmul.f32 %v7115, %v7121
        %v7131 = vadd.f32 %v7099, %v7123
        %v7132 = vadd.f32 %v7100, %v7124
        %v7133 = vadd.f32 %v7101, %v7125
        %v7134 = vadd.f32 %v7102, %v7126
        %v7135 = vadd.f32 %v7103, %v7127
        %v7136 = vadd.f32 %v7104, %v7128
        %v7137 = vadd.f32 %v7105, %v7129
        %v7138 = vadd.f32 %v7106, %v7130
        %v7139 = vld [vmem:[%s7075 + $0x1] sm:$0xff]
        %v7140 = vld [vmem:[%s7075 + $0x11] sm:$0xff]
        %v7141 = vld [vmem:[%s7075 + $0x21] sm:$0xff]
        %v7142 = vld [vmem:[%s7075 + $0x31] sm:$0xff]
        %v7143 = vld [vmem:[%s7075 + $0x41] sm:$0xff]
        %v7144 = vld [vmem:[%s7075 + $0x51] sm:$0xff]
        %v7145 = vld [vmem:[%s7075 + $0x61] sm:$0xff]
        %v7146 = vld [vmem:[%s7075 + $0x71] sm:$0xff]
        %v7147 = vld [vmem:[%s6320] sm:$0x1]
        %v7149 = vlaneseq
        %v7150 = vshrl.u32 %v7149, 7
        %v7151 = vsub.s32 0, %v7150
        %v7152 = vrot.slane %v7147, %v7151
        %v7154 = vmul.f32 %v7139, %v7152
        %v7155 = vmul.f32 %v7140, %v7152
        %v7156 = vmul.f32 %v7141, %v7152
        %v7157 = vmul.f32 %v7142, %v7152
        %v7158 = vmul.f32 %v7143, %v7152
        %v7159 = vmul.f32 %v7144, %v7152
        %v7160 = vmul.f32 %v7145, %v7152
        %v7161 = vmul.f32 %v7146, %v7152
        %v7162 = vadd.f32 %v7131, %v7154
        %v7163 = vadd.f32 %v7132, %v7155
        %v7164 = vadd.f32 %v7133, %v7156
        %v7165 = vadd.f32 %v7134, %v7157
        %v7166 = vadd.f32 %v7135, %v7158
        %v7167 = vadd.f32 %v7136, %v7159
        %v7168 = vadd.f32 %v7137, %v7160
        %v7169 = vadd.f32 %v7138, %v7161
        %v7170 = vsel %vm457, %v7162, 0.0
        %7171 = vadd.xlane.f32.xlu0 %v7170
        %v7172 = vpop.xlane.xlu0 %7171
        %v7173 = vsel %vm457, %v7163, 0.0
        %7174 = vadd.xlane.f32.xlu0 %v7173
        %v7175 = vpop.xlane.xlu0 %7174
        %v7176 = vsel %vm457, %v7164, 0.0
        %7177 = vadd.xlane.f32.xlu0 %v7176
        %v7178 = vpop.xlane.xlu0 %7177
        %v7179 = vsel %vm457, %v7165, 0.0
        %7180 = vadd.xlane.f32.xlu0 %v7179
        %v7181 = vpop.xlane.xlu0 %7180
        %v7182 = vsel %vm457, %v7166, 0.0
        %7183 = vadd.xlane.f32.xlu0 %v7182
        %v7184 = vpop.xlane.xlu0 %7183
        %v7185 = vsel %vm457, %v7167, 0.0
        %7186 = vadd.xlane.f32.xlu0 %v7185
        %v7187 = vpop.xlane.xlu0 %7186
        %v7188 = vsel %vm457, %v7168, 0.0
        %7189 = vadd.xlane.f32.xlu0 %v7188
        %v7190 = vpop.xlane.xlu0 %7189
        %v7191 = vsel %vm457, %v7169, 0.0
        %7192 = vadd.xlane.f32.xlu0 %v7191
        %v7193 = vpop.xlane.xlu0 %7192
        %v7194 = vld [vmem:[#allocation4] sm:$0x1]
        %v7196 = vlaneseq
        %v7197 = vshrl.u32 %v7196, 7
        %v7198 = vsub.s32 0, %v7197
        %v7199 = vrot.slane %v7194, %v7198
        %7200 = vset.pattern.permute.xlu0 0
        %7201 = vperm.xlu0 %7200, %v7199
        %v7202 = vpop.permute.xlu0 %7201
        %v7204 = vadd.f32 %v7172, %v7202
        %v7205 = vadd.f32 %v7175, %v7202
        %v7206 = vadd.f32 %v7178, %v7202
        %v7207 = vadd.f32 %v7181, %v7202
        %v7208 = vadd.f32 %v7184, %v7202
        %v7209 = vadd.f32 %v7187, %v7202
        %v7210 = vadd.f32 %v7190, %v7202
        %v7211 = vadd.f32 %v7193, %v7202
        %v7212 = vsub.f32 0.0, %v7204
        %v7213 = vsub.f32 0.0, %v7205
        %v7214 = vsub.f32 0.0, %v7206
        %v7215 = vsub.f32 0.0, %v7207
        %v7216 = vsub.f32 0.0, %v7208
        %v7217 = vsub.f32 0.0, %v7209
        %v7218 = vsub.f32 0.0, %v7210
        %v7219 = vsub.f32 0.0, %v7211
        %v7220 = vmul.f32 %v7212, 1.442695
        %v7221 = vpow.pop %v7220
        %v7222 = vmul.f32 %v7213, 1.442695
        %v7223 = vpow.pop %v7222
        %v7224 = vmul.f32 %v7214, 1.442695
        %v7225 = vpow.pop %v7224
        %v7226 = vmul.f32 %v7215, 1.442695
        %v7227 = vpow.pop %v7226
        %v7228 = vmul.f32 %v7216, 1.442695
        %v7229 = vpow.pop %v7228
        %v7230 = vmul.f32 %v7217, 1.442695
        %v7231 = vpow.pop %v7230
        %v7232 = vmul.f32 %v7218, 1.442695
        %v7233 = vpow.pop %v7232
        %v7234 = vmul.f32 %v7219, 1.442695
        %v7235 = vpow.pop %v7234
        %v7236 = vadd.f32 %v7221, 1.0
        %v7237 = vadd.f32 %v7223, 1.0
        %v7238 = vadd.f32 %v7225, 1.0
        %v7239 = vadd.f32 %v7227, 1.0
        %v7240 = vadd.f32 %v7229, 1.0
        %v7241 = vadd.f32 %v7231, 1.0
        %v7242 = vadd.f32 %v7233, 1.0
        %v7243 = vadd.f32 %v7235, 1.0
        %v7244 = vrcp.pop %v7236
        %v7245 = vrcp.pop %v7237
        %v7246 = vrcp.pop %v7238
        %v7247 = vrcp.pop %v7239
        %v7248 = vrcp.pop %v7240
        %v7249 = vrcp.pop %v7241
        %v7250 = vrcp.pop %v7242
        %v7251 = vrcp.pop %v7243
        %v7260 = vlaneseq
        %v7261 = vshrl.u32 %v7260, 7
        %v7262 = vsub.s32 %v6435, %v7261
        %v7263 = vrot.slane %v7244, %v7262
        %v7264 = vlaneseq
        %v7265 = vshrl.u32 %v7264, 7
        %v7266 = vsub.s32 %v6435, %v7265
        %v7267 = vrot.slane %v7245, %v7266
        %v7268 = vlaneseq
        %v7269 = vshrl.u32 %v7268, 7
        %v7270 = vsub.s32 %v6435, %v7269
        %v7271 = vrot.slane %v7246, %v7270
        %v7272 = vlaneseq
        %v7273 = vshrl.u32 %v7272, 7
        %v7274 = vsub.s32 %v6435, %v7273
        %v7275 = vrot.slane %v7247, %v7274
        %v7276 = vlaneseq
        %v7277 = vshrl.u32 %v7276, 7
        %v7278 = vsub.s32 %v6435, %v7277
        %v7279 = vrot.slane %v7248, %v7278
        %v7280 = vlaneseq
        %v7281 = vshrl.u32 %v7280, 7
        %v7282 = vsub.s32 %v6435, %v7281
        %v7283 = vrot.slane %v7249, %v7282
        %v7284 = vlaneseq
        %v7285 = vshrl.u32 %v7284, 7
        %v7286 = vsub.s32 %v6435, %v7285
        %v7287 = vrot.slane %v7250, %v7286
        %v7288 = vlaneseq
        %v7289 = vshrl.u32 %v7288, 7
        %v7290 = vsub.s32 %v6435, %v7289
        %v7291 = vrot.slane %v7251, %v7290
        %v7292 = vsel %vm5602, %v7267, %v7263
        %v7293 = vsel %vm5605, %v7271, %v7292
        %v7294 = vsel %vm5608, %v7275, %v7293
        %v7295 = vsel %vm5611, %v7279, %v7294
        %v7296 = vsel %vm5614, %v7283, %v7295
        %v7297 = vsel %vm5617, %v7287, %v7296
        %v7298 = vsel %vm5620, %v7291, %v7297
        %s7300 = scalar_lea.vmem %s327, 16 [#allocation5]
        %7301 = vst.msk [vmem:[%s7300] sm:$0xff] %vm6476, %v7298
        %v7302 = vld [vmem:[%s5848 + $0x1] sm:$0xff]
        %v7303 = vld [vmem:[%s5848 + $0x11] sm:$0xff]
        %v7304 = vld [vmem:[%s5848 + $0x21] sm:$0xff]
        %v7305 = vld [vmem:[%s5848 + $0x31] sm:$0xff]
        %v7306 = vld [vmem:[%s5848 + $0x41] sm:$0xff]
        %v7307 = vld [vmem:[%s5848 + $0x51] sm:$0xff]
        %v7308 = vld [vmem:[%s5848 + $0x61] sm:$0xff]
        %v7309 = vld [vmem:[%s5848 + $0x71] sm:$0xff]
        %v7310 = vld [vmem:[%s7] sm:$0x1]
        %v7312 = vlaneseq
        %v7313 = vshrl.u32 %v7312, 7
        %v7314 = vsub.s32 0, %v7313
        %v7315 = vrot.slane %v7310, %v7314
        %v7317 = vmul.f32 %v7302, %v7315
        %v7318 = vmul.f32 %v7303, %v7315
        %v7319 = vmul.f32 %v7304, %v7315
        %v7320 = vmul.f32 %v7305, %v7315
        %v7321 = vmul.f32 %v7306, %v7315
        %v7322 = vmul.f32 %v7307, %v7315
        %v7323 = vmul.f32 %v7308, %v7315
        %v7324 = vmul.f32 %v7309, %v7315
        %v7325 = vadd.f32 %v7317, 0.0
        %v7326 = vadd.f32 %v7318, 0.0
        %v7327 = vadd.f32 %v7319, 0.0
        %v7328 = vadd.f32 %v7320, 0.0
        %v7329 = vadd.f32 %v7321, 0.0
        %v7330 = vadd.f32 %v7322, 0.0
        %v7331 = vadd.f32 %v7323, 0.0
        %v7332 = vadd.f32 %v7324, 0.0
        %v7333 = vld [vmem:[%s5914 + $0x1] sm:$0xff]
        %v7334 = vld [vmem:[%s5914 + $0x11] sm:$0xff]
        %v7335 = vld [vmem:[%s5914 + $0x21] sm:$0xff]
        %v7336 = vld [vmem:[%s5914 + $0x31] sm:$0xff]
        %v7337 = vld [vmem:[%s5914 + $0x41] sm:$0xff]
        %v7338 = vld [vmem:[%s5914 + $0x51] sm:$0xff]
        %v7339 = vld [vmem:[%s5914 + $0x61] sm:$0xff]
        %v7340 = vld [vmem:[%s5914 + $0x71] sm:$0xff]
        %v7341 = vld [vmem:[%s6096] sm:$0x1]
        %v7343 = vlaneseq
        %v7344 = vshrl.u32 %v7343, 7
        %v7345 = vsub.s32 0, %v7344
        %v7346 = vrot.slane %v7341, %v7345
        %v7348 = vmul.f32 %v7333, %v7346
        %v7349 = vmul.f32 %v7334, %v7346
        %v7350 = vmul.f32 %v7335, %v7346
        %v7351 = vmul.f32 %v7336, %v7346
        %v7352 = vmul.f32 %v7337, %v7346
        %v7353 = vmul.f32 %v7338, %v7346
        %v7354 = vmul.f32 %v7339, %v7346
        %v7355 = vmul.f32 %v7340, %v7346
        %v7356 = vadd.f32 %v7325, %v7348
        %v7357 = vadd.f32 %v7326, %v7349
        %v7358 = vadd.f32 %v7327, %v7350
        %v7359 = vadd.f32 %v7328, %v7351
        %v7360 = vadd.f32 %v7329, %v7352
        %v7361 = vadd.f32 %v7330, %v7353
        %v7362 = vadd.f32 %v7331, %v7354
        %v7363 = vadd.f32 %v7332, %v7355
        %v7364 = vld [vmem:[%s5848 + $0x2] sm:$0xff]
        %v7365 = vld [vmem:[%s5848 + $0x12] sm:$0xff]
        %v7366 = vld [vmem:[%s5848 + $0x22] sm:$0xff]
        %v7367 = vld [vmem:[%s5848 + $0x32] sm:$0xff]
        %v7368 = vld [vmem:[%s5848 + $0x42] sm:$0xff]
        %v7369 = vld [vmem:[%s5848 + $0x52] sm:$0xff]
        %v7370 = vld [vmem:[%s5848 + $0x62] sm:$0xff]
        %v7371 = vld [vmem:[%s5848 + $0x72] sm:$0xff]
        %v7372 = vld [vmem:[%s6128] sm:$0x1]
        %v7374 = vlaneseq
        %v7375 = vshrl.u32 %v7374, 7
        %v7376 = vsub.s32 0, %v7375
        %v7377 = vrot.slane %v7372, %v7376
        %v7379 = vmul.f32 %v7364, %v7377
        %v7380 = vmul.f32 %v7365, %v7377
        %v7381 = vmul.f32 %v7366, %v7377
        %v7382 = vmul.f32 %v7367, %v7377
        %v7383 = vmul.f32 %v7368, %v7377
        %v7384 = vmul.f32 %v7369, %v7377
        %v7385 = vmul.f32 %v7370, %v7377
        %v7386 = vmul.f32 %v7371, %v7377
        %v7387 = vadd.f32 %v7356, %v7379
        %v7388 = vadd.f32 %v7357, %v7380
        %v7389 = vadd.f32 %v7358, %v7381
        %v7390 = vadd.f32 %v7359, %v7382
        %v7391 = vadd.f32 %v7360, %v7383
        %v7392 = vadd.f32 %v7361, %v7384
        %v7393 = vadd.f32 %v7362, %v7385
        %v7394 = vadd.f32 %v7363, %v7386
        %v7395 = vld [vmem:[%s5980 + $0x1] sm:$0xff]
        %v7396 = vld [vmem:[%s5980 + $0x11] sm:$0xff]
        %v7397 = vld [vmem:[%s5980 + $0x21] sm:$0xff]
        %v7398 = vld [vmem:[%s5980 + $0x31] sm:$0xff]
        %v7399 = vld [vmem:[%s5980 + $0x41] sm:$0xff]
        %v7400 = vld [vmem:[%s5980 + $0x51] sm:$0xff]
        %v7401 = vld [vmem:[%s5980 + $0x61] sm:$0xff]
        %v7402 = vld [vmem:[%s5980 + $0x71] sm:$0xff]
        %v7403 = vld [vmem:[%s6160] sm:$0x1]
        %v7405 = vlaneseq
        %v7406 = vshrl.u32 %v7405, 7
        %v7407 = vsub.s32 0, %v7406
        %v7408 = vrot.slane %v7403, %v7407
        %v7410 = vmul.f32 %v7395, %v7408
        %v7411 = vmul.f32 %v7396, %v7408
        %v7412 = vmul.f32 %v7397, %v7408
        %v7413 = vmul.f32 %v7398, %v7408
        %v7414 = vmul.f32 %v7399, %v7408
        %v7415 = vmul.f32 %v7400, %v7408
        %v7416 = vmul.f32 %v7401, %v7408
        %v7417 = vmul.f32 %v7402, %v7408
        %v7418 = vadd.f32 %v7387, %v7410
        %v7419 = vadd.f32 %v7388, %v7411
        %v7420 = vadd.f32 %v7389, %v7412
        %v7421 = vadd.f32 %v7390, %v7413
        %v7422 = vadd.f32 %v7391, %v7414
        %v7423 = vadd.f32 %v7392, %v7415
        %v7424 = vadd.f32 %v7393, %v7416
        %v7425 = vadd.f32 %v7394, %v7417
        %v7426 = vld [vmem:[%s6046 + $0x1] sm:$0xff]
        %v7427 = vld [vmem:[%s6046 + $0x11] sm:$0xff]
        %v7428 = vld [vmem:[%s6046 + $0x21] sm:$0xff]
        %v7429 = vld [vmem:[%s6046 + $0x31] sm:$0xff]
        %v7430 = vld [vmem:[%s6046 + $0x41] sm:$0xff]
        %v7431 = vld [vmem:[%s6046 + $0x51] sm:$0xff]
        %v7432 = vld [vmem:[%s6046 + $0x61] sm:$0xff]
        %v7433 = vld [vmem:[%s6046 + $0x71] sm:$0xff]
        %v7434 = vld [vmem:[%s6192] sm:$0x1]
        %v7436 = vlaneseq
        %v7437 = vshrl.u32 %v7436, 7
        %v7438 = vsub.s32 0, %v7437
        %v7439 = vrot.slane %v7434, %v7438
        %v7441 = vmul.f32 %v7426, %v7439
        %v7442 = vmul.f32 %v7427, %v7439
        %v7443 = vmul.f32 %v7428, %v7439
        %v7444 = vmul.f32 %v7429, %v7439
        %v7445 = vmul.f32 %v7430, %v7439
        %v7446 = vmul.f32 %v7431, %v7439
        %v7447 = vmul.f32 %v7432, %v7439
        %v7448 = vmul.f32 %v7433, %v7439
        %v7449 = vadd.f32 %v7418, %v7441
        %v7450 = vadd.f32 %v7419, %v7442
        %v7451 = vadd.f32 %v7420, %v7443
        %v7452 = vadd.f32 %v7421, %v7444
        %v7453 = vadd.f32 %v7422, %v7445
        %v7454 = vadd.f32 %v7423, %v7446
        %v7455 = vadd.f32 %v7424, %v7447
        %v7456 = vadd.f32 %v7425, %v7448
        %v7457 = vld [vmem:[%s5980 + $0x2] sm:$0xff]
        %v7458 = vld [vmem:[%s5980 + $0x12] sm:$0xff]
        %v7459 = vld [vmem:[%s5980 + $0x22] sm:$0xff]
        %v7460 = vld [vmem:[%s5980 + $0x32] sm:$0xff]
        %v7461 = vld [vmem:[%s5980 + $0x42] sm:$0xff]
        %v7462 = vld [vmem:[%s5980 + $0x52] sm:$0xff]
        %v7463 = vld [vmem:[%s5980 + $0x62] sm:$0xff]
        %v7464 = vld [vmem:[%s5980 + $0x72] sm:$0xff]
        %v7465 = vld [vmem:[%s6224] sm:$0x1]
        %v7467 = vlaneseq
        %v7468 = vshrl.u32 %v7467, 7
        %v7469 = vsub.s32 0, %v7468
        %v7470 = vrot.slane %v7465, %v7469
        %v7472 = vmul.f32 %v7457, %v7470
        %v7473 = vmul.f32 %v7458, %v7470
        %v7474 = vmul.f32 %v7459, %v7470
        %v7475 = vmul.f32 %v7460, %v7470
        %v7476 = vmul.f32 %v7461, %v7470
        %v7477 = vmul.f32 %v7462, %v7470
        %v7478 = vmul.f32 %v7463, %v7470
        %v7479 = vmul.f32 %v7464, %v7470
        %v7480 = vadd.f32 %v7449, %v7472
        %v7481 = vadd.f32 %v7450, %v7473
        %v7482 = vadd.f32 %v7451, %v7474
        %v7483 = vadd.f32 %v7452, %v7475
        %v7484 = vadd.f32 %v7453, %v7476
        %v7485 = vadd.f32 %v7454, %v7477
        %v7486 = vadd.f32 %v7455, %v7478
        %v7487 = vadd.f32 %v7456, %v7479
        %v7488 = vld [vmem:[%s7107 + $0x1] sm:$0xff]
        %v7489 = vld [vmem:[%s7107 + $0x11] sm:$0xff]
        %v7490 = vld [vmem:[%s7107 + $0x21] sm:$0xff]
        %v7491 = vld [vmem:[%s7107 + $0x31] sm:$0xff]
        %v7492 = vld [vmem:[%s7107 + $0x41] sm:$0xff]
        %v7493 = vld [vmem:[%s7107 + $0x51] sm:$0xff]
        %v7494 = vld [vmem:[%s7107 + $0x61] sm:$0xff]
        %v7495 = vld [vmem:[%s7107 + $0x71] sm:$0xff]
        %v7496 = vld [vmem:[%s6256] sm:$0x1]
        %v7498 = vlaneseq
        %v7499 = vshrl.u32 %v7498, 7
        %v7500 = vsub.s32 0, %v7499
        %v7501 = vrot.slane %v7496, %v7500
        %v7503 = vmul.f32 %v7488, %v7501
        %v7504 = vmul.f32 %v7489, %v7501
        %v7505 = vmul.f32 %v7490, %v7501
        %v7506 = vmul.f32 %v7491, %v7501
        %v7507 = vmul.f32 %v7492, %v7501
        %v7508 = vmul.f32 %v7493, %v7501
        %v7509 = vmul.f32 %v7494, %v7501
        %v7510 = vmul.f32 %v7495, %v7501
        %v7511 = vadd.f32 %v7480, %v7503
        %v7512 = vadd.f32 %v7481, %v7504
        %v7513 = vadd.f32 %v7482, %v7505
        %v7514 = vadd.f32 %v7483, %v7506
        %v7515 = vadd.f32 %v7484, %v7507
        %v7516 = vadd.f32 %v7485, %v7508
        %v7517 = vadd.f32 %v7486, %v7509
        %v7518 = vadd.f32 %v7487, %v7510
        %v7519 = vld [vmem:[%s7075 + $0x1] sm:$0xff]
        %v7520 = vld [vmem:[%s7075 + $0x11] sm:$0xff]
        %v7521 = vld [vmem:[%s7075 + $0x21] sm:$0xff]
        %v7522 = vld [vmem:[%s7075 + $0x31] sm:$0xff]
        %v7523 = vld [vmem:[%s7075 + $0x41] sm:$0xff]
        %v7524 = vld [vmem:[%s7075 + $0x51] sm:$0xff]
        %v7525 = vld [vmem:[%s7075 + $0x61] sm:$0xff]
        %v7526 = vld [vmem:[%s7075 + $0x71] sm:$0xff]
        %v7527 = vld [vmem:[%s6288] sm:$0x1]
        %v7529 = vlaneseq
        %v7530 = vshrl.u32 %v7529, 7
        %v7531 = vsub.s32 0, %v7530
        %v7532 = vrot.slane %v7527, %v7531
        %v7534 = vmul.f32 %v7519, %v7532
        %v7535 = vmul.f32 %v7520, %v7532
        %v7536 = vmul.f32 %v7521, %v7532
        %v7537 = vmul.f32 %v7522, %v7532
        %v7538 = vmul.f32 %v7523, %v7532
        %v7539 = vmul.f32 %v7524, %v7532
        %v7540 = vmul.f32 %v7525, %v7532
        %v7541 = vmul.f32 %v7526, %v7532
        %v7542 = vadd.f32 %v7511, %v7534
        %v7543 = vadd.f32 %v7512, %v7535
        %v7544 = vadd.f32 %v7513, %v7536
        %v7545 = vadd.f32 %v7514, %v7537
        %v7546 = vadd.f32 %v7515, %v7538
        %v7547 = vadd.f32 %v7516, %v7539
        %v7548 = vadd.f32 %v7517, %v7540
        %v7549 = vadd.f32 %v7518, %v7541
        %v7550 = vld [vmem:[%s7107 + $0x2] sm:$0xff]
        %v7551 = vld [vmem:[%s7107 + $0x12] sm:$0xff]
        %v7552 = vld [vmem:[%s7107 + $0x22] sm:$0xff]
        %v7553 = vld [vmem:[%s7107 + $0x32] sm:$0xff]
        %v7554 = vld [vmem:[%s7107 + $0x42] sm:$0xff]
        %v7555 = vld [vmem:[%s7107 + $0x52] sm:$0xff]
        %v7556 = vld [vmem:[%s7107 + $0x62] sm:$0xff]
        %v7557 = vld [vmem:[%s7107 + $0x72] sm:$0xff]
        %v7558 = vld [vmem:[%s6320] sm:$0x1]
        %v7560 = vlaneseq
        %v7561 = vshrl.u32 %v7560, 7
        %v7562 = vsub.s32 0, %v7561
        %v7563 = vrot.slane %v7558, %v7562
        %v7565 = vmul.f32 %v7550, %v7563
        %v7566 = vmul.f32 %v7551, %v7563
        %v7567 = vmul.f32 %v7552, %v7563
        %v7568 = vmul.f32 %v7553, %v7563
        %v7569 = vmul.f32 %v7554, %v7563
        %v7570 = vmul.f32 %v7555, %v7563
        %v7571 = vmul.f32 %v7556, %v7563
        %v7572 = vmul.f32 %v7557, %v7563
        %v7573 = vadd.f32 %v7542, %v7565
        %v7574 = vadd.f32 %v7543, %v7566
        %v7575 = vadd.f32 %v7544, %v7567
        %v7576 = vadd.f32 %v7545, %v7568
        %v7577 = vadd.f32 %v7546, %v7569
        %v7578 = vadd.f32 %v7547, %v7570
        %v7579 = vadd.f32 %v7548, %v7571
        %v7580 = vadd.f32 %v7549, %v7572
        %v7581 = vsel %vm457, %v7573, 0.0
        %7582 = vadd.xlane.f32.xlu0 %v7581
        %v7583 = vpop.xlane.xlu0 %7582
        %v7584 = vsel %vm457, %v7574, 0.0
        %7585 = vadd.xlane.f32.xlu0 %v7584
        %v7586 = vpop.xlane.xlu0 %7585
        %v7587 = vsel %vm457, %v7575, 0.0
        %7588 = vadd.xlane.f32.xlu0 %v7587
        %v7589 = vpop.xlane.xlu0 %7588
        %v7590 = vsel %vm457, %v7576, 0.0
        %7591 = vadd.xlane.f32.xlu0 %v7590
        %v7592 = vpop.xlane.xlu0 %7591
        %v7593 = vsel %vm457, %v7577, 0.0
        %7594 = vadd.xlane.f32.xlu0 %v7593
        %v7595 = vpop.xlane.xlu0 %7594
        %v7596 = vsel %vm457, %v7578, 0.0
        %7597 = vadd.xlane.f32.xlu0 %v7596
        %v7598 = vpop.xlane.xlu0 %7597
        %v7599 = vsel %vm457, %v7579, 0.0
        %7600 = vadd.xlane.f32.xlu0 %v7599
        %v7601 = vpop.xlane.xlu0 %7600
        %v7602 = vsel %vm457, %v7580, 0.0
        %7603 = vadd.xlane.f32.xlu0 %v7602
        %v7604 = vpop.xlane.xlu0 %7603
        %v7605 = vld [vmem:[#allocation4] sm:$0x1]
        %v7607 = vlaneseq
        %v7608 = vshrl.u32 %v7607, 7
        %v7609 = vsub.s32 0, %v7608
        %v7610 = vrot.slane %v7605, %v7609
        %7611 = vset.pattern.permute.xlu0 0
        %7612 = vperm.xlu0 %7611, %v7610
        %v7613 = vpop.permute.xlu0 %7612
        %v7615 = vadd.f32 %v7583, %v7613
        %v7616 = vadd.f32 %v7586, %v7613
        %v7617 = vadd.f32 %v7589, %v7613
        %v7618 = vadd.f32 %v7592, %v7613
        %v7619 = vadd.f32 %v7595, %v7613
        %v7620 = vadd.f32 %v7598, %v7613
        %v7621 = vadd.f32 %v7601, %v7613
        %v7622 = vadd.f32 %v7604, %v7613
        %v7623 = vsub.f32 0.0, %v7615
        %v7624 = vsub.f32 0.0, %v7616
        %v7625 = vsub.f32 0.0, %v7617
        %v7626 = vsub.f32 0.0, %v7618
        %v7627 = vsub.f32 0.0, %v7619
        %v7628 = vsub.f32 0.0, %v7620
        %v7629 = vsub.f32 0.0, %v7621
        %v7630 = vsub.f32 0.0, %v7622
        %v7631 = vmul.f32 %v7623, 1.442695
        %v7632 = vpow.pop %v7631
        %v7633 = vmul.f32 %v7624, 1.442695
        %v7634 = vpow.pop %v7633
        %v7635 = vmul.f32 %v7625, 1.442695
        %v7636 = vpow.pop %v7635
        %v7637 = vmul.f32 %v7626, 1.442695
        %v7638 = vpow.pop %v7637
        %v7639 = vmul.f32 %v7627, 1.442695
        %v7640 = vpow.pop %v7639
        %v7641 = vmul.f32 %v7628, 1.442695
        %v7642 = vpow.pop %v7641
        %v7643 = vmul.f32 %v7629, 1.442695
        %v7644 = vpow.pop %v7643
        %v7645 = vmul.f32 %v7630, 1.442695
        %v7646 = vpow.pop %v7645
        %v7647 = vadd.f32 %v7632, 1.0
        %v7648 = vadd.f32 %v7634, 1.0
        %v7649 = vadd.f32 %v7636, 1.0
        %v7650 = vadd.f32 %v7638, 1.0
        %v7651 = vadd.f32 %v7640, 1.0
        %v7652 = vadd.f32 %v7642, 1.0
        %v7653 = vadd.f32 %v7644, 1.0
        %v7654 = vadd.f32 %v7646, 1.0
        %v7655 = vrcp.pop %v7647
        %v7656 = vrcp.pop %v7648
        %v7657 = vrcp.pop %v7649
        %v7658 = vrcp.pop %v7650
        %v7659 = vrcp.pop %v7651
        %v7660 = vrcp.pop %v7652
        %v7661 = vrcp.pop %v7653
        %v7662 = vrcp.pop %v7654
        %v7671 = vlaneseq
        %v7672 = vshrl.u32 %v7671, 7
        %v7673 = vsub.s32 %v6435, %v7672
        %v7674 = vrot.slane %v7655, %v7673
        %v7675 = vlaneseq
        %v7676 = vshrl.u32 %v7675, 7
        %v7677 = vsub.s32 %v6435, %v7676
        %v7678 = vrot.slane %v7656, %v7677
        %v7679 = vlaneseq
        %v7680 = vshrl.u32 %v7679, 7
        %v7681 = vsub.s32 %v6435, %v7680
        %v7682 = vrot.slane %v7657, %v7681
        %v7683 = vlaneseq
        %v7684 = vshrl.u32 %v7683, 7
        %v7685 = vsub.s32 %v6435, %v7684
        %v7686 = vrot.slane %v7658, %v7685
        %v7687 = vlaneseq
        %v7688 = vshrl.u32 %v7687, 7
        %v7689 = vsub.s32 %v6435, %v7688
        %v7690 = vrot.slane %v7659, %v7689
        %v7691 = vlaneseq
        %v7692 = vshrl.u32 %v7691, 7
        %v7693 = vsub.s32 %v6435, %v7692
        %v7694 = vrot.slane %v7660, %v7693
        %v7695 = vlaneseq
        %v7696 = vshrl.u32 %v7695, 7
        %v7697 = vsub.s32 %v6435, %v7696
        %v7698 = vrot.slane %v7661, %v7697
        %v7699 = vlaneseq
        %v7700 = vshrl.u32 %v7699, 7
        %v7701 = vsub.s32 %v6435, %v7700
        %v7702 = vrot.slane %v7662, %v7701
        %v7703 = vsel %vm5602, %v7678, %v7674
        %v7704 = vsel %vm5605, %v7682, %v7703
        %v7705 = vsel %vm5608, %v7686, %v7704
        %v7706 = vsel %vm5611, %v7690, %v7705
        %v7707 = vsel %vm5614, %v7694, %v7706
        %v7708 = vsel %vm5617, %v7698, %v7707
        %v7709 = vsel %vm5620, %v7702, %v7708
        %s7711 = scalar_lea.vmem %s327, 24 [#allocation5]
        %7712 = vst.msk [vmem:[%s7711] sm:$0xff] %vm6476, %v7709
        %s7713 = sand.u32 %s227, 1
        %s7714 = scalar_lea.sflag [#allocation6], %s7713
        %s7715 = sand.u32 %s227, 1
        %s7716 = smul.addr %s7715, 32
        %s7717 = scalar_lea.vmem [#allocation5], %s7716
        // Predicated region
        $region57: #{tpu_custom_call.1} parent=55 // pred_check
          %p7718 = pneg %p237
        $region58: #{tpu_custom_call.1} parent=55 // pred_check_branch
          %7720 = sbr.rel (%p7718) target = $region60
        $region59: #{tpu_custom_call.1} parent=55 // pred_region
          %s7721 = smul.u32 4, %s25
          %s7723 = ssub.s32 512, 512
          %7724 = vsyncadd %s7714, %s7723
          %s7725 = smul.addr %s7721, 128
          %s7726 = scalar_lea.hbm %s9, %s7725
          %s7727 = sshll.u32 %s7717, 4
          %s7728 = int_to_ptr.vmem [resolvable:$true] %s7727
          %7733 = dma.vmem_to_hbm [thread:$0]  %s7728, 512, %s7726, %s7714, 128, 128, 8
        $region60: #{tpu_custom_call.1} parent=55 // pred_fallthru
          _
      $region56: #{tpu_custom_call.1} parent=5 // pred_fallthru
        _
      %p7734 = scmp.le.s32.totalorder 2, %s20
      // Predicated region
      $region61: #{tpu_custom_call.1} parent=5 // pred_check
        %p7735 = pneg %p7734
      $region62: #{tpu_custom_call.1} parent=5 // pred_check_branch
        %7737 = sbr.rel (%p7735) target = $region64
      $region63: #{tpu_custom_call.1} parent=5 // pred_region
        %s7738 = ssub.s32 %s20, 2
        // Predicated region
        $region65: #{tpu_custom_call.1} parent=63 // pred_check
          %p7739 = pneg %p243
        $region66: #{tpu_custom_call.1} parent=63 // pred_check_branch
          %7741 = sbr.rel (%p7739) target = $region68
        $region67: #{tpu_custom_call.1} parent=63 // pred_region
          %s7742 = sand.u32 %s228, 1
          %s7743 = scalar_lea.sflag [#allocation6], %s7742
          %s7744 = sand.u32 %s228, 1
          %s7745 = smul.addr %s7744, 32
          %s7746 = scalar_lea.vmem [#allocation5], %s7745
          %7747 = dma.done %s7743, 512
        $region68: #{tpu_custom_call.1} parent=63 // pred_fallthru
          _
      $region64: #{tpu_custom_call.1} parent=5 // pred_fallthru
        _
    $region6: #{tpu_custom_call.1} parent=1 // loop_footer
      %s24 = sadd.s32 1, %s20
    $region7: #{tpu_custom_call.1} parent=1 // loop_footer_branch
      %19 = sbr.rel target = $region3
    $region8: #{tpu_custom_call.1} parent=1 // loop_exit
      _
    %7748 = vsyncpa [#allocation6], 1
    %s7749 = scalar_lea.sflag [#allocation6], 1
    %7750 = vsyncpa %s7749, 1

</llo_original>
